<compile_context>
chip_gen: v5e
topology: v5e:2x2
jax: 0.10.0
libtpu: 0.0.40
codegen_flags: <defaults>
</compile_context>

<pallas_src>
import jax
import jax.numpy as jnp
from jax.experimental import pallas as pl
from jax.experimental.pallas import tpu as pltpu

# ---- synthetic (scaled-down) DINOv2-vitg14 config --------------------------
PATCH = 14            # real patch size (kept)
EMBED_DIM = 128       # real vitg14: 1536 (synthetic, lane-dense)
NUM_HEADS = 4         # real vitg14: 24
HEAD_DIM = EMBED_DIM // NUM_HEADS
MLP_DIM = 4 * EMBED_DIM
DEPTH = 32            # number of blocks; hook sits on blocks[31].attn.qkv
DESC_LAYER = 31       # module's desc_layer
LN_EPS = 1e-6
LS_INIT = 1e-5        # DINOv2 LayerScale init
DEPTH_PER_STEP = 4    # depths processed per grid step (amortize step overhead)
D_TILE = 32           # channel tile for the upsample kernel
W_SLAB = MLP_DIM      # lane width of the packed per-depth vector slab

assert EMBED_DIM % NUM_HEADS == 0
assert EMBED_DIM % D_TILE == 0
assert DEPTH % DEPTH_PER_STEP == 0
assert DESC_LAYER == DEPTH - 1          # facet is the last work item
assert 3 * EMBED_DIM <= W_SLAB


# ----------------------------- kernels --------------------------------------
def _layer_norm(x, g, b):
    mu = jnp.mean(x, axis=-1, keepdims=True)
    var = jnp.mean((x - mu) ** 2, axis=-1, keepdims=True)
    return (x - mu) * jax.lax.rsqrt(var + LN_EPS) * g + b


def _make_vit_stack_kernel(n_tok):
    """Fused: patch-embed prologue + DESC_LAYER pre-LN blocks + qkv-value hook.

    Grid = (DEPTH // DEPTH_PER_STEP,).  The token residual lives in a VMEM
    scratch (persists across grid steps); per-depth-group weights are streamed
    by the BlockSpec pipeline; the only output is the L2-normalized 'value'
    descriptor (CLS dropped), written once at the final sub-step.
    """
    bf16 = jnp.bfloat16

    def kernel(patches_ref, patch_w_ref, prolog_ref, vecs_ref,
               qkv_w_ref, proj_w_ref, fc1_w_ref, fc2_w_ref,
               o_ref, x_ref):
        g = pl.program_id(0)

        # ---- prologue: conv(k=14,s=14)-as-matmul + CLS + pos (step 0) ------
        @pl.when(g == 0)
        def _prologue():
            tok = jnp.dot(patches_ref[...], patch_w_ref[...],
                          preferred_element_type=jnp.float32)
            x_ref[0:1, :] = prolog_ref[0:1, :]            # cls + pos[0]
            x_ref[1:, :] = tok + prolog_ref[1:, :]        # + patch bias + pos[1:]

        def block_body(j):
            vec = vecs_ref[j]                             # (8, W_SLAB) f32 slab
            ln1_g = vec[0:1, :EMBED_DIM]
            ln1_b = vec[1:2, :EMBED_DIM]
            qkv_b = vec[2:3, :3 * EMBED_DIM]              # q-part pre-scaled
            proj_b = vec[3:4, :EMBED_DIM]                 # ls1 folded
            ln2_g = vec[4:5, :EMBED_DIM]
            ln2_b = vec[5:6, :EMBED_DIM]
            fc1_b = vec[6:7, :MLP_DIM]
            fc2_b = vec[7:8, :EMBED_DIM]                  # ls2 folded

            x = x_ref[...]                                # (N, D) f32

            # ---- attention branch ----
            h = _layer_norm(x, ln1_g, ln1_b)
            qkv = (jnp.dot(h.astype(bf16), qkv_w_ref[j],
                           preferred_element_type=jnp.float32) + qkv_b)

            def split_heads(t):                           # (N, D) -> (H, N, hd)
                return jnp.stack(
                    [t[:, i * HEAD_DIM:(i + 1) * HEAD_DIM]
                     for i in range(NUM_HEADS)], axis=0)

            # 1/sqrt(head_dim) is folded into the q columns of qkv_w / qkv_b.
            q = split_heads(qkv[:, :EMBED_DIM]).astype(bf16)
            k = split_heads(qkv[:, EMBED_DIM:2 * EMBED_DIM]).astype(bf16)
            v = split_heads(qkv[:, 2 * EMBED_DIM:]).astype(bf16)

            s = jnp.einsum('hqd,hkd->hqk', q, k,
                           preferred_element_type=jnp.float32)      # (H, N, N)
            s = s - jnp.max(s, axis=-1, keepdims=True)
            p = jnp.exp(s)
            p = p * pl.reciprocal(jnp.sum(p, axis=-1, keepdims=True), approx=True)
            oh = jnp.einsum('hqk,hkd->hqd', p.astype(bf16), v,
                            preferred_element_type=jnp.float32)     # (H, N, hd)
            attn_in = jnp.concatenate([oh[i] for i in range(NUM_HEADS)], axis=-1)
            attn = (jnp.dot(attn_in.astype(bf16), proj_w_ref[j],
                            preferred_element_type=jnp.float32) + proj_b)
            x = x + attn                                  # LayerScale folded into proj

            # ---- MLP branch ----
            h2 = _layer_norm(x, ln2_g, ln2_b)
            m = (jnp.dot(h2.astype(bf16), fc1_w_ref[j],
                         preferred_element_type=jnp.float32) + fc1_b)
            # TODO(synk): PyTorch nn.GELU is exact erf and vitg14 really uses a
            # SwiGLU FFN; tanh-approx GELU used for a Mosaic-safe synthetic block.
            m = jax.nn.gelu(m, approximate=True)
            m = (jnp.dot(m.astype(bf16), fc2_w_ref[j],
                         preferred_element_type=jnp.float32) + fc2_b)
            x_ref[...] = x + m                            # LayerScale folded into fc2

        def facet_body(j):
            # blocks[DESC_LAYER].attn.qkv hook: norm1 + value columns of qkv,
            # then F.normalize(dim=-1); only the value columns are computed.
            vec = vecs_ref[j]
            ln1_g = vec[0:1, :EMBED_DIM]
            ln1_b = vec[1:2, :EMBED_DIM]
            bv = vec[2:3, 2 * EMBED_DIM:3 * EMBED_DIM]    # value bias (unscaled)
            h = _layer_norm(x_ref[...], ln1_g, ln1_b)
            wv = qkv_w_ref[j][:, 2 * EMBED_DIM:]          # (D, D) bf16, value cols
            vfac = (jnp.dot(h.astype(bf16), wv,
                            preferred_element_type=jnp.float32) + bv)
            # 1/max(||v||,1e-12) == rsqrt(max(sum v^2, 1e-24)); rsqrt on the EUP.
            inv = jax.lax.rsqrt(
                jnp.maximum(jnp.sum(vfac * vfac, axis=-1, keepdims=True), 1e-24))
            o_ref[...] = (vfac * inv)[1:, :]              # drop CLS (use_cls=False)

        for j in range(DEPTH_PER_STEP):                   # static unroll
            d = g * DEPTH_PER_STEP + j
            pl.when(d < DESC_LAYER)(lambda j=j: block_body(j))
            pl.when(d == DESC_LAYER)(lambda j=j: facet_body(j))

    return kernel


def _make_upsample_kernel(d_tile, hp, wp, h_new, w_new):
    """Separable bilinear upsample + masked_fill for a tile of d_tile channels.

    Two channel-batched einsums per grid step (no per-channel Python loop):
      width:  (c, hp, wp) x (c, wp, w_new)  -> (c, hp, w_new)
      height: (c, h_new, hp) x (c, hp, w_new) -> (c, h_new, w_new)
    """
    def kernel(wh_ref, da_ref, wwt_ref, m_ref, o_ref):
        da = da_ref[...]                                              # (c, hp, wp)
        wwt_b = jnp.broadcast_to(wwt_ref[...][None], (d_tile, wp, w_new))
        wh_b = jnp.broadcast_to(wh_ref[...][None], (d_tile, h_new, hp))
        t = jnp.einsum('cyp,cpx->cyx', da, wwt_b,
                       preferred_element_type=jnp.float32)            # width interp
        r = jnp.einsum('chy,cyx->chx', wh_b, t,
                       preferred_element_type=jnp.float32)            # height interp
        o_ref[...] = jnp.where(m_ref[...] != 0.0, r, 0.0)             # masked_fill

    return kernel


# ----------------------------- glue / params --------------------------------
def bilinear_matrix(src, dst):
    """Rows = dst index, cols = src index; matches F.interpolate(mode='bilinear',
    align_corners=False) with edge clamping."""
    t = jnp.arange(dst, dtype=jnp.float32)
    s = jnp.maximum((t + 0.5) * (src / dst) - 0.5, 0.0)
    s0 = jnp.floor(s)
    frac = s - s0
    i0 = jnp.clip(s0.astype(jnp.int32), 0, src - 1)
    i1 = jnp.clip(i0 + 1, 0, src - 1)
    rows = jnp.arange(dst)
    W = jnp.zeros((dst, src), jnp.float32)
    W = W.at[rows, i0].add(1.0 - frac)
    W = W.at[rows, i1].add(frac)
    return W


def init_params(key, n_tokens):
    """Raw f32 master weights of the synthetic scaled-down vitg14."""
    keys = jax.random.split(key, 12)

    def nrm(k, shape, scale=0.02):
        return (scale * jax.random.normal(k, shape)).astype(jnp.float32)

    blocks = {
        "ln1_g": jnp.ones((DEPTH, 1, EMBED_DIM), jnp.float32),
        "ln1_b": jnp.zeros((DEPTH, 1, EMBED_DIM), jnp.float32),
        "qkv_w": nrm(keys[3], (DEPTH, EMBED_DIM, 3 * EMBED_DIM)),
        "qkv_b": nrm(keys[4], (DEPTH, 1, 3 * EMBED_DIM)),
        "proj_w": nrm(keys[5], (DEPTH, EMBED_DIM, EMBED_DIM)),
        "proj_b": nrm(keys[6], (DEPTH, 1, EMBED_DIM)),
        "ls1": jnp.full((DEPTH, 1, EMBED_DIM), LS_INIT, jnp.float32),
        "ln2_g": jnp.ones((DEPTH, 1, EMBED_DIM), jnp.float32),
        "ln2_b": jnp.zeros((DEPTH, 1, EMBED_DIM), jnp.float32),
        "fc1_w": nrm(keys[7], (DEPTH, EMBED_DIM, MLP_DIM)),
        "fc1_b": nrm(keys[8], (DEPTH, 1, MLP_DIM)),
        "fc2_w": nrm(keys[9], (DEPTH, MLP_DIM, EMBED_DIM)),
        "fc2_b": nrm(keys[10], (DEPTH, 1, EMBED_DIM)),
        "ls2": jnp.full((DEPTH, 1, EMBED_DIM), LS_INIT, jnp.float32),
    }
    return {
        "mean": jnp.array([0.485, 0.456, 0.406], jnp.float32),
        "std": jnp.array([0.229, 0.224, 0.225], jnp.float32),
        "patch_w": nrm(keys[0], (3 * PATCH * PATCH, EMBED_DIM)),
        "patch_b": nrm(keys[1], (1, EMBED_DIM)),
        "cls": nrm(keys[2], (1, EMBED_DIM)),
        "pos": nrm(keys[11], (n_tokens, EMBED_DIM)),
        "blocks": blocks,
    }


def fold_params(p):
    """All exact algebraic folds + packing; produces the kernel-ready params."""
    bf16 = jnp.bfloat16
    blk = p["blocks"]

    # (1) fold per-channel (x-mean)/std into the patch projection (conv is linear)
    ch_idx = jnp.repeat(jnp.arange(3), PATCH * PATCH)                 # (588,)
    inv_std = 1.0 / p["std"]
    patch_w = p["patch_w"] * inv_std[ch_idx][:, None]
    patch_b = p["patch_b"] - (p["mean"] * inv_std)[ch_idx][None, :] @ p["patch_w"]

    # (2) prologue additive term: row0 = cls + pos[0]; rows 1: = pos[1:] + patch bias
    prolog = jnp.concatenate([p["cls"] + p["pos"][0:1],
                              p["pos"][1:] + patch_b], axis=0)

    # (3) fold 1/sqrt(head_dim) into the q columns of qkv
    scale = float(HEAD_DIM) ** -0.5
    colscale = jnp.concatenate([jnp.full((EMBED_DIM,), scale, jnp.float32),
                                jnp.ones((2 * EMBED_DIM,), jnp.float32)])
    qkv_w = blk["qkv_w"] * colscale[None, None, :]
    qkv_b = blk["qkv_b"] * colscale[None, None, :]

    # (4) fold LayerScale gammas into the branch output projections
    proj_w = blk["proj_w"] * blk["ls1"]
    proj_b = blk["proj_b"] * blk["ls1"]
    fc2_w = blk["fc2_w"] * blk["ls2"]
    fc2_b = blk["fc2_b"] * blk["ls2"]

    # (5) pack all small per-depth vectors into one (DEPTH, 8, W_SLAB) slab
    def row(v):
        return jnp.pad(v, ((0, 0), (0, 0), (0, W_SLAB - v.shape[-1])))

    vecs = jnp.concatenate(
        [row(blk["ln1_g"]), row(blk["ln1_b"]), row(qkv_b), row(proj_b),
         row(blk["ln2_g"]), row(blk["ln2_b"]), row(blk["fc1_b"]), row(fc2_b)],
        axis=1)                                                       # (DEPTH, 8, 512)

    return {
        "patch_w": patch_w.astype(bf16),
        "prolog": prolog.astype(jnp.float32),
        "vecs": vecs.astype(jnp.float32),
        "qkv_w": qkv_w.astype(bf16),
        "proj_w": proj_w.astype(bf16),
        "fc1_w": blk["fc1_w"].astype(bf16),
        "fc2_w": fc2_w.astype(bf16),
    }


@jax.jit
def dinov2_mid_encoder_forward(params, image, valid):
    """image: (1, 3, H, W) float32 NCHW; valid: (1, H, W) bool.
    Returns feature of shape (1, EMBED_DIM, H//14*14, W//14*14) float32."""
    b, c, h, w = image.shape
    assert b == 1 and c == 3, "module's broadcasting implies batch == 1"
    bf16 = jnp.bfloat16

    # center crop to multiples of the patch size (normalization is folded into
    # the patch projection, so the raw image is cropped)
    hp, wp = h // PATCH, w // PATCH
    h_new, w_new = hp * PATCH, wp * PATCH
    top = int(round((h - h_new) / 2.0))
    left = int(round((w - w_new) / 2.0))
    img_c = image[0, :, top:top + h_new, left:left + w_new]           # (3, h_new, w_new)
    # TODO(synk): the max_img_size>1024 PIL-style bicubic resize branch never
    # triggers at these shapes and is not implemented.

    # patch-flatten (glue): conv(k=14, s=14) == flatten + matmul
    patches = img_c.reshape(c, hp, PATCH, wp, PATCH)
    patches = patches.transpose(1, 3, 0, 2, 4).reshape(hp * wp, c * PATCH * PATCH)
    n_tok = 1 + hp * wp
    dpg = DEPTH_PER_STEP

    # fused: patch-embed prologue + blocks 0..30 + qkv-value hook of block 31
    desc = pl.pallas_call(
        _make_vit_stack_kernel(n_tok),
        out_shape=jax.ShapeDtypeStruct((n_tok - 1, EMBED_DIM), jnp.float32),
        grid=(DEPTH // dpg,),
        in_specs=[
            pl.BlockSpec((n_tok - 1, 3 * PATCH * PATCH), lambda g: (0, 0)),  # patches
            pl.BlockSpec((3 * PATCH * PATCH, EMBED_DIM), lambda g: (0, 0)),  # patch_w
            pl.BlockSpec((n_tok, EMBED_DIM), lambda g: (0, 0)),              # prolog add
            pl.BlockSpec((dpg, 8, W_SLAB), lambda g: (g, 0, 0)),             # packed vecs
            pl.BlockSpec((dpg, EMBED_DIM, 3 * EMBED_DIM), lambda g: (g, 0, 0)),  # qkv_w
            pl.BlockSpec((dpg, EMBED_DIM, EMBED_DIM), lambda g: (g, 0, 0)),      # proj_w
            pl.BlockSpec((dpg, EMBED_DIM, MLP_DIM), lambda g: (g, 0, 0)),        # fc1_w
            pl.BlockSpec((dpg, MLP_DIM, EMBED_DIM), lambda g: (g, 0, 0)),        # fc2_w
        ],
        out_specs=pl.BlockSpec((n_tok - 1, EMBED_DIM), lambda g: (0, 0)),
        scratch_shapes=[pltpu.VMEM((n_tok, EMBED_DIM), jnp.float32)],     # residual
        compiler_params=pltpu.CompilerParams(dimension_semantics=("arbitrary",)),
    )(patches.astype(bf16), params["patch_w"], params["prolog"], params["vecs"],
      params["qkv_w"], params["proj_w"], params["fc1_w"], params["fc2_w"])
    # TODO(synk): blocks[DESC_LAYER:] + the final norm/head of dino_model(img) run
    # in torch but their result is discarded; skipped here (identical returned value).

    # separable bilinear upsample of the descriptor map + masked_fill
    da3 = desc.T.reshape(EMBED_DIM, hp, wp)            # tiny wrapper-side transpose
    Wh = bilinear_matrix(hp, h_new)                    # (h_new, hp)
    WwT = bilinear_matrix(wp, w_new).T                 # (wp, w_new)
    # valid-mask resize (descriptor-independent, tiny -> wrapper glue, separable);
    # torch resizes the full uncropped (h, w) mask to (h_new, w_new): same here.
    Wh_v = bilinear_matrix(h, h_new)
    Ww_v = bilinear_matrix(w, w_new)
    vr = Wh_v @ valid[0].astype(jnp.float32) @ Ww_v.T  # (h_new, w_new)
    mask = (jnp.round(vr) != 0.0).astype(jnp.float32)  # .round().bool()
    # note: torch does the feature interpolation in float64 (`.to(float)`); f32 here.

    feat = pl.pallas_call(
        _make_upsample_kernel(D_TILE, hp, wp, h_new, w_new),
        out_shape=jax.ShapeDtypeStruct((EMBED_DIM, h_new, w_new), jnp.float32),
        grid=(EMBED_DIM // D_TILE,),
        in_specs=[
            pl.BlockSpec((h_new, hp), lambda i: (0, 0)),             # Wh (resident)
            pl.BlockSpec((D_TILE, hp, wp), lambda i: (i, 0, 0)),     # descriptor tile
            pl.BlockSpec((wp, w_new), lambda i: (0, 0)),             # WwT (resident)
            pl.BlockSpec((h_new, w_new), lambda i: (0, 0)),          # mask (resident)
        ],
        out_specs=pl.BlockSpec((D_TILE, h_new, w_new), lambda i: (i, 0, 0)),
        compiler_params=pltpu.CompilerParams(dimension_semantics=("parallel",)),
    )(Wh, da3, WwT, mask)

    return feat[None]                                  # (1, D, h_new, w_new)


if __name__ == "__main__":
    key = jax.random.PRNGKey(0)
    k_img, k_val, k_par = jax.random.split(key, 3)
    H = W = 28                      # small, multiple of 14 -> 2x2 patch grid
    image = jax.random.uniform(k_img, (1, 3, H, W), jnp.float32)
    valid = jax.random.uniform(k_val, (1, H, W)) > 0.3
    n_tokens = 1 + (H // PATCH) * (W // PATCH)
    params = fold_params(init_params(k_par, n_tokens))
    feat = dinov2_mid_encoder_forward(params, image, valid)
    feat = jax.block_until_ready(feat)
    assert feat.shape == (1, EMBED_DIM, H, W) and feat.dtype == jnp.float32
    print("KERNEL_OK")
</pallas_src>

<mosaic_0001>
module attributes {stable_mosaic.version = 11 : i64} {
  func.func @kernel(%arg0: i32, %arg1: memref<4x588xbf16, #tpu.memory_space<vmem>>, %arg2: memref<588x128xbf16, #tpu.memory_space<vmem>>, %arg3: memref<5x128xf32, #tpu.memory_space<vmem>>, %arg4: memref<4x8x512xf32, #tpu.memory_space<vmem>>, %arg5: memref<4x128x384xbf16, #tpu.memory_space<vmem>>, %arg6: memref<4x128x128xbf16, #tpu.memory_space<vmem>>, %arg7: memref<4x128x512xbf16, #tpu.memory_space<vmem>>, %arg8: memref<4x512x128xbf16, #tpu.memory_space<vmem>>, %arg9: memref<4x128xf32, #tpu.memory_space<vmem>>, %arg10: memref<5x128xf32, #tpu.memory_space<vmem>>) attributes {dimension_semantics = [#tpu.dimension_semantics<arbitrary>], iteration_bounds = array<i64: 8>, scalar_prefetch = 0 : i64, scratch_operands = 1 : i64, tpu.core_type = #tpu.core_type<tc>, window_params = [{pipeline_mode = #tpu.pipeline_mode<synchronous>, transform_indices = @transform_0, window_bounds = array<i64: 4, 588>}, {pipeline_mode = #tpu.pipeline_mode<synchronous>, transform_indices = @transform_1, window_bounds = array<i64: 588, 128>}, {pipeline_mode = #tpu.pipeline_mode<synchronous>, transform_indices = @transform_2, window_bounds = array<i64: 5, 128>}, {transform_indices = @transform_3, window_bounds = array<i64: 4, 8, 512>}, {transform_indices = @transform_4, window_bounds = array<i64: 4, 128, 384>}, {transform_indices = @transform_5, window_bounds = array<i64: 4, 128, 128>}, {transform_indices = @transform_6, window_bounds = array<i64: 4, 128, 512>}, {transform_indices = @transform_7, window_bounds = array<i64: 4, 512, 128>}, {pipeline_mode = #tpu.pipeline_mode<synchronous>, transform_indices = @transform_8, window_bounds = array<i64: 4, 128>}]} {
    %c0_i32 = arith.constant 0 : i32
    %0 = arith.cmpi eq, %arg0, %c0_i32 : i32
    %1 = arith.extui %0 : i1 to i32
    %c0_i32_0 = arith.constant 0 : i32
    %2 = arith.cmpi ne, %1, %c0_i32_0 : i32
    scf.if %2 {
      %c0 = arith.constant 0 : index
      %c0_20 = arith.constant 0 : index
      %35 = vector.load %arg1[%c0, %c0_20] : memref<4x588xbf16, #tpu.memory_space<vmem>>, vector<4x588xbf16>
      %c0_21 = arith.constant 0 : index
      %c0_22 = arith.constant 0 : index
      %36 = vector.load %arg2[%c0_21, %c0_22] : memref<588x128xbf16, #tpu.memory_space<vmem>>, vector<588x128xbf16>
      %cst = arith.constant dense<0.000000e+00> : vector<4x128xf32>
      %37 = tpu.matmul %35, %36, %cst {dimension_numbers = #tpu.dot_dimension_numbers<[1], [0], [0], [1], [0, 0, 1, 1], [], []>} : vector<4x588xbf16>, vector<588x128xbf16>, vector<4x128xf32> -> vector<4x128xf32>
      %c0_23 = arith.constant 0 : index
      %c0_24 = arith.constant 0 : index
      %38 = vector.load %arg3[%c0_23, %c0_24] : memref<5x128xf32, #tpu.memory_space<vmem>>, vector<1x128xf32>
      %c0_25 = arith.constant 0 : index
      %c0_26 = arith.constant 0 : index
      %39 = vector.load %arg10[%c0_25, %c0_26] : memref<5x128xf32, #tpu.memory_space<vmem>>, vector<1x128xf32>
      tpu.vector_store %arg10[%c0_25, %c0_26], %38 {strides = array<i32>} : memref<5x128xf32, #tpu.memory_space<vmem>>, vector<1x128xf32>,
      %c1 = arith.constant 1 : index
      %c0_27 = arith.constant 0 : index
      %40 = vector.load %arg3[%c1, %c0_27] : memref<5x128xf32, #tpu.memory_space<vmem>>, vector<4x128xf32>
      %41 = arith.addf %37, %40 : vector<4x128xf32>
      %c1_28 = arith.constant 1 : index
      %c0_29 = arith.constant 0 : index
      %42 = vector.load %arg10[%c1_28, %c0_29] : memref<5x128xf32, #tpu.memory_space<vmem>>, vector<4x128xf32>
      tpu.vector_store %arg10[%c1_28, %c0_29], %41 {strides = array<i32>} : memref<5x128xf32, #tpu.memory_space<vmem>>, vector<4x128xf32>,
    } else {
    }
    %c4_i32 = arith.constant 4 : i32
    %3 = arith.muli %arg0, %c4_i32 : i32
    %c0_i32_1 = arith.constant 0 : i32
    %4 = arith.addi %3, %c0_i32_1 : i32
    %c31_i32 = arith.constant 31 : i32
    %5 = arith.cmpi slt, %4, %c31_i32 : i32
    %6 = arith.extui %5 : i1 to i32
    %c0_i32_2 = arith.constant 0 : i32
    %7 = arith.cmpi ne, %6, %c0_i32_2 : i32
    scf.if %7 {
      %c0 = arith.constant 0 : index
      %c0_20 = arith.constant 0 : index
      %c0_21 = arith.constant 0 : index
      %35 = vector.load %arg4[%c0, %c0_20, %c0_21] : memref<4x8x512xf32, #tpu.memory_space<vmem>>, vector<1x8x512xf32>
      %36 = vector.shape_cast %35 : vector<1x8x512xf32> to vector<8x512xf32>
      %37 = vector.extract_strided_slice %36 {offsets = [0, 0], sizes = [1, 128], strides = [1, 1]} : vector<8x512xf32> to vector<1x128xf32>
      %38 = vector.extract_strided_slice %36 {offsets = [1, 0], sizes = [1, 128], strides = [1, 1]} : vector<8x512xf32> to vector<1x128xf32>
      %39 = vector.extract_strided_slice %36 {offsets = [2, 0], sizes = [1, 384], strides = [1, 1]} : vector<8x512xf32> to vector<1x384xf32>
      %40 = vector.extract_strided_slice %36 {offsets = [3, 0], sizes = [1, 128], strides = [1, 1]} : vector<8x512xf32> to vector<1x128xf32>
      %41 = vector.extract_strided_slice %36 {offsets = [4, 0], sizes = [1, 128], strides = [1, 1]} : vector<8x512xf32> to vector<1x128xf32>
      %42 = vector.extract_strided_slice %36 {offsets = [5, 0], sizes = [1, 128], strides = [1, 1]} : vector<8x512xf32> to vector<1x128xf32>
      %43 = vector.extract_strided_slice %36 {offsets = [6, 0], sizes = [1, 512], strides = [1, 1]} : vector<8x512xf32> to vector<1x512xf32>
      %44 = vector.extract_strided_slice %36 {offsets = [7, 0], sizes = [1, 128], strides = [1, 1]} : vector<8x512xf32> to vector<1x128xf32>
      %c0_22 = arith.constant 0 : index
      %c0_23 = arith.constant 0 : index
      %45 = vector.load %arg10[%c0_22, %c0_23] : memref<5x128xf32, #tpu.memory_space<vmem>>, vector<5x128xf32>
      %cst = arith.constant dense<0.000000e+00> : vector<5xf32>
      %46 = vector.multi_reduction <add>, %45, %cst [1] : vector<5x128xf32> to vector<5xf32>
      %47 = vector.shape_cast %46 : vector<5xf32> to vector<5x1xf32>
      %cst_24 = arith.constant 1.280000e+02 : f32
      %48 = vector.broadcast %cst_24 : f32 to vector<5x1xf32>
      %49 = arith.divf %47, %48 : vector<5x1xf32>
      %50 = vector.broadcast %49 : vector<5x1xf32> to vector<5x128xf32>
      %51 = arith.subf %45, %50 : vector<5x128xf32>
      %52 = arith.mulf %51, %51 : vector<5x128xf32>
      %cst_25 = arith.constant dense<0.000000e+00> : vector<5xf32>
      %53 = vector.multi_reduction <add>, %52, %cst_25 [1] : vector<5x128xf32> to vector<5xf32>
      %54 = vector.shape_cast %53 : vector<5xf32> to vector<5x1xf32>
      %cst_26 = arith.constant 1.280000e+02 : f32
      %55 = vector.broadcast %cst_26 : f32 to vector<5x1xf32>
      %56 = arith.divf %54, %55 : vector<5x1xf32>
      %57 = vector.broadcast %49 : vector<5x1xf32> to vector<5x128xf32>
      %58 = arith.subf %45, %57 : vector<5x128xf32>
      %cst_27 = arith.constant 9.99999997E-7 : f32
      %59 = vector.broadcast %cst_27 : f32 to vector<5x1xf32>
      %60 = arith.addf %56, %59 : vector<5x1xf32>
      %61 = math.rsqrt %60 : vector<5x1xf32>
      %62 = vector.broadcast %61 : vector<5x1xf32> to vector<5x128xf32>
      %63 = arith.mulf %58, %62 : vector<5x128xf32>
      %64 = vector.broadcast %37 : vector<1x128xf32> to vector<5x128xf32>
      %65 = arith.mulf %63, %64 : vector<5x128xf32>
      %66 = vector.broadcast %38 : vector<1x128xf32> to vector<5x128xf32>
      %67 = arith.addf %65, %66 : vector<5x128xf32>
      %68 = arith.truncf %67 : vector<5x128xf32> to vector<5x128xbf16>
      %c0_28 = arith.constant 0 : index
      %c0_29 = arith.constant 0 : index
      %c0_30 = arith.constant 0 : index
      %69 = vector.load %arg5[%c0_28, %c0_29, %c0_30] : memref<4x128x384xbf16, #tpu.memory_space<vmem>>, vector<1x128x384xbf16>
      %70 = vector.shape_cast %69 : vector<1x128x384xbf16> to vector<128x384xbf16>
      %cst_31 = arith.constant dense<0.000000e+00> : vector<5x384xf32>
      %71 = tpu.matmul %68, %70, %cst_31 {dimension_numbers = #tpu.dot_dimension_numbers<[1], [0], [0], [1], [0, 0, 1, 1], [], []>} : vector<5x128xbf16>, vector<128x384xbf16>, vector<5x384xf32> -> vector<5x384xf32>
      %72 = vector.broadcast %39 : vector<1x384xf32> to vector<5x384xf32>
      %73 = arith.addf %71, %72 : vector<5x384xf32>
      %74 = vector.extract_strided_slice %73 {offsets = [0, 0], sizes = [5, 128], strides = [1, 1]} : vector<5x384xf32> to vector<5x128xf32>
      %75 = vector.extract_strided_slice %74 {offsets = [0, 0], sizes = [5, 32], strides = [1, 1]} : vector<5x128xf32> to vector<5x32xf32>
      %76 = vector.extract_strided_slice %74 {offsets = [0, 32], sizes = [5, 32], strides = [1, 1]} : vector<5x128xf32> to vector<5x32xf32>
      %77 = vector.extract_strided_slice %74 {offsets = [0, 64], sizes = [5, 32], strides = [1, 1]} : vector<5x128xf32> to vector<5x32xf32>
      %78 = vector.extract_strided_slice %74 {offsets = [0, 96], sizes = [5, 32], strides = [1, 1]} : vector<5x128xf32> to vector<5x32xf32>
      %79 = vector.shape_cast %75 : vector<5x32xf32> to vector<1x5x32xf32>
      %80 = vector.shape_cast %76 : vector<5x32xf32> to vector<1x5x32xf32>
      %81 = vector.shape_cast %77 : vector<5x32xf32> to vector<1x5x32xf32>
      %82 = vector.shape_cast %78 : vector<5x32xf32> to vector<1x5x32xf32>
      %83 = tpu.concatenate %79, %80, %81, %82 in 0 : vector<1x5x32xf32>, vector<1x5x32xf32>, vector<1x5x32xf32>, vector<1x5x32xf32> -> vector<4x5x32xf32>
      %84 = arith.truncf %83 : vector<4x5x32xf32> to vector<4x5x32xbf16>
      %85 = vector.extract_strided_slice %73 {offsets = [0, 128], sizes = [5, 128], strides = [1, 1]} : vector<5x384xf32> to vector<5x128xf32>
      %86 = vector.extract_strided_slice %85 {offsets = [0, 0], sizes = [5, 32], strides = [1, 1]} : vector<5x128xf32> to vector<5x32xf32>
      %87 = vector.extract_strided_slice %85 {offsets = [0, 32], sizes = [5, 32], strides = [1, 1]} : vector<5x128xf32> to vector<5x32xf32>
      %88 = vector.extract_strided_slice %85 {offsets = [0, 64], sizes = [5, 32], strides = [1, 1]} : vector<5x128xf32> to vector<5x32xf32>
      %89 = vector.extract_strided_slice %85 {offsets = [0, 96], sizes = [5, 32], strides = [1, 1]} : vector<5x128xf32> to vector<5x32xf32>
      %90 = vector.shape_cast %86 : vector<5x32xf32> to vector<1x5x32xf32>
      %91 = vector.shape_cast %87 : vector<5x32xf32> to vector<1x5x32xf32>
      %92 = vector.shape_cast %88 : vector<5x32xf32> to vector<1x5x32xf32>
      %93 = vector.shape_cast %89 : vector<5x32xf32> to vector<1x5x32xf32>
      %94 = tpu.concatenate %90, %91, %92, %93 in 0 : vector<1x5x32xf32>, vector<1x5x32xf32>, vector<1x5x32xf32>, vector<1x5x32xf32> -> vector<4x5x32xf32>
      %95 = arith.truncf %94 : vector<4x5x32xf32> to vector<4x5x32xbf16>
      %96 = vector.extract_strided_slice %73 {offsets = [0, 256], sizes = [5, 128], strides = [1, 1]} : vector<5x384xf32> to vector<5x128xf32>
      %97 = vector.extract_strided_slice %96 {offsets = [0, 0], sizes = [5, 32], strides = [1, 1]} : vector<5x128xf32> to vector<5x32xf32>
      %98 = vector.extract_strided_slice %96 {offsets = [0, 32], sizes = [5, 32], strides = [1, 1]} : vector<5x128xf32> to vector<5x32xf32>
      %99 = vector.extract_strided_slice %96 {offsets = [0, 64], sizes = [5, 32], strides = [1, 1]} : vector<5x128xf32> to vector<5x32xf32>
      %100 = vector.extract_strided_slice %96 {offsets = [0, 96], sizes = [5, 32], strides = [1, 1]} : vector<5x128xf32> to vector<5x32xf32>
      %101 = vector.shape_cast %97 : vector<5x32xf32> to vector<1x5x32xf32>
      %102 = vector.shape_cast %98 : vector<5x32xf32> to vector<1x5x32xf32>
      %103 = vector.shape_cast %99 : vector<5x32xf32> to vector<1x5x32xf32>
      %104 = vector.shape_cast %100 : vector<5x32xf32> to vector<1x5x32xf32>
      %105 = tpu.concatenate %101, %102, %103, %104 in 0 : vector<1x5x32xf32>, vector<1x5x32xf32>, vector<1x5x32xf32>, vector<1x5x32xf32> -> vector<4x5x32xf32>
      %106 = arith.truncf %105 : vector<4x5x32xf32> to vector<4x5x32xbf16>
      "tpu.trace_start"() <{level = 10 : i32, message = "hqd,hkd->hqk"}> : () -> ()
      %cst_32 = arith.constant dense<0.000000e+00> : vector<4x5x5xf32>
      %107 = tpu.matmul %84, %95, %cst_32 {dimension_numbers = #tpu.dot_dimension_numbers<[2], [2], [1], [1], [0, 0, 0, 1, 1, 1], [0], [0]>} : vector<4x5x32xbf16>, vector<4x5x32xbf16>, vector<4x5x5xf32> -> vector<4x5x5xf32>
      "tpu.trace_stop"() : () -> ()
      %cst_33 = arith.constant dense<0xFF800000> : vector<4x5xf32>
      %108 = vector.multi_reduction <maximumf>, %107, %cst_33 [2] : vector<4x5x5xf32> to vector<4x5xf32>
      %109 = vector.shape_cast %108 : vector<4x5xf32> to vector<4x5x1xf32>
      %110 = vector.broadcast %109 : vector<4x5x1xf32> to vector<4x5x5xf32>
      %111 = arith.subf %107, %110 : vector<4x5x5xf32>
      %112 = math.exp %111 : vector<4x5x5xf32>
      %cst_34 = arith.constant dense<0.000000e+00> : vector<4x5xf32>
      %113 = vector.multi_reduction <add>, %112, %cst_34 [2] : vector<4x5x5xf32> to vector<4x5xf32>
      %114 = vector.shape_cast %113 : vector<4x5xf32> to vector<4x5x1xf32>
      %115 = tpu.reciprocal %114 {approx = true} : vector<4x5x1xf32> -> vector<4x5x1xf32>
      %116 = vector.broadcast %115 : vector<4x5x1xf32> to vector<4x5x5xf32>
      %117 = arith.mulf %112, %116 : vector<4x5x5xf32>
      %118 = arith.truncf %117 : vector<4x5x5xf32> to vector<4x5x5xbf16>
      "tpu.trace_start"() <{level = 10 : i32, message = "hqk,hkd->hqd"}> : () -> ()
      %cst_35 = arith.constant dense<0.000000e+00> : vector<4x5x32xf32>
      %119 = tpu.matmul %118, %106, %cst_35 {dimension_numbers = #tpu.dot_dimension_numbers<[2], [1], [1], [2], [0, 0, 0, 1, 1, 2], [0], [0]>} : vector<4x5x5xbf16>, vector<4x5x32xbf16>, vector<4x5x32xf32> -> vector<4x5x32xf32>
      "tpu.trace_stop"() : () -> ()
      %120 = vector.extract_strided_slice %119 {offsets = [0, 0, 0], sizes = [1, 5, 32], strides = [1, 1, 1]} : vector<4x5x32xf32> to vector<1x5x32xf32>
      %121 = vector.shape_cast %120 : vector<1x5x32xf32> to vector<5x32xf32>
      %122 = vector.extract_strided_slice %119 {offsets = [1, 0, 0], sizes = [1, 5, 32], strides = [1, 1, 1]} : vector<4x5x32xf32> to vector<1x5x32xf32>
      %123 = vector.shape_cast %122 : vector<1x5x32xf32> to vector<5x32xf32>
      %124 = vector.extract_strided_slice %119 {offsets = [2, 0, 0], sizes = [1, 5, 32], strides = [1, 1, 1]} : vector<4x5x32xf32> to vector<1x5x32xf32>
      %125 = vector.shape_cast %124 : vector<1x5x32xf32> to vector<5x32xf32>
      %126 = vector.extract_strided_slice %119 {offsets = [3, 0, 0], sizes = [1, 5, 32], strides = [1, 1, 1]} : vector<4x5x32xf32> to vector<1x5x32xf32>
      %127 = vector.shape_cast %126 : vector<1x5x32xf32> to vector<5x32xf32>
      %128 = tpu.concatenate %121, %123, %125, %127 in 1 : vector<5x32xf32>, vector<5x32xf32>, vector<5x32xf32>, vector<5x32xf32> -> vector<5x128xf32>
      %129 = arith.truncf %128 : vector<5x128xf32> to vector<5x128xbf16>
      %c0_36 = arith.constant 0 : index
      %c0_37 = arith.constant 0 : index
      %c0_38 = arith.constant 0 : index
      %130 = vector.load %arg6[%c0_36, %c0_37, %c0_38] : memref<4x128x128xbf16, #tpu.memory_space<vmem>>, vector<1x128x128xbf16>
      %131 = vector.shape_cast %130 : vector<1x128x128xbf16> to vector<128x128xbf16>
      %cst_39 = arith.constant dense<0.000000e+00> : vector<5x128xf32>
      %132 = tpu.matmul %129, %131, %cst_39 {dimension_numbers = #tpu.dot_dimension_numbers<[1], [0], [0], [1], [0, 0, 1, 1], [], []>} : vector<5x128xbf16>, vector<128x128xbf16>, vector<5x128xf32> -> vector<5x128xf32>
      %133 = vector.broadcast %40 : vector<1x128xf32> to vector<5x128xf32>
      %134 = arith.addf %132, %133 : vector<5x128xf32>
      %135 = arith.addf %45, %134 : vector<5x128xf32>
      %cst_40 = arith.constant dense<0.000000e+00> : vector<5xf32>
      %136 = vector.multi_reduction <add>, %135, %cst_40 [1] : vector<5x128xf32> to vector<5xf32>
      %137 = vector.shape_cast %136 : vector<5xf32> to vector<5x1xf32>
      %cst_41 = arith.constant 1.280000e+02 : f32
      %138 = vector.broadcast %cst_41 : f32 to vector<5x1xf32>
      %139 = arith.divf %137, %138 : vector<5x1xf32>
      %140 = vector.broadcast %139 : vector<5x1xf32> to vector<5x128xf32>
      %141 = arith.subf %135, %140 : vector<5x128xf32>
      %142 = arith.mulf %141, %141 : vector<5x128xf32>
      %cst_42 = arith.constant dense<0.000000e+00> : vector<5xf32>
      %143 = vector.multi_reduction <add>, %142, %cst_42 [1] : vector<5x128xf32> to vector<5xf32>
      %144 = vector.shape_cast %143 : vector<5xf32> to vector<5x1xf32>
      %cst_43 = arith.constant 1.280000e+02 : f32
      %145 = vector.broadcast %cst_43 : f32 to vector<5x1xf32>
      %146 = arith.divf %144, %145 : vector<5x1xf32>
      %147 = vector.broadcast %139 : vector<5x1xf32> to vector<5x128xf32>
      %148 = arith.subf %135, %147 : vector<5x128xf32>
      %cst_44 = arith.constant 9.99999997E-7 : f32
      %149 = vector.broadcast %cst_44 : f32 to vector<5x1xf32>
      %150 = arith.addf %146, %149 : vector<5x1xf32>
      %151 = math.rsqrt %150 : vector<5x1xf32>
      %152 = vector.broadcast %151 : vector<5x1xf32> to vector<5x128xf32>
      %153 = arith.mulf %148, %152 : vector<5x128xf32>
      %154 = vector.broadcast %41 : vector<1x128xf32> to vector<5x128xf32>
      %155 = arith.mulf %153, %154 : vector<5x128xf32>
      %156 = vector.broadcast %42 : vector<1x128xf32> to vector<5x128xf32>
      %157 = arith.addf %155, %156 : vector<5x128xf32>
      %158 = arith.truncf %157 : vector<5x128xf32> to vector<5x128xbf16>
      %c0_45 = arith.constant 0 : index
      %c0_46 = arith.constant 0 : index
      %c0_47 = arith.constant 0 : index
      %159 = vector.load %arg7[%c0_45, %c0_46, %c0_47] : memref<4x128x512xbf16, #tpu.memory_space<vmem>>, vector<1x128x512xbf16>
      %160 = vector.shape_cast %159 : vector<1x128x512xbf16> to vector<128x512xbf16>
      %cst_48 = arith.constant dense<0.000000e+00> : vector<5x512xf32>
      %161 = tpu.matmul %158, %160, %cst_48 {dimension_numbers = #tpu.dot_dimension_numbers<[1], [0], [0], [1], [0, 0, 1, 1], [], []>} : vector<5x128xbf16>, vector<128x512xbf16>, vector<5x512xf32> -> vector<5x512xf32>
      %162 = vector.broadcast %43 : vector<1x512xf32> to vector<5x512xf32>
      %163 = arith.addf %161, %162 : vector<5x512xf32>
      %164 = arith.mulf %163, %163 : vector<5x512xf32>
      %165 = arith.mulf %163, %164 : vector<5x512xf32>
      %cst_49 = arith.constant 4.471500e-02 : f32
      %166 = vector.broadcast %cst_49 : f32 to vector<5x512xf32>
      %167 = arith.mulf %166, %165 : vector<5x512xf32>
      %168 = arith.addf %163, %167 : vector<5x512xf32>
      %cst_50 = arith.constant 0.797884583 : f32
      %169 = vector.broadcast %cst_50 : f32 to vector<5x512xf32>
      %170 = arith.mulf %169, %168 : vector<5x512xf32>
      %171 = math.tanh %170 : vector<5x512xf32>
      %cst_51 = arith.constant 1.000000e+00 : f32
      %172 = vector.broadcast %cst_51 : f32 to vector<5x512xf32>
      %173 = arith.addf %172, %171 : vector<5x512xf32>
      %cst_52 = arith.constant 5.000000e-01 : f32
      %174 = vector.broadcast %cst_52 : f32 to vector<5x512xf32>
      %175 = arith.mulf %174, %173 : vector<5x512xf32>
      %176 = arith.mulf %163, %175 : vector<5x512xf32>
      %177 = arith.truncf %176 : vector<5x512xf32> to vector<5x512xbf16>
      %c0_53 = arith.constant 0 : index
      %c0_54 = arith.constant 0 : index
      %c0_55 = arith.constant 0 : index
      %178 = vector.load %arg8[%c0_53, %c0_54, %c0_55] : memref<4x512x128xbf16, #tpu.memory_space<vmem>>, vector<1x512x128xbf16>
      %179 = vector.shape_cast %178 : vector<1x512x128xbf16> to vector<512x128xbf16>
      %cst_56 = arith.constant dense<0.000000e+00> : vector<5x128xf32>
      %180 = tpu.matmul %177, %179, %cst_56 {dimension_numbers = #tpu.dot_dimension_numbers<[1], [0], [0], [1], [0, 0, 1, 1], [], []>} : vector<5x512xbf16>, vector<512x128xbf16>, vector<5x128xf32> -> vector<5x128xf32>
      %181 = vector.broadcast %44 : vector<1x128xf32> to vector<5x128xf32>
      %182 = arith.addf %180, %181 : vector<5x128xf32>
      %183 = arith.addf %135, %182 : vector<5x128xf32>
      %c0_57 = arith.constant 0 : index
      %c0_58 = arith.constant 0 : index
      %184 = vector.load %arg10[%c0_57, %c0_58] : memref<5x128xf32, #tpu.memory_space<vmem>>, vector<5x128xf32>
      tpu.vector_store %arg10[%c0_57, %c0_58], %183 {strides = array<i32>} : memref<5x128xf32, #tpu.memory_space<vmem>>, vector<5x128xf32>,
    } else {
    }
    %c31_i32_3 = arith.constant 31 : i32
    %8 = arith.cmpi eq, %4, %c31_i32_3 : i32
    %9 = arith.extui %8 : i1 to i32
    %c0_i32_4 = arith.constant 0 : i32
    %10 = arith.cmpi ne, %9, %c0_i32_4 : i32
    scf.if %10 {
      %c0 = arith.constant 0 : index
      %c0_20 = arith.constant 0 : index
      %c0_21 = arith.constant 0 : index
      %35 = vector.load %arg4[%c0, %c0_20, %c0_21] : memref<4x8x512xf32, #tpu.memory_space<vmem>>, vector<1x8x512xf32>
      %36 = vector.shape_cast %35 : vector<1x8x512xf32> to vector<8x512xf32>
      %37 = vector.extract_strided_slice %36 {offsets = [0, 0], sizes = [1, 128], strides = [1, 1]} : vector<8x512xf32> to vector<1x128xf32>
      %38 = vector.extract_strided_slice %36 {offsets = [1, 0], sizes = [1, 128], strides = [1, 1]} : vector<8x512xf32> to vector<1x128xf32>
      %39 = vector.extract_strided_slice %36 {offsets = [2, 256], sizes = [1, 128], strides = [1, 1]} : vector<8x512xf32> to vector<1x128xf32>
      %c0_22 = arith.constant 0 : index
      %c0_23 = arith.constant 0 : index
      %40 = vector.load %arg10[%c0_22, %c0_23] : memref<5x128xf32, #tpu.memory_space<vmem>>, vector<5x128xf32>
      %cst = arith.constant dense<0.000000e+00> : vector<5xf32>
      %41 = vector.multi_reduction <add>, %40, %cst [1] : vector<5x128xf32> to vector<5xf32>
      %42 = vector.shape_cast %41 : vector<5xf32> to vector<5x1xf32>
      %cst_24 = arith.constant 1.280000e+02 : f32
      %43 = vector.broadcast %cst_24 : f32 to vector<5x1xf32>
      %44 = arith.divf %42, %43 : vector<5x1xf32>
      %45 = vector.broadcast %44 : vector<5x1xf32> to vector<5x128xf32>
      %46 = arith.subf %40, %45 : vector<5x128xf32>
      %47 = arith.mulf %46, %46 : vector<5x128xf32>
      %cst_25 = arith.constant dense<0.000000e+00> : vector<5xf32>
      %48 = vector.multi_reduction <add>, %47, %cst_25 [1] : vector<5x128xf32> to vector<5xf32>
      %49 = vector.shape_cast %48 : vector<5xf32> to vector<5x1xf32>
      %cst_26 = arith.constant 1.280000e+02 : f32
      %50 = vector.broadcast %cst_26 : f32 to vector<5x1xf32>
      %51 = arith.divf %49, %50 : vector<5x1xf32>
      %52 = vector.broadcast %44 : vector<5x1xf32> to vector<5x128xf32>
      %53 = arith.subf %40, %52 : vector<5x128xf32>
      %cst_27 = arith.constant 9.99999997E-7 : f32
      %54 = vector.broadcast %cst_27 : f32 to vector<5x1xf32>
      %55 = arith.addf %51, %54 : vector<5x1xf32>
      %56 = math.rsqrt %55 : vector<5x1xf32>
      %57 = vector.broadcast %56 : vector<5x1xf32> to vector<5x128xf32>
      %58 = arith.mulf %53, %57 : vector<5x128xf32>
      %59 = vector.broadcast %37 : vector<1x128xf32> to vector<5x128xf32>
      %60 = arith.mulf %58, %59 : vector<5x128xf32>
      %61 = vector.broadcast %38 : vector<1x128xf32> to vector<5x128xf32>
      %62 = arith.addf %60, %61 : vector<5x128xf32>
      %c0_28 = arith.constant 0 : index
      %c0_29 = arith.constant 0 : index
      %c0_30 = arith.constant 0 : index
      %63 = vector.load %arg5[%c0_28, %c0_29, %c0_30] : memref<4x128x384xbf16, #tpu.memory_space<vmem>>, vector<1x128x384xbf16>
      %64 = vector.shape_cast %63 : vector<1x128x384xbf16> to vector<128x384xbf16>
      %65 = vector.extract_strided_slice %64 {offsets = [0, 256], sizes = [128, 128], strides = [1, 1]} : vector<128x384xbf16> to vector<128x128xbf16>
      %66 = arith.truncf %62 : vector<5x128xf32> to vector<5x128xbf16>
      %cst_31 = arith.constant dense<0.000000e+00> : vector<5x128xf32>
      %67 = tpu.matmul %66, %65, %cst_31 {dimension_numbers = #tpu.dot_dimension_numbers<[1], [0], [0], [1], [0, 0, 1, 1], [], []>} : vector<5x128xbf16>, vector<128x128xbf16>, vector<5x128xf32> -> vector<5x128xf32>
      %68 = vector.broadcast %39 : vector<1x128xf32> to vector<5x128xf32>
      %69 = arith.addf %67, %68 : vector<5x128xf32>
      %70 = arith.mulf %69, %69 : vector<5x128xf32>
      %cst_32 = arith.constant dense<0.000000e+00> : vector<5xf32>
      %71 = vector.multi_reduction <add>, %70, %cst_32 [1] : vector<5x128xf32> to vector<5xf32>
      %72 = vector.shape_cast %71 : vector<5xf32> to vector<5x1xf32>
      %cst_33 = arith.constant 1.000000e-24 : f32
      %73 = vector.broadcast %cst_33 : f32 to vector<5x1xf32>
      %74 = arith.maximumf %72, %73 : vector<5x1xf32>
      %75 = math.rsqrt %74 : vector<5x1xf32>
      %76 = vector.broadcast %75 : vector<5x1xf32> to vector<5x128xf32>
      %77 = arith.mulf %69, %76 : vector<5x128xf32>
      %78 = vector.extract_strided_slice %77 {offsets = [1, 0], sizes = [4, 128], strides = [1, 1]} : vector<5x128xf32> to vector<4x128xf32>
      %c0_34 = arith.constant 0 : index
      %c0_35 = arith.constant 0 : index
      %79 = vector.load %arg9[%c0_34, %c0_35] : memref<4x128xf32, #tpu.memory_space<vmem>>, vector<4x128xf32>
      tpu.vector_store %arg9[%c0_34, %c0_35], %78 {strides = array<i32>} : memref<4x128xf32, #tpu.memory_space<vmem>>, vector<4x128xf32>,
    } else {
    }
    %c4_i32_5 = arith.constant 4 : i32
    %11 = arith.muli %arg0, %c4_i32_5 : i32
    %c1_i32 = arith.constant 1 : i32
    %12 = arith.addi %11, %c1_i32 : i32
    %c31_i32_6 = arith.constant 31 : i32
    %13 = arith.cmpi slt, %12, %c31_i32_6 : i32
    %14 = arith.extui %13 : i1 to i32
    %c0_i32_7 = arith.constant 0 : i32
    %15 = arith.cmpi ne, %14, %c0_i32_7 : i32
    scf.if %15 {
      %c1 = arith.constant 1 : index
      %c0 = arith.constant 0 : index
      %c0_20 = arith.constant 0 : index
      %35 = vector.load %arg4[%c1, %c0, %c0_20] : memref<4x8x512xf32, #tpu.memory_space<vmem>>, vector<1x8x512xf32>
      %36 = vector.shape_cast %35 : vector<1x8x512xf32> to vector<8x512xf32>
      %37 = vector.extract_strided_slice %36 {offsets = [0, 0], sizes = [1, 128], strides = [1, 1]} : vector<8x512xf32> to vector<1x128xf32>
      %38 = vector.extract_strided_slice %36 {offsets = [1, 0], sizes = [1, 128], strides = [1, 1]} : vector<8x512xf32> to vector<1x128xf32>
      %39 = vector.extract_strided_slice %36 {offsets = [2, 0], sizes = [1, 384], strides = [1, 1]} : vector<8x512xf32> to vector<1x384xf32>
      %40 = vector.extract_strided_slice %36 {offsets = [3, 0], sizes = [1, 128], strides = [1, 1]} : vector<8x512xf32> to vector<1x128xf32>
      %41 = vector.extract_strided_slice %36 {offsets = [4, 0], sizes = [1, 128], strides = [1, 1]} : vector<8x512xf32> to vector<1x128xf32>
      %42 = vector.extract_strided_slice %36 {offsets = [5, 0], sizes = [1, 128], strides = [1, 1]} : vector<8x512xf32> to vector<1x128xf32>
      %43 = vector.extract_strided_slice %36 {offsets = [6, 0], sizes = [1, 512], strides = [1, 1]} : vector<8x512xf32> to vector<1x512xf32>
      %44 = vector.extract_strided_slice %36 {offsets = [7, 0], sizes = [1, 128], strides = [1, 1]} : vector<8x512xf32> to vector<1x128xf32>
      %c0_21 = arith.constant 0 : index
      %c0_22 = arith.constant 0 : index
      %45 = vector.load %arg10[%c0_21, %c0_22] : memref<5x128xf32, #tpu.memory_space<vmem>>, vector<5x128xf32>
      %cst = arith.constant dense<0.000000e+00> : vector<5xf32>
      %46 = vector.multi_reduction <add>, %45, %cst [1] : vector<5x128xf32> to vector<5xf32>
      %47 = vector.shape_cast %46 : vector<5xf32> to vector<5x1xf32>
      %cst_23 = arith.constant 1.280000e+02 : f32
      %48 = vector.broadcast %cst_23 : f32 to vector<5x1xf32>
      %49 = arith.divf %47, %48 : vector<5x1xf32>
      %50 = vector.broadcast %49 : vector<5x1xf32> to vector<5x128xf32>
      %51 = arith.subf %45, %50 : vector<5x128xf32>
      %52 = arith.mulf %51, %51 : vector<5x128xf32>
      %cst_24 = arith.constant dense<0.000000e+00> : vector<5xf32>
      %53 = vector.multi_reduction <add>, %52, %cst_24 [1] : vector<5x128xf32> to vector<5xf32>
      %54 = vector.shape_cast %53 : vector<5xf32> to vector<5x1xf32>
      %cst_25 = arith.constant 1.280000e+02 : f32
      %55 = vector.broadcast %cst_25 : f32 to vector<5x1xf32>
      %56 = arith.divf %54, %55 : vector<5x1xf32>
      %57 = vector.broadcast %49 : vector<5x1xf32> to vector<5x128xf32>
      %58 = arith.subf %45, %57 : vector<5x128xf32>
      %cst_26 = arith.constant 9.99999997E-7 : f32
      %59 = vector.broadcast %cst_26 : f32 to vector<5x1xf32>
      %60 = arith.addf %56, %59 : vector<5x1xf32>
      %61 = math.rsqrt %60 : vector<5x1xf32>
      %62 = vector.broadcast %61 : vector<5x1xf32> to vector<5x128xf32>
      %63 = arith.mulf %58, %62 : vector<5x128xf32>
      %64 = vector.broadcast %37 : vector<1x128xf32> to vector<5x128xf32>
      %65 = arith.mulf %63, %64 : vector<5x128xf32>
      %66 = vector.broadcast %38 : vector<1x128xf32> to vector<5x128xf32>
      %67 = arith.addf %65, %66 : vector<5x128xf32>
      %68 = arith.truncf %67 : vector<5x128xf32> to vector<5x128xbf16>
      %c1_27 = arith.constant 1 : index
      %c0_28 = arith.constant 0 : index
      %c0_29 = arith.constant 0 : index
      %69 = vector.load %arg5[%c1_27, %c0_28, %c0_29] : memref<4x128x384xbf16, #tpu.memory_space<vmem>>, vector<1x128x384xbf16>
      %70 = vector.shape_cast %69 : vector<1x128x384xbf16> to vector<128x384xbf16>
      %cst_30 = arith.constant dense<0.000000e+00> : vector<5x384xf32>
      %71 = tpu.matmul %68, %70, %cst_30 {dimension_numbers = #tpu.dot_dimension_numbers<[1], [0], [0], [1], [0, 0, 1, 1], [], []>} : vector<5x128xbf16>, vector<128x384xbf16>, vector<5x384xf32> -> vector<5x384xf32>
      %72 = vector.broadcast %39 : vector<1x384xf32> to vector<5x384xf32>
      %73 = arith.addf %71, %72 : vector<5x384xf32>
      %74 = vector.extract_strided_slice %73 {offsets = [0, 0], sizes = [5, 128], strides = [1, 1]} : vector<5x384xf32> to vector<5x128xf32>
      %75 = vector.extract_strided_slice %74 {offsets = [0, 0], sizes = [5, 32], strides = [1, 1]} : vector<5x128xf32> to vector<5x32xf32>
      %76 = vector.extract_strided_slice %74 {offsets = [0, 32], sizes = [5, 32], strides = [1, 1]} : vector<5x128xf32> to vector<5x32xf32>
      %77 = vector.extract_strided_slice %74 {offsets = [0, 64], sizes = [5, 32], strides = [1, 1]} : vector<5x128xf32> to vector<5x32xf32>
      %78 = vector.extract_strided_slice %74 {offsets = [0, 96], sizes = [5, 32], strides = [1, 1]} : vector<5x128xf32> to vector<5x32xf32>
      %79 = vector.shape_cast %75 : vector<5x32xf32> to vector<1x5x32xf32>
      %80 = vector.shape_cast %76 : vector<5x32xf32> to vector<1x5x32xf32>
      %81 = vector.shape_cast %77 : vector<5x32xf32> to vector<1x5x32xf32>
      %82 = vector.shape_cast %78 : vector<5x32xf32> to vector<1x5x32xf32>
      %83 = tpu.concatenate %79, %80, %81, %82 in 0 : vector<1x5x32xf32>, vector<1x5x32xf32>, vector<1x5x32xf32>, vector<1x5x32xf32> -> vector<4x5x32xf32>
      %84 = arith.truncf %83 : vector<4x5x32xf32> to vector<4x5x32xbf16>
      %85 = vector.extract_strided_slice %73 {offsets = [0, 128], sizes = [5, 128], strides = [1, 1]} : vector<5x384xf32> to vector<5x128xf32>
      %86 = vector.extract_strided_slice %85 {offsets = [0, 0], sizes = [5, 32], strides = [1, 1]} : vector<5x128xf32> to vector<5x32xf32>
      %87 = vector.extract_strided_slice %85 {offsets = [0, 32], sizes = [5, 32], strides = [1, 1]} : vector<5x128xf32> to vector<5x32xf32>
      %88 = vector.extract_strided_slice %85 {offsets = [0, 64], sizes = [5, 32], strides = [1, 1]} : vector<5x128xf32> to vector<5x32xf32>
      %89 = vector.extract_strided_slice %85 {offsets = [0, 96], sizes = [5, 32], strides = [1, 1]} : vector<5x128xf32> to vector<5x32xf32>
      %90 = vector.shape_cast %86 : vector<5x32xf32> to vector<1x5x32xf32>
      %91 = vector.shape_cast %87 : vector<5x32xf32> to vector<1x5x32xf32>
      %92 = vector.shape_cast %88 : vector<5x32xf32> to vector<1x5x32xf32>
      %93 = vector.shape_cast %89 : vector<5x32xf32> to vector<1x5x32xf32>
      %94 = tpu.concatenate %90, %91, %92, %93 in 0 : vector<1x5x32xf32>, vector<1x5x32xf32>, vector<1x5x32xf32>, vector<1x5x32xf32> -> vector<4x5x32xf32>
      %95 = arith.truncf %94 : vector<4x5x32xf32> to vector<4x5x32xbf16>
      %96 = vector.extract_strided_slice %73 {offsets = [0, 256], sizes = [5, 128], strides = [1, 1]} : vector<5x384xf32> to vector<5x128xf32>
      %97 = vector.extract_strided_slice %96 {offsets = [0, 0], sizes = [5, 32], strides = [1, 1]} : vector<5x128xf32> to vector<5x32xf32>
      %98 = vector.extract_strided_slice %96 {offsets = [0, 32], sizes = [5, 32], strides = [1, 1]} : vector<5x128xf32> to vector<5x32xf32>
      %99 = vector.extract_strided_slice %96 {offsets = [0, 64], sizes = [5, 32], strides = [1, 1]} : vector<5x128xf32> to vector<5x32xf32>
      %100 = vector.extract_strided_slice %96 {offsets = [0, 96], sizes = [5, 32], strides = [1, 1]} : vector<5x128xf32> to vector<5x32xf32>
      %101 = vector.shape_cast %97 : vector<5x32xf32> to vector<1x5x32xf32>
      %102 = vector.shape_cast %98 : vector<5x32xf32> to vector<1x5x32xf32>
      %103 = vector.shape_cast %99 : vector<5x32xf32> to vector<1x5x32xf32>
      %104 = vector.shape_cast %100 : vector<5x32xf32> to vector<1x5x32xf32>
      %105 = tpu.concatenate %101, %102, %103, %104 in 0 : vector<1x5x32xf32>, vector<1x5x32xf32>, vector<1x5x32xf32>, vector<1x5x32xf32> -> vector<4x5x32xf32>
      %106 = arith.truncf %105 : vector<4x5x32xf32> to vector<4x5x32xbf16>
      "tpu.trace_start"() <{level = 10 : i32, message = "hqd,hkd->hqk"}> : () -> ()
      %cst_31 = arith.constant dense<0.000000e+00> : vector<4x5x5xf32>
      %107 = tpu.matmul %84, %95, %cst_31 {dimension_numbers = #tpu.dot_dimension_numbers<[2], [2], [1], [1], [0, 0, 0, 1, 1, 1], [0], [0]>} : vector<4x5x32xbf16>, vector<4x5x32xbf16>, vector<4x5x5xf32> -> vector<4x5x5xf32>
      "tpu.trace_stop"() : () -> ()
      %cst_32 = arith.constant dense<0xFF800000> : vector<4x5xf32>
      %108 = vector.multi_reduction <maximumf>, %107, %cst_32 [2] : vector<4x5x5xf32> to vector<4x5xf32>
      %109 = vector.shape_cast %108 : vector<4x5xf32> to vector<4x5x1xf32>
      %110 = vector.broadcast %109 : vector<4x5x1xf32> to vector<4x5x5xf32>
      %111 = arith.subf %107, %110 : vector<4x5x5xf32>
      %112 = math.exp %111 : vector<4x5x5xf32>
      %cst_33 = arith.constant dense<0.000000e+00> : vector<4x5xf32>
      %113 = vector.multi_reduction <add>, %112, %cst_33 [2] : vector<4x5x5xf32> to vector<4x5xf32>
      %114 = vector.shape_cast %113 : vector<4x5xf32> to vector<4x5x1xf32>
      %115 = tpu.reciprocal %114 {approx = true} : vector<4x5x1xf32> -> vector<4x5x1xf32>
      %116 = vector.broadcast %115 : vector<4x5x1xf32> to vector<4x5x5xf32>
      %117 = arith.mulf %112, %116 : vector<4x5x5xf32>
      %118 = arith.truncf %117 : vector<4x5x5xf32> to vector<4x5x5xbf16>
      "tpu.trace_start"() <{level = 10 : i32, message = "hqk,hkd->hqd"}> : () -> ()
      %cst_34 = arith.constant dense<0.000000e+00> : vector<4x5x32xf32>
      %119 = tpu.matmul %118, %106, %cst_34 {dimension_numbers = #tpu.dot_dimension_numbers<[2], [1], [1], [2], [0, 0, 0, 1, 1, 2], [0], [0]>} : vector<4x5x5xbf16>, vector<4x5x32xbf16>, vector<4x5x32xf32> -> vector<4x5x32xf32>
      "tpu.trace_stop"() : () -> ()
      %120 = vector.extract_strided_slice %119 {offsets = [0, 0, 0], sizes = [1, 5, 32], strides = [1, 1, 1]} : vector<4x5x32xf32> to vector<1x5x32xf32>
      %121 = vector.shape_cast %120 : vector<1x5x32xf32> to vector<5x32xf32>
      %122 = vector.extract_strided_slice %119 {offsets = [1, 0, 0], sizes = [1, 5, 32], strides = [1, 1, 1]} : vector<4x5x32xf32> to vector<1x5x32xf32>
      %123 = vector.shape_cast %122 : vector<1x5x32xf32> to vector<5x32xf32>
      %124 = vector.extract_strided_slice %119 {offsets = [2, 0, 0], sizes = [1, 5, 32], strides = [1, 1, 1]} : vector<4x5x32xf32> to vector<1x5x32xf32>
      %125 = vector.shape_cast %124 : vector<1x5x32xf32> to vector<5x32xf32>
      %126 = vector.extract_strided_slice %119 {offsets = [3, 0, 0], sizes = [1, 5, 32], strides = [1, 1, 1]} : vector<4x5x32xf32> to vector<1x5x32xf32>
      %127 = vector.shape_cast %126 : vector<1x5x32xf32> to vector<5x32xf32>
      %128 = tpu.concatenate %121, %123, %125, %127 in 1 : vector<5x32xf32>, vector<5x32xf32>, vector<5x32xf32>, vector<5x32xf32> -> vector<5x128xf32>
      %129 = arith.truncf %128 : vector<5x128xf32> to vector<5x128xbf16>
      %c1_35 = arith.constant 1 : index
      %c0_36 = arith.constant 0 : index
      %c0_37 = arith.constant 0 : index
      %130 = vector.load %arg6[%c1_35, %c0_36, %c0_37] : memref<4x128x128xbf16, #tpu.memory_space<vmem>>, vector<1x128x128xbf16>
      %131 = vector.shape_cast %130 : vector<1x128x128xbf16> to vector<128x128xbf16>
      %cst_38 = arith.constant dense<0.000000e+00> : vector<5x128xf32>
      %132 = tpu.matmul %129, %131, %cst_38 {dimension_numbers = #tpu.dot_dimension_numbers<[1], [0], [0], [1], [0, 0, 1, 1], [], []>} : vector<5x128xbf16>, vector<128x128xbf16>, vector<5x128xf32> -> vector<5x128xf32>
      %133 = vector.broadcast %40 : vector<1x128xf32> to vector<5x128xf32>
      %134 = arith.addf %132, %133 : vector<5x128xf32>
      %135 = arith.addf %45, %134 : vector<5x128xf32>
      %cst_39 = arith.constant dense<0.000000e+00> : vector<5xf32>
      %136 = vector.multi_reduction <add>, %135, %cst_39 [1] : vector<5x128xf32> to vector<5xf32>
      %137 = vector.shape_cast %136 : vector<5xf32> to vector<5x1xf32>
      %cst_40 = arith.constant 1.280000e+02 : f32
      %138 = vector.broadcast %cst_40 : f32 to vector<5x1xf32>
      %139 = arith.divf %137, %138 : vector<5x1xf32>
      %140 = vector.broadcast %139 : vector<5x1xf32> to vector<5x128xf32>
      %141 = arith.subf %135, %140 : vector<5x128xf32>
      %142 = arith.mulf %141, %141 : vector<5x128xf32>
      %cst_41 = arith.constant dense<0.000000e+00> : vector<5xf32>
      %143 = vector.multi_reduction <add>, %142, %cst_41 [1] : vector<5x128xf32> to vector<5xf32>
      %144 = vector.shape_cast %143 : vector<5xf32> to vector<5x1xf32>
      %cst_42 = arith.constant 1.280000e+02 : f32
      %145 = vector.broadcast %cst_42 : f32 to vector<5x1xf32>
      %146 = arith.divf %144, %145 : vector<5x1xf32>
      %147 = vector.broadcast %139 : vector<5x1xf32> to vector<5x128xf32>
      %148 = arith.subf %135, %147 : vector<5x128xf32>
      %cst_43 = arith.constant 9.99999997E-7 : f32
      %149 = vector.broadcast %cst_43 : f32 to vector<5x1xf32>
      %150 = arith.addf %146, %149 : vector<5x1xf32>
      %151 = math.rsqrt %150 : vector<5x1xf32>
      %152 = vector.broadcast %151 : vector<5x1xf32> to vector<5x128xf32>
      %153 = arith.mulf %148, %152 : vector<5x128xf32>
      %154 = vector.broadcast %41 : vector<1x128xf32> to vector<5x128xf32>
      %155 = arith.mulf %153, %154 : vector<5x128xf32>
      %156 = vector.broadcast %42 : vector<1x128xf32> to vector<5x128xf32>
      %157 = arith.addf %155, %156 : vector<5x128xf32>
      %158 = arith.truncf %157 : vector<5x128xf32> to vector<5x128xbf16>
      %c1_44 = arith.constant 1 : index
      %c0_45 = arith.constant 0 : index
      %c0_46 = arith.constant 0 : index
      %159 = vector.load %arg7[%c1_44, %c0_45, %c0_46] : memref<4x128x512xbf16, #tpu.memory_space<vmem>>, vector<1x128x512xbf16>
      %160 = vector.shape_cast %159 : vector<1x128x512xbf16> to vector<128x512xbf16>
      %cst_47 = arith.constant dense<0.000000e+00> : vector<5x512xf32>
      %161 = tpu.matmul %158, %160, %cst_47 {dimension_numbers = #tpu.dot_dimension_numbers<[1], [0], [0], [1], [0, 0, 1, 1], [], []>} : vector<5x128xbf16>, vector<128x512xbf16>, vector<5x512xf32> -> vector<5x512xf32>
      %162 = vector.broadcast %43 : vector<1x512xf32> to vector<5x512xf32>
      %163 = arith.addf %161, %162 : vector<5x512xf32>
      %164 = arith.mulf %163, %163 : vector<5x512xf32>
      %165 = arith.mulf %163, %164 : vector<5x512xf32>
      %cst_48 = arith.constant 4.471500e-02 : f32
      %166 = vector.broadcast %cst_48 : f32 to vector<5x512xf32>
      %167 = arith.mulf %166, %165 : vector<5x512xf32>
      %168 = arith.addf %163, %167 : vector<5x512xf32>
      %cst_49 = arith.constant 0.797884583 : f32
      %169 = vector.broadcast %cst_49 : f32 to vector<5x512xf32>
      %170 = arith.mulf %169, %168 : vector<5x512xf32>
      %171 = math.tanh %170 : vector<5x512xf32>
      %cst_50 = arith.constant 1.000000e+00 : f32
      %172 = vector.broadcast %cst_50 : f32 to vector<5x512xf32>
      %173 = arith.addf %172, %171 : vector<5x512xf32>
      %cst_51 = arith.constant 5.000000e-01 : f32
      %174 = vector.broadcast %cst_51 : f32 to vector<5x512xf32>
      %175 = arith.mulf %174, %173 : vector<5x512xf32>
      %176 = arith.mulf %163, %175 : vector<5x512xf32>
      %177 = arith.truncf %176 : vector<5x512xf32> to vector<5x512xbf16>
      %c1_52 = arith.constant 1 : index
      %c0_53 = arith.constant 0 : index
      %c0_54 = arith.constant 0 : index
      %178 = vector.load %arg8[%c1_52, %c0_53, %c0_54] : memref<4x512x128xbf16, #tpu.memory_space<vmem>>, vector<1x512x128xbf16>
      %179 = vector.shape_cast %178 : vector<1x512x128xbf16> to vector<512x128xbf16>
      %cst_55 = arith.constant dense<0.000000e+00> : vector<5x128xf32>
      %180 = tpu.matmul %177, %179, %cst_55 {dimension_numbers = #tpu.dot_dimension_numbers<[1], [0], [0], [1], [0, 0, 1, 1], [], []>} : vector<5x512xbf16>, vector<512x128xbf16>, vector<5x128xf32> -> vector<5x128xf32>
      %181 = vector.broadcast %44 : vector<1x128xf32> to vector<5x128xf32>
      %182 = arith.addf %180, %181 : vector<5x128xf32>
      %183 = arith.addf %135, %182 : vector<5x128xf32>
      %c0_56 = arith.constant 0 : index
      %c0_57 = arith.constant 0 : index
      %184 = vector.load %arg10[%c0_56, %c0_57] : memref<5x128xf32, #tpu.memory_space<vmem>>, vector<5x128xf32>
      tpu.vector_store %arg10[%c0_56, %c0_57], %183 {strides = array<i32>} : memref<5x128xf32, #tpu.memory_space<vmem>>, vector<5x128xf32>,
    } else {
    }
    %c31_i32_8 = arith.constant 31 : i32
    %16 = arith.cmpi eq, %12, %c31_i32_8 : i32
    %17 = arith.extui %16 : i1 to i32
    %c0_i32_9 = arith.constant 0 : i32
    %18 = arith.cmpi ne, %17, %c0_i32_9 : i32
    scf.if %18 {
      %c1 = arith.constant 1 : index
      %c0 = arith.constant 0 : index
      %c0_20 = arith.constant 0 : index
      %35 = vector.load %arg4[%c1, %c0, %c0_20] : memref<4x8x512xf32, #tpu.memory_space<vmem>>, vector<1x8x512xf32>
      %36 = vector.shape_cast %35 : vector<1x8x512xf32> to vector<8x512xf32>
      %37 = vector.extract_strided_slice %36 {offsets = [0, 0], sizes = [1, 128], strides = [1, 1]} : vector<8x512xf32> to vector<1x128xf32>
      %38 = vector.extract_strided_slice %36 {offsets = [1, 0], sizes = [1, 128], strides = [1, 1]} : vector<8x512xf32> to vector<1x128xf32>
      %39 = vector.extract_strided_slice %36 {offsets = [2, 256], sizes = [1, 128], strides = [1, 1]} : vector<8x512xf32> to vector<1x128xf32>
      %c0_21 = arith.constant 0 : index
      %c0_22 = arith.constant 0 : index
      %40 = vector.load %arg10[%c0_21, %c0_22] : memref<5x128xf32, #tpu.memory_space<vmem>>, vector<5x128xf32>
      %cst = arith.constant dense<0.000000e+00> : vector<5xf32>
      %41 = vector.multi_reduction <add>, %40, %cst [1] : vector<5x128xf32> to vector<5xf32>
      %42 = vector.shape_cast %41 : vector<5xf32> to vector<5x1xf32>
      %cst_23 = arith.constant 1.280000e+02 : f32
      %43 = vector.broadcast %cst_23 : f32 to vector<5x1xf32>
      %44 = arith.divf %42, %43 : vector<5x1xf32>
      %45 = vector.broadcast %44 : vector<5x1xf32> to vector<5x128xf32>
      %46 = arith.subf %40, %45 : vector<5x128xf32>
      %47 = arith.mulf %46, %46 : vector<5x128xf32>
      %cst_24 = arith.constant dense<0.000000e+00> : vector<5xf32>
      %48 = vector.multi_reduction <add>, %47, %cst_24 [1] : vector<5x128xf32> to vector<5xf32>
      %49 = vector.shape_cast %48 : vector<5xf32> to vector<5x1xf32>
      %cst_25 = arith.constant 1.280000e+02 : f32
      %50 = vector.broadcast %cst_25 : f32 to vector<5x1xf32>
      %51 = arith.divf %49, %50 : vector<5x1xf32>
      %52 = vector.broadcast %44 : vector<5x1xf32> to vector<5x128xf32>
      %53 = arith.subf %40, %52 : vector<5x128xf32>
      %cst_26 = arith.constant 9.99999997E-7 : f32
      %54 = vector.broadcast %cst_26 : f32 to vector<5x1xf32>
      %55 = arith.addf %51, %54 : vector<5x1xf32>
      %56 = math.rsqrt %55 : vector<5x1xf32>
      %57 = vector.broadcast %56 : vector<5x1xf32> to vector<5x128xf32>
      %58 = arith.mulf %53, %57 : vector<5x128xf32>
      %59 = vector.broadcast %37 : vector<1x128xf32> to vector<5x128xf32>
      %60 = arith.mulf %58, %59 : vector<5x128xf32>
      %61 = vector.broadcast %38 : vector<1x128xf32> to vector<5x128xf32>
      %62 = arith.addf %60, %61 : vector<5x128xf32>
      %c1_27 = arith.constant 1 : index
      %c0_28 = arith.constant 0 : index
      %c0_29 = arith.constant 0 : index
      %63 = vector.load %arg5[%c1_27, %c0_28, %c0_29] : memref<4x128x384xbf16, #tpu.memory_space<vmem>>, vector<1x128x384xbf16>
      %64 = vector.shape_cast %63 : vector<1x128x384xbf16> to vector<128x384xbf16>
      %65 = vector.extract_strided_slice %64 {offsets = [0, 256], sizes = [128, 128], strides = [1, 1]} : vector<128x384xbf16> to vector<128x128xbf16>
      %66 = arith.truncf %62 : vector<5x128xf32> to vector<5x128xbf16>
      %cst_30 = arith.constant dense<0.000000e+00> : vector<5x128xf32>
      %67 = tpu.matmul %66, %65, %cst_30 {dimension_numbers = #tpu.dot_dimension_numbers<[1], [0], [0], [1], [0, 0, 1, 1], [], []>} : vector<5x128xbf16>, vector<128x128xbf16>, vector<5x128xf32> -> vector<5x128xf32>
      %68 = vector.broadcast %39 : vector<1x128xf32> to vector<5x128xf32>
      %69 = arith.addf %67, %68 : vector<5x128xf32>
      %70 = arith.mulf %69, %69 : vector<5x128xf32>
      %cst_31 = arith.constant dense<0.000000e+00> : vector<5xf32>
      %71 = vector.multi_reduction <add>, %70, %cst_31 [1] : vector<5x128xf32> to vector<5xf32>
      %72 = vector.shape_cast %71 : vector<5xf32> to vector<5x1xf32>
      %cst_32 = arith.constant 1.000000e-24 : f32
      %73 = vector.broadcast %cst_32 : f32 to vector<5x1xf32>
      %74 = arith.maximumf %72, %73 : vector<5x1xf32>
      %75 = math.rsqrt %74 : vector<5x1xf32>
      %76 = vector.broadcast %75 : vector<5x1xf32> to vector<5x128xf32>
      %77 = arith.mulf %69, %76 : vector<5x128xf32>
      %78 = vector.extract_strided_slice %77 {offsets = [1, 0], sizes = [4, 128], strides = [1, 1]} : vector<5x128xf32> to vector<4x128xf32>
      %c0_33 = arith.constant 0 : index
      %c0_34 = arith.constant 0 : index
      %79 = vector.load %arg9[%c0_33, %c0_34] : memref<4x128xf32, #tpu.memory_space<vmem>>, vector<4x128xf32>
      tpu.vector_store %arg9[%c0_33, %c0_34], %78 {strides = array<i32>} : memref<4x128xf32, #tpu.memory_space<vmem>>, vector<4x128xf32>,
    } else {
    }
    %c4_i32_10 = arith.constant 4 : i32
    %19 = arith.muli %arg0, %c4_i32_10 : i32
    %c2_i32 = arith.constant 2 : i32
    %20 = arith.addi %19, %c2_i32 : i32
    %c31_i32_11 = arith.constant 31 : i32
    %21 = arith.cmpi slt, %20, %c31_i32_11 : i32
    %22 = arith.extui %21 : i1 to i32
    %c0_i32_12 = arith.constant 0 : i32
    %23 = arith.cmpi ne, %22, %c0_i32_12 : i32
    scf.if %23 {
      %c2 = arith.constant 2 : index
      %c0 = arith.constant 0 : index
      %c0_20 = arith.constant 0 : index
      %35 = vector.load %arg4[%c2, %c0, %c0_20] : memref<4x8x512xf32, #tpu.memory_space<vmem>>, vector<1x8x512xf32>
      %36 = vector.shape_cast %35 : vector<1x8x512xf32> to vector<8x512xf32>
      %37 = vector.extract_strided_slice %36 {offsets = [0, 0], sizes = [1, 128], strides = [1, 1]} : vector<8x512xf32> to vector<1x128xf32>
      %38 = vector.extract_strided_slice %36 {offsets = [1, 0], sizes = [1, 128], strides = [1, 1]} : vector<8x512xf32> to vector<1x128xf32>
      %39 = vector.extract_strided_slice %36 {offsets = [2, 0], sizes = [1, 384], strides = [1, 1]} : vector<8x512xf32> to vector<1x384xf32>
      %40 = vector.extract_strided_slice %36 {offsets = [3, 0], sizes = [1, 128], strides = [1, 1]} : vector<8x512xf32> to vector<1x128xf32>
      %41 = vector.extract_strided_slice %36 {offsets = [4, 0], sizes = [1, 128], strides = [1, 1]} : vector<8x512xf32> to vector<1x128xf32>
      %42 = vector.extract_strided_slice %36 {offsets = [5, 0], sizes = [1, 128], strides = [1, 1]} : vector<8x512xf32> to vector<1x128xf32>
      %43 = vector.extract_strided_slice %36 {offsets = [6, 0], sizes = [1, 512], strides = [1, 1]} : vector<8x512xf32> to vector<1x512xf32>
      %44 = vector.extract_strided_slice %36 {offsets = [7, 0], sizes = [1, 128], strides = [1, 1]} : vector<8x512xf32> to vector<1x128xf32>
      %c0_21 = arith.constant 0 : index
      %c0_22 = arith.constant 0 : index
      %45 = vector.load %arg10[%c0_21, %c0_22] : memref<5x128xf32, #tpu.memory_space<vmem>>, vector<5x128xf32>
      %cst = arith.constant dense<0.000000e+00> : vector<5xf32>
      %46 = vector.multi_reduction <add>, %45, %cst [1] : vector<5x128xf32> to vector<5xf32>
      %47 = vector.shape_cast %46 : vector<5xf32> to vector<5x1xf32>
      %cst_23 = arith.constant 1.280000e+02 : f32
      %48 = vector.broadcast %cst_23 : f32 to vector<5x1xf32>
      %49 = arith.divf %47, %48 : vector<5x1xf32>
      %50 = vector.broadcast %49 : vector<5x1xf32> to vector<5x128xf32>
      %51 = arith.subf %45, %50 : vector<5x128xf32>
      %52 = arith.mulf %51, %51 : vector<5x128xf32>
      %cst_24 = arith.constant dense<0.000000e+00> : vector<5xf32>
      %53 = vector.multi_reduction <add>, %52, %cst_24 [1] : vector<5x128xf32> to vector<5xf32>
      %54 = vector.shape_cast %53 : vector<5xf32> to vector<5x1xf32>
      %cst_25 = arith.constant 1.280000e+02 : f32
      %55 = vector.broadcast %cst_25 : f32 to vector<5x1xf32>
      %56 = arith.divf %54, %55 : vector<5x1xf32>
      %57 = vector.broadcast %49 : vector<5x1xf32> to vector<5x128xf32>
      %58 = arith.subf %45, %57 : vector<5x128xf32>
      %cst_26 = arith.constant 9.99999997E-7 : f32
      %59 = vector.broadcast %cst_26 : f32 to vector<5x1xf32>
      %60 = arith.addf %56, %59 : vector<5x1xf32>
      %61 = math.rsqrt %60 : vector<5x1xf32>
      %62 = vector.broadcast %61 : vector<5x1xf32> to vector<5x128xf32>
      %63 = arith.mulf %58, %62 : vector<5x128xf32>
      %64 = vector.broadcast %37 : vector<1x128xf32> to vector<5x128xf32>
      %65 = arith.mulf %63, %64 : vector<5x128xf32>
      %66 = vector.broadcast %38 : vector<1x128xf32> to vector<5x128xf32>
      %67 = arith.addf %65, %66 : vector<5x128xf32>
      %68 = arith.truncf %67 : vector<5x128xf32> to vector<5x128xbf16>
      %c2_27 = arith.constant 2 : index
      %c0_28 = arith.constant 0 : index
      %c0_29 = arith.constant 0 : index
      %69 = vector.load %arg5[%c2_27, %c0_28, %c0_29] : memref<4x128x384xbf16, #tpu.memory_space<vmem>>, vector<1x128x384xbf16>
      %70 = vector.shape_cast %69 : vector<1x128x384xbf16> to vector<128x384xbf16>
      %cst_30 = arith.constant dense<0.000000e+00> : vector<5x384xf32>
      %71 = tpu.matmul %68, %70, %cst_30 {dimension_numbers = #tpu.dot_dimension_numbers<[1], [0], [0], [1], [0, 0, 1, 1], [], []>} : vector<5x128xbf16>, vector<128x384xbf16>, vector<5x384xf32> -> vector<5x384xf32>
      %72 = vector.broadcast %39 : vector<1x384xf32> to vector<5x384xf32>
      %73 = arith.addf %71, %72 : vector<5x384xf32>
      %74 = vector.extract_strided_slice %73 {offsets = [0, 0], sizes = [5, 128], strides = [1, 1]} : vector<5x384xf32> to vector<5x128xf32>
      %75 = vector.extract_strided_slice %74 {offsets = [0, 0], sizes = [5, 32], strides = [1, 1]} : vector<5x128xf32> to vector<5x32xf32>
      %76 = vector.extract_strided_slice %74 {offsets = [0, 32], sizes = [5, 32], strides = [1, 1]} : vector<5x128xf32> to vector<5x32xf32>
      %77 = vector.extract_strided_slice %74 {offsets = [0, 64], sizes = [5, 32], strides = [1, 1]} : vector<5x128xf32> to vector<5x32xf32>
      %78 = vector.extract_strided_slice %74 {offsets = [0, 96], sizes = [5, 32], strides = [1, 1]} : vector<5x128xf32> to vector<5x32xf32>
      %79 = vector.shape_cast %75 : vector<5x32xf32> to vector<1x5x32xf32>
      %80 = vector.shape_cast %76 : vector<5x32xf32> to vector<1x5x32xf32>
      %81 = vector.shape_cast %77 : vector<5x32xf32> to vector<1x5x32xf32>
      %82 = vector.shape_cast %78 : vector<5x32xf32> to vector<1x5x32xf32>
      %83 = tpu.concatenate %79, %80, %81, %82 in 0 : vector<1x5x32xf32>, vector<1x5x32xf32>, vector<1x5x32xf32>, vector<1x5x32xf32> -> vector<4x5x32xf32>
      %84 = arith.truncf %83 : vector<4x5x32xf32> to vector<4x5x32xbf16>
      %85 = vector.extract_strided_slice %73 {offsets = [0, 128], sizes = [5, 128], strides = [1, 1]} : vector<5x384xf32> to vector<5x128xf32>
      %86 = vector.extract_strided_slice %85 {offsets = [0, 0], sizes = [5, 32], strides = [1, 1]} : vector<5x128xf32> to vector<5x32xf32>
      %87 = vector.extract_strided_slice %85 {offsets = [0, 32], sizes = [5, 32], strides = [1, 1]} : vector<5x128xf32> to vector<5x32xf32>
      %88 = vector.extract_strided_slice %85 {offsets = [0, 64], sizes = [5, 32], strides = [1, 1]} : vector<5x128xf32> to vector<5x32xf32>
      %89 = vector.extract_strided_slice %85 {offsets = [0, 96], sizes = [5, 32], strides = [1, 1]} : vector<5x128xf32> to vector<5x32xf32>
      %90 = vector.shape_cast %86 : vector<5x32xf32> to vector<1x5x32xf32>
      %91 = vector.shape_cast %87 : vector<5x32xf32> to vector<1x5x32xf32>
      %92 = vector.shape_cast %88 : vector<5x32xf32> to vector<1x5x32xf32>
      %93 = vector.shape_cast %89 : vector<5x32xf32> to vector<1x5x32xf32>
      %94 = tpu.concatenate %90, %91, %92, %93 in 0 : vector<1x5x32xf32>, vector<1x5x32xf32>, vector<1x5x32xf32>, vector<1x5x32xf32> -> vector<4x5x32xf32>
      %95 = arith.truncf %94 : vector<4x5x32xf32> to vector<4x5x32xbf16>
      %96 = vector.extract_strided_slice %73 {offsets = [0, 256], sizes = [5, 128], strides = [1, 1]} : vector<5x384xf32> to vector<5x128xf32>
      %97 = vector.extract_strided_slice %96 {offsets = [0, 0], sizes = [5, 32], strides = [1, 1]} : vector<5x128xf32> to vector<5x32xf32>
      %98 = vector.extract_strided_slice %96 {offsets = [0, 32], sizes = [5, 32], strides = [1, 1]} : vector<5x128xf32> to vector<5x32xf32>
      %99 = vector.extract_strided_slice %96 {offsets = [0, 64], sizes = [5, 32], strides = [1, 1]} : vector<5x128xf32> to vector<5x32xf32>
      %100 = vector.extract_strided_slice %96 {offsets = [0, 96], sizes = [5, 32], strides = [1, 1]} : vector<5x128xf32> to vector<5x32xf32>
      %101 = vector.shape_cast %97 : vector<5x32xf32> to vector<1x5x32xf32>
      %102 = vector.shape_cast %98 : vector<5x32xf32> to vector<1x5x32xf32>
      %103 = vector.shape_cast %99 : vector<5x32xf32> to vector<1x5x32xf32>
      %104 = vector.shape_cast %100 : vector<5x32xf32> to vector<1x5x32xf32>
      %105 = tpu.concatenate %101, %102, %103, %104 in 0 : vector<1x5x32xf32>, vector<1x5x32xf32>, vector<1x5x32xf32>, vector<1x5x32xf32> -> vector<4x5x32xf32>
      %106 = arith.truncf %105 : vector<4x5x32xf32> to vector<4x5x32xbf16>
      "tpu.trace_start"() <{level = 10 : i32, message = "hqd,hkd->hqk"}> : () -> ()
      %cst_31 = arith.constant dense<0.000000e+00> : vector<4x5x5xf32>
      %107 = tpu.matmul %84, %95, %cst_31 {dimension_numbers = #tpu.dot_dimension_numbers<[2], [2], [1], [1], [0, 0, 0, 1, 1, 1], [0], [0]>} : vector<4x5x32xbf16>, vector<4x5x32xbf16>, vector<4x5x5xf32> -> vector<4x5x5xf32>
      "tpu.trace_stop"() : () -> ()
      %cst_32 = arith.constant dense<0xFF800000> : vector<4x5xf32>
      %108 = vector.multi_reduction <maximumf>, %107, %cst_32 [2] : vector<4x5x5xf32> to vector<4x5xf32>
      %109 = vector.shape_cast %108 : vector<4x5xf32> to vector<4x5x1xf32>
      %110 = vector.broadcast %109 : vector<4x5x1xf32> to vector<4x5x5xf32>
      %111 = arith.subf %107, %110 : vector<4x5x5xf32>
      %112 = math.exp %111 : vector<4x5x5xf32>
      %cst_33 = arith.constant dense<0.000000e+00> : vector<4x5xf32>
      %113 = vector.multi_reduction <add>, %112, %cst_33 [2] : vector<4x5x5xf32> to vector<4x5xf32>
      %114 = vector.shape_cast %113 : vector<4x5xf32> to vector<4x5x1xf32>
      %115 = tpu.reciprocal %114 {approx = true} : vector<4x5x1xf32> -> vector<4x5x1xf32>
      %116 = vector.broadcast %115 : vector<4x5x1xf32> to vector<4x5x5xf32>
      %117 = arith.mulf %112, %116 : vector<4x5x5xf32>
      %118 = arith.truncf %117 : vector<4x5x5xf32> to vector<4x5x5xbf16>
      "tpu.trace_start"() <{level = 10 : i32, message = "hqk,hkd->hqd"}> : () -> ()
      %cst_34 = arith.constant dense<0.000000e+00> : vector<4x5x32xf32>
      %119 = tpu.matmul %118, %106, %cst_34 {dimension_numbers = #tpu.dot_dimension_numbers<[2], [1], [1], [2], [0, 0, 0, 1, 1, 2], [0], [0]>} : vector<4x5x5xbf16>, vector<4x5x32xbf16>, vector<4x5x32xf32> -> vector<4x5x32xf32>
      "tpu.trace_stop"() : () -> ()
      %120 = vector.extract_strided_slice %119 {offsets = [0, 0, 0], sizes = [1, 5, 32], strides = [1, 1, 1]} : vector<4x5x32xf32> to vector<1x5x32xf32>
      %121 = vector.shape_cast %120 : vector<1x5x32xf32> to vector<5x32xf32>
      %122 = vector.extract_strided_slice %119 {offsets = [1, 0, 0], sizes = [1, 5, 32], strides = [1, 1, 1]} : vector<4x5x32xf32> to vector<1x5x32xf32>
      %123 = vector.shape_cast %122 : vector<1x5x32xf32> to vector<5x32xf32>
      %124 = vector.extract_strided_slice %119 {offsets = [2, 0, 0], sizes = [1, 5, 32], strides = [1, 1, 1]} : vector<4x5x32xf32> to vector<1x5x32xf32>
      %125 = vector.shape_cast %124 : vector<1x5x32xf32> to vector<5x32xf32>
      %126 = vector.extract_strided_slice %119 {offsets = [3, 0, 0], sizes = [1, 5, 32], strides = [1, 1, 1]} : vector<4x5x32xf32> to vector<1x5x32xf32>
      %127 = vector.shape_cast %126 : vector<1x5x32xf32> to vector<5x32xf32>
      %128 = tpu.concatenate %121, %123, %125, %127 in 1 : vector<5x32xf32>, vector<5x32xf32>, vector<5x32xf32>, vector<5x32xf32> -> vector<5x128xf32>
      %129 = arith.truncf %128 : vector<5x128xf32> to vector<5x128xbf16>
      %c2_35 = arith.constant 2 : index
      %c0_36 = arith.constant 0 : index
      %c0_37 = arith.constant 0 : index
      %130 = vector.load %arg6[%c2_35, %c0_36, %c0_37] : memref<4x128x128xbf16, #tpu.memory_space<vmem>>, vector<1x128x128xbf16>
      %131 = vector.shape_cast %130 : vector<1x128x128xbf16> to vector<128x128xbf16>
      %cst_38 = arith.constant dense<0.000000e+00> : vector<5x128xf32>
      %132 = tpu.matmul %129, %131, %cst_38 {dimension_numbers = #tpu.dot_dimension_numbers<[1], [0], [0], [1], [0, 0, 1, 1], [], []>} : vector<5x128xbf16>, vector<128x128xbf16>, vector<5x128xf32> -> vector<5x128xf32>
      %133 = vector.broadcast %40 : vector<1x128xf32> to vector<5x128xf32>
      %134 = arith.addf %132, %133 : vector<5x128xf32>
      %135 = arith.addf %45, %134 : vector<5x128xf32>
      %cst_39 = arith.constant dense<0.000000e+00> : vector<5xf32>
      %136 = vector.multi_reduction <add>, %135, %cst_39 [1] : vector<5x128xf32> to vector<5xf32>
      %137 = vector.shape_cast %136 : vector<5xf32> to vector<5x1xf32>
      %cst_40 = arith.constant 1.280000e+02 : f32
      %138 = vector.broadcast %cst_40 : f32 to vector<5x1xf32>
      %139 = arith.divf %137, %138 : vector<5x1xf32>
      %140 = vector.broadcast %139 : vector<5x1xf32> to vector<5x128xf32>
      %141 = arith.subf %135, %140 : vector<5x128xf32>
      %142 = arith.mulf %141, %141 : vector<5x128xf32>
      %cst_41 = arith.constant dense<0.000000e+00> : vector<5xf32>
      %143 = vector.multi_reduction <add>, %142, %cst_41 [1] : vector<5x128xf32> to vector<5xf32>
      %144 = vector.shape_cast %143 : vector<5xf32> to vector<5x1xf32>
      %cst_42 = arith.constant 1.280000e+02 : f32
      %145 = vector.broadcast %cst_42 : f32 to vector<5x1xf32>
      %146 = arith.divf %144, %145 : vector<5x1xf32>
      %147 = vector.broadcast %139 : vector<5x1xf32> to vector<5x128xf32>
      %148 = arith.subf %135, %147 : vector<5x128xf32>
      %cst_43 = arith.constant 9.99999997E-7 : f32
      %149 = vector.broadcast %cst_43 : f32 to vector<5x1xf32>
      %150 = arith.addf %146, %149 : vector<5x1xf32>
      %151 = math.rsqrt %150 : vector<5x1xf32>
      %152 = vector.broadcast %151 : vector<5x1xf32> to vector<5x128xf32>
      %153 = arith.mulf %148, %152 : vector<5x128xf32>
      %154 = vector.broadcast %41 : vector<1x128xf32> to vector<5x128xf32>
      %155 = arith.mulf %153, %154 : vector<5x128xf32>
      %156 = vector.broadcast %42 : vector<1x128xf32> to vector<5x128xf32>
      %157 = arith.addf %155, %156 : vector<5x128xf32>
      %158 = arith.truncf %157 : vector<5x128xf32> to vector<5x128xbf16>
      %c2_44 = arith.constant 2 : index
      %c0_45 = arith.constant 0 : index
      %c0_46 = arith.constant 0 : index
      %159 = vector.load %arg7[%c2_44, %c0_45, %c0_46] : memref<4x128x512xbf16, #tpu.memory_space<vmem>>, vector<1x128x512xbf16>
      %160 = vector.shape_cast %159 : vector<1x128x512xbf16> to vector<128x512xbf16>
      %cst_47 = arith.constant dense<0.000000e+00> : vector<5x512xf32>
      %161 = tpu.matmul %158, %160, %cst_47 {dimension_numbers = #tpu.dot_dimension_numbers<[1], [0], [0], [1], [0, 0, 1, 1], [], []>} : vector<5x128xbf16>, vector<128x512xbf16>, vector<5x512xf32> -> vector<5x512xf32>
      %162 = vector.broadcast %43 : vector<1x512xf32> to vector<5x512xf32>
      %163 = arith.addf %161, %162 : vector<5x512xf32>
      %164 = arith.mulf %163, %163 : vector<5x512xf32>
      %165 = arith.mulf %163, %164 : vector<5x512xf32>
      %cst_48 = arith.constant 4.471500e-02 : f32
      %166 = vector.broadcast %cst_48 : f32 to vector<5x512xf32>
      %167 = arith.mulf %166, %165 : vector<5x512xf32>
      %168 = arith.addf %163, %167 : vector<5x512xf32>
      %cst_49 = arith.constant 0.797884583 : f32
      %169 = vector.broadcast %cst_49 : f32 to vector<5x512xf32>
      %170 = arith.mulf %169, %168 : vector<5x512xf32>
      %171 = math.tanh %170 : vector<5x512xf32>
      %cst_50 = arith.constant 1.000000e+00 : f32
      %172 = vector.broadcast %cst_50 : f32 to vector<5x512xf32>
      %173 = arith.addf %172, %171 : vector<5x512xf32>
      %cst_51 = arith.constant 5.000000e-01 : f32
      %174 = vector.broadcast %cst_51 : f32 to vector<5x512xf32>
      %175 = arith.mulf %174, %173 : vector<5x512xf32>
      %176 = arith.mulf %163, %175 : vector<5x512xf32>
      %177 = arith.truncf %176 : vector<5x512xf32> to vector<5x512xbf16>
      %c2_52 = arith.constant 2 : index
      %c0_53 = arith.constant 0 : index
      %c0_54 = arith.constant 0 : index
      %178 = vector.load %arg8[%c2_52, %c0_53, %c0_54] : memref<4x512x128xbf16, #tpu.memory_space<vmem>>, vector<1x512x128xbf16>
      %179 = vector.shape_cast %178 : vector<1x512x128xbf16> to vector<512x128xbf16>
      %cst_55 = arith.constant dense<0.000000e+00> : vector<5x128xf32>
      %180 = tpu.matmul %177, %179, %cst_55 {dimension_numbers = #tpu.dot_dimension_numbers<[1], [0], [0], [1], [0, 0, 1, 1], [], []>} : vector<5x512xbf16>, vector<512x128xbf16>, vector<5x128xf32> -> vector<5x128xf32>
      %181 = vector.broadcast %44 : vector<1x128xf32> to vector<5x128xf32>
      %182 = arith.addf %180, %181 : vector<5x128xf32>
      %183 = arith.addf %135, %182 : vector<5x128xf32>
      %c0_56 = arith.constant 0 : index
      %c0_57 = arith.constant 0 : index
      %184 = vector.load %arg10[%c0_56, %c0_57] : memref<5x128xf32, #tpu.memory_space<vmem>>, vector<5x128xf32>
      tpu.vector_store %arg10[%c0_56, %c0_57], %183 {strides = array<i32>} : memref<5x128xf32, #tpu.memory_space<vmem>>, vector<5x128xf32>,
    } else {
    }
    %c31_i32_13 = arith.constant 31 : i32
    %24 = arith.cmpi eq, %20, %c31_i32_13 : i32
    %25 = arith.extui %24 : i1 to i32
    %c0_i32_14 = arith.constant 0 : i32
    %26 = arith.cmpi ne, %25, %c0_i32_14 : i32
    scf.if %26 {
      %c2 = arith.constant 2 : index
      %c0 = arith.constant 0 : index
      %c0_20 = arith.constant 0 : index
      %35 = vector.load %arg4[%c2, %c0, %c0_20] : memref<4x8x512xf32, #tpu.memory_space<vmem>>, vector<1x8x512xf32>
      %36 = vector.shape_cast %35 : vector<1x8x512xf32> to vector<8x512xf32>
      %37 = vector.extract_strided_slice %36 {offsets = [0, 0], sizes = [1, 128], strides = [1, 1]} : vector<8x512xf32> to vector<1x128xf32>
      %38 = vector.extract_strided_slice %36 {offsets = [1, 0], sizes = [1, 128], strides = [1, 1]} : vector<8x512xf32> to vector<1x128xf32>
      %39 = vector.extract_strided_slice %36 {offsets = [2, 256], sizes = [1, 128], strides = [1, 1]} : vector<8x512xf32> to vector<1x128xf32>
      %c0_21 = arith.constant 0 : index
      %c0_22 = arith.constant 0 : index
      %40 = vector.load %arg10[%c0_21, %c0_22] : memref<5x128xf32, #tpu.memory_space<vmem>>, vector<5x128xf32>
      %cst = arith.constant dense<0.000000e+00> : vector<5xf32>
      %41 = vector.multi_reduction <add>, %40, %cst [1] : vector<5x128xf32> to vector<5xf32>
      %42 = vector.shape_cast %41 : vector<5xf32> to vector<5x1xf32>
      %cst_23 = arith.constant 1.280000e+02 : f32
      %43 = vector.broadcast %cst_23 : f32 to vector<5x1xf32>
      %44 = arith.divf %42, %43 : vector<5x1xf32>
      %45 = vector.broadcast %44 : vector<5x1xf32> to vector<5x128xf32>
      %46 = arith.subf %40, %45 : vector<5x128xf32>
      %47 = arith.mulf %46, %46 : vector<5x128xf32>
      %cst_24 = arith.constant dense<0.000000e+00> : vector<5xf32>
      %48 = vector.multi_reduction <add>, %47, %cst_24 [1] : vector<5x128xf32> to vector<5xf32>
      %49 = vector.shape_cast %48 : vector<5xf32> to vector<5x1xf32>
      %cst_25 = arith.constant 1.280000e+02 : f32
      %50 = vector.broadcast %cst_25 : f32 to vector<5x1xf32>
      %51 = arith.divf %49, %50 : vector<5x1xf32>
      %52 = vector.broadcast %44 : vector<5x1xf32> to vector<5x128xf32>
      %53 = arith.subf %40, %52 : vector<5x128xf32>
      %cst_26 = arith.constant 9.99999997E-7 : f32
      %54 = vector.broadcast %cst_26 : f32 to vector<5x1xf32>
      %55 = arith.addf %51, %54 : vector<5x1xf32>
      %56 = math.rsqrt %55 : vector<5x1xf32>
      %57 = vector.broadcast %56 : vector<5x1xf32> to vector<5x128xf32>
      %58 = arith.mulf %53, %57 : vector<5x128xf32>
      %59 = vector.broadcast %37 : vector<1x128xf32> to vector<5x128xf32>
      %60 = arith.mulf %58, %59 : vector<5x128xf32>
      %61 = vector.broadcast %38 : vector<1x128xf32> to vector<5x128xf32>
      %62 = arith.addf %60, %61 : vector<5x128xf32>
      %c2_27 = arith.constant 2 : index
      %c0_28 = arith.constant 0 : index
      %c0_29 = arith.constant 0 : index
      %63 = vector.load %arg5[%c2_27, %c0_28, %c0_29] : memref<4x128x384xbf16, #tpu.memory_space<vmem>>, vector<1x128x384xbf16>
      %64 = vector.shape_cast %63 : vector<1x128x384xbf16> to vector<128x384xbf16>
      %65 = vector.extract_strided_slice %64 {offsets = [0, 256], sizes = [128, 128], strides = [1, 1]} : vector<128x384xbf16> to vector<128x128xbf16>
      %66 = arith.truncf %62 : vector<5x128xf32> to vector<5x128xbf16>
      %cst_30 = arith.constant dense<0.000000e+00> : vector<5x128xf32>
      %67 = tpu.matmul %66, %65, %cst_30 {dimension_numbers = #tpu.dot_dimension_numbers<[1], [0], [0], [1], [0, 0, 1, 1], [], []>} : vector<5x128xbf16>, vector<128x128xbf16>, vector<5x128xf32> -> vector<5x128xf32>
      %68 = vector.broadcast %39 : vector<1x128xf32> to vector<5x128xf32>
      %69 = arith.addf %67, %68 : vector<5x128xf32>
      %70 = arith.mulf %69, %69 : vector<5x128xf32>
      %cst_31 = arith.constant dense<0.000000e+00> : vector<5xf32>
      %71 = vector.multi_reduction <add>, %70, %cst_31 [1] : vector<5x128xf32> to vector<5xf32>
      %72 = vector.shape_cast %71 : vector<5xf32> to vector<5x1xf32>
      %cst_32 = arith.constant 1.000000e-24 : f32
      %73 = vector.broadcast %cst_32 : f32 to vector<5x1xf32>
      %74 = arith.maximumf %72, %73 : vector<5x1xf32>
      %75 = math.rsqrt %74 : vector<5x1xf32>
      %76 = vector.broadcast %75 : vector<5x1xf32> to vector<5x128xf32>
      %77 = arith.mulf %69, %76 : vector<5x128xf32>
      %78 = vector.extract_strided_slice %77 {offsets = [1, 0], sizes = [4, 128], strides = [1, 1]} : vector<5x128xf32> to vector<4x128xf32>
      %c0_33 = arith.constant 0 : index
      %c0_34 = arith.constant 0 : index
      %79 = vector.load %arg9[%c0_33, %c0_34] : memref<4x128xf32, #tpu.memory_space<vmem>>, vector<4x128xf32>
      tpu.vector_store %arg9[%c0_33, %c0_34], %78 {strides = array<i32>} : memref<4x128xf32, #tpu.memory_space<vmem>>, vector<4x128xf32>,
    } else {
    }
    %c4_i32_15 = arith.constant 4 : i32
    %27 = arith.muli %arg0, %c4_i32_15 : i32
    %c3_i32 = arith.constant 3 : i32
    %28 = arith.addi %27, %c3_i32 : i32
    %c31_i32_16 = arith.constant 31 : i32
    %29 = arith.cmpi slt, %28, %c31_i32_16 : i32
    %30 = arith.extui %29 : i1 to i32
    %c0_i32_17 = arith.constant 0 : i32
    %31 = arith.cmpi ne, %30, %c0_i32_17 : i32
    scf.if %31 {
      %c3 = arith.constant 3 : index
      %c0 = arith.constant 0 : index
      %c0_20 = arith.constant 0 : index
      %35 = vector.load %arg4[%c3, %c0, %c0_20] : memref<4x8x512xf32, #tpu.memory_space<vmem>>, vector<1x8x512xf32>
      %36 = vector.shape_cast %35 : vector<1x8x512xf32> to vector<8x512xf32>
      %37 = vector.extract_strided_slice %36 {offsets = [0, 0], sizes = [1, 128], strides = [1, 1]} : vector<8x512xf32> to vector<1x128xf32>
      %38 = vector.extract_strided_slice %36 {offsets = [1, 0], sizes = [1, 128], strides = [1, 1]} : vector<8x512xf32> to vector<1x128xf32>
      %39 = vector.extract_strided_slice %36 {offsets = [2, 0], sizes = [1, 384], strides = [1, 1]} : vector<8x512xf32> to vector<1x384xf32>
      %40 = vector.extract_strided_slice %36 {offsets = [3, 0], sizes = [1, 128], strides = [1, 1]} : vector<8x512xf32> to vector<1x128xf32>
      %41 = vector.extract_strided_slice %36 {offsets = [4, 0], sizes = [1, 128], strides = [1, 1]} : vector<8x512xf32> to vector<1x128xf32>
      %42 = vector.extract_strided_slice %36 {offsets = [5, 0], sizes = [1, 128], strides = [1, 1]} : vector<8x512xf32> to vector<1x128xf32>
      %43 = vector.extract_strided_slice %36 {offsets = [6, 0], sizes = [1, 512], strides = [1, 1]} : vector<8x512xf32> to vector<1x512xf32>
      %44 = vector.extract_strided_slice %36 {offsets = [7, 0], sizes = [1, 128], strides = [1, 1]} : vector<8x512xf32> to vector<1x128xf32>
      %c0_21 = arith.constant 0 : index
      %c0_22 = arith.constant 0 : index
      %45 = vector.load %arg10[%c0_21, %c0_22] : memref<5x128xf32, #tpu.memory_space<vmem>>, vector<5x128xf32>
      %cst = arith.constant dense<0.000000e+00> : vector<5xf32>
      %46 = vector.multi_reduction <add>, %45, %cst [1] : vector<5x128xf32> to vector<5xf32>
      %47 = vector.shape_cast %46 : vector<5xf32> to vector<5x1xf32>
      %cst_23 = arith.constant 1.280000e+02 : f32
      %48 = vector.broadcast %cst_23 : f32 to vector<5x1xf32>
      %49 = arith.divf %47, %48 : vector<5x1xf32>
      %50 = vector.broadcast %49 : vector<5x1xf32> to vector<5x128xf32>
      %51 = arith.subf %45, %50 : vector<5x128xf32>
      %52 = arith.mulf %51, %51 : vector<5x128xf32>
      %cst_24 = arith.constant dense<0.000000e+00> : vector<5xf32>
      %53 = vector.multi_reduction <add>, %52, %cst_24 [1] : vector<5x128xf32> to vector<5xf32>
      %54 = vector.shape_cast %53 : vector<5xf32> to vector<5x1xf32>
      %cst_25 = arith.constant 1.280000e+02 : f32
      %55 = vector.broadcast %cst_25 : f32 to vector<5x1xf32>
      %56 = arith.divf %54, %55 : vector<5x1xf32>
      %57 = vector.broadcast %49 : vector<5x1xf32> to vector<5x128xf32>
      %58 = arith.subf %45, %57 : vector<5x128xf32>
      %cst_26 = arith.constant 9.99999997E-7 : f32
      %59 = vector.broadcast %cst_26 : f32 to vector<5x1xf32>
      %60 = arith.addf %56, %59 : vector<5x1xf32>
      %61 = math.rsqrt %60 : vector<5x1xf32>
      %62 = vector.broadcast %61 : vector<5x1xf32> to vector<5x128xf32>
      %63 = arith.mulf %58, %62 : vector<5x128xf32>
      %64 = vector.broadcast %37 : vector<1x128xf32> to vector<5x128xf32>
      %65 = arith.mulf %63, %64 : vector<5x128xf32>
      %66 = vector.broadcast %38 : vector<1x128xf32> to vector<5x128xf32>
      %67 = arith.addf %65, %66 : vector<5x128xf32>
      %68 = arith.truncf %67 : vector<5x128xf32> to vector<5x128xbf16>
      %c3_27 = arith.constant 3 : index
      %c0_28 = arith.constant 0 : index
      %c0_29 = arith.constant 0 : index
      %69 = vector.load %arg5[%c3_27, %c0_28, %c0_29] : memref<4x128x384xbf16, #tpu.memory_space<vmem>>, vector<1x128x384xbf16>
      %70 = vector.shape_cast %69 : vector<1x128x384xbf16> to vector<128x384xbf16>
      %cst_30 = arith.constant dense<0.000000e+00> : vector<5x384xf32>
      %71 = tpu.matmul %68, %70, %cst_30 {dimension_numbers = #tpu.dot_dimension_numbers<[1], [0], [0], [1], [0, 0, 1, 1], [], []>} : vector<5x128xbf16>, vector<128x384xbf16>, vector<5x384xf32> -> vector<5x384xf32>
      %72 = vector.broadcast %39 : vector<1x384xf32> to vector<5x384xf32>
      %73 = arith.addf %71, %72 : vector<5x384xf32>
      %74 = vector.extract_strided_slice %73 {offsets = [0, 0], sizes = [5, 128], strides = [1, 1]} : vector<5x384xf32> to vector<5x128xf32>
      %75 = vector.extract_strided_slice %74 {offsets = [0, 0], sizes = [5, 32], strides = [1, 1]} : vector<5x128xf32> to vector<5x32xf32>
      %76 = vector.extract_strided_slice %74 {offsets = [0, 32], sizes = [5, 32], strides = [1, 1]} : vector<5x128xf32> to vector<5x32xf32>
      %77 = vector.extract_strided_slice %74 {offsets = [0, 64], sizes = [5, 32], strides = [1, 1]} : vector<5x128xf32> to vector<5x32xf32>
      %78 = vector.extract_strided_slice %74 {offsets = [0, 96], sizes = [5, 32], strides = [1, 1]} : vector<5x128xf32> to vector<5x32xf32>
      %79 = vector.shape_cast %75 : vector<5x32xf32> to vector<1x5x32xf32>
      %80 = vector.shape_cast %76 : vector<5x32xf32> to vector<1x5x32xf32>
      %81 = vector.shape_cast %77 : vector<5x32xf32> to vector<1x5x32xf32>
      %82 = vector.shape_cast %78 : vector<5x32xf32> to vector<1x5x32xf32>
      %83 = tpu.concatenate %79, %80, %81, %82 in 0 : vector<1x5x32xf32>, vector<1x5x32xf32>, vector<1x5x32xf32>, vector<1x5x32xf32> -> vector<4x5x32xf32>
      %84 = arith.truncf %83 : vector<4x5x32xf32> to vector<4x5x32xbf16>
      %85 = vector.extract_strided_slice %73 {offsets = [0, 128], sizes = [5, 128], strides = [1, 1]} : vector<5x384xf32> to vector<5x128xf32>
      %86 = vector.extract_strided_slice %85 {offsets = [0, 0], sizes = [5, 32], strides = [1, 1]} : vector<5x128xf32> to vector<5x32xf32>
      %87 = vector.extract_strided_slice %85 {offsets = [0, 32], sizes = [5, 32], strides = [1, 1]} : vector<5x128xf32> to vector<5x32xf32>
      %88 = vector.extract_strided_slice %85 {offsets = [0, 64], sizes = [5, 32], strides = [1, 1]} : vector<5x128xf32> to vector<5x32xf32>
      %89 = vector.extract_strided_slice %85 {offsets = [0, 96], sizes = [5, 32], strides = [1, 1]} : vector<5x128xf32> to vector<5x32xf32>
      %90 = vector.shape_cast %86 : vector<5x32xf32> to vector<1x5x32xf32>
      %91 = vector.shape_cast %87 : vector<5x32xf32> to vector<1x5x32xf32>
      %92 = vector.shape_cast %88 : vector<5x32xf32> to vector<1x5x32xf32>
      %93 = vector.shape_cast %89 : vector<5x32xf32> to vector<1x5x32xf32>
      %94 = tpu.concatenate %90, %91, %92, %93 in 0 : vector<1x5x32xf32>, vector<1x5x32xf32>, vector<1x5x32xf32>, vector<1x5x32xf32> -> vector<4x5x32xf32>
      %95 = arith.truncf %94 : vector<4x5x32xf32> to vector<4x5x32xbf16>
      %96 = vector.extract_strided_slice %73 {offsets = [0, 256], sizes = [5, 128], strides = [1, 1]} : vector<5x384xf32> to vector<5x128xf32>
      %97 = vector.extract_strided_slice %96 {offsets = [0, 0], sizes = [5, 32], strides = [1, 1]} : vector<5x128xf32> to vector<5x32xf32>
      %98 = vector.extract_strided_slice %96 {offsets = [0, 32], sizes = [5, 32], strides = [1, 1]} : vector<5x128xf32> to vector<5x32xf32>
      %99 = vector.extract_strided_slice %96 {offsets = [0, 64], sizes = [5, 32], strides = [1, 1]} : vector<5x128xf32> to vector<5x32xf32>
      %100 = vector.extract_strided_slice %96 {offsets = [0, 96], sizes = [5, 32], strides = [1, 1]} : vector<5x128xf32> to vector<5x32xf32>
      %101 = vector.shape_cast %97 : vector<5x32xf32> to vector<1x5x32xf32>
      %102 = vector.shape_cast %98 : vector<5x32xf32> to vector<1x5x32xf32>
      %103 = vector.shape_cast %99 : vector<5x32xf32> to vector<1x5x32xf32>
      %104 = vector.shape_cast %100 : vector<5x32xf32> to vector<1x5x32xf32>
      %105 = tpu.concatenate %101, %102, %103, %104 in 0 : vector<1x5x32xf32>, vector<1x5x32xf32>, vector<1x5x32xf32>, vector<1x5x32xf32> -> vector<4x5x32xf32>
      %106 = arith.truncf %105 : vector<4x5x32xf32> to vector<4x5x32xbf16>
      "tpu.trace_start"() <{level = 10 : i32, message = "hqd,hkd->hqk"}> : () -> ()
      %cst_31 = arith.constant dense<0.000000e+00> : vector<4x5x5xf32>
      %107 = tpu.matmul %84, %95, %cst_31 {dimension_numbers = #tpu.dot_dimension_numbers<[2], [2], [1], [1], [0, 0, 0, 1, 1, 1], [0], [0]>} : vector<4x5x32xbf16>, vector<4x5x32xbf16>, vector<4x5x5xf32> -> vector<4x5x5xf32>
      "tpu.trace_stop"() : () -> ()
      %cst_32 = arith.constant dense<0xFF800000> : vector<4x5xf32>
      %108 = vector.multi_reduction <maximumf>, %107, %cst_32 [2] : vector<4x5x5xf32> to vector<4x5xf32>
      %109 = vector.shape_cast %108 : vector<4x5xf32> to vector<4x5x1xf32>
      %110 = vector.broadcast %109 : vector<4x5x1xf32> to vector<4x5x5xf32>
      %111 = arith.subf %107, %110 : vector<4x5x5xf32>
      %112 = math.exp %111 : vector<4x5x5xf32>
      %cst_33 = arith.constant dense<0.000000e+00> : vector<4x5xf32>
      %113 = vector.multi_reduction <add>, %112, %cst_33 [2] : vector<4x5x5xf32> to vector<4x5xf32>
      %114 = vector.shape_cast %113 : vector<4x5xf32> to vector<4x5x1xf32>
      %115 = tpu.reciprocal %114 {approx = true} : vector<4x5x1xf32> -> vector<4x5x1xf32>
      %116 = vector.broadcast %115 : vector<4x5x1xf32> to vector<4x5x5xf32>
      %117 = arith.mulf %112, %116 : vector<4x5x5xf32>
      %118 = arith.truncf %117 : vector<4x5x5xf32> to vector<4x5x5xbf16>
      "tpu.trace_start"() <{level = 10 : i32, message = "hqk,hkd->hqd"}> : () -> ()
      %cst_34 = arith.constant dense<0.000000e+00> : vector<4x5x32xf32>
      %119 = tpu.matmul %118, %106, %cst_34 {dimension_numbers = #tpu.dot_dimension_numbers<[2], [1], [1], [2], [0, 0, 0, 1, 1, 2], [0], [0]>} : vector<4x5x5xbf16>, vector<4x5x32xbf16>, vector<4x5x32xf32> -> vector<4x5x32xf32>
      "tpu.trace_stop"() : () -> ()
      %120 = vector.extract_strided_slice %119 {offsets = [0, 0, 0], sizes = [1, 5, 32], strides = [1, 1, 1]} : vector<4x5x32xf32> to vector<1x5x32xf32>
      %121 = vector.shape_cast %120 : vector<1x5x32xf32> to vector<5x32xf32>
      %122 = vector.extract_strided_slice %119 {offsets = [1, 0, 0], sizes = [1, 5, 32], strides = [1, 1, 1]} : vector<4x5x32xf32> to vector<1x5x32xf32>
      %123 = vector.shape_cast %122 : vector<1x5x32xf32> to vector<5x32xf32>
      %124 = vector.extract_strided_slice %119 {offsets = [2, 0, 0], sizes = [1, 5, 32], strides = [1, 1, 1]} : vector<4x5x32xf32> to vector<1x5x32xf32>
      %125 = vector.shape_cast %124 : vector<1x5x32xf32> to vector<5x32xf32>
      %126 = vector.extract_strided_slice %119 {offsets = [3, 0, 0], sizes = [1, 5, 32], strides = [1, 1, 1]} : vector<4x5x32xf32> to vector<1x5x32xf32>
      %127 = vector.shape_cast %126 : vector<1x5x32xf32> to vector<5x32xf32>
      %128 = tpu.concatenate %121, %123, %125, %127 in 1 : vector<5x32xf32>, vector<5x32xf32>, vector<5x32xf32>, vector<5x32xf32> -> vector<5x128xf32>
      %129 = arith.truncf %128 : vector<5x128xf32> to vector<5x128xbf16>
      %c3_35 = arith.constant 3 : index
      %c0_36 = arith.constant 0 : index
      %c0_37 = arith.constant 0 : index
      %130 = vector.load %arg6[%c3_35, %c0_36, %c0_37] : memref<4x128x128xbf16, #tpu.memory_space<vmem>>, vector<1x128x128xbf16>
      %131 = vector.shape_cast %130 : vector<1x128x128xbf16> to vector<128x128xbf16>
      %cst_38 = arith.constant dense<0.000000e+00> : vector<5x128xf32>
      %132 = tpu.matmul %129, %131, %cst_38 {dimension_numbers = #tpu.dot_dimension_numbers<[1], [0], [0], [1], [0, 0, 1, 1], [], []>} : vector<5x128xbf16>, vector<128x128xbf16>, vector<5x128xf32> -> vector<5x128xf32>
      %133 = vector.broadcast %40 : vector<1x128xf32> to vector<5x128xf32>
      %134 = arith.addf %132, %133 : vector<5x128xf32>
      %135 = arith.addf %45, %134 : vector<5x128xf32>
      %cst_39 = arith.constant dense<0.000000e+00> : vector<5xf32>
      %136 = vector.multi_reduction <add>, %135, %cst_39 [1] : vector<5x128xf32> to vector<5xf32>
      %137 = vector.shape_cast %136 : vector<5xf32> to vector<5x1xf32>
      %cst_40 = arith.constant 1.280000e+02 : f32
      %138 = vector.broadcast %cst_40 : f32 to vector<5x1xf32>
      %139 = arith.divf %137, %138 : vector<5x1xf32>
      %140 = vector.broadcast %139 : vector<5x1xf32> to vector<5x128xf32>
      %141 = arith.subf %135, %140 : vector<5x128xf32>
      %142 = arith.mulf %141, %141 : vector<5x128xf32>
      %cst_41 = arith.constant dense<0.000000e+00> : vector<5xf32>
      %143 = vector.multi_reduction <add>, %142, %cst_41 [1] : vector<5x128xf32> to vector<5xf32>
      %144 = vector.shape_cast %143 : vector<5xf32> to vector<5x1xf32>
      %cst_42 = arith.constant 1.280000e+02 : f32
      %145 = vector.broadcast %cst_42 : f32 to vector<5x1xf32>
      %146 = arith.divf %144, %145 : vector<5x1xf32>
      %147 = vector.broadcast %139 : vector<5x1xf32> to vector<5x128xf32>
      %148 = arith.subf %135, %147 : vector<5x128xf32>
      %cst_43 = arith.constant 9.99999997E-7 : f32
      %149 = vector.broadcast %cst_43 : f32 to vector<5x1xf32>
      %150 = arith.addf %146, %149 : vector<5x1xf32>
      %151 = math.rsqrt %150 : vector<5x1xf32>
      %152 = vector.broadcast %151 : vector<5x1xf32> to vector<5x128xf32>
      %153 = arith.mulf %148, %152 : vector<5x128xf32>
      %154 = vector.broadcast %41 : vector<1x128xf32> to vector<5x128xf32>
      %155 = arith.mulf %153, %154 : vector<5x128xf32>
      %156 = vector.broadcast %42 : vector<1x128xf32> to vector<5x128xf32>
      %157 = arith.addf %155, %156 : vector<5x128xf32>
      %158 = arith.truncf %157 : vector<5x128xf32> to vector<5x128xbf16>
      %c3_44 = arith.constant 3 : index
      %c0_45 = arith.constant 0 : index
      %c0_46 = arith.constant 0 : index
      %159 = vector.load %arg7[%c3_44, %c0_45, %c0_46] : memref<4x128x512xbf16, #tpu.memory_space<vmem>>, vector<1x128x512xbf16>
      %160 = vector.shape_cast %159 : vector<1x128x512xbf16> to vector<128x512xbf16>
      %cst_47 = arith.constant dense<0.000000e+00> : vector<5x512xf32>
      %161 = tpu.matmul %158, %160, %cst_47 {dimension_numbers = #tpu.dot_dimension_numbers<[1], [0], [0], [1], [0, 0, 1, 1], [], []>} : vector<5x128xbf16>, vector<128x512xbf16>, vector<5x512xf32> -> vector<5x512xf32>
      %162 = vector.broadcast %43 : vector<1x512xf32> to vector<5x512xf32>
      %163 = arith.addf %161, %162 : vector<5x512xf32>
      %164 = arith.mulf %163, %163 : vector<5x512xf32>
      %165 = arith.mulf %163, %164 : vector<5x512xf32>
      %cst_48 = arith.constant 4.471500e-02 : f32
      %166 = vector.broadcast %cst_48 : f32 to vector<5x512xf32>
      %167 = arith.mulf %166, %165 : vector<5x512xf32>
      %168 = arith.addf %163, %167 : vector<5x512xf32>
      %cst_49 = arith.constant 0.797884583 : f32
      %169 = vector.broadcast %cst_49 : f32 to vector<5x512xf32>
      %170 = arith.mulf %169, %168 : vector<5x512xf32>
      %171 = math.tanh %170 : vector<5x512xf32>
      %cst_50 = arith.constant 1.000000e+00 : f32
      %172 = vector.broadcast %cst_50 : f32 to vector<5x512xf32>
      %173 = arith.addf %172, %171 : vector<5x512xf32>
      %cst_51 = arith.constant 5.000000e-01 : f32
      %174 = vector.broadcast %cst_51 : f32 to vector<5x512xf32>
      %175 = arith.mulf %174, %173 : vector<5x512xf32>
      %176 = arith.mulf %163, %175 : vector<5x512xf32>
      %177 = arith.truncf %176 : vector<5x512xf32> to vector<5x512xbf16>
      %c3_52 = arith.constant 3 : index
      %c0_53 = arith.constant 0 : index
      %c0_54 = arith.constant 0 : index
      %178 = vector.load %arg8[%c3_52, %c0_53, %c0_54] : memref<4x512x128xbf16, #tpu.memory_space<vmem>>, vector<1x512x128xbf16>
      %179 = vector.shape_cast %178 : vector<1x512x128xbf16> to vector<512x128xbf16>
      %cst_55 = arith.constant dense<0.000000e+00> : vector<5x128xf32>
      %180 = tpu.matmul %177, %179, %cst_55 {dimension_numbers = #tpu.dot_dimension_numbers<[1], [0], [0], [1], [0, 0, 1, 1], [], []>} : vector<5x512xbf16>, vector<512x128xbf16>, vector<5x128xf32> -> vector<5x128xf32>
      %181 = vector.broadcast %44 : vector<1x128xf32> to vector<5x128xf32>
      %182 = arith.addf %180, %181 : vector<5x128xf32>
      %183 = arith.addf %135, %182 : vector<5x128xf32>
      %c0_56 = arith.constant 0 : index
      %c0_57 = arith.constant 0 : index
      %184 = vector.load %arg10[%c0_56, %c0_57] : memref<5x128xf32, #tpu.memory_space<vmem>>, vector<5x128xf32>
      tpu.vector_store %arg10[%c0_56, %c0_57], %183 {strides = array<i32>} : memref<5x128xf32, #tpu.memory_space<vmem>>, vector<5x128xf32>,
    } else {
    }
    %c31_i32_18 = arith.constant 31 : i32
    %32 = arith.cmpi eq, %28, %c31_i32_18 : i32
    %33 = arith.extui %32 : i1 to i32
    %c0_i32_19 = arith.constant 0 : i32
    %34 = arith.cmpi ne, %33, %c0_i32_19 : i32
    scf.if %34 {
      %c3 = arith.constant 3 : index
      %c0 = arith.constant 0 : index
      %c0_20 = arith.constant 0 : index
      %35 = vector.load %arg4[%c3, %c0, %c0_20] : memref<4x8x512xf32, #tpu.memory_space<vmem>>, vector<1x8x512xf32>
      %36 = vector.shape_cast %35 : vector<1x8x512xf32> to vector<8x512xf32>
      %37 = vector.extract_strided_slice %36 {offsets = [0, 0], sizes = [1, 128], strides = [1, 1]} : vector<8x512xf32> to vector<1x128xf32>
      %38 = vector.extract_strided_slice %36 {offsets = [1, 0], sizes = [1, 128], strides = [1, 1]} : vector<8x512xf32> to vector<1x128xf32>
      %39 = vector.extract_strided_slice %36 {offsets = [2, 256], sizes = [1, 128], strides = [1, 1]} : vector<8x512xf32> to vector<1x128xf32>
      %c0_21 = arith.constant 0 : index
      %c0_22 = arith.constant 0 : index
      %40 = vector.load %arg10[%c0_21, %c0_22] : memref<5x128xf32, #tpu.memory_space<vmem>>, vector<5x128xf32>
      %cst = arith.constant dense<0.000000e+00> : vector<5xf32>
      %41 = vector.multi_reduction <add>, %40, %cst [1] : vector<5x128xf32> to vector<5xf32>
      %42 = vector.shape_cast %41 : vector<5xf32> to vector<5x1xf32>
      %cst_23 = arith.constant 1.280000e+02 : f32
      %43 = vector.broadcast %cst_23 : f32 to vector<5x1xf32>
      %44 = arith.divf %42, %43 : vector<5x1xf32>
      %45 = vector.broadcast %44 : vector<5x1xf32> to vector<5x128xf32>
      %46 = arith.subf %40, %45 : vector<5x128xf32>
      %47 = arith.mulf %46, %46 : vector<5x128xf32>
      %cst_24 = arith.constant dense<0.000000e+00> : vector<5xf32>
      %48 = vector.multi_reduction <add>, %47, %cst_24 [1] : vector<5x128xf32> to vector<5xf32>
      %49 = vector.shape_cast %48 : vector<5xf32> to vector<5x1xf32>
      %cst_25 = arith.constant 1.280000e+02 : f32
      %50 = vector.broadcast %cst_25 : f32 to vector<5x1xf32>
      %51 = arith.divf %49, %50 : vector<5x1xf32>
      %52 = vector.broadcast %44 : vector<5x1xf32> to vector<5x128xf32>
      %53 = arith.subf %40, %52 : vector<5x128xf32>
      %cst_26 = arith.constant 9.99999997E-7 : f32
      %54 = vector.broadcast %cst_26 : f32 to vector<5x1xf32>
      %55 = arith.addf %51, %54 : vector<5x1xf32>
      %56 = math.rsqrt %55 : vector<5x1xf32>
      %57 = vector.broadcast %56 : vector<5x1xf32> to vector<5x128xf32>
      %58 = arith.mulf %53, %57 : vector<5x128xf32>
      %59 = vector.broadcast %37 : vector<1x128xf32> to vector<5x128xf32>
      %60 = arith.mulf %58, %59 : vector<5x128xf32>
      %61 = vector.broadcast %38 : vector<1x128xf32> to vector<5x128xf32>
      %62 = arith.addf %60, %61 : vector<5x128xf32>
      %c3_27 = arith.constant 3 : index
      %c0_28 = arith.constant 0 : index
      %c0_29 = arith.constant 0 : index
      %63 = vector.load %arg5[%c3_27, %c0_28, %c0_29] : memref<4x128x384xbf16, #tpu.memory_space<vmem>>, vector<1x128x384xbf16>
      %64 = vector.shape_cast %63 : vector<1x128x384xbf16> to vector<128x384xbf16>
      %65 = vector.extract_strided_slice %64 {offsets = [0, 256], sizes = [128, 128], strides = [1, 1]} : vector<128x384xbf16> to vector<128x128xbf16>
      %66 = arith.truncf %62 : vector<5x128xf32> to vector<5x128xbf16>
      %cst_30 = arith.constant dense<0.000000e+00> : vector<5x128xf32>
      %67 = tpu.matmul %66, %65, %cst_30 {dimension_numbers = #tpu.dot_dimension_numbers<[1], [0], [0], [1], [0, 0, 1, 1], [], []>} : vector<5x128xbf16>, vector<128x128xbf16>, vector<5x128xf32> -> vector<5x128xf32>
      %68 = vector.broadcast %39 : vector<1x128xf32> to vector<5x128xf32>
      %69 = arith.addf %67, %68 : vector<5x128xf32>
      %70 = arith.mulf %69, %69 : vector<5x128xf32>
      %cst_31 = arith.constant dense<0.000000e+00> : vector<5xf32>
      %71 = vector.multi_reduction <add>, %70, %cst_31 [1] : vector<5x128xf32> to vector<5xf32>
      %72 = vector.shape_cast %71 : vector<5xf32> to vector<5x1xf32>
      %cst_32 = arith.constant 1.000000e-24 : f32
      %73 = vector.broadcast %cst_32 : f32 to vector<5x1xf32>
      %74 = arith.maximumf %72, %73 : vector<5x1xf32>
      %75 = math.rsqrt %74 : vector<5x1xf32>
      %76 = vector.broadcast %75 : vector<5x1xf32> to vector<5x128xf32>
      %77 = arith.mulf %69, %76 : vector<5x128xf32>
      %78 = vector.extract_strided_slice %77 {offsets = [1, 0], sizes = [4, 128], strides = [1, 1]} : vector<5x128xf32> to vector<4x128xf32>
      %c0_33 = arith.constant 0 : index
      %c0_34 = arith.constant 0 : index
      %79 = vector.load %arg9[%c0_33, %c0_34] : memref<4x128xf32, #tpu.memory_space<vmem>>, vector<4x128xf32>
      tpu.vector_store %arg9[%c0_33, %c0_34], %78 {strides = array<i32>} : memref<4x128xf32, #tpu.memory_space<vmem>>, vector<4x128xf32>,
    } else {
    }
    return
  }
  func.func @transform_0(%arg0: i32) -> (i32, i32) {
    %c0_i32 = arith.constant 0 : i32
    %c0_i32_0 = arith.constant 0 : i32
    %c0_i32_1 = arith.constant 0 : i32
    return %c0_i32, %c0_i32_0 : i32, i32
  }
  func.func @transform_1(%arg0: i32) -> (i32, i32) {
    %c0_i32 = arith.constant 0 : i32
    %c0_i32_0 = arith.constant 0 : i32
    %c0_i32_1 = arith.constant 0 : i32
    return %c0_i32, %c0_i32_0 : i32, i32
  }
  func.func @transform_2(%arg0: i32) -> (i32, i32) {
    %c0_i32 = arith.constant 0 : i32
    %c0_i32_0 = arith.constant 0 : i32
    %c0_i32_1 = arith.constant 0 : i32
    return %c0_i32, %c0_i32_0 : i32, i32
  }
  func.func @transform_3(%arg0: i32) -> (i32, i32, i32) {
    %c0_i32 = arith.constant 0 : i32
    %c0_i32_0 = arith.constant 0 : i32
    %c0_i32_1 = arith.constant 0 : i32
    return %arg0, %c0_i32, %c0_i32_0 : i32, i32, i32
  }
  func.func @transform_4(%arg0: i32) -> (i32, i32, i32) {
    %c0_i32 = arith.constant 0 : i32
    %c0_i32_0 = arith.constant 0 : i32
    %c0_i32_1 = arith.constant 0 : i32
    return %arg0, %c0_i32, %c0_i32_0 : i32, i32, i32
  }
  func.func @transform_5(%arg0: i32) -> (i32, i32, i32) {
    %c0_i32 = arith.constant 0 : i32
    %c0_i32_0 = arith.constant 0 : i32
    %c0_i32_1 = arith.constant 0 : i32
    return %arg0, %c0_i32, %c0_i32_0 : i32, i32, i32
  }
  func.func @transform_6(%arg0: i32) -> (i32, i32, i32) {
    %c0_i32 = arith.constant 0 : i32
    %c0_i32_0 = arith.constant 0 : i32
    %c0_i32_1 = arith.constant 0 : i32
    return %arg0, %c0_i32, %c0_i32_0 : i32, i32, i32
  }
  func.func @transform_7(%arg0: i32) -> (i32, i32, i32) {
    %c0_i32 = arith.constant 0 : i32
    %c0_i32_0 = arith.constant 0 : i32
    %c0_i32_1 = arith.constant 0 : i32
    return %arg0, %c0_i32, %c0_i32_0 : i32, i32, i32
  }
  func.func @transform_8(%arg0: i32) -> (i32, i32) {
    %c0_i32 = arith.constant 0 : i32
    %c0_i32_0 = arith.constant 0 : i32
    %c0_i32_1 = arith.constant 0 : i32
    return %c0_i32, %c0_i32_0 : i32, i32
  }
}

module attributes {stable_mosaic.version = 11 : i64} {
  func.func @kernel(%arg0: i32, %arg1: memref<28x2xf32, #tpu.memory_space<vmem>>, %arg2: memref<32x2x2xf32, #tpu.memory_space<vmem>>, %arg3: memref<2x28xf32, #tpu.memory_space<vmem>>, %arg4: memref<28x28xf32, #tpu.memory_space<vmem>>, %arg5: memref<32x28x28xf32, #tpu.memory_space<vmem>>) attributes {dimension_semantics = [#tpu.dimension_semantics<parallel>], iteration_bounds = array<i64: 4>, scalar_prefetch = 0 : i64, scratch_operands = 0 : i64, tpu.core_type = #tpu.core_type<tc>, window_params = [{pipeline_mode = #tpu.pipeline_mode<synchronous>, transform_indices = @transform_0, window_bounds = array<i64: 28, 2>}, {transform_indices = @transform_1, window_bounds = array<i64: 32, 2, 2>}, {pipeline_mode = #tpu.pipeline_mode<synchronous>, transform_indices = @transform_2, window_bounds = array<i64: 2, 28>}, {pipeline_mode = #tpu.pipeline_mode<synchronous>, transform_indices = @transform_3, window_bounds = array<i64: 28, 28>}, {transform_indices = @transform_4, window_bounds = array<i64: 32, 28, 28>}]} {
    %c0 = arith.constant 0 : index
    %c0_0 = arith.constant 0 : index
    %c0_1 = arith.constant 0 : index
    %0 = vector.load %arg2[%c0, %c0_0, %c0_1] : memref<32x2x2xf32, #tpu.memory_space<vmem>>, vector<32x2x2xf32>
    %c0_2 = arith.constant 0 : index
    %c0_3 = arith.constant 0 : index
    %1 = vector.load %arg3[%c0_2, %c0_3] : memref<2x28xf32, #tpu.memory_space<vmem>>, vector<2x28xf32>
    %2 = vector.shape_cast %1 : vector<2x28xf32> to vector<1x2x28xf32>
    %3 = vector.shape_cast %2 : vector<1x2x28xf32> to vector<1x2x28xf32>
    %4 = vector.broadcast %3 : vector<1x2x28xf32> to vector<32x2x28xf32>
    %c0_4 = arith.constant 0 : index
    %c0_5 = arith.constant 0 : index
    %5 = vector.load %arg1[%c0_4, %c0_5] : memref<28x2xf32, #tpu.memory_space<vmem>>, vector<28x2xf32>
    %6 = vector.shape_cast %5 : vector<28x2xf32> to vector<1x28x2xf32>
    %7 = vector.shape_cast %6 : vector<1x28x2xf32> to vector<1x28x2xf32>
    %8 = vector.broadcast %7 : vector<1x28x2xf32> to vector<32x28x2xf32>
    "tpu.trace_start"() <{level = 10 : i32, message = "cyp,cpx->cyx"}> : () -> ()
    %cst = arith.constant dense<0.000000e+00> : vector<32x2x28xf32>
    %9 = tpu.matmul %0, %4, %cst {dimension_numbers = #tpu.dot_dimension_numbers<[2], [1], [1], [2], [0, 0, 0, 1, 1, 2], [0], [0]>} : vector<32x2x2xf32>, vector<32x2x28xf32>, vector<32x2x28xf32> -> vector<32x2x28xf32>
    "tpu.trace_stop"() : () -> ()
    "tpu.trace_start"() <{level = 10 : i32, message = "chy,cyx->chx"}> : () -> ()
    %cst_6 = arith.constant dense<0.000000e+00> : vector<32x28x28xf32>
    %10 = tpu.matmul %8, %9, %cst_6 {dimension_numbers = #tpu.dot_dimension_numbers<[2], [1], [1], [2], [0, 0, 0, 1, 1, 2], [0], [0]>} : vector<32x28x2xf32>, vector<32x2x28xf32>, vector<32x28x28xf32> -> vector<32x28x28xf32>
    "tpu.trace_stop"() : () -> ()
    %c0_7 = arith.constant 0 : index
    %c0_8 = arith.constant 0 : index
    %11 = vector.load %arg4[%c0_7, %c0_8] : memref<28x28xf32, #tpu.memory_space<vmem>>, vector<28x28xf32>
    %cst_9 = arith.constant 0.000000e+00 : f32
    %12 = vector.broadcast %cst_9 : f32 to vector<28x28xf32>
    %13 = arith.cmpf one, %11, %12 : vector<28x28xf32>
    %cst_10 = arith.constant 0.000000e+00 : f32
    %14 = vector.shape_cast %13 : vector<28x28xi1> to vector<1x28x28xi1>
    %15 = vector.broadcast %14 : vector<1x28x28xi1> to vector<32x28x28xi1>
    %16 = vector.broadcast %cst_10 : f32 to vector<32x28x28xf32>
    %17 = arith.select %15, %10, %16 : vector<32x28x28xi1>, vector<32x28x28xf32>
    %c0_11 = arith.constant 0 : index
    %c0_12 = arith.constant 0 : index
    %c0_13 = arith.constant 0 : index
    %18 = vector.load %arg5[%c0_11, %c0_12, %c0_13] : memref<32x28x28xf32, #tpu.memory_space<vmem>>, vector<32x28x28xf32>
    tpu.vector_store %arg5[%c0_11, %c0_12, %c0_13], %17 {strides = array<i32>} : memref<32x28x28xf32, #tpu.memory_space<vmem>>, vector<32x28x28xf32>,
    return
  }
  func.func @transform_0(%arg0: i32) -> (i32, i32) {
    %c0_i32 = arith.constant 0 : i32
    %c0_i32_0 = arith.constant 0 : i32
    %c0_i32_1 = arith.constant 0 : i32
    return %c0_i32, %c0_i32_0 : i32, i32
  }
  func.func @transform_1(%arg0: i32) -> (i32, i32, i32) {
    %c0_i32 = arith.constant 0 : i32
    %c0_i32_0 = arith.constant 0 : i32
    %c0_i32_1 = arith.constant 0 : i32
    return %arg0, %c0_i32, %c0_i32_0 : i32, i32, i32
  }
  func.func @transform_2(%arg0: i32) -> (i32, i32) {
    %c0_i32 = arith.constant 0 : i32
    %c0_i32_0 = arith.constant 0 : i32
    %c0_i32_1 = arith.constant 0 : i32
    return %c0_i32, %c0_i32_0 : i32, i32
  }
  func.func @transform_3(%arg0: i32) -> (i32, i32) {
    %c0_i32 = arith.constant 0 : i32
    %c0_i32_0 = arith.constant 0 : i32
    %c0_i32_1 = arith.constant 0 : i32
    return %c0_i32, %c0_i32_0 : i32, i32
  }
  func.func @transform_4(%arg0: i32) -> (i32, i32, i32) {
    %c0_i32 = arith.constant 0 : i32
    %c0_i32_0 = arith.constant 0 : i32
    %c0_i32_1 = arith.constant 0 : i32
    return %arg0, %c0_i32, %c0_i32_0 : i32, i32, i32
  }
}

</mosaic_0001>

<llo_original>
// kernel: dinov2_mid_encoder_forward.3
$region0: #{dinov2_mid_encoder_forward.3}
  #allocation0 [shape = 'u32[]', space=smem, size = 0x4, offset = 0x4, fixed_abs, tag = 'smem constant byte address 0x4 - core index']
  #allocation1 [shape = 'u32[72,128]{1,0:T(1,128)}', space=vmem, size = 0x9000, scoped, tag = 'internal scratch']
  %s0 = inlined_call_operand.vmem [shape: f32[28,2], index: 0, kind: input, shape index: {}]
  %s1 = inlined_call_operand.vmem [shape: f32[128,2,2], index: 1, kind: input, shape index: {}]
  %s2 = inlined_call_operand.vmem [shape: f32[2,28], index: 2, kind: input, shape index: {}]
  %s3 = inlined_call_operand.vmem [shape: f32[28,28], index: 3, kind: input, shape index: {}]
  %s4 = inlined_call_operand.vmem [shape: f32[128,28,28], index: 4, kind: output, shape index: {}]
  %s5 = sld [smem:[#allocation0]]
  $region49: #{dinov2_mid_encoder_forward.3} parent=0
    _
  %s7 = ssub.s32 1, %s5
  %s8 = scalar_select 0, %s7, %s5
  loop: start=0, step=1, limit=6
  $region2: #{dinov2_mid_encoder_forward.3} parent=0 // loop_pre_header
    _
  $region3: #{dinov2_mid_encoder_forward.3} parent=0 // loop_header
    %s10 = sphi 0, %s14
    %p11 = scmp.ge.s32.totalorder %s10, 6
    %s18 = sphi 0, %s18
    %s20 = sphi 0, %s18
    %s21 = sphi 0, %s20
    %s35 = sphi 0, %s21
    %s41 = sphi 0, %s43
    %s44 = sphi 0, %s41
    %s45 = sphi 0, %s44
    %s61 = sphi 0, %s45
    %s65 = sphi 0, %s65
    %s67 = sphi 0, %s65
    %s68 = sphi 0, %s67
    %s82 = sphi 0, %s68
    %s86 = sphi 0, %s86
    %s88 = sphi 0, %s86
    %s89 = sphi 0, %s88
    %s103 = sphi 0, %s89
    %s109 = sphi 0, %s111
    %s112 = sphi 0, %s109
    %s113 = sphi 0, %s112
    %s129 = sphi 0, %s113
  $region4: #{dinov2_mid_encoder_forward.3} parent=0 // loop_header_branch
    %13 = sbr.rel (%p11) target = $region8
  $region5: #{dinov2_mid_encoder_forward.3} parent=0 // loop_body
    %s15 = ssub.s32 %s10, 1
    %s16 = ssub.s32 %s10, 2
    %s17 = sadd.s32 %s10, 1
    %s19 = sadd.s32 %s18, 1
    %p22 = scmp.eq.s32.totalorder %s10, 3
    %p23 = scmp.ne.s32.totalorder %s18, %s20
    %p24 = scmp.eq.s32.totalorder %s10, 0
    %p25 = por %p23, %p24
    %p26 = scmp.ne.s32.totalorder %s18, %s20
    %p27 = scmp.eq.s32.totalorder %s15, 3
    %p28 = por %p26, %p27
    %p29 = scmp.ne.s32.totalorder %s20, %s21
    %p30 = scmp.eq.s32.totalorder %s15, 0
    %p31 = por %p29, %p30
    %p32 = scmp.ne.s32.totalorder %s20, %s21
    %p33 = scmp.eq.s32.totalorder %s16, 3
    %p34 = por %p32, %p33
    %p36 = scmp.ne.s32.totalorder %s21, %s35
    %p37 = scmp.eq.s32.totalorder %s16, 0
    %p38 = por %p36, %p37
    %s39 = ssub.s32 %s10, %s17
    %p40 = scmp.eq.s32.totalorder %s39, 0
    %s42 = sadd.s32 %s41, 1
    %s43 = scalar_select %p40, %s41, %s42
    %p46 = pneg %p40
    %p47 = scmp.eq.s32.totalorder %s10, 3
    %p48 = por %p46, %p47
    %p49 = scmp.ne.s32.totalorder %s41, %s44
    %p50 = scmp.eq.s32.totalorder %s10, 0
    %p51 = por %p49, %p50
    %p52 = scmp.ne.s32.totalorder %s41, %s44
    %p53 = scmp.eq.s32.totalorder %s15, 3
    %p54 = por %p52, %p53
    %p55 = scmp.ne.s32.totalorder %s44, %s45
    %p56 = scmp.eq.s32.totalorder %s15, 0
    %p57 = por %p55, %p56
    %p58 = scmp.ne.s32.totalorder %s44, %s45
    %p59 = scmp.eq.s32.totalorder %s16, 3
    %p60 = por %p58, %p59
    %p62 = scmp.ne.s32.totalorder %s45, %s61
    %p63 = scmp.eq.s32.totalorder %s16, 0
    %p64 = por %p62, %p63
    %s66 = sadd.s32 %s65, 1
    %p69 = scmp.eq.s32.totalorder %s10, 3
    %p70 = scmp.ne.s32.totalorder %s65, %s67
    %p71 = scmp.eq.s32.totalorder %s10, 0
    %p72 = por %p70, %p71
    %p73 = scmp.ne.s32.totalorder %s65, %s67
    %p74 = scmp.eq.s32.totalorder %s15, 3
    %p75 = por %p73, %p74
    %p76 = scmp.ne.s32.totalorder %s67, %s68
    %p77 = scmp.eq.s32.totalorder %s15, 0
    %p78 = por %p76, %p77
    %p79 = scmp.ne.s32.totalorder %s67, %s68
    %p80 = scmp.eq.s32.totalorder %s16, 3
    %p81 = por %p79, %p80
    %p83 = scmp.ne.s32.totalorder %s68, %s82
    %p84 = scmp.eq.s32.totalorder %s16, 0
    %p85 = por %p83, %p84
    %s87 = sadd.s32 %s86, 1
    %p90 = scmp.eq.s32.totalorder %s10, 3
    %p91 = scmp.ne.s32.totalorder %s86, %s88
    %p92 = scmp.eq.s32.totalorder %s10, 0
    %p93 = por %p91, %p92
    %p94 = scmp.ne.s32.totalorder %s86, %s88
    %p95 = scmp.eq.s32.totalorder %s15, 3
    %p96 = por %p94, %p95
    %p97 = scmp.ne.s32.totalorder %s88, %s89
    %p98 = scmp.eq.s32.totalorder %s15, 0
    %p99 = por %p97, %p98
    %p100 = scmp.ne.s32.totalorder %s88, %s89
    %p101 = scmp.eq.s32.totalorder %s16, 3
    %p102 = por %p100, %p101
    %p104 = scmp.ne.s32.totalorder %s89, %s103
    %p105 = scmp.eq.s32.totalorder %s16, 0
    %p106 = por %p104, %p105
    %s107 = ssub.s32 %s10, %s17
    %p108 = scmp.eq.s32.totalorder %s107, 0
    %s110 = sadd.s32 %s109, 1
    %s111 = scalar_select %p108, %s109, %s110
    %p114 = pneg %p108
    %p115 = scmp.eq.s32.totalorder %s10, 3
    %p116 = por %p114, %p115
    %p117 = scmp.ne.s32.totalorder %s109, %s112
    %p118 = scmp.eq.s32.totalorder %s10, 0
    %p119 = por %p117, %p118
    %p120 = scmp.ne.s32.totalorder %s109, %s112
    %p121 = scmp.eq.s32.totalorder %s15, 3
    %p122 = por %p120, %p121
    %p123 = scmp.ne.s32.totalorder %s112, %s113
    %p124 = scmp.eq.s32.totalorder %s15, 0
    %p125 = por %p123, %p124
    %p126 = scmp.ne.s32.totalorder %s112, %s113
    %p127 = scmp.eq.s32.totalorder %s16, 3
    %p128 = por %p126, %p127
    %p130 = scmp.ne.s32.totalorder %s113, %s129
    %p131 = scmp.eq.s32.totalorder %s16, 0
    %p132 = por %p130, %p131
    %p133 = scmp.le.s32.totalorder 1, %s10
    %p134 = scmp.lt.s32.totalorder %s10, 5
    %p135 = pnand %p133, %p134
    %p136 = pneg %p135
    // Predicated region
    $region9: #{dinov2_mid_encoder_forward.3} parent=5 // pred_check
      _
    $region10: #{dinov2_mid_encoder_forward.3} parent=5 // pred_check_branch
      %138 = sbr.rel (%p135) target = $region12
    $region11: #{dinov2_mid_encoder_forward.3} parent=5 // pred_region
      %s139 = ssub.s32 %s10, 1
      // Predicated region
      $region13: #{dinov2_mid_encoder_forward.3} parent=11 // pred_check
        %p140 = pneg %p31
      $region14: #{dinov2_mid_encoder_forward.3} parent=11 // pred_check_branch
        %142 = sbr.rel (%p140) target = $region16
      $region15: #{dinov2_mid_encoder_forward.3} parent=11 // pred_region
        _
      $region16: #{dinov2_mid_encoder_forward.3} parent=11 // pred_fallthru
        _
      // Predicated region
      $region17: #{dinov2_mid_encoder_forward.3} parent=11 // pred_check
        %p143 = pneg %p78
      $region18: #{dinov2_mid_encoder_forward.3} parent=11 // pred_check_branch
        %145 = sbr.rel (%p143) target = $region20
      $region19: #{dinov2_mid_encoder_forward.3} parent=11 // pred_region
        _
      $region20: #{dinov2_mid_encoder_forward.3} parent=11 // pred_fallthru
        _
      // Predicated region
      $region21: #{dinov2_mid_encoder_forward.3} parent=11 // pred_check
        %p146 = pneg %p99
      $region22: #{dinov2_mid_encoder_forward.3} parent=11 // pred_check_branch
        %148 = sbr.rel (%p146) target = $region24
      $region23: #{dinov2_mid_encoder_forward.3} parent=11 // pred_region
        _
      $region24: #{dinov2_mid_encoder_forward.3} parent=11 // pred_fallthru
        _
    $region12: #{dinov2_mid_encoder_forward.3} parent=5 // pred_fallthru
      _
    %p149 = scmp.lt.s32.totalorder %s10, 4
    // Predicated region
    $region25: #{dinov2_mid_encoder_forward.3} parent=5 // pred_check
      %p150 = pneg %p149
    $region26: #{dinov2_mid_encoder_forward.3} parent=5 // pred_check_branch
      %152 = sbr.rel (%p150) target = $region28
    $region27: #{dinov2_mid_encoder_forward.3} parent=5 // pred_region
      // Predicated region
      $region29: #{dinov2_mid_encoder_forward.3} parent=27 // pred_check
        %p153 = pneg %p51
      $region30: #{dinov2_mid_encoder_forward.3} parent=27 // pred_check_branch
        %155 = sbr.rel (%p153) target = $region32
      $region31: #{dinov2_mid_encoder_forward.3} parent=27 // pred_region
        %s156 = smul.u32 32, %s10
        %p157 = scmp.lt.s32.totalorder %s156, 127
        %s158 = scalar_select %p157, %s156, 127
        %s159 = smul.addr %s158, 2
        %s160 = scalar_lea.vmem %s1, %s159
        %s161 = smul.u32 32, %s10
      $region32: #{dinov2_mid_encoder_forward.3} parent=27 // pred_fallthru
        _
    $region28: #{dinov2_mid_encoder_forward.3} parent=5 // pred_fallthru
      _
    %p162 = scmp.le.s32.totalorder 1, %s10
    %p163 = scmp.lt.s32.totalorder %s10, 5
    %p164 = pnand %p162, %p163
    %p165 = pneg %p164
    // Predicated region
    $region33: #{dinov2_mid_encoder_forward.3} parent=5 // pred_check
      _
    $region34: #{dinov2_mid_encoder_forward.3} parent=5 // pred_check_branch
      %167 = sbr.rel (%p164) target = $region36
    $region35: #{dinov2_mid_encoder_forward.3} parent=5 // pred_region
      %s168 = ssub.s32 %s10, 1
      %p169 = pneg %p31
      %p170 = pneg %p28
      %s171 = smul.u32 32, %s15
      %p172 = scmp.lt.s32.totalorder %s171, 127
      %s173 = scalar_select %p172, %s171, 127
      %s174 = smul.addr %s173, 2
      %s175 = scalar_lea.vmem %s1, %s174
      %p176 = pneg %p57
      %p177 = pneg %p54
      %p178 = pneg %p78
      %p179 = pneg %p75
      %p180 = pneg %p99
      %p181 = pneg %p96
      %p182 = pneg %p125
      %p183 = pneg %p122
      %s184 = smul.u32 32, %s15
      %p185 = scmp.lt.s32.totalorder %s184, 127
      %s186 = scalar_select %p185, %s184, 127
      %s187 = smul.addr %s186, 4
      %s188 = smul.addr %s187, 8
      %s189 = scalar_lea.vmem %s4, %s188
      %s190 = smul.u32 32, %s15
      %p191 = scmp.lt.s32.totalorder %s190, 127
      %s192 = scalar_select %p191, %s190, 127
      %s193 = smul.addr %s192, 2
      %s194 = scalar_lea.vmem %s1, %s193
      %s195 = smul.u32 32, %s15
      %s196 = smul.u32 32, %s15
      %p197 = scmp.lt.s32.totalorder %s196, 127
      %s198 = scalar_select %p197, %s196, 127
      %s199 = smul.addr %s198, 4
      %s200 = smul.addr %s199, 8
      %s201 = scalar_lea.vmem %s4, %s200
      %s202 = smul.u32 32, %s15
      %v203 = vld [vmem:[%s194] sm:$0x3]
      %v204 = vld [vmem:[%s194 + $0x2] sm:$0x3]
      %v205 = vld [vmem:[%s194 + $0x4] sm:$0x3]
      %v206 = vld [vmem:[%s194 + $0x6] sm:$0x3]
      %v207 = vld [vmem:[%s194 + $0x8] sm:$0x3]
      %v208 = vld [vmem:[%s194 + $0xa] sm:$0x3]
      %v209 = vld [vmem:[%s194 + $0xc] sm:$0x3]
      %v210 = vld [vmem:[%s194 + $0xe] sm:$0x3]
      %v211 = vld [vmem:[%s194 + $0x10] sm:$0x3]
      %v212 = vld [vmem:[%s194 + $0x12] sm:$0x3]
      %v213 = vld [vmem:[%s194 + $0x14] sm:$0x3]
      %v214 = vld [vmem:[%s194 + $0x16] sm:$0x3]
      %v215 = vld [vmem:[%s194 + $0x18] sm:$0x3]
      %v216 = vld [vmem:[%s194 + $0x1a] sm:$0x3]
      %v217 = vld [vmem:[%s194 + $0x1c] sm:$0x3]
      %v218 = vld [vmem:[%s194 + $0x1e] sm:$0x3]
      %v219 = vld [vmem:[%s194 + $0x20] sm:$0x3]
      %v220 = vld [vmem:[%s194 + $0x22] sm:$0x3]
      %v221 = vld [vmem:[%s194 + $0x24] sm:$0x3]
      %v222 = vld [vmem:[%s194 + $0x26] sm:$0x3]
      %v223 = vld [vmem:[%s194 + $0x28] sm:$0x3]
      %v224 = vld [vmem:[%s194 + $0x2a] sm:$0x3]
      %v225 = vld [vmem:[%s194 + $0x2c] sm:$0x3]
      %v226 = vld [vmem:[%s194 + $0x2e] sm:$0x3]
      %v227 = vld [vmem:[%s194 + $0x30] sm:$0x3]
      %v228 = vld [vmem:[%s194 + $0x32] sm:$0x3]
      %v229 = vld [vmem:[%s194 + $0x34] sm:$0x3]
      %v230 = vld [vmem:[%s194 + $0x36] sm:$0x3]
      %v231 = vld [vmem:[%s194 + $0x38] sm:$0x3]
      %v232 = vld [vmem:[%s194 + $0x3a] sm:$0x3]
      %v233 = vld [vmem:[%s194 + $0x3c] sm:$0x3]
      %v234 = vld [vmem:[%s194 + $0x3e] sm:$0x3]
      %v235 = vld [vmem:[%s2] sm:$0x3]
      %v236 = vld [vmem:[%s0] sm:$0xff]
      %v237 = vld [vmem:[%s0 + $0x8] sm:$0xff]
      %v238 = vld [vmem:[%s0 + $0x10] sm:$0xff]
      %v239 = vld [vmem:[%s0 + $0x18] sm:$0xf]
      %vm240 = vcmask 15360
      %v242 = vsel %vm240, %v203, 0
      %vm244 = vcmask 1041408
      %v246 = vsel %vm244, %v235, 0
      %248 = vmatpush.msra.mxu0 0.0
      %249 = vmatpush.msra.mxu0 0.0
      %250 = vmatpush.msra.mxu0 0.0
      %251 = vmatpush.msra.mxu0 0.0
      %252 = vmatpush.msra.mxu0 0.0
      %253 = vmatpush.msra.mxu0 0.0
      %254 = vmatpush.msra.mxu0 0.0
      %255 = vmatpush.msra.mxu0 0.0
      %256 = vmatpush.msra.mxu0 0.0
      %257 = vmatpush.msra.mxu0 0.0
      %258 = vmatpush.msra.mxu0 0.0
      %259 = vmatpush.msra.mxu0 0.0
      %260 = vmatpush.msra.mxu0 0.0
      %261 = vmatpush.msra.mxu0 0.0
      %262 = vmatpush.msra.mxu0 0.0
      %263 = vmatpush.msra.mxu0 %v246
      %264 = vmatmul.f32.gmra.mxu0 %v242
      %v265 = vpop.f32.mrf.mxu0
      %v266 = vadd.f32 0.0, %v265
      %267 = vdwg.mxu0
      %v269 = vsel %vm240, %v204, 0
      %271 = vmatpush.msra.mxu0 0.0
      %272 = vmatpush.msra.mxu0 0.0
      %273 = vmatpush.msra.mxu0 0.0
      %274 = vmatpush.msra.mxu0 0.0
      %275 = vmatpush.msra.mxu0 0.0
      %276 = vmatpush.msra.mxu0 0.0
      %277 = vmatpush.msra.mxu0 0.0
      %278 = vmatpush.msra.mxu0 0.0
      %279 = vmatpush.msra.mxu0 0.0
      %280 = vmatpush.msra.mxu0 0.0
      %281 = vmatpush.msra.mxu0 0.0
      %282 = vmatpush.msra.mxu0 0.0
      %283 = vmatpush.msra.mxu0 0.0
      %284 = vmatpush.msra.mxu0 0.0
      %285 = vmatpush.msra.mxu0 0.0
      %286 = vmatpush.msra.mxu0 %v246
      %287 = vmatmul.f32.gmra.mxu0 %v269
      %v288 = vpop.f32.mrf.mxu0
      %v289 = vadd.f32 0.0, %v288
      %290 = vdwg.mxu0
      %v292 = vsel %vm240, %v205, 0
      %294 = vmatpush.msra.mxu0 0.0
      %295 = vmatpush.msra.mxu0 0.0
      %296 = vmatpush.msra.mxu0 0.0
      %297 = vmatpush.msra.mxu0 0.0
      %298 = vmatpush.msra.mxu0 0.0
      %299 = vmatpush.msra.mxu0 0.0
      %300 = vmatpush.msra.mxu0 0.0
      %301 = vmatpush.msra.mxu0 0.0
      %302 = vmatpush.msra.mxu0 0.0
      %303 = vmatpush.msra.mxu0 0.0
      %304 = vmatpush.msra.mxu0 0.0
      %305 = vmatpush.msra.mxu0 0.0
      %306 = vmatpush.msra.mxu0 0.0
      %307 = vmatpush.msra.mxu0 0.0
      %308 = vmatpush.msra.mxu0 0.0
      %309 = vmatpush.msra.mxu0 %v246
      %310 = vmatmul.f32.gmra.mxu0 %v292
      %v311 = vpop.f32.mrf.mxu0
      %v312 = vadd.f32 0.0, %v311
      %313 = vdwg.mxu0
      %v315 = vsel %vm240, %v206, 0
      %317 = vmatpush.msra.mxu0 0.0
      %318 = vmatpush.msra.mxu0 0.0
      %319 = vmatpush.msra.mxu0 0.0
      %320 = vmatpush.msra.mxu0 0.0
      %321 = vmatpush.msra.mxu0 0.0
      %322 = vmatpush.msra.mxu0 0.0
      %323 = vmatpush.msra.mxu0 0.0
      %324 = vmatpush.msra.mxu0 0.0
      %325 = vmatpush.msra.mxu0 0.0
      %326 = vmatpush.msra.mxu0 0.0
      %327 = vmatpush.msra.mxu0 0.0
      %328 = vmatpush.msra.mxu0 0.0
      %329 = vmatpush.msra.mxu0 0.0
      %330 = vmatpush.msra.mxu0 0.0
      %331 = vmatpush.msra.mxu0 0.0
      %332 = vmatpush.msra.mxu0 %v246
      %333 = vmatmul.f32.gmra.mxu0 %v315
      %v334 = vpop.f32.mrf.mxu0
      %v335 = vadd.f32 0.0, %v334
      %336 = vdwg.mxu0
      %v338 = vsel %vm240, %v207, 0
      %340 = vmatpush.msra.mxu0 0.0
      %341 = vmatpush.msra.mxu0 0.0
      %342 = vmatpush.msra.mxu0 0.0
      %343 = vmatpush.msra.mxu0 0.0
      %344 = vmatpush.msra.mxu0 0.0
      %345 = vmatpush.msra.mxu0 0.0
      %346 = vmatpush.msra.mxu0 0.0
      %347 = vmatpush.msra.mxu0 0.0
      %348 = vmatpush.msra.mxu0 0.0
      %349 = vmatpush.msra.mxu0 0.0
      %350 = vmatpush.msra.mxu0 0.0
      %351 = vmatpush.msra.mxu0 0.0
      %352 = vmatpush.msra.mxu0 0.0
      %353 = vmatpush.msra.mxu0 0.0
      %354 = vmatpush.msra.mxu0 0.0
      %355 = vmatpush.msra.mxu0 %v246
      %356 = vmatmul.f32.gmra.mxu0 %v338
      %v357 = vpop.f32.mrf.mxu0
      %v358 = vadd.f32 0.0, %v357
      %359 = vdwg.mxu0
      %v361 = vsel %vm240, %v208, 0
      %363 = vmatpush.msra.mxu0 0.0
      %364 = vmatpush.msra.mxu0 0.0
      %365 = vmatpush.msra.mxu0 0.0
      %366 = vmatpush.msra.mxu0 0.0
      %367 = vmatpush.msra.mxu0 0.0
      %368 = vmatpush.msra.mxu0 0.0
      %369 = vmatpush.msra.mxu0 0.0
      %370 = vmatpush.msra.mxu0 0.0
      %371 = vmatpush.msra.mxu0 0.0
      %372 = vmatpush.msra.mxu0 0.0
      %373 = vmatpush.msra.mxu0 0.0
      %374 = vmatpush.msra.mxu0 0.0
      %375 = vmatpush.msra.mxu0 0.0
      %376 = vmatpush.msra.mxu0 0.0
      %377 = vmatpush.msra.mxu0 0.0
      %378 = vmatpush.msra.mxu0 %v246
      %379 = vmatmul.f32.gmra.mxu0 %v361
      %v380 = vpop.f32.mrf.mxu0
      %v381 = vadd.f32 0.0, %v380
      %382 = vdwg.mxu0
      %v384 = vsel %vm240, %v209, 0
      %386 = vmatpush.msra.mxu0 0.0
      %387 = vmatpush.msra.mxu0 0.0
      %388 = vmatpush.msra.mxu0 0.0
      %389 = vmatpush.msra.mxu0 0.0
      %390 = vmatpush.msra.mxu0 0.0
      %391 = vmatpush.msra.mxu0 0.0
      %392 = vmatpush.msra.mxu0 0.0
      %393 = vmatpush.msra.mxu0 0.0
      %394 = vmatpush.msra.mxu0 0.0
      %395 = vmatpush.msra.mxu0 0.0
      %396 = vmatpush.msra.mxu0 0.0
      %397 = vmatpush.msra.mxu0 0.0
      %398 = vmatpush.msra.mxu0 0.0
      %399 = vmatpush.msra.mxu0 0.0
      %400 = vmatpush.msra.mxu0 0.0
      %401 = vmatpush.msra.mxu0 %v246
      %402 = vmatmul.f32.gmra.mxu0 %v384
      %v403 = vpop.f32.mrf.mxu0
      %v404 = vadd.f32 0.0, %v403
      %405 = vdwg.mxu0
      %v407 = vsel %vm240, %v210, 0
      %409 = vmatpush.msra.mxu0 0.0
      %410 = vmatpush.msra.mxu0 0.0
      %411 = vmatpush.msra.mxu0 0.0
      %412 = vmatpush.msra.mxu0 0.0
      %413 = vmatpush.msra.mxu0 0.0
      %414 = vmatpush.msra.mxu0 0.0
      %415 = vmatpush.msra.mxu0 0.0
      %416 = vmatpush.msra.mxu0 0.0
      %417 = vmatpush.msra.mxu0 0.0
      %418 = vmatpush.msra.mxu0 0.0
      %419 = vmatpush.msra.mxu0 0.0
      %420 = vmatpush.msra.mxu0 0.0
      %421 = vmatpush.msra.mxu0 0.0
      %422 = vmatpush.msra.mxu0 0.0
      %423 = vmatpush.msra.mxu0 0.0
      %424 = vmatpush.msra.mxu0 %v246
      %425 = vmatmul.f32.gmra.mxu0 %v407
      %v426 = vpop.f32.mrf.mxu0
      %v427 = vadd.f32 0.0, %v426
      %428 = vdwg.mxu0
      %v430 = vsel %vm240, %v211, 0
      %432 = vmatpush.msra.mxu0 0.0
      %433 = vmatpush.msra.mxu0 0.0
      %434 = vmatpush.msra.mxu0 0.0
      %435 = vmatpush.msra.mxu0 0.0
      %436 = vmatpush.msra.mxu0 0.0
      %437 = vmatpush.msra.mxu0 0.0
      %438 = vmatpush.msra.mxu0 0.0
      %439 = vmatpush.msra.mxu0 0.0
      %440 = vmatpush.msra.mxu0 0.0
      %441 = vmatpush.msra.mxu0 0.0
      %442 = vmatpush.msra.mxu0 0.0
      %443 = vmatpush.msra.mxu0 0.0
      %444 = vmatpush.msra.mxu0 0.0
      %445 = vmatpush.msra.mxu0 0.0
      %446 = vmatpush.msra.mxu0 0.0
      %447 = vmatpush.msra.mxu0 %v246
      %448 = vmatmul.f32.gmra.mxu0 %v430
      %v449 = vpop.f32.mrf.mxu0
      %v450 = vadd.f32 0.0, %v449
      %451 = vdwg.mxu0
      %v453 = vsel %vm240, %v212, 0
      %455 = vmatpush.msra.mxu0 0.0
      %456 = vmatpush.msra.mxu0 0.0
      %457 = vmatpush.msra.mxu0 0.0
      %458 = vmatpush.msra.mxu0 0.0
      %459 = vmatpush.msra.mxu0 0.0
      %460 = vmatpush.msra.mxu0 0.0
      %461 = vmatpush.msra.mxu0 0.0
      %462 = vmatpush.msra.mxu0 0.0
      %463 = vmatpush.msra.mxu0 0.0
      %464 = vmatpush.msra.mxu0 0.0
      %465 = vmatpush.msra.mxu0 0.0
      %466 = vmatpush.msra.mxu0 0.0
      %467 = vmatpush.msra.mxu0 0.0
      %468 = vmatpush.msra.mxu0 0.0
      %469 = vmatpush.msra.mxu0 0.0
      %470 = vmatpush.msra.mxu0 %v246
      %471 = vmatmul.f32.gmra.mxu0 %v453
      %v472 = vpop.f32.mrf.mxu0
      %v473 = vadd.f32 0.0, %v472
      %474 = vdwg.mxu0
      %v476 = vsel %vm240, %v213, 0
      %478 = vmatpush.msra.mxu0 0.0
      %479 = vmatpush.msra.mxu0 0.0
      %480 = vmatpush.msra.mxu0 0.0
      %481 = vmatpush.msra.mxu0 0.0
      %482 = vmatpush.msra.mxu0 0.0
      %483 = vmatpush.msra.mxu0 0.0
      %484 = vmatpush.msra.mxu0 0.0
      %485 = vmatpush.msra.mxu0 0.0
      %486 = vmatpush.msra.mxu0 0.0
      %487 = vmatpush.msra.mxu0 0.0
      %488 = vmatpush.msra.mxu0 0.0
      %489 = vmatpush.msra.mxu0 0.0
      %490 = vmatpush.msra.mxu0 0.0
      %491 = vmatpush.msra.mxu0 0.0
      %492 = vmatpush.msra.mxu0 0.0
      %493 = vmatpush.msra.mxu0 %v246
      %494 = vmatmul.f32.gmra.mxu0 %v476
      %v495 = vpop.f32.mrf.mxu0
      %v496 = vadd.f32 0.0, %v495
      %497 = vdwg.mxu0
      %v499 = vsel %vm240, %v214, 0
      %501 = vmatpush.msra.mxu0 0.0
      %502 = vmatpush.msra.mxu0 0.0
      %503 = vmatpush.msra.mxu0 0.0
      %504 = vmatpush.msra.mxu0 0.0
      %505 = vmatpush.msra.mxu0 0.0
      %506 = vmatpush.msra.mxu0 0.0
      %507 = vmatpush.msra.mxu0 0.0
      %508 = vmatpush.msra.mxu0 0.0
      %509 = vmatpush.msra.mxu0 0.0
      %510 = vmatpush.msra.mxu0 0.0
      %511 = vmatpush.msra.mxu0 0.0
      %512 = vmatpush.msra.mxu0 0.0
      %513 = vmatpush.msra.mxu0 0.0
      %514 = vmatpush.msra.mxu0 0.0
      %515 = vmatpush.msra.mxu0 0.0
      %516 = vmatpush.msra.mxu0 %v246
      %517 = vmatmul.f32.gmra.mxu0 %v499
      %v518 = vpop.f32.mrf.mxu0
      %v519 = vadd.f32 0.0, %v518
      %520 = vdwg.mxu0
      %v522 = vsel %vm240, %v215, 0
      %524 = vmatpush.msra.mxu0 0.0
      %525 = vmatpush.msra.mxu0 0.0
      %526 = vmatpush.msra.mxu0 0.0
      %527 = vmatpush.msra.mxu0 0.0
      %528 = vmatpush.msra.mxu0 0.0
      %529 = vmatpush.msra.mxu0 0.0
      %530 = vmatpush.msra.mxu0 0.0
      %531 = vmatpush.msra.mxu0 0.0
      %532 = vmatpush.msra.mxu0 0.0
      %533 = vmatpush.msra.mxu0 0.0
      %534 = vmatpush.msra.mxu0 0.0
      %535 = vmatpush.msra.mxu0 0.0
      %536 = vmatpush.msra.mxu0 0.0
      %537 = vmatpush.msra.mxu0 0.0
      %538 = vmatpush.msra.mxu0 0.0
      %539 = vmatpush.msra.mxu0 %v246
      %540 = vmatmul.f32.gmra.mxu0 %v522
      %v541 = vpop.f32.mrf.mxu0
      %v542 = vadd.f32 0.0, %v541
      %543 = vdwg.mxu0
      %v545 = vsel %vm240, %v216, 0
      %547 = vmatpush.msra.mxu0 0.0
      %548 = vmatpush.msra.mxu0 0.0
      %549 = vmatpush.msra.mxu0 0.0
      %550 = vmatpush.msra.mxu0 0.0
      %551 = vmatpush.msra.mxu0 0.0
      %552 = vmatpush.msra.mxu0 0.0
      %553 = vmatpush.msra.mxu0 0.0
      %554 = vmatpush.msra.mxu0 0.0
      %555 = vmatpush.msra.mxu0 0.0
      %556 = vmatpush.msra.mxu0 0.0
      %557 = vmatpush.msra.mxu0 0.0
      %558 = vmatpush.msra.mxu0 0.0
      %559 = vmatpush.msra.mxu0 0.0
      %560 = vmatpush.msra.mxu0 0.0
      %561 = vmatpush.msra.mxu0 0.0
      %562 = vmatpush.msra.mxu0 %v246
      %563 = vmatmul.f32.gmra.mxu0 %v545
      %v564 = vpop.f32.mrf.mxu0
      %v565 = vadd.f32 0.0, %v564
      %566 = vdwg.mxu0
      %v568 = vsel %vm240, %v217, 0
      %570 = vmatpush.msra.mxu0 0.0
      %571 = vmatpush.msra.mxu0 0.0
      %572 = vmatpush.msra.mxu0 0.0
      %573 = vmatpush.msra.mxu0 0.0
      %574 = vmatpush.msra.mxu0 0.0
      %575 = vmatpush.msra.mxu0 0.0
      %576 = vmatpush.msra.mxu0 0.0
      %577 = vmatpush.msra.mxu0 0.0
      %578 = vmatpush.msra.mxu0 0.0
      %579 = vmatpush.msra.mxu0 0.0
      %580 = vmatpush.msra.mxu0 0.0
      %581 = vmatpush.msra.mxu0 0.0
      %582 = vmatpush.msra.mxu0 0.0
      %583 = vmatpush.msra.mxu0 0.0
      %584 = vmatpush.msra.mxu0 0.0
      %585 = vmatpush.msra.mxu0 %v246
      %586 = vmatmul.f32.gmra.mxu0 %v568
      %v587 = vpop.f32.mrf.mxu0
      %v588 = vadd.f32 0.0, %v587
      %589 = vdwg.mxu0
      %v591 = vsel %vm240, %v218, 0
      %593 = vmatpush.msra.mxu0 0.0
      %594 = vmatpush.msra.mxu0 0.0
      %595 = vmatpush.msra.mxu0 0.0
      %596 = vmatpush.msra.mxu0 0.0
      %597 = vmatpush.msra.mxu0 0.0
      %598 = vmatpush.msra.mxu0 0.0
      %599 = vmatpush.msra.mxu0 0.0
      %600 = vmatpush.msra.mxu0 0.0
      %601 = vmatpush.msra.mxu0 0.0
      %602 = vmatpush.msra.mxu0 0.0
      %603 = vmatpush.msra.mxu0 0.0
      %604 = vmatpush.msra.mxu0 0.0
      %605 = vmatpush.msra.mxu0 0.0
      %606 = vmatpush.msra.mxu0 0.0
      %607 = vmatpush.msra.mxu0 0.0
      %608 = vmatpush.msra.mxu0 %v246
      %609 = vmatmul.f32.gmra.mxu0 %v591
      %v610 = vpop.f32.mrf.mxu0
      %v611 = vadd.f32 0.0, %v610
      %612 = vdwg.mxu0
      %v614 = vsel %vm240, %v219, 0
      %616 = vmatpush.msra.mxu0 0.0
      %617 = vmatpush.msra.mxu0 0.0
      %618 = vmatpush.msra.mxu0 0.0
      %619 = vmatpush.msra.mxu0 0.0
      %620 = vmatpush.msra.mxu0 0.0
      %621 = vmatpush.msra.mxu0 0.0
      %622 = vmatpush.msra.mxu0 0.0
      %623 = vmatpush.msra.mxu0 0.0
      %624 = vmatpush.msra.mxu0 0.0
      %625 = vmatpush.msra.mxu0 0.0
      %626 = vmatpush.msra.mxu0 0.0
      %627 = vmatpush.msra.mxu0 0.0
      %628 = vmatpush.msra.mxu0 0.0
      %629 = vmatpush.msra.mxu0 0.0
      %630 = vmatpush.msra.mxu0 0.0
      %631 = vmatpush.msra.mxu0 %v246
      %632 = vmatmul.f32.gmra.mxu0 %v614
      %v633 = vpop.f32.mrf.mxu0
      %v634 = vadd.f32 0.0, %v633
      %635 = vdwg.mxu0
      %v637 = vsel %vm240, %v220, 0
      %639 = vmatpush.msra.mxu0 0.0
      %640 = vmatpush.msra.mxu0 0.0
      %641 = vmatpush.msra.mxu0 0.0
      %642 = vmatpush.msra.mxu0 0.0
      %643 = vmatpush.msra.mxu0 0.0
      %644 = vmatpush.msra.mxu0 0.0
      %645 = vmatpush.msra.mxu0 0.0
      %646 = vmatpush.msra.mxu0 0.0
      %647 = vmatpush.msra.mxu0 0.0
      %648 = vmatpush.msra.mxu0 0.0
      %649 = vmatpush.msra.mxu0 0.0
      %650 = vmatpush.msra.mxu0 0.0
      %651 = vmatpush.msra.mxu0 0.0
      %652 = vmatpush.msra.mxu0 0.0
      %653 = vmatpush.msra.mxu0 0.0
      %654 = vmatpush.msra.mxu0 %v246
      %655 = vmatmul.f32.gmra.mxu0 %v637
      %v656 = vpop.f32.mrf.mxu0
      %v657 = vadd.f32 0.0, %v656
      %658 = vdwg.mxu0
      %v660 = vsel %vm240, %v221, 0
      %662 = vmatpush.msra.mxu0 0.0
      %663 = vmatpush.msra.mxu0 0.0
      %664 = vmatpush.msra.mxu0 0.0
      %665 = vmatpush.msra.mxu0 0.0
      %666 = vmatpush.msra.mxu0 0.0
      %667 = vmatpush.msra.mxu0 0.0
      %668 = vmatpush.msra.mxu0 0.0
      %669 = vmatpush.msra.mxu0 0.0
      %670 = vmatpush.msra.mxu0 0.0
      %671 = vmatpush.msra.mxu0 0.0
      %672 = vmatpush.msra.mxu0 0.0
      %673 = vmatpush.msra.mxu0 0.0
      %674 = vmatpush.msra.mxu0 0.0
      %675 = vmatpush.msra.mxu0 0.0
      %676 = vmatpush.msra.mxu0 0.0
      %677 = vmatpush.msra.mxu0 %v246
      %678 = vmatmul.f32.gmra.mxu0 %v660
      %v679 = vpop.f32.mrf.mxu0
      %v680 = vadd.f32 0.0, %v679
      %681 = vdwg.mxu0
      %v683 = vsel %vm240, %v222, 0
      %685 = vmatpush.msra.mxu0 0.0
      %686 = vmatpush.msra.mxu0 0.0
      %687 = vmatpush.msra.mxu0 0.0
      %688 = vmatpush.msra.mxu0 0.0
      %689 = vmatpush.msra.mxu0 0.0
      %690 = vmatpush.msra.mxu0 0.0
      %691 = vmatpush.msra.mxu0 0.0
      %692 = vmatpush.msra.mxu0 0.0
      %693 = vmatpush.msra.mxu0 0.0
      %694 = vmatpush.msra.mxu0 0.0
      %695 = vmatpush.msra.mxu0 0.0
      %696 = vmatpush.msra.mxu0 0.0
      %697 = vmatpush.msra.mxu0 0.0
      %698 = vmatpush.msra.mxu0 0.0
      %699 = vmatpush.msra.mxu0 0.0
      %700 = vmatpush.msra.mxu0 %v246
      %701 = vmatmul.f32.gmra.mxu0 %v683
      %v702 = vpop.f32.mrf.mxu0
      %v703 = vadd.f32 0.0, %v702
      %704 = vdwg.mxu0
      %v706 = vsel %vm240, %v223, 0
      %708 = vmatpush.msra.mxu0 0.0
      %709 = vmatpush.msra.mxu0 0.0
      %710 = vmatpush.msra.mxu0 0.0
      %711 = vmatpush.msra.mxu0 0.0
      %712 = vmatpush.msra.mxu0 0.0
      %713 = vmatpush.msra.mxu0 0.0
      %714 = vmatpush.msra.mxu0 0.0
      %715 = vmatpush.msra.mxu0 0.0
      %716 = vmatpush.msra.mxu0 0.0
      %717 = vmatpush.msra.mxu0 0.0
      %718 = vmatpush.msra.mxu0 0.0
      %719 = vmatpush.msra.mxu0 0.0
      %720 = vmatpush.msra.mxu0 0.0
      %721 = vmatpush.msra.mxu0 0.0
      %722 = vmatpush.msra.mxu0 0.0
      %723 = vmatpush.msra.mxu0 %v246
      %724 = vmatmul.f32.gmra.mxu0 %v706
      %v725 = vpop.f32.mrf.mxu0
      %v726 = vadd.f32 0.0, %v725
      %727 = vdwg.mxu0
      %v729 = vsel %vm240, %v224, 0
      %731 = vmatpush.msra.mxu0 0.0
      %732 = vmatpush.msra.mxu0 0.0
      %733 = vmatpush.msra.mxu0 0.0
      %734 = vmatpush.msra.mxu0 0.0
      %735 = vmatpush.msra.mxu0 0.0
      %736 = vmatpush.msra.mxu0 0.0
      %737 = vmatpush.msra.mxu0 0.0
      %738 = vmatpush.msra.mxu0 0.0
      %739 = vmatpush.msra.mxu0 0.0
      %740 = vmatpush.msra.mxu0 0.0
      %741 = vmatpush.msra.mxu0 0.0
      %742 = vmatpush.msra.mxu0 0.0
      %743 = vmatpush.msra.mxu0 0.0
      %744 = vmatpush.msra.mxu0 0.0
      %745 = vmatpush.msra.mxu0 0.0
      %746 = vmatpush.msra.mxu0 %v246
      %747 = vmatmul.f32.gmra.mxu0 %v729
      %v748 = vpop.f32.mrf.mxu0
      %v749 = vadd.f32 0.0, %v748
      %750 = vdwg.mxu0
      %v752 = vsel %vm240, %v225, 0
      %754 = vmatpush.msra.mxu0 0.0
      %755 = vmatpush.msra.mxu0 0.0
      %756 = vmatpush.msra.mxu0 0.0
      %757 = vmatpush.msra.mxu0 0.0
      %758 = vmatpush.msra.mxu0 0.0
      %759 = vmatpush.msra.mxu0 0.0
      %760 = vmatpush.msra.mxu0 0.0
      %761 = vmatpush.msra.mxu0 0.0
      %762 = vmatpush.msra.mxu0 0.0
      %763 = vmatpush.msra.mxu0 0.0
      %764 = vmatpush.msra.mxu0 0.0
      %765 = vmatpush.msra.mxu0 0.0
      %766 = vmatpush.msra.mxu0 0.0
      %767 = vmatpush.msra.mxu0 0.0
      %768 = vmatpush.msra.mxu0 0.0
      %769 = vmatpush.msra.mxu0 %v246
      %770 = vmatmul.f32.gmra.mxu0 %v752
      %v771 = vpop.f32.mrf.mxu0
      %v772 = vadd.f32 0.0, %v771
      %773 = vdwg.mxu0
      %v775 = vsel %vm240, %v226, 0
      %777 = vmatpush.msra.mxu0 0.0
      %778 = vmatpush.msra.mxu0 0.0
      %779 = vmatpush.msra.mxu0 0.0
      %780 = vmatpush.msra.mxu0 0.0
      %781 = vmatpush.msra.mxu0 0.0
      %782 = vmatpush.msra.mxu0 0.0
      %783 = vmatpush.msra.mxu0 0.0
      %784 = vmatpush.msra.mxu0 0.0
      %785 = vmatpush.msra.mxu0 0.0
      %786 = vmatpush.msra.mxu0 0.0
      %787 = vmatpush.msra.mxu0 0.0
      %788 = vmatpush.msra.mxu0 0.0
      %789 = vmatpush.msra.mxu0 0.0
      %790 = vmatpush.msra.mxu0 0.0
      %791 = vmatpush.msra.mxu0 0.0
      %792 = vmatpush.msra.mxu0 %v246
      %793 = vmatmul.f32.gmra.mxu0 %v775
      %v794 = vpop.f32.mrf.mxu0
      %v795 = vadd.f32 0.0, %v794
      %796 = vdwg.mxu0
      %v798 = vsel %vm240, %v227, 0
      %800 = vmatpush.msra.mxu0 0.0
      %801 = vmatpush.msra.mxu0 0.0
      %802 = vmatpush.msra.mxu0 0.0
      %803 = vmatpush.msra.mxu0 0.0
      %804 = vmatpush.msra.mxu0 0.0
      %805 = vmatpush.msra.mxu0 0.0
      %806 = vmatpush.msra.mxu0 0.0
      %807 = vmatpush.msra.mxu0 0.0
      %808 = vmatpush.msra.mxu0 0.0
      %809 = vmatpush.msra.mxu0 0.0
      %810 = vmatpush.msra.mxu0 0.0
      %811 = vmatpush.msra.mxu0 0.0
      %812 = vmatpush.msra.mxu0 0.0
      %813 = vmatpush.msra.mxu0 0.0
      %814 = vmatpush.msra.mxu0 0.0
      %815 = vmatpush.msra.mxu0 %v246
      %816 = vmatmul.f32.gmra.mxu0 %v798
      %v817 = vpop.f32.mrf.mxu0
      %v818 = vadd.f32 0.0, %v817
      %819 = vdwg.mxu0
      %v821 = vsel %vm240, %v228, 0
      %823 = vmatpush.msra.mxu0 0.0
      %824 = vmatpush.msra.mxu0 0.0
      %825 = vmatpush.msra.mxu0 0.0
      %826 = vmatpush.msra.mxu0 0.0
      %827 = vmatpush.msra.mxu0 0.0
      %828 = vmatpush.msra.mxu0 0.0
      %829 = vmatpush.msra.mxu0 0.0
      %830 = vmatpush.msra.mxu0 0.0
      %831 = vmatpush.msra.mxu0 0.0
      %832 = vmatpush.msra.mxu0 0.0
      %833 = vmatpush.msra.mxu0 0.0
      %834 = vmatpush.msra.mxu0 0.0
      %835 = vmatpush.msra.mxu0 0.0
      %836 = vmatpush.msra.mxu0 0.0
      %837 = vmatpush.msra.mxu0 0.0
      %838 = vmatpush.msra.mxu0 %v246
      %839 = vmatmul.f32.gmra.mxu0 %v821
      %v840 = vpop.f32.mrf.mxu0
      %v841 = vadd.f32 0.0, %v840
      %842 = vdwg.mxu0
      %v844 = vsel %vm240, %v229, 0
      %846 = vmatpush.msra.mxu0 0.0
      %847 = vmatpush.msra.mxu0 0.0
      %848 = vmatpush.msra.mxu0 0.0
      %849 = vmatpush.msra.mxu0 0.0
      %850 = vmatpush.msra.mxu0 0.0
      %851 = vmatpush.msra.mxu0 0.0
      %852 = vmatpush.msra.mxu0 0.0
      %853 = vmatpush.msra.mxu0 0.0
      %854 = vmatpush.msra.mxu0 0.0
      %855 = vmatpush.msra.mxu0 0.0
      %856 = vmatpush.msra.mxu0 0.0
      %857 = vmatpush.msra.mxu0 0.0
      %858 = vmatpush.msra.mxu0 0.0
      %859 = vmatpush.msra.mxu0 0.0
      %860 = vmatpush.msra.mxu0 0.0
      %861 = vmatpush.msra.mxu0 %v246
      %862 = vmatmul.f32.gmra.mxu0 %v844
      %v863 = vpop.f32.mrf.mxu0
      %v864 = vadd.f32 0.0, %v863
      %865 = vdwg.mxu0
      %v867 = vsel %vm240, %v230, 0
      %869 = vmatpush.msra.mxu0 0.0
      %870 = vmatpush.msra.mxu0 0.0
      %871 = vmatpush.msra.mxu0 0.0
      %872 = vmatpush.msra.mxu0 0.0
      %873 = vmatpush.msra.mxu0 0.0
      %874 = vmatpush.msra.mxu0 0.0
      %875 = vmatpush.msra.mxu0 0.0
      %876 = vmatpush.msra.mxu0 0.0
      %877 = vmatpush.msra.mxu0 0.0
      %878 = vmatpush.msra.mxu0 0.0
      %879 = vmatpush.msra.mxu0 0.0
      %880 = vmatpush.msra.mxu0 0.0
      %881 = vmatpush.msra.mxu0 0.0
      %882 = vmatpush.msra.mxu0 0.0
      %883 = vmatpush.msra.mxu0 0.0
      %884 = vmatpush.msra.mxu0 %v246
      %885 = vmatmul.f32.gmra.mxu0 %v867
      %v886 = vpop.f32.mrf.mxu0
      %v887 = vadd.f32 0.0, %v886
      %888 = vdwg.mxu0
      %v890 = vsel %vm240, %v231, 0
      %892 = vmatpush.msra.mxu0 0.0
      %893 = vmatpush.msra.mxu0 0.0
      %894 = vmatpush.msra.mxu0 0.0
      %895 = vmatpush.msra.mxu0 0.0
      %896 = vmatpush.msra.mxu0 0.0
      %897 = vmatpush.msra.mxu0 0.0
      %898 = vmatpush.msra.mxu0 0.0
      %899 = vmatpush.msra.mxu0 0.0
      %900 = vmatpush.msra.mxu0 0.0
      %901 = vmatpush.msra.mxu0 0.0
      %902 = vmatpush.msra.mxu0 0.0
      %903 = vmatpush.msra.mxu0 0.0
      %904 = vmatpush.msra.mxu0 0.0
      %905 = vmatpush.msra.mxu0 0.0
      %906 = vmatpush.msra.mxu0 0.0
      %907 = vmatpush.msra.mxu0 %v246
      %908 = vmatmul.f32.gmra.mxu0 %v890
      %v909 = vpop.f32.mrf.mxu0
      %v910 = vadd.f32 0.0, %v909
      %911 = vdwg.mxu0
      %v913 = vsel %vm240, %v232, 0
      %915 = vmatpush.msra.mxu0 0.0
      %916 = vmatpush.msra.mxu0 0.0
      %917 = vmatpush.msra.mxu0 0.0
      %918 = vmatpush.msra.mxu0 0.0
      %919 = vmatpush.msra.mxu0 0.0
      %920 = vmatpush.msra.mxu0 0.0
      %921 = vmatpush.msra.mxu0 0.0
      %922 = vmatpush.msra.mxu0 0.0
      %923 = vmatpush.msra.mxu0 0.0
      %924 = vmatpush.msra.mxu0 0.0
      %925 = vmatpush.msra.mxu0 0.0
      %926 = vmatpush.msra.mxu0 0.0
      %927 = vmatpush.msra.mxu0 0.0
      %928 = vmatpush.msra.mxu0 0.0
      %929 = vmatpush.msra.mxu0 0.0
      %930 = vmatpush.msra.mxu0 %v246
      %931 = vmatmul.f32.gmra.mxu0 %v913
      %v932 = vpop.f32.mrf.mxu0
      %v933 = vadd.f32 0.0, %v932
      %934 = vdwg.mxu0
      %v936 = vsel %vm240, %v233, 0
      %938 = vmatpush.msra.mxu0 0.0
      %939 = vmatpush.msra.mxu0 0.0
      %940 = vmatpush.msra.mxu0 0.0
      %941 = vmatpush.msra.mxu0 0.0
      %942 = vmatpush.msra.mxu0 0.0
      %943 = vmatpush.msra.mxu0 0.0
      %944 = vmatpush.msra.mxu0 0.0
      %945 = vmatpush.msra.mxu0 0.0
      %946 = vmatpush.msra.mxu0 0.0
      %947 = vmatpush.msra.mxu0 0.0
      %948 = vmatpush.msra.mxu0 0.0
      %949 = vmatpush.msra.mxu0 0.0
      %950 = vmatpush.msra.mxu0 0.0
      %951 = vmatpush.msra.mxu0 0.0
      %952 = vmatpush.msra.mxu0 0.0
      %953 = vmatpush.msra.mxu0 %v246
      %954 = vmatmul.f32.gmra.mxu0 %v936
      %v955 = vpop.f32.mrf.mxu0
      %v956 = vadd.f32 0.0, %v955
      %957 = vdwg.mxu0
      %v959 = vsel %vm240, %v234, 0
      %961 = vmatpush.msra.mxu0 0.0
      %962 = vmatpush.msra.mxu0 0.0
      %963 = vmatpush.msra.mxu0 0.0
      %964 = vmatpush.msra.mxu0 0.0
      %965 = vmatpush.msra.mxu0 0.0
      %966 = vmatpush.msra.mxu0 0.0
      %967 = vmatpush.msra.mxu0 0.0
      %968 = vmatpush.msra.mxu0 0.0
      %969 = vmatpush.msra.mxu0 0.0
      %970 = vmatpush.msra.mxu0 0.0
      %971 = vmatpush.msra.mxu0 0.0
      %972 = vmatpush.msra.mxu0 0.0
      %973 = vmatpush.msra.mxu0 0.0
      %974 = vmatpush.msra.mxu0 0.0
      %975 = vmatpush.msra.mxu0 0.0
      %976 = vmatpush.msra.mxu0 %v246
      %977 = vmatmul.f32.gmra.mxu0 %v959
      %v978 = vpop.f32.mrf.mxu0
      %v979 = vadd.f32 0.0, %v978
      %980 = vdwg.mxu0
      %v982 = vsel %vm240, %v236, 0
      %v985 = vsel %vm240, %v237, 0
      %v988 = vsel %vm240, %v238, 0
      %v991 = vsel %vm240, %v239, 0
      %v994 = vsel %vm244, %v266, 0
      %996 = vmatpush.msra.mxu0 0.0
      %997 = vmatpush.msra.mxu0 0.0
      %998 = vmatpush.msra.mxu0 0.0
      %999 = vmatpush.msra.mxu0 0.0
      %1000 = vmatpush.msra.mxu0 0.0
      %1001 = vmatpush.msra.mxu0 0.0
      %1002 = vmatpush.msra.mxu0 0.0
      %1003 = vmatpush.msra.mxu0 0.0
      %1004 = vmatpush.msra.mxu0 0.0
      %1005 = vmatpush.msra.mxu0 0.0
      %1006 = vmatpush.msra.mxu0 0.0
      %1007 = vmatpush.msra.mxu0 0.0
      %1008 = vmatpush.msra.mxu0 0.0
      %1009 = vmatpush.msra.mxu0 0.0
      %1010 = vmatpush.msra.mxu0 0.0
      %1011 = vmatpush.msra.mxu0 %v994
      %1012 = vmatmul.f32.gmra.mxu0 %v982
      %v1013 = vpop.f32.mrf.mxu0
      %v1014 = vadd.f32 0.0, %v1013
      %1015 = vmatmul.f32.gmra.mxu0 %v985
      %v1016 = vpop.f32.mrf.mxu0
      %v1017 = vadd.f32 0.0, %v1016
      %1018 = vmatmul.f32.gmra.mxu0 %v988
      %v1019 = vpop.f32.mrf.mxu0
      %v1020 = vadd.f32 0.0, %v1019
      %1021 = vmatmul.f32.gmra.mxu0 %v991
      %v1022 = vpop.f32.mrf.mxu0
      %v1023 = vadd.f32 0.0, %v1022
      %1024 = vdwg.mxu0
      %v1026 = vsel %vm244, %v289, 0
      %1028 = vmatpush.msra.mxu0 0.0
      %1029 = vmatpush.msra.mxu0 0.0
      %1030 = vmatpush.msra.mxu0 0.0
      %1031 = vmatpush.msra.mxu0 0.0
      %1032 = vmatpush.msra.mxu0 0.0
      %1033 = vmatpush.msra.mxu0 0.0
      %1034 = vmatpush.msra.mxu0 0.0
      %1035 = vmatpush.msra.mxu0 0.0
      %1036 = vmatpush.msra.mxu0 0.0
      %1037 = vmatpush.msra.mxu0 0.0
      %1038 = vmatpush.msra.mxu0 0.0
      %1039 = vmatpush.msra.mxu0 0.0
      %1040 = vmatpush.msra.mxu0 0.0
      %1041 = vmatpush.msra.mxu0 0.0
      %1042 = vmatpush.msra.mxu0 0.0
      %1043 = vmatpush.msra.mxu0 %v1026
      %1044 = vmatmul.f32.gmra.mxu0 %v982
      %v1045 = vpop.f32.mrf.mxu0
      %v1046 = vadd.f32 0.0, %v1045
      %1047 = vmatmul.f32.gmra.mxu0 %v985
      %v1048 = vpop.f32.mrf.mxu0
      %v1049 = vadd.f32 0.0, %v1048
      %1050 = vmatmul.f32.gmra.mxu0 %v988
      %v1051 = vpop.f32.mrf.mxu0
      %v1052 = vadd.f32 0.0, %v1051
      %1053 = vmatmul.f32.gmra.mxu0 %v991
      %v1054 = vpop.f32.mrf.mxu0
      %v1055 = vadd.f32 0.0, %v1054
      %1056 = vdwg.mxu0
      %v1058 = vsel %vm244, %v312, 0
      %1060 = vmatpush.msra.mxu0 0.0
      %1061 = vmatpush.msra.mxu0 0.0
      %1062 = vmatpush.msra.mxu0 0.0
      %1063 = vmatpush.msra.mxu0 0.0
      %1064 = vmatpush.msra.mxu0 0.0
      %1065 = vmatpush.msra.mxu0 0.0
      %1066 = vmatpush.msra.mxu0 0.0
      %1067 = vmatpush.msra.mxu0 0.0
      %1068 = vmatpush.msra.mxu0 0.0
      %1069 = vmatpush.msra.mxu0 0.0
      %1070 = vmatpush.msra.mxu0 0.0
      %1071 = vmatpush.msra.mxu0 0.0
      %1072 = vmatpush.msra.mxu0 0.0
      %1073 = vmatpush.msra.mxu0 0.0
      %1074 = vmatpush.msra.mxu0 0.0
      %1075 = vmatpush.msra.mxu0 %v1058
      %1076 = vmatmul.f32.gmra.mxu0 %v982
      %v1077 = vpop.f32.mrf.mxu0
      %v1078 = vadd.f32 0.0, %v1077
      %1079 = vmatmul.f32.gmra.mxu0 %v985
      %v1080 = vpop.f32.mrf.mxu0
      %v1081 = vadd.f32 0.0, %v1080
      %1082 = vmatmul.f32.gmra.mxu0 %v988
      %v1083 = vpop.f32.mrf.mxu0
      %v1084 = vadd.f32 0.0, %v1083
      %1085 = vmatmul.f32.gmra.mxu0 %v991
      %v1086 = vpop.f32.mrf.mxu0
      %v1087 = vadd.f32 0.0, %v1086
      %1088 = vdwg.mxu0
      %v1090 = vsel %vm244, %v335, 0
      %1092 = vmatpush.msra.mxu0 0.0
      %1093 = vmatpush.msra.mxu0 0.0
      %1094 = vmatpush.msra.mxu0 0.0
      %1095 = vmatpush.msra.mxu0 0.0
      %1096 = vmatpush.msra.mxu0 0.0
      %1097 = vmatpush.msra.mxu0 0.0
      %1098 = vmatpush.msra.mxu0 0.0
      %1099 = vmatpush.msra.mxu0 0.0
      %1100 = vmatpush.msra.mxu0 0.0
      %1101 = vmatpush.msra.mxu0 0.0
      %1102 = vmatpush.msra.mxu0 0.0
      %1103 = vmatpush.msra.mxu0 0.0
      %1104 = vmatpush.msra.mxu0 0.0
      %1105 = vmatpush.msra.mxu0 0.0
      %1106 = vmatpush.msra.mxu0 0.0
      %1107 = vmatpush.msra.mxu0 %v1090
      %1108 = vmatmul.f32.gmra.mxu0 %v982
      %v1109 = vpop.f32.mrf.mxu0
      %v1110 = vadd.f32 0.0, %v1109
      %1111 = vmatmul.f32.gmra.mxu0 %v985
      %v1112 = vpop.f32.mrf.mxu0
      %v1113 = vadd.f32 0.0, %v1112
      %1114 = vmatmul.f32.gmra.mxu0 %v988
      %v1115 = vpop.f32.mrf.mxu0
      %v1116 = vadd.f32 0.0, %v1115
      %1117 = vmatmul.f32.gmra.mxu0 %v991
      %v1118 = vpop.f32.mrf.mxu0
      %v1119 = vadd.f32 0.0, %v1118
      %1120 = vdwg.mxu0
      %v1122 = vsel %vm244, %v358, 0
      %1124 = vmatpush.msra.mxu0 0.0
      %1125 = vmatpush.msra.mxu0 0.0
      %1126 = vmatpush.msra.mxu0 0.0
      %1127 = vmatpush.msra.mxu0 0.0
      %1128 = vmatpush.msra.mxu0 0.0
      %1129 = vmatpush.msra.mxu0 0.0
      %1130 = vmatpush.msra.mxu0 0.0
      %1131 = vmatpush.msra.mxu0 0.0
      %1132 = vmatpush.msra.mxu0 0.0
      %1133 = vmatpush.msra.mxu0 0.0
      %1134 = vmatpush.msra.mxu0 0.0
      %1135 = vmatpush.msra.mxu0 0.0
      %1136 = vmatpush.msra.mxu0 0.0
      %1137 = vmatpush.msra.mxu0 0.0
      %1138 = vmatpush.msra.mxu0 0.0
      %1139 = vmatpush.msra.mxu0 %v1122
      %1140 = vmatmul.f32.gmra.mxu0 %v982
      %v1141 = vpop.f32.mrf.mxu0
      %v1142 = vadd.f32 0.0, %v1141
      %1143 = vmatmul.f32.gmra.mxu0 %v985
      %v1144 = vpop.f32.mrf.mxu0
      %v1145 = vadd.f32 0.0, %v1144
      %1146 = vmatmul.f32.gmra.mxu0 %v988
      %v1147 = vpop.f32.mrf.mxu0
      %v1148 = vadd.f32 0.0, %v1147
      %1149 = vmatmul.f32.gmra.mxu0 %v991
      %v1150 = vpop.f32.mrf.mxu0
      %v1151 = vadd.f32 0.0, %v1150
      %1152 = vdwg.mxu0
      %v1154 = vsel %vm244, %v381, 0
      %1156 = vmatpush.msra.mxu0 0.0
      %1157 = vmatpush.msra.mxu0 0.0
      %1158 = vmatpush.msra.mxu0 0.0
      %1159 = vmatpush.msra.mxu0 0.0
      %1160 = vmatpush.msra.mxu0 0.0
      %1161 = vmatpush.msra.mxu0 0.0
      %1162 = vmatpush.msra.mxu0 0.0
      %1163 = vmatpush.msra.mxu0 0.0
      %1164 = vmatpush.msra.mxu0 0.0
      %1165 = vmatpush.msra.mxu0 0.0
      %1166 = vmatpush.msra.mxu0 0.0
      %1167 = vmatpush.msra.mxu0 0.0
      %1168 = vmatpush.msra.mxu0 0.0
      %1169 = vmatpush.msra.mxu0 0.0
      %1170 = vmatpush.msra.mxu0 0.0
      %1171 = vmatpush.msra.mxu0 %v1154
      %1172 = vmatmul.f32.gmra.mxu0 %v982
      %v1173 = vpop.f32.mrf.mxu0
      %v1174 = vadd.f32 0.0, %v1173
      %1175 = vmatmul.f32.gmra.mxu0 %v985
      %v1176 = vpop.f32.mrf.mxu0
      %v1177 = vadd.f32 0.0, %v1176
      %1178 = vmatmul.f32.gmra.mxu0 %v988
      %v1179 = vpop.f32.mrf.mxu0
      %v1180 = vadd.f32 0.0, %v1179
      %1181 = vmatmul.f32.gmra.mxu0 %v991
      %v1182 = vpop.f32.mrf.mxu0
      %v1183 = vadd.f32 0.0, %v1182
      %1184 = vdwg.mxu0
      %v1186 = vsel %vm244, %v404, 0
      %1188 = vmatpush.msra.mxu0 0.0
      %1189 = vmatpush.msra.mxu0 0.0
      %1190 = vmatpush.msra.mxu0 0.0
      %1191 = vmatpush.msra.mxu0 0.0
      %1192 = vmatpush.msra.mxu0 0.0
      %1193 = vmatpush.msra.mxu0 0.0
      %1194 = vmatpush.msra.mxu0 0.0
      %1195 = vmatpush.msra.mxu0 0.0
      %1196 = vmatpush.msra.mxu0 0.0
      %1197 = vmatpush.msra.mxu0 0.0
      %1198 = vmatpush.msra.mxu0 0.0
      %1199 = vmatpush.msra.mxu0 0.0
      %1200 = vmatpush.msra.mxu0 0.0
      %1201 = vmatpush.msra.mxu0 0.0
      %1202 = vmatpush.msra.mxu0 0.0
      %1203 = vmatpush.msra.mxu0 %v1186
      %1204 = vmatmul.f32.gmra.mxu0 %v982
      %v1205 = vpop.f32.mrf.mxu0
      %v1206 = vadd.f32 0.0, %v1205
      %1207 = vmatmul.f32.gmra.mxu0 %v985
      %v1208 = vpop.f32.mrf.mxu0
      %v1209 = vadd.f32 0.0, %v1208
      %1210 = vmatmul.f32.gmra.mxu0 %v988
      %v1211 = vpop.f32.mrf.mxu0
      %v1212 = vadd.f32 0.0, %v1211
      %1213 = vmatmul.f32.gmra.mxu0 %v991
      %v1214 = vpop.f32.mrf.mxu0
      %v1215 = vadd.f32 0.0, %v1214
      %1216 = vdwg.mxu0
      %v1218 = vsel %vm244, %v427, 0
      %1220 = vmatpush.msra.mxu0 0.0
      %1221 = vmatpush.msra.mxu0 0.0
      %1222 = vmatpush.msra.mxu0 0.0
      %1223 = vmatpush.msra.mxu0 0.0
      %1224 = vmatpush.msra.mxu0 0.0
      %1225 = vmatpush.msra.mxu0 0.0
      %1226 = vmatpush.msra.mxu0 0.0
      %1227 = vmatpush.msra.mxu0 0.0
      %1228 = vmatpush.msra.mxu0 0.0
      %1229 = vmatpush.msra.mxu0 0.0
      %1230 = vmatpush.msra.mxu0 0.0
      %1231 = vmatpush.msra.mxu0 0.0
      %1232 = vmatpush.msra.mxu0 0.0
      %1233 = vmatpush.msra.mxu0 0.0
      %1234 = vmatpush.msra.mxu0 0.0
      %1235 = vmatpush.msra.mxu0 %v1218
      %1236 = vmatmul.f32.gmra.mxu0 %v982
      %v1237 = vpop.f32.mrf.mxu0
      %v1238 = vadd.f32 0.0, %v1237
      %1239 = vmatmul.f32.gmra.mxu0 %v985
      %v1240 = vpop.f32.mrf.mxu0
      %v1241 = vadd.f32 0.0, %v1240
      %1242 = vmatmul.f32.gmra.mxu0 %v988
      %v1243 = vpop.f32.mrf.mxu0
      %v1244 = vadd.f32 0.0, %v1243
      %1245 = vmatmul.f32.gmra.mxu0 %v991
      %v1246 = vpop.f32.mrf.mxu0
      %v1247 = vadd.f32 0.0, %v1246
      %1248 = vdwg.mxu0
      %v1250 = vsel %vm244, %v450, 0
      %1252 = vmatpush.msra.mxu0 0.0
      %1253 = vmatpush.msra.mxu0 0.0
      %1254 = vmatpush.msra.mxu0 0.0
      %1255 = vmatpush.msra.mxu0 0.0
      %1256 = vmatpush.msra.mxu0 0.0
      %1257 = vmatpush.msra.mxu0 0.0
      %1258 = vmatpush.msra.mxu0 0.0
      %1259 = vmatpush.msra.mxu0 0.0
      %1260 = vmatpush.msra.mxu0 0.0
      %1261 = vmatpush.msra.mxu0 0.0
      %1262 = vmatpush.msra.mxu0 0.0
      %1263 = vmatpush.msra.mxu0 0.0
      %1264 = vmatpush.msra.mxu0 0.0
      %1265 = vmatpush.msra.mxu0 0.0
      %1266 = vmatpush.msra.mxu0 0.0
      %1267 = vmatpush.msra.mxu0 %v1250
      %1268 = vmatmul.f32.gmra.mxu0 %v982
      %v1269 = vpop.f32.mrf.mxu0
      %v1270 = vadd.f32 0.0, %v1269
      %1271 = vmatmul.f32.gmra.mxu0 %v985
      %v1272 = vpop.f32.mrf.mxu0
      %v1273 = vadd.f32 0.0, %v1272
      %1274 = vmatmul.f32.gmra.mxu0 %v988
      %v1275 = vpop.f32.mrf.mxu0
      %v1276 = vadd.f32 0.0, %v1275
      %1277 = vmatmul.f32.gmra.mxu0 %v991
      %v1278 = vpop.f32.mrf.mxu0
      %v1279 = vadd.f32 0.0, %v1278
      %1280 = vdwg.mxu0
      %v1282 = vsel %vm244, %v473, 0
      %1284 = vmatpush.msra.mxu0 0.0
      %1285 = vmatpush.msra.mxu0 0.0
      %1286 = vmatpush.msra.mxu0 0.0
      %1287 = vmatpush.msra.mxu0 0.0
      %1288 = vmatpush.msra.mxu0 0.0
      %1289 = vmatpush.msra.mxu0 0.0
      %1290 = vmatpush.msra.mxu0 0.0
      %1291 = vmatpush.msra.mxu0 0.0
      %1292 = vmatpush.msra.mxu0 0.0
      %1293 = vmatpush.msra.mxu0 0.0
      %1294 = vmatpush.msra.mxu0 0.0
      %1295 = vmatpush.msra.mxu0 0.0
      %1296 = vmatpush.msra.mxu0 0.0
      %1297 = vmatpush.msra.mxu0 0.0
      %1298 = vmatpush.msra.mxu0 0.0
      %1299 = vmatpush.msra.mxu0 %v1282
      %1300 = vmatmul.f32.gmra.mxu0 %v982
      %v1301 = vpop.f32.mrf.mxu0
      %v1302 = vadd.f32 0.0, %v1301
      %1303 = vmatmul.f32.gmra.mxu0 %v985
      %v1304 = vpop.f32.mrf.mxu0
      %v1305 = vadd.f32 0.0, %v1304
      %1306 = vmatmul.f32.gmra.mxu0 %v988
      %v1307 = vpop.f32.mrf.mxu0
      %v1308 = vadd.f32 0.0, %v1307
      %1309 = vmatmul.f32.gmra.mxu0 %v991
      %v1310 = vpop.f32.mrf.mxu0
      %v1311 = vadd.f32 0.0, %v1310
      %1312 = vdwg.mxu0
      %v1314 = vsel %vm244, %v496, 0
      %1316 = vmatpush.msra.mxu0 0.0
      %1317 = vmatpush.msra.mxu0 0.0
      %1318 = vmatpush.msra.mxu0 0.0
      %1319 = vmatpush.msra.mxu0 0.0
      %1320 = vmatpush.msra.mxu0 0.0
      %1321 = vmatpush.msra.mxu0 0.0
      %1322 = vmatpush.msra.mxu0 0.0
      %1323 = vmatpush.msra.mxu0 0.0
      %1324 = vmatpush.msra.mxu0 0.0
      %1325 = vmatpush.msra.mxu0 0.0
      %1326 = vmatpush.msra.mxu0 0.0
      %1327 = vmatpush.msra.mxu0 0.0
      %1328 = vmatpush.msra.mxu0 0.0
      %1329 = vmatpush.msra.mxu0 0.0
      %1330 = vmatpush.msra.mxu0 0.0
      %1331 = vmatpush.msra.mxu0 %v1314
      %1332 = vmatmul.f32.gmra.mxu0 %v982
      %v1333 = vpop.f32.mrf.mxu0
      %v1334 = vadd.f32 0.0, %v1333
      %1335 = vmatmul.f32.gmra.mxu0 %v985
      %v1336 = vpop.f32.mrf.mxu0
      %v1337 = vadd.f32 0.0, %v1336
      %1338 = vmatmul.f32.gmra.mxu0 %v988
      %v1339 = vpop.f32.mrf.mxu0
      %v1340 = vadd.f32 0.0, %v1339
      %1341 = vmatmul.f32.gmra.mxu0 %v991
      %v1342 = vpop.f32.mrf.mxu0
      %v1343 = vadd.f32 0.0, %v1342
      %1344 = vdwg.mxu0
      %v1346 = vsel %vm244, %v519, 0
      %1348 = vmatpush.msra.mxu0 0.0
      %1349 = vmatpush.msra.mxu0 0.0
      %1350 = vmatpush.msra.mxu0 0.0
      %1351 = vmatpush.msra.mxu0 0.0
      %1352 = vmatpush.msra.mxu0 0.0
      %1353 = vmatpush.msra.mxu0 0.0
      %1354 = vmatpush.msra.mxu0 0.0
      %1355 = vmatpush.msra.mxu0 0.0
      %1356 = vmatpush.msra.mxu0 0.0
      %1357 = vmatpush.msra.mxu0 0.0
      %1358 = vmatpush.msra.mxu0 0.0
      %1359 = vmatpush.msra.mxu0 0.0
      %1360 = vmatpush.msra.mxu0 0.0
      %1361 = vmatpush.msra.mxu0 0.0
      %1362 = vmatpush.msra.mxu0 0.0
      %1363 = vmatpush.msra.mxu0 %v1346
      %1364 = vmatmul.f32.gmra.mxu0 %v982
      %v1365 = vpop.f32.mrf.mxu0
      %v1366 = vadd.f32 0.0, %v1365
      %1367 = vmatmul.f32.gmra.mxu0 %v985
      %v1368 = vpop.f32.mrf.mxu0
      %v1369 = vadd.f32 0.0, %v1368
      %1370 = vmatmul.f32.gmra.mxu0 %v988
      %v1371 = vpop.f32.mrf.mxu0
      %v1372 = vadd.f32 0.0, %v1371
      %1373 = vmatmul.f32.gmra.mxu0 %v991
      %v1374 = vpop.f32.mrf.mxu0
      %v1375 = vadd.f32 0.0, %v1374
      %1376 = vdwg.mxu0
      %v1378 = vsel %vm244, %v542, 0
      %1380 = vmatpush.msra.mxu0 0.0
      %1381 = vmatpush.msra.mxu0 0.0
      %1382 = vmatpush.msra.mxu0 0.0
      %1383 = vmatpush.msra.mxu0 0.0
      %1384 = vmatpush.msra.mxu0 0.0
      %1385 = vmatpush.msra.mxu0 0.0
      %1386 = vmatpush.msra.mxu0 0.0
      %1387 = vmatpush.msra.mxu0 0.0
      %1388 = vmatpush.msra.mxu0 0.0
      %1389 = vmatpush.msra.mxu0 0.0
      %1390 = vmatpush.msra.mxu0 0.0
      %1391 = vmatpush.msra.mxu0 0.0
      %1392 = vmatpush.msra.mxu0 0.0
      %1393 = vmatpush.msra.mxu0 0.0
      %1394 = vmatpush.msra.mxu0 0.0
      %1395 = vmatpush.msra.mxu0 %v1378
      %1396 = vmatmul.f32.gmra.mxu0 %v982
      %v1397 = vpop.f32.mrf.mxu0
      %v1398 = vadd.f32 0.0, %v1397
      %1399 = vmatmul.f32.gmra.mxu0 %v985
      %v1400 = vpop.f32.mrf.mxu0
      %v1401 = vadd.f32 0.0, %v1400
      %1402 = vmatmul.f32.gmra.mxu0 %v988
      %v1403 = vpop.f32.mrf.mxu0
      %v1404 = vadd.f32 0.0, %v1403
      %1405 = vmatmul.f32.gmra.mxu0 %v991
      %v1406 = vpop.f32.mrf.mxu0
      %v1407 = vadd.f32 0.0, %v1406
      %1408 = vdwg.mxu0
      %v1410 = vsel %vm244, %v565, 0
      %1412 = vmatpush.msra.mxu0 0.0
      %1413 = vmatpush.msra.mxu0 0.0
      %1414 = vmatpush.msra.mxu0 0.0
      %1415 = vmatpush.msra.mxu0 0.0
      %1416 = vmatpush.msra.mxu0 0.0
      %1417 = vmatpush.msra.mxu0 0.0
      %1418 = vmatpush.msra.mxu0 0.0
      %1419 = vmatpush.msra.mxu0 0.0
      %1420 = vmatpush.msra.mxu0 0.0
      %1421 = vmatpush.msra.mxu0 0.0
      %1422 = vmatpush.msra.mxu0 0.0
      %1423 = vmatpush.msra.mxu0 0.0
      %1424 = vmatpush.msra.mxu0 0.0
      %1425 = vmatpush.msra.mxu0 0.0
      %1426 = vmatpush.msra.mxu0 0.0
      %1427 = vmatpush.msra.mxu0 %v1410
      %1428 = vmatmul.f32.gmra.mxu0 %v982
      %v1429 = vpop.f32.mrf.mxu0
      %v1430 = vadd.f32 0.0, %v1429
      %1431 = vmatmul.f32.gmra.mxu0 %v985
      %v1432 = vpop.f32.mrf.mxu0
      %v1433 = vadd.f32 0.0, %v1432
      %1434 = vmatmul.f32.gmra.mxu0 %v988
      %v1435 = vpop.f32.mrf.mxu0
      %v1436 = vadd.f32 0.0, %v1435
      %1437 = vmatmul.f32.gmra.mxu0 %v991
      %v1438 = vpop.f32.mrf.mxu0
      %v1439 = vadd.f32 0.0, %v1438
      %1440 = vdwg.mxu0
      %v1442 = vsel %vm244, %v588, 0
      %1444 = vmatpush.msra.mxu0 0.0
      %1445 = vmatpush.msra.mxu0 0.0
      %1446 = vmatpush.msra.mxu0 0.0
      %1447 = vmatpush.msra.mxu0 0.0
      %1448 = vmatpush.msra.mxu0 0.0
      %1449 = vmatpush.msra.mxu0 0.0
      %1450 = vmatpush.msra.mxu0 0.0
      %1451 = vmatpush.msra.mxu0 0.0
      %1452 = vmatpush.msra.mxu0 0.0
      %1453 = vmatpush.msra.mxu0 0.0
      %1454 = vmatpush.msra.mxu0 0.0
      %1455 = vmatpush.msra.mxu0 0.0
      %1456 = vmatpush.msra.mxu0 0.0
      %1457 = vmatpush.msra.mxu0 0.0
      %1458 = vmatpush.msra.mxu0 0.0
      %1459 = vmatpush.msra.mxu0 %v1442
      %1460 = vmatmul.f32.gmra.mxu0 %v982
      %v1461 = vpop.f32.mrf.mxu0
      %v1462 = vadd.f32 0.0, %v1461
      %1463 = vmatmul.f32.gmra.mxu0 %v985
      %v1464 = vpop.f32.mrf.mxu0
      %v1465 = vadd.f32 0.0, %v1464
      %1466 = vmatmul.f32.gmra.mxu0 %v988
      %v1467 = vpop.f32.mrf.mxu0
      %v1468 = vadd.f32 0.0, %v1467
      %1469 = vmatmul.f32.gmra.mxu0 %v991
      %v1470 = vpop.f32.mrf.mxu0
      %v1471 = vadd.f32 0.0, %v1470
      %1472 = vdwg.mxu0
      %v1474 = vsel %vm244, %v611, 0
      %1476 = vmatpush.msra.mxu0 0.0
      %1477 = vmatpush.msra.mxu0 0.0
      %1478 = vmatpush.msra.mxu0 0.0
      %1479 = vmatpush.msra.mxu0 0.0
      %1480 = vmatpush.msra.mxu0 0.0
      %1481 = vmatpush.msra.mxu0 0.0
      %1482 = vmatpush.msra.mxu0 0.0
      %1483 = vmatpush.msra.mxu0 0.0
      %1484 = vmatpush.msra.mxu0 0.0
      %1485 = vmatpush.msra.mxu0 0.0
      %1486 = vmatpush.msra.mxu0 0.0
      %1487 = vmatpush.msra.mxu0 0.0
      %1488 = vmatpush.msra.mxu0 0.0
      %1489 = vmatpush.msra.mxu0 0.0
      %1490 = vmatpush.msra.mxu0 0.0
      %1491 = vmatpush.msra.mxu0 %v1474
      %1492 = vmatmul.f32.gmra.mxu0 %v982
      %v1493 = vpop.f32.mrf.mxu0
      %v1494 = vadd.f32 0.0, %v1493
      %1495 = vmatmul.f32.gmra.mxu0 %v985
      %v1496 = vpop.f32.mrf.mxu0
      %v1497 = vadd.f32 0.0, %v1496
      %1498 = vmatmul.f32.gmra.mxu0 %v988
      %v1499 = vpop.f32.mrf.mxu0
      %v1500 = vadd.f32 0.0, %v1499
      %1501 = vmatmul.f32.gmra.mxu0 %v991
      %v1502 = vpop.f32.mrf.mxu0
      %v1503 = vadd.f32 0.0, %v1502
      %1504 = vdwg.mxu0
      %v1506 = vsel %vm244, %v634, 0
      %1508 = vmatpush.msra.mxu0 0.0
      %1509 = vmatpush.msra.mxu0 0.0
      %1510 = vmatpush.msra.mxu0 0.0
      %1511 = vmatpush.msra.mxu0 0.0
      %1512 = vmatpush.msra.mxu0 0.0
      %1513 = vmatpush.msra.mxu0 0.0
      %1514 = vmatpush.msra.mxu0 0.0
      %1515 = vmatpush.msra.mxu0 0.0
      %1516 = vmatpush.msra.mxu0 0.0
      %1517 = vmatpush.msra.mxu0 0.0
      %1518 = vmatpush.msra.mxu0 0.0
      %1519 = vmatpush.msra.mxu0 0.0
      %1520 = vmatpush.msra.mxu0 0.0
      %1521 = vmatpush.msra.mxu0 0.0
      %1522 = vmatpush.msra.mxu0 0.0
      %1523 = vmatpush.msra.mxu0 %v1506
      %1524 = vmatmul.f32.gmra.mxu0 %v982
      %v1525 = vpop.f32.mrf.mxu0
      %v1526 = vadd.f32 0.0, %v1525
      %1527 = vmatmul.f32.gmra.mxu0 %v985
      %v1528 = vpop.f32.mrf.mxu0
      %v1529 = vadd.f32 0.0, %v1528
      %1530 = vmatmul.f32.gmra.mxu0 %v988
      %v1531 = vpop.f32.mrf.mxu0
      %v1532 = vadd.f32 0.0, %v1531
      %1533 = vmatmul.f32.gmra.mxu0 %v991
      %v1534 = vpop.f32.mrf.mxu0
      %v1535 = vadd.f32 0.0, %v1534
      %1536 = vdwg.mxu0
      %v1538 = vsel %vm244, %v657, 0
      %1540 = vmatpush.msra.mxu0 0.0
      %1541 = vmatpush.msra.mxu0 0.0
      %1542 = vmatpush.msra.mxu0 0.0
      %1543 = vmatpush.msra.mxu0 0.0
      %1544 = vmatpush.msra.mxu0 0.0
      %1545 = vmatpush.msra.mxu0 0.0
      %1546 = vmatpush.msra.mxu0 0.0
      %1547 = vmatpush.msra.mxu0 0.0
      %1548 = vmatpush.msra.mxu0 0.0
      %1549 = vmatpush.msra.mxu0 0.0
      %1550 = vmatpush.msra.mxu0 0.0
      %1551 = vmatpush.msra.mxu0 0.0
      %1552 = vmatpush.msra.mxu0 0.0
      %1553 = vmatpush.msra.mxu0 0.0
      %1554 = vmatpush.msra.mxu0 0.0
      %1555 = vmatpush.msra.mxu0 %v1538
      %1556 = vmatmul.f32.gmra.mxu0 %v982
      %v1557 = vpop.f32.mrf.mxu0
      %v1558 = vadd.f32 0.0, %v1557
      %1559 = vmatmul.f32.gmra.mxu0 %v985
      %v1560 = vpop.f32.mrf.mxu0
      %v1561 = vadd.f32 0.0, %v1560
      %1562 = vmatmul.f32.gmra.mxu0 %v988
      %v1563 = vpop.f32.mrf.mxu0
      %v1564 = vadd.f32 0.0, %v1563
      %1565 = vmatmul.f32.gmra.mxu0 %v991
      %v1566 = vpop.f32.mrf.mxu0
      %v1567 = vadd.f32 0.0, %v1566
      %1568 = vdwg.mxu0
      %v1570 = vsel %vm244, %v680, 0
      %1572 = vmatpush.msra.mxu0 0.0
      %1573 = vmatpush.msra.mxu0 0.0
      %1574 = vmatpush.msra.mxu0 0.0
      %1575 = vmatpush.msra.mxu0 0.0
      %1576 = vmatpush.msra.mxu0 0.0
      %1577 = vmatpush.msra.mxu0 0.0
      %1578 = vmatpush.msra.mxu0 0.0
      %1579 = vmatpush.msra.mxu0 0.0
      %1580 = vmatpush.msra.mxu0 0.0
      %1581 = vmatpush.msra.mxu0 0.0
      %1582 = vmatpush.msra.mxu0 0.0
      %1583 = vmatpush.msra.mxu0 0.0
      %1584 = vmatpush.msra.mxu0 0.0
      %1585 = vmatpush.msra.mxu0 0.0
      %1586 = vmatpush.msra.mxu0 0.0
      %1587 = vmatpush.msra.mxu0 %v1570
      %1588 = vmatmul.f32.gmra.mxu0 %v982
      %v1589 = vpop.f32.mrf.mxu0
      %v1590 = vadd.f32 0.0, %v1589
      %1591 = vmatmul.f32.gmra.mxu0 %v985
      %v1592 = vpop.f32.mrf.mxu0
      %v1593 = vadd.f32 0.0, %v1592
      %1594 = vmatmul.f32.gmra.mxu0 %v988
      %v1595 = vpop.f32.mrf.mxu0
      %v1596 = vadd.f32 0.0, %v1595
      %1597 = vmatmul.f32.gmra.mxu0 %v991
      %v1598 = vpop.f32.mrf.mxu0
      %v1599 = vadd.f32 0.0, %v1598
      %1600 = vdwg.mxu0
      %v1602 = vsel %vm244, %v703, 0
      %1604 = vmatpush.msra.mxu0 0.0
      %1605 = vmatpush.msra.mxu0 0.0
      %1606 = vmatpush.msra.mxu0 0.0
      %1607 = vmatpush.msra.mxu0 0.0
      %1608 = vmatpush.msra.mxu0 0.0
      %1609 = vmatpush.msra.mxu0 0.0
      %1610 = vmatpush.msra.mxu0 0.0
      %1611 = vmatpush.msra.mxu0 0.0
      %1612 = vmatpush.msra.mxu0 0.0
      %1613 = vmatpush.msra.mxu0 0.0
      %1614 = vmatpush.msra.mxu0 0.0
      %1615 = vmatpush.msra.mxu0 0.0
      %1616 = vmatpush.msra.mxu0 0.0
      %1617 = vmatpush.msra.mxu0 0.0
      %1618 = vmatpush.msra.mxu0 0.0
      %1619 = vmatpush.msra.mxu0 %v1602
      %1620 = vmatmul.f32.gmra.mxu0 %v982
      %v1621 = vpop.f32.mrf.mxu0
      %v1622 = vadd.f32 0.0, %v1621
      %1623 = vmatmul.f32.gmra.mxu0 %v985
      %v1624 = vpop.f32.mrf.mxu0
      %v1625 = vadd.f32 0.0, %v1624
      %1626 = vmatmul.f32.gmra.mxu0 %v988
      %v1627 = vpop.f32.mrf.mxu0
      %v1628 = vadd.f32 0.0, %v1627
      %1629 = vmatmul.f32.gmra.mxu0 %v991
      %v1630 = vpop.f32.mrf.mxu0
      %v1631 = vadd.f32 0.0, %v1630
      %1632 = vdwg.mxu0
      %v1634 = vsel %vm244, %v726, 0
      %1636 = vmatpush.msra.mxu0 0.0
      %1637 = vmatpush.msra.mxu0 0.0
      %1638 = vmatpush.msra.mxu0 0.0
      %1639 = vmatpush.msra.mxu0 0.0
      %1640 = vmatpush.msra.mxu0 0.0
      %1641 = vmatpush.msra.mxu0 0.0
      %1642 = vmatpush.msra.mxu0 0.0
      %1643 = vmatpush.msra.mxu0 0.0
      %1644 = vmatpush.msra.mxu0 0.0
      %1645 = vmatpush.msra.mxu0 0.0
      %1646 = vmatpush.msra.mxu0 0.0
      %1647 = vmatpush.msra.mxu0 0.0
      %1648 = vmatpush.msra.mxu0 0.0
      %1649 = vmatpush.msra.mxu0 0.0
      %1650 = vmatpush.msra.mxu0 0.0
      %1651 = vmatpush.msra.mxu0 %v1634
      %1652 = vmatmul.f32.gmra.mxu0 %v982
      %v1653 = vpop.f32.mrf.mxu0
      %v1654 = vadd.f32 0.0, %v1653
      %1655 = vmatmul.f32.gmra.mxu0 %v985
      %v1656 = vpop.f32.mrf.mxu0
      %v1657 = vadd.f32 0.0, %v1656
      %1658 = vmatmul.f32.gmra.mxu0 %v988
      %v1659 = vpop.f32.mrf.mxu0
      %v1660 = vadd.f32 0.0, %v1659
      %1661 = vmatmul.f32.gmra.mxu0 %v991
      %v1662 = vpop.f32.mrf.mxu0
      %v1663 = vadd.f32 0.0, %v1662
      %1664 = vdwg.mxu0
      %v1666 = vsel %vm244, %v749, 0
      %1668 = vmatpush.msra.mxu0 0.0
      %1669 = vmatpush.msra.mxu0 0.0
      %1670 = vmatpush.msra.mxu0 0.0
      %1671 = vmatpush.msra.mxu0 0.0
      %1672 = vmatpush.msra.mxu0 0.0
      %1673 = vmatpush.msra.mxu0 0.0
      %1674 = vmatpush.msra.mxu0 0.0
      %1675 = vmatpush.msra.mxu0 0.0
      %1676 = vmatpush.msra.mxu0 0.0
      %1677 = vmatpush.msra.mxu0 0.0
      %1678 = vmatpush.msra.mxu0 0.0
      %1679 = vmatpush.msra.mxu0 0.0
      %1680 = vmatpush.msra.mxu0 0.0
      %1681 = vmatpush.msra.mxu0 0.0
      %1682 = vmatpush.msra.mxu0 0.0
      %1683 = vmatpush.msra.mxu0 %v1666
      %1684 = vmatmul.f32.gmra.mxu0 %v982
      %v1685 = vpop.f32.mrf.mxu0
      %v1686 = vadd.f32 0.0, %v1685
      %1687 = vmatmul.f32.gmra.mxu0 %v985
      %v1688 = vpop.f32.mrf.mxu0
      %v1689 = vadd.f32 0.0, %v1688
      %1690 = vmatmul.f32.gmra.mxu0 %v988
      %v1691 = vpop.f32.mrf.mxu0
      %v1692 = vadd.f32 0.0, %v1691
      %1693 = vmatmul.f32.gmra.mxu0 %v991
      %v1694 = vpop.f32.mrf.mxu0
      %v1695 = vadd.f32 0.0, %v1694
      %1696 = vdwg.mxu0
      %v1698 = vsel %vm244, %v772, 0
      %1700 = vmatpush.msra.mxu0 0.0
      %1701 = vmatpush.msra.mxu0 0.0
      %1702 = vmatpush.msra.mxu0 0.0
      %1703 = vmatpush.msra.mxu0 0.0
      %1704 = vmatpush.msra.mxu0 0.0
      %1705 = vmatpush.msra.mxu0 0.0
      %1706 = vmatpush.msra.mxu0 0.0
      %1707 = vmatpush.msra.mxu0 0.0
      %1708 = vmatpush.msra.mxu0 0.0
      %1709 = vmatpush.msra.mxu0 0.0
      %1710 = vmatpush.msra.mxu0 0.0
      %1711 = vmatpush.msra.mxu0 0.0
      %1712 = vmatpush.msra.mxu0 0.0
      %1713 = vmatpush.msra.mxu0 0.0
      %1714 = vmatpush.msra.mxu0 0.0
      %1715 = vmatpush.msra.mxu0 %v1698
      %1716 = vmatmul.f32.gmra.mxu0 %v982
      %v1717 = vpop.f32.mrf.mxu0
      %v1718 = vadd.f32 0.0, %v1717
      %1719 = vmatmul.f32.gmra.mxu0 %v985
      %v1720 = vpop.f32.mrf.mxu0
      %v1721 = vadd.f32 0.0, %v1720
      %1722 = vmatmul.f32.gmra.mxu0 %v988
      %v1723 = vpop.f32.mrf.mxu0
      %v1724 = vadd.f32 0.0, %v1723
      %1725 = vmatmul.f32.gmra.mxu0 %v991
      %v1726 = vpop.f32.mrf.mxu0
      %v1727 = vadd.f32 0.0, %v1726
      %1728 = vdwg.mxu0
      %v1730 = vsel %vm244, %v795, 0
      %1732 = vmatpush.msra.mxu0 0.0
      %1733 = vmatpush.msra.mxu0 0.0
      %1734 = vmatpush.msra.mxu0 0.0
      %1735 = vmatpush.msra.mxu0 0.0
      %1736 = vmatpush.msra.mxu0 0.0
      %1737 = vmatpush.msra.mxu0 0.0
      %1738 = vmatpush.msra.mxu0 0.0
      %1739 = vmatpush.msra.mxu0 0.0
      %1740 = vmatpush.msra.mxu0 0.0
      %1741 = vmatpush.msra.mxu0 0.0
      %1742 = vmatpush.msra.mxu0 0.0
      %1743 = vmatpush.msra.mxu0 0.0
      %1744 = vmatpush.msra.mxu0 0.0
      %1745 = vmatpush.msra.mxu0 0.0
      %1746 = vmatpush.msra.mxu0 0.0
      %1747 = vmatpush.msra.mxu0 %v1730
      %1748 = vmatmul.f32.gmra.mxu0 %v982
      %v1749 = vpop.f32.mrf.mxu0
      %v1750 = vadd.f32 0.0, %v1749
      %1751 = vmatmul.f32.gmra.mxu0 %v985
      %v1752 = vpop.f32.mrf.mxu0
      %v1753 = vadd.f32 0.0, %v1752
      %1754 = vmatmul.f32.gmra.mxu0 %v988
      %v1755 = vpop.f32.mrf.mxu0
      %v1756 = vadd.f32 0.0, %v1755
      %1757 = vmatmul.f32.gmra.mxu0 %v991
      %v1758 = vpop.f32.mrf.mxu0
      %v1759 = vadd.f32 0.0, %v1758
      %1760 = vdwg.mxu0
      %v1762 = vsel %vm244, %v818, 0
      %1764 = vmatpush.msra.mxu0 0.0
      %1765 = vmatpush.msra.mxu0 0.0
      %1766 = vmatpush.msra.mxu0 0.0
      %1767 = vmatpush.msra.mxu0 0.0
      %1768 = vmatpush.msra.mxu0 0.0
      %1769 = vmatpush.msra.mxu0 0.0
      %1770 = vmatpush.msra.mxu0 0.0
      %1771 = vmatpush.msra.mxu0 0.0
      %1772 = vmatpush.msra.mxu0 0.0
      %1773 = vmatpush.msra.mxu0 0.0
      %1774 = vmatpush.msra.mxu0 0.0
      %1775 = vmatpush.msra.mxu0 0.0
      %1776 = vmatpush.msra.mxu0 0.0
      %1777 = vmatpush.msra.mxu0 0.0
      %1778 = vmatpush.msra.mxu0 0.0
      %1779 = vmatpush.msra.mxu0 %v1762
      %1780 = vmatmul.f32.gmra.mxu0 %v982
      %v1781 = vpop.f32.mrf.mxu0
      %v1782 = vadd.f32 0.0, %v1781
      %1783 = vmatmul.f32.gmra.mxu0 %v985
      %v1784 = vpop.f32.mrf.mxu0
      %v1785 = vadd.f32 0.0, %v1784
      %1786 = vmatmul.f32.gmra.mxu0 %v988
      %v1787 = vpop.f32.mrf.mxu0
      %v1788 = vadd.f32 0.0, %v1787
      %1789 = vmatmul.f32.gmra.mxu0 %v991
      %v1790 = vpop.f32.mrf.mxu0
      %v1791 = vadd.f32 0.0, %v1790
      %1792 = vdwg.mxu0
      %v1794 = vsel %vm244, %v841, 0
      %1796 = vmatpush.msra.mxu0 0.0
      %1797 = vmatpush.msra.mxu0 0.0
      %1798 = vmatpush.msra.mxu0 0.0
      %1799 = vmatpush.msra.mxu0 0.0
      %1800 = vmatpush.msra.mxu0 0.0
      %1801 = vmatpush.msra.mxu0 0.0
      %1802 = vmatpush.msra.mxu0 0.0
      %1803 = vmatpush.msra.mxu0 0.0
      %1804 = vmatpush.msra.mxu0 0.0
      %1805 = vmatpush.msra.mxu0 0.0
      %1806 = vmatpush.msra.mxu0 0.0
      %1807 = vmatpush.msra.mxu0 0.0
      %1808 = vmatpush.msra.mxu0 0.0
      %1809 = vmatpush.msra.mxu0 0.0
      %1810 = vmatpush.msra.mxu0 0.0
      %1811 = vmatpush.msra.mxu0 %v1794
      %1812 = vmatmul.f32.gmra.mxu0 %v982
      %v1813 = vpop.f32.mrf.mxu0
      %v1814 = vadd.f32 0.0, %v1813
      %1815 = vmatmul.f32.gmra.mxu0 %v985
      %v1816 = vpop.f32.mrf.mxu0
      %v1817 = vadd.f32 0.0, %v1816
      %1818 = vmatmul.f32.gmra.mxu0 %v988
      %v1819 = vpop.f32.mrf.mxu0
      %v1820 = vadd.f32 0.0, %v1819
      %1821 = vmatmul.f32.gmra.mxu0 %v991
      %v1822 = vpop.f32.mrf.mxu0
      %v1823 = vadd.f32 0.0, %v1822
      %1824 = vdwg.mxu0
      %v1826 = vsel %vm244, %v864, 0
      %1828 = vmatpush.msra.mxu0 0.0
      %1829 = vmatpush.msra.mxu0 0.0
      %1830 = vmatpush.msra.mxu0 0.0
      %1831 = vmatpush.msra.mxu0 0.0
      %1832 = vmatpush.msra.mxu0 0.0
      %1833 = vmatpush.msra.mxu0 0.0
      %1834 = vmatpush.msra.mxu0 0.0
      %1835 = vmatpush.msra.mxu0 0.0
      %1836 = vmatpush.msra.mxu0 0.0
      %1837 = vmatpush.msra.mxu0 0.0
      %1838 = vmatpush.msra.mxu0 0.0
      %1839 = vmatpush.msra.mxu0 0.0
      %1840 = vmatpush.msra.mxu0 0.0
      %1841 = vmatpush.msra.mxu0 0.0
      %1842 = vmatpush.msra.mxu0 0.0
      %1843 = vmatpush.msra.mxu0 %v1826
      %1844 = vmatmul.f32.gmra.mxu0 %v982
      %v1845 = vpop.f32.mrf.mxu0
      %v1846 = vadd.f32 0.0, %v1845
      %1847 = vmatmul.f32.gmra.mxu0 %v985
      %v1848 = vpop.f32.mrf.mxu0
      %v1849 = vadd.f32 0.0, %v1848
      %1850 = vmatmul.f32.gmra.mxu0 %v988
      %v1851 = vpop.f32.mrf.mxu0
      %v1852 = vadd.f32 0.0, %v1851
      %1853 = vmatmul.f32.gmra.mxu0 %v991
      %v1854 = vpop.f32.mrf.mxu0
      %v1855 = vadd.f32 0.0, %v1854
      %1856 = vdwg.mxu0
      %v1858 = vsel %vm244, %v887, 0
      %1860 = vmatpush.msra.mxu0 0.0
      %1861 = vmatpush.msra.mxu0 0.0
      %1862 = vmatpush.msra.mxu0 0.0
      %1863 = vmatpush.msra.mxu0 0.0
      %1864 = vmatpush.msra.mxu0 0.0
      %1865 = vmatpush.msra.mxu0 0.0
      %1866 = vmatpush.msra.mxu0 0.0
      %1867 = vmatpush.msra.mxu0 0.0
      %1868 = vmatpush.msra.mxu0 0.0
      %1869 = vmatpush.msra.mxu0 0.0
      %1870 = vmatpush.msra.mxu0 0.0
      %1871 = vmatpush.msra.mxu0 0.0
      %1872 = vmatpush.msra.mxu0 0.0
      %1873 = vmatpush.msra.mxu0 0.0
      %1874 = vmatpush.msra.mxu0 0.0
      %1875 = vmatpush.msra.mxu0 %v1858
      %1876 = vmatmul.f32.gmra.mxu0 %v982
      %v1877 = vpop.f32.mrf.mxu0
      %v1878 = vadd.f32 0.0, %v1877
      %1879 = vmatmul.f32.gmra.mxu0 %v985
      %v1880 = vpop.f32.mrf.mxu0
      %v1881 = vadd.f32 0.0, %v1880
      %1882 = vmatmul.f32.gmra.mxu0 %v988
      %v1883 = vpop.f32.mrf.mxu0
      %v1884 = vadd.f32 0.0, %v1883
      %1885 = vmatmul.f32.gmra.mxu0 %v991
      %v1886 = vpop.f32.mrf.mxu0
      %v1887 = vadd.f32 0.0, %v1886
      %1888 = vdwg.mxu0
      %v1890 = vsel %vm244, %v910, 0
      %1892 = vmatpush.msra.mxu0 0.0
      %1893 = vmatpush.msra.mxu0 0.0
      %1894 = vmatpush.msra.mxu0 0.0
      %1895 = vmatpush.msra.mxu0 0.0
      %1896 = vmatpush.msra.mxu0 0.0
      %1897 = vmatpush.msra.mxu0 0.0
      %1898 = vmatpush.msra.mxu0 0.0
      %1899 = vmatpush.msra.mxu0 0.0
      %1900 = vmatpush.msra.mxu0 0.0
      %1901 = vmatpush.msra.mxu0 0.0
      %1902 = vmatpush.msra.mxu0 0.0
      %1903 = vmatpush.msra.mxu0 0.0
      %1904 = vmatpush.msra.mxu0 0.0
      %1905 = vmatpush.msra.mxu0 0.0
      %1906 = vmatpush.msra.mxu0 0.0
      %1907 = vmatpush.msra.mxu0 %v1890
      %1908 = vmatmul.f32.gmra.mxu0 %v982
      %v1909 = vpop.f32.mrf.mxu0
      %v1910 = vadd.f32 0.0, %v1909
      %1911 = vmatmul.f32.gmra.mxu0 %v985
      %v1912 = vpop.f32.mrf.mxu0
      %v1913 = vadd.f32 0.0, %v1912
      %1914 = vmatmul.f32.gmra.mxu0 %v988
      %v1915 = vpop.f32.mrf.mxu0
      %v1916 = vadd.f32 0.0, %v1915
      %1917 = vmatmul.f32.gmra.mxu0 %v991
      %v1918 = vpop.f32.mrf.mxu0
      %v1919 = vadd.f32 0.0, %v1918
      %1920 = vdwg.mxu0
      %v1922 = vsel %vm244, %v933, 0
      %1924 = vmatpush.msra.mxu0 0.0
      %1925 = vmatpush.msra.mxu0 0.0
      %1926 = vmatpush.msra.mxu0 0.0
      %1927 = vmatpush.msra.mxu0 0.0
      %1928 = vmatpush.msra.mxu0 0.0
      %1929 = vmatpush.msra.mxu0 0.0
      %1930 = vmatpush.msra.mxu0 0.0
      %1931 = vmatpush.msra.mxu0 0.0
      %1932 = vmatpush.msra.mxu0 0.0
      %1933 = vmatpush.msra.mxu0 0.0
      %1934 = vmatpush.msra.mxu0 0.0
      %1935 = vmatpush.msra.mxu0 0.0
      %1936 = vmatpush.msra.mxu0 0.0
      %1937 = vmatpush.msra.mxu0 0.0
      %1938 = vmatpush.msra.mxu0 0.0
      %1939 = vmatpush.msra.mxu0 %v1922
      %1940 = vmatmul.f32.gmra.mxu0 %v982
      %v1941 = vpop.f32.mrf.mxu0
      %v1942 = vadd.f32 0.0, %v1941
      %1943 = vmatmul.f32.gmra.mxu0 %v985
      %v1944 = vpop.f32.mrf.mxu0
      %v1945 = vadd.f32 0.0, %v1944
      %1946 = vmatmul.f32.gmra.mxu0 %v988
      %v1947 = vpop.f32.mrf.mxu0
      %v1948 = vadd.f32 0.0, %v1947
      %1949 = vmatmul.f32.gmra.mxu0 %v991
      %v1950 = vpop.f32.mrf.mxu0
      %v1951 = vadd.f32 0.0, %v1950
      %1952 = vdwg.mxu0
      %v1954 = vsel %vm244, %v956, 0
      %1956 = vmatpush.msra.mxu0 0.0
      %1957 = vmatpush.msra.mxu0 0.0
      %1958 = vmatpush.msra.mxu0 0.0
      %1959 = vmatpush.msra.mxu0 0.0
      %1960 = vmatpush.msra.mxu0 0.0
      %1961 = vmatpush.msra.mxu0 0.0
      %1962 = vmatpush.msra.mxu0 0.0
      %1963 = vmatpush.msra.mxu0 0.0
      %1964 = vmatpush.msra.mxu0 0.0
      %1965 = vmatpush.msra.mxu0 0.0
      %1966 = vmatpush.msra.mxu0 0.0
      %1967 = vmatpush.msra.mxu0 0.0
      %1968 = vmatpush.msra.mxu0 0.0
      %1969 = vmatpush.msra.mxu0 0.0
      %1970 = vmatpush.msra.mxu0 0.0
      %1971 = vmatpush.msra.mxu0 %v1954
      %1972 = vmatmul.f32.gmra.mxu0 %v982
      %v1973 = vpop.f32.mrf.mxu0
      %v1974 = vadd.f32 0.0, %v1973
      %1975 = vmatmul.f32.gmra.mxu0 %v985
      %v1976 = vpop.f32.mrf.mxu0
      %v1977 = vadd.f32 0.0, %v1976
      %1978 = vmatmul.f32.gmra.mxu0 %v988
      %v1979 = vpop.f32.mrf.mxu0
      %v1980 = vadd.f32 0.0, %v1979
      %1981 = vmatmul.f32.gmra.mxu0 %v991
      %v1982 = vpop.f32.mrf.mxu0
      %v1983 = vadd.f32 0.0, %v1982
      %1984 = vdwg.mxu0
      %v1986 = vsel %vm244, %v979, 0
      %1988 = vmatpush.msra.mxu0 0.0
      %1989 = vmatpush.msra.mxu0 0.0
      %1990 = vmatpush.msra.mxu0 0.0
      %1991 = vmatpush.msra.mxu0 0.0
      %1992 = vmatpush.msra.mxu0 0.0
      %1993 = vmatpush.msra.mxu0 0.0
      %1994 = vmatpush.msra.mxu0 0.0
      %1995 = vmatpush.msra.mxu0 0.0
      %1996 = vmatpush.msra.mxu0 0.0
      %1997 = vmatpush.msra.mxu0 0.0
      %1998 = vmatpush.msra.mxu0 0.0
      %1999 = vmatpush.msra.mxu0 0.0
      %2000 = vmatpush.msra.mxu0 0.0
      %2001 = vmatpush.msra.mxu0 0.0
      %2002 = vmatpush.msra.mxu0 0.0
      %2003 = vmatpush.msra.mxu0 %v1986
      %2004 = vmatmul.f32.gmra.mxu0 %v982
      %v2005 = vpop.f32.mrf.mxu0
      %v2006 = vadd.f32 0.0, %v2005
      %2007 = vmatmul.f32.gmra.mxu0 %v985
      %v2008 = vpop.f32.mrf.mxu0
      %v2009 = vadd.f32 0.0, %v2008
      %2010 = vmatmul.f32.gmra.mxu0 %v988
      %v2011 = vpop.f32.mrf.mxu0
      %v2012 = vadd.f32 0.0, %v2011
      %2013 = vmatmul.f32.gmra.mxu0 %v991
      %v2014 = vpop.f32.mrf.mxu0
      %v2015 = vadd.f32 0.0, %v2014
      %2016 = vdwg.mxu0
      %v2017 = vld [vmem:[%s3] sm:$0xff]
      %v2018 = vld [vmem:[%s3 + $0x8] sm:$0xff]
      %v2019 = vld [vmem:[%s3 + $0x10] sm:$0xff]
      %v2020 = vld [vmem:[%s3 + $0x18] sm:$0xf]
      %vm2021 = vcmp.ne.f32.partialorder %v2017, 0.0
      %vm2022 = vcmp.ne.f32.partialorder %v2018, 0.0
      %vm2023 = vcmp.ne.f32.partialorder %v2019, 0.0
      %vm2024 = vcmp.ne.f32.partialorder %v2020, 0.0
      %v2025 = vsel %vm2021, 1, 0
      %v2026 = vsel %vm2022, 1, 0
      %v2027 = vsel %vm2023, 1, 0
      %v2028 = vsel %vm2024, 1, 0
      %vm2029 = vcmp.eq.s32.totalorder %v2025, 1
      %vm2030 = vcmp.eq.s32.totalorder %v2026, 1
      %vm2031 = vcmp.eq.s32.totalorder %v2027, 1
      %vm2032 = vcmp.eq.s32.totalorder %v2028, 1
      %v2033 = vsel %vm2029, %v1014, 0.0
      %v2034 = vsel %vm2030, %v1017, 0.0
      %v2035 = vsel %vm2031, %v1020, 0.0
      %v2036 = vsel %vm2032, %v1023, 0.0
      %v2037 = vsel %vm2029, %v1046, 0.0
      %v2038 = vsel %vm2030, %v1049, 0.0
      %v2039 = vsel %vm2031, %v1052, 0.0
      %v2040 = vsel %vm2032, %v1055, 0.0
      %v2041 = vsel %vm2029, %v1078, 0.0
      %v2042 = vsel %vm2030, %v1081, 0.0
      %v2043 = vsel %vm2031, %v1084, 0.0
      %v2044 = vsel %vm2032, %v1087, 0.0
      %v2045 = vsel %vm2029, %v1110, 0.0
      %v2046 = vsel %vm2030, %v1113, 0.0
      %v2047 = vsel %vm2031, %v1116, 0.0
      %v2048 = vsel %vm2032, %v1119, 0.0
      %v2049 = vsel %vm2029, %v1142, 0.0
      %v2050 = vsel %vm2030, %v1145, 0.0
      %v2051 = vsel %vm2031, %v1148, 0.0
      %v2052 = vsel %vm2032, %v1151, 0.0
      %v2053 = vsel %vm2029, %v1174, 0.0
      %v2054 = vsel %vm2030, %v1177, 0.0
      %v2055 = vsel %vm2031, %v1180, 0.0
      %v2056 = vsel %vm2032, %v1183, 0.0
      %v2057 = vsel %vm2029, %v1206, 0.0
      %v2058 = vsel %vm2030, %v1209, 0.0
      %v2059 = vsel %vm2031, %v1212, 0.0
      %v2060 = vsel %vm2032, %v1215, 0.0
      %v2061 = vsel %vm2029, %v1238, 0.0
      %v2062 = vsel %vm2030, %v1241, 0.0
      %v2063 = vsel %vm2031, %v1244, 0.0
      %v2064 = vsel %vm2032, %v1247, 0.0
      %v2065 = vsel %vm2029, %v1270, 0.0
      %v2066 = vsel %vm2030, %v1273, 0.0
      %v2067 = vsel %vm2031, %v1276, 0.0
      %v2068 = vsel %vm2032, %v1279, 0.0
      %v2069 = vsel %vm2029, %v1302, 0.0
      %v2070 = vsel %vm2030, %v1305, 0.0
      %v2071 = vsel %vm2031, %v1308, 0.0
      %v2072 = vsel %vm2032, %v1311, 0.0
      %v2073 = vsel %vm2029, %v1334, 0.0
      %v2074 = vsel %vm2030, %v1337, 0.0
      %v2075 = vsel %vm2031, %v1340, 0.0
      %v2076 = vsel %vm2032, %v1343, 0.0
      %v2077 = vsel %vm2029, %v1366, 0.0
      %v2078 = vsel %vm2030, %v1369, 0.0
      %v2079 = vsel %vm2031, %v1372, 0.0
      %v2080 = vsel %vm2032, %v1375, 0.0
      %v2081 = vsel %vm2029, %v1398, 0.0
      %v2082 = vsel %vm2030, %v1401, 0.0
      %v2083 = vsel %vm2031, %v1404, 0.0
      %v2084 = vsel %vm2032, %v1407, 0.0
      %v2085 = vsel %vm2029, %v1430, 0.0
      %v2086 = vsel %vm2030, %v1433, 0.0
      %v2087 = vsel %vm2031, %v1436, 0.0
      %v2088 = vsel %vm2032, %v1439, 0.0
      %v2089 = vsel %vm2029, %v1462, 0.0
      %v2090 = vsel %vm2030, %v1465, 0.0
      %v2091 = vsel %vm2031, %v1468, 0.0
      %v2092 = vsel %vm2032, %v1471, 0.0
      %v2093 = vsel %vm2029, %v1494, 0.0
      %v2094 = vsel %vm2030, %v1497, 0.0
      %v2095 = vsel %vm2031, %v1500, 0.0
      %v2096 = vsel %vm2032, %v1503, 0.0
      %v2097 = vsel %vm2029, %v1526, 0.0
      %v2098 = vsel %vm2030, %v1529, 0.0
      %v2099 = vsel %vm2031, %v1532, 0.0
      %v2100 = vsel %vm2032, %v1535, 0.0
      %v2101 = vsel %vm2029, %v1558, 0.0
      %v2102 = vsel %vm2030, %v1561, 0.0
      %v2103 = vsel %vm2031, %v1564, 0.0
      %v2104 = vsel %vm2032, %v1567, 0.0
      %v2105 = vsel %vm2029, %v1590, 0.0
      %v2106 = vsel %vm2030, %v1593, 0.0
      %v2107 = vsel %vm2031, %v1596, 0.0
      %v2108 = vsel %vm2032, %v1599, 0.0
      %v2109 = vsel %vm2029, %v1622, 0.0
      %v2110 = vsel %vm2030, %v1625, 0.0
      %v2111 = vsel %vm2031, %v1628, 0.0
      %v2112 = vsel %vm2032, %v1631, 0.0
      %v2113 = vsel %vm2029, %v1654, 0.0
      %v2114 = vsel %vm2030, %v1657, 0.0
      %v2115 = vsel %vm2031, %v1660, 0.0
      %v2116 = vsel %vm2032, %v1663, 0.0
      %v2117 = vsel %vm2029, %v1686, 0.0
      %v2118 = vsel %vm2030, %v1689, 0.0
      %v2119 = vsel %vm2031, %v1692, 0.0
      %v2120 = vsel %vm2032, %v1695, 0.0
      %v2121 = vsel %vm2029, %v1718, 0.0
      %v2122 = vsel %vm2030, %v1721, 0.0
      %v2123 = vsel %vm2031, %v1724, 0.0
      %v2124 = vsel %vm2032, %v1727, 0.0
      %v2125 = vsel %vm2029, %v1750, 0.0
      %v2126 = vsel %vm2030, %v1753, 0.0
      %v2127 = vsel %vm2031, %v1756, 0.0
      %v2128 = vsel %vm2032, %v1759, 0.0
      %v2129 = vsel %vm2029, %v1782, 0.0
      %v2130 = vsel %vm2030, %v1785, 0.0
      %v2131 = vsel %vm2031, %v1788, 0.0
      %v2132 = vsel %vm2032, %v1791, 0.0
      %v2133 = vsel %vm2029, %v1814, 0.0
      %v2134 = vsel %vm2030, %v1817, 0.0
      %v2135 = vsel %vm2031, %v1820, 0.0
      %v2136 = vsel %vm2032, %v1823, 0.0
      %v2137 = vsel %vm2029, %v1846, 0.0
      %v2138 = vsel %vm2030, %v1849, 0.0
      %v2139 = vsel %vm2031, %v1852, 0.0
      %v2140 = vsel %vm2032, %v1855, 0.0
      %v2141 = vsel %vm2029, %v1878, 0.0
      %v2142 = vsel %vm2030, %v1881, 0.0
      %v2143 = vsel %vm2031, %v1884, 0.0
      %v2144 = vsel %vm2032, %v1887, 0.0
      %v2145 = vsel %vm2029, %v1910, 0.0
      %v2146 = vsel %vm2030, %v1913, 0.0
      %v2147 = vsel %vm2031, %v1916, 0.0
      %v2148 = vsel %vm2032, %v1919, 0.0
      %v2149 = vsel %vm2029, %v1942, 0.0
      %v2150 = vsel %vm2030, %v1945, 0.0
      %v2151 = vsel %vm2031, %v1948, 0.0
      %v2152 = vsel %vm2032, %v1951, 0.0
      %v2153 = vsel %vm2029, %v1974, 0.0
      %v2154 = vsel %vm2030, %v1977, 0.0
      %v2155 = vsel %vm2031, %v1980, 0.0
      %v2156 = vsel %vm2032, %v1983, 0.0
      %v2157 = vsel %vm2029, %v2006, 0.0
      %v2158 = vsel %vm2030, %v2009, 0.0
      %v2159 = vsel %vm2031, %v2012, 0.0
      %v2160 = vsel %vm2032, %v2015, 0.0
      %vm2161 = vcmask 228352
      %2162 = vst.msk [vmem:[%s201] sm:$0xff] %vm2161, %v2033
      %2163 = vst.msk [vmem:[%s201 + $0x8] sm:$0xff] %vm2161, %v2034
      %2164 = vst.msk [vmem:[%s201 + $0x10] sm:$0xff] %vm2161, %v2035
      %vm2165 = vcmask 224256
      %2166 = vst.msk [vmem:[%s201 + $0x18] sm:$0xf] %vm2165, %v2036
      %2167 = vst.msk [vmem:[%s201 + $0x20] sm:$0xff] %vm2161, %v2037
      %2168 = vst.msk [vmem:[%s201 + $0x28] sm:$0xff] %vm2161, %v2038
      %2169 = vst.msk [vmem:[%s201 + $0x30] sm:$0xff] %vm2161, %v2039
      %2170 = vst.msk [vmem:[%s201 + $0x38] sm:$0xf] %vm2165, %v2040
      %2171 = vst.msk [vmem:[%s201 + $0x40] sm:$0xff] %vm2161, %v2041
      %2172 = vst.msk [vmem:[%s201 + $0x48] sm:$0xff] %vm2161, %v2042
      %2173 = vst.msk [vmem:[%s201 + $0x50] sm:$0xff] %vm2161, %v2043
      %2174 = vst.msk [vmem:[%s201 + $0x58] sm:$0xf] %vm2165, %v2044
      %2175 = vst.msk [vmem:[%s201 + $0x60] sm:$0xff] %vm2161, %v2045
      %2176 = vst.msk [vmem:[%s201 + $0x68] sm:$0xff] %vm2161, %v2046
      %2177 = vst.msk [vmem:[%s201 + $0x70] sm:$0xff] %vm2161, %v2047
      %2178 = vst.msk [vmem:[%s201 + $0x78] sm:$0xf] %vm2165, %v2048
      %2179 = vst.msk [vmem:[%s201 + $0x80] sm:$0xff] %vm2161, %v2049
      %2180 = vst.msk [vmem:[%s201 + $0x88] sm:$0xff] %vm2161, %v2050
      %2181 = vst.msk [vmem:[%s201 + $0x90] sm:$0xff] %vm2161, %v2051
      %2182 = vst.msk [vmem:[%s201 + $0x98] sm:$0xf] %vm2165, %v2052
      %2183 = vst.msk [vmem:[%s201 + $0xa0] sm:$0xff] %vm2161, %v2053
      %2184 = vst.msk [vmem:[%s201 + $0xa8] sm:$0xff] %vm2161, %v2054
      %2185 = vst.msk [vmem:[%s201 + $0xb0] sm:$0xff] %vm2161, %v2055
      %2186 = vst.msk [vmem:[%s201 + $0xb8] sm:$0xf] %vm2165, %v2056
      %2187 = vst.msk [vmem:[%s201 + $0xc0] sm:$0xff] %vm2161, %v2057
      %2188 = vst.msk [vmem:[%s201 + $0xc8] sm:$0xff] %vm2161, %v2058
      %2189 = vst.msk [vmem:[%s201 + $0xd0] sm:$0xff] %vm2161, %v2059
      %2190 = vst.msk [vmem:[%s201 + $0xd8] sm:$0xf] %vm2165, %v2060
      %2191 = vst.msk [vmem:[%s201 + $0xe0] sm:$0xff] %vm2161, %v2061
      %2192 = vst.msk [vmem:[%s201 + $0xe8] sm:$0xff] %vm2161, %v2062
      %2193 = vst.msk [vmem:[%s201 + $0xf0] sm:$0xff] %vm2161, %v2063
      %2194 = vst.msk [vmem:[%s201 + $0xf8] sm:$0xf] %vm2165, %v2064
      %2195 = vst.msk [vmem:[%s201 + $0x100] sm:$0xff] %vm2161, %v2065
      %2196 = vst.msk [vmem:[%s201 + $0x108] sm:$0xff] %vm2161, %v2066
      %2197 = vst.msk [vmem:[%s201 + $0x110] sm:$0xff] %vm2161, %v2067
      %2198 = vst.msk [vmem:[%s201 + $0x118] sm:$0xf] %vm2165, %v2068
      %2199 = vst.msk [vmem:[%s201 + $0x120] sm:$0xff] %vm2161, %v2069
      %2200 = vst.msk [vmem:[%s201 + $0x128] sm:$0xff] %vm2161, %v2070
      %2201 = vst.msk [vmem:[%s201 + $0x130] sm:$0xff] %vm2161, %v2071
      %2202 = vst.msk [vmem:[%s201 + $0x138] sm:$0xf] %vm2165, %v2072
      %2203 = vst.msk [vmem:[%s201 + $0x140] sm:$0xff] %vm2161, %v2073
      %2204 = vst.msk [vmem:[%s201 + $0x148] sm:$0xff] %vm2161, %v2074
      %2205 = vst.msk [vmem:[%s201 + $0x150] sm:$0xff] %vm2161, %v2075
      %2206 = vst.msk [vmem:[%s201 + $0x158] sm:$0xf] %vm2165, %v2076
      %2207 = vst.msk [vmem:[%s201 + $0x160] sm:$0xff] %vm2161, %v2077
      %2208 = vst.msk [vmem:[%s201 + $0x168] sm:$0xff] %vm2161, %v2078
      %2209 = vst.msk [vmem:[%s201 + $0x170] sm:$0xff] %vm2161, %v2079
      %2210 = vst.msk [vmem:[%s201 + $0x178] sm:$0xf] %vm2165, %v2080
      %2211 = vst.msk [vmem:[%s201 + $0x180] sm:$0xff] %vm2161, %v2081
      %2212 = vst.msk [vmem:[%s201 + $0x188] sm:$0xff] %vm2161, %v2082
      %2213 = vst.msk [vmem:[%s201 + $0x190] sm:$0xff] %vm2161, %v2083
      %2214 = vst.msk [vmem:[%s201 + $0x198] sm:$0xf] %vm2165, %v2084
      %2215 = vst.msk [vmem:[%s201 + $0x1a0] sm:$0xff] %vm2161, %v2085
      %2216 = vst.msk [vmem:[%s201 + $0x1a8] sm:$0xff] %vm2161, %v2086
      %2217 = vst.msk [vmem:[%s201 + $0x1b0] sm:$0xff] %vm2161, %v2087
      %2218 = vst.msk [vmem:[%s201 + $0x1b8] sm:$0xf] %vm2165, %v2088
      %2219 = vst.msk [vmem:[%s201 + $0x1c0] sm:$0xff] %vm2161, %v2089
      %2220 = vst.msk [vmem:[%s201 + $0x1c8] sm:$0xff] %vm2161, %v2090
      %2221 = vst.msk [vmem:[%s201 + $0x1d0] sm:$0xff] %vm2161, %v2091
      %2222 = vst.msk [vmem:[%s201 + $0x1d8] sm:$0xf] %vm2165, %v2092
      %2223 = vst.msk [vmem:[%s201 + $0x1e0] sm:$0xff] %vm2161, %v2093
      %2224 = vst.msk [vmem:[%s201 + $0x1e8] sm:$0xff] %vm2161, %v2094
      %2225 = vst.msk [vmem:[%s201 + $0x1f0] sm:$0xff] %vm2161, %v2095
      %2226 = vst.msk [vmem:[%s201 + $0x1f8] sm:$0xf] %vm2165, %v2096
      %2227 = vst.msk [vmem:[%s201 + $0x200] sm:$0xff] %vm2161, %v2097
      %2228 = vst.msk [vmem:[%s201 + $0x208] sm:$0xff] %vm2161, %v2098
      %2229 = vst.msk [vmem:[%s201 + $0x210] sm:$0xff] %vm2161, %v2099
      %2230 = vst.msk [vmem:[%s201 + $0x218] sm:$0xf] %vm2165, %v2100
      %2231 = vst.msk [vmem:[%s201 + $0x220] sm:$0xff] %vm2161, %v2101
      %2232 = vst.msk [vmem:[%s201 + $0x228] sm:$0xff] %vm2161, %v2102
      %2233 = vst.msk [vmem:[%s201 + $0x230] sm:$0xff] %vm2161, %v2103
      %2234 = vst.msk [vmem:[%s201 + $0x238] sm:$0xf] %vm2165, %v2104
      %2235 = vst.msk [vmem:[%s201 + $0x240] sm:$0xff] %vm2161, %v2105
      %2236 = vst.msk [vmem:[%s201 + $0x248] sm:$0xff] %vm2161, %v2106
      %2237 = vst.msk [vmem:[%s201 + $0x250] sm:$0xff] %vm2161, %v2107
      %2238 = vst.msk [vmem:[%s201 + $0x258] sm:$0xf] %vm2165, %v2108
      %2239 = vst.msk [vmem:[%s201 + $0x260] sm:$0xff] %vm2161, %v2109
      %2240 = vst.msk [vmem:[%s201 + $0x268] sm:$0xff] %vm2161, %v2110
      %2241 = vst.msk [vmem:[%s201 + $0x270] sm:$0xff] %vm2161, %v2111
      %2242 = vst.msk [vmem:[%s201 + $0x278] sm:$0xf] %vm2165, %v2112
      %2243 = vst.msk [vmem:[%s201 + $0x280] sm:$0xff] %vm2161, %v2113
      %2244 = vst.msk [vmem:[%s201 + $0x288] sm:$0xff] %vm2161, %v2114
      %2245 = vst.msk [vmem:[%s201 + $0x290] sm:$0xff] %vm2161, %v2115
      %2246 = vst.msk [vmem:[%s201 + $0x298] sm:$0xf] %vm2165, %v2116
      %2247 = vst.msk [vmem:[%s201 + $0x2a0] sm:$0xff] %vm2161, %v2117
      %2248 = vst.msk [vmem:[%s201 + $0x2a8] sm:$0xff] %vm2161, %v2118
      %2249 = vst.msk [vmem:[%s201 + $0x2b0] sm:$0xff] %vm2161, %v2119
      %2250 = vst.msk [vmem:[%s201 + $0x2b8] sm:$0xf] %vm2165, %v2120
      %2251 = vst.msk [vmem:[%s201 + $0x2c0] sm:$0xff] %vm2161, %v2121
      %2252 = vst.msk [vmem:[%s201 + $0x2c8] sm:$0xff] %vm2161, %v2122
      %2253 = vst.msk [vmem:[%s201 + $0x2d0] sm:$0xff] %vm2161, %v2123
      %2254 = vst.msk [vmem:[%s201 + $0x2d8] sm:$0xf] %vm2165, %v2124
      %2255 = vst.msk [vmem:[%s201 + $0x2e0] sm:$0xff] %vm2161, %v2125
      %2256 = vst.msk [vmem:[%s201 + $0x2e8] sm:$0xff] %vm2161, %v2126
      %2257 = vst.msk [vmem:[%s201 + $0x2f0] sm:$0xff] %vm2161, %v2127
      %2258 = vst.msk [vmem:[%s201 + $0x2f8] sm:$0xf] %vm2165, %v2128
      %2259 = vst.msk [vmem:[%s201 + $0x300] sm:$0xff] %vm2161, %v2129
      %2260 = vst.msk [vmem:[%s201 + $0x308] sm:$0xff] %vm2161, %v2130
      %2261 = vst.msk [vmem:[%s201 + $0x310] sm:$0xff] %vm2161, %v2131
      %2262 = vst.msk [vmem:[%s201 + $0x318] sm:$0xf] %vm2165, %v2132
      %2263 = vst.msk [vmem:[%s201 + $0x320] sm:$0xff] %vm2161, %v2133
      %2264 = vst.msk [vmem:[%s201 + $0x328] sm:$0xff] %vm2161, %v2134
      %2265 = vst.msk [vmem:[%s201 + $0x330] sm:$0xff] %vm2161, %v2135
      %2266 = vst.msk [vmem:[%s201 + $0x338] sm:$0xf] %vm2165, %v2136
      %2267 = vst.msk [vmem:[%s201 + $0x340] sm:$0xff] %vm2161, %v2137
      %2268 = vst.msk [vmem:[%s201 + $0x348] sm:$0xff] %vm2161, %v2138
      %2269 = vst.msk [vmem:[%s201 + $0x350] sm:$0xff] %vm2161, %v2139
      %2270 = vst.msk [vmem:[%s201 + $0x358] sm:$0xf] %vm2165, %v2140
      %2271 = vst.msk [vmem:[%s201 + $0x360] sm:$0xff] %vm2161, %v2141
      %2272 = vst.msk [vmem:[%s201 + $0x368] sm:$0xff] %vm2161, %v2142
      %2273 = vst.msk [vmem:[%s201 + $0x370] sm:$0xff] %vm2161, %v2143
      %2274 = vst.msk [vmem:[%s201 + $0x378] sm:$0xf] %vm2165, %v2144
      %2275 = vst.msk [vmem:[%s201 + $0x380] sm:$0xff] %vm2161, %v2145
      %2276 = vst.msk [vmem:[%s201 + $0x388] sm:$0xff] %vm2161, %v2146
      %2277 = vst.msk [vmem:[%s201 + $0x390] sm:$0xff] %vm2161, %v2147
      %2278 = vst.msk [vmem:[%s201 + $0x398] sm:$0xf] %vm2165, %v2148
      %2279 = vst.msk [vmem:[%s201 + $0x3a0] sm:$0xff] %vm2161, %v2149
      %2280 = vst.msk [vmem:[%s201 + $0x3a8] sm:$0xff] %vm2161, %v2150
      %2281 = vst.msk [vmem:[%s201 + $0x3b0] sm:$0xff] %vm2161, %v2151
      %2282 = vst.msk [vmem:[%s201 + $0x3b8] sm:$0xf] %vm2165, %v2152
      %2283 = vst.msk [vmem:[%s201 + $0x3c0] sm:$0xff] %vm2161, %v2153
      %2284 = vst.msk [vmem:[%s201 + $0x3c8] sm:$0xff] %vm2161, %v2154
      %2285 = vst.msk [vmem:[%s201 + $0x3d0] sm:$0xff] %vm2161, %v2155
      %2286 = vst.msk [vmem:[%s201 + $0x3d8] sm:$0xf] %vm2165, %v2156
      %2287 = vst.msk [vmem:[%s201 + $0x3e0] sm:$0xff] %vm2161, %v2157
      %2288 = vst.msk [vmem:[%s201 + $0x3e8] sm:$0xff] %vm2161, %v2158
      %2289 = vst.msk [vmem:[%s201 + $0x3f0] sm:$0xff] %vm2161, %v2159
      %2290 = vst.msk [vmem:[%s201 + $0x3f8] sm:$0xf] %vm2165, %v2160
      %s2291 = smul.u32 32, %s15
      %p2292 = scmp.lt.s32.totalorder %s2291, 127
      %s2293 = scalar_select %p2292, %s2291, 127
      %s2294 = smul.addr %s2293, 4
      %s2295 = smul.addr %s2294, 8
      %s2296 = scalar_lea.vmem %s4, %s2295
      // Predicated region
      $region37: #{dinov2_mid_encoder_forward.3} parent=35 // pred_check
        %p2297 = pneg %p122
      $region38: #{dinov2_mid_encoder_forward.3} parent=35 // pred_check_branch
        %2299 = sbr.rel (%p2297) target = $region40
      $region39: #{dinov2_mid_encoder_forward.3} parent=35 // pred_region
        %s2300 = smul.u32 32, %s15
      $region40: #{dinov2_mid_encoder_forward.3} parent=35 // pred_fallthru
        _
    $region36: #{dinov2_mid_encoder_forward.3} parent=5 // pred_fallthru
      _
    %p2301 = scmp.le.s32.totalorder 2, %s10
    // Predicated region
    $region41: #{dinov2_mid_encoder_forward.3} parent=5 // pred_check
      %p2302 = pneg %p2301
    $region42: #{dinov2_mid_encoder_forward.3} parent=5 // pred_check_branch
      %2304 = sbr.rel (%p2302) target = $region44
    $region43: #{dinov2_mid_encoder_forward.3} parent=5 // pred_region
      %s2305 = ssub.s32 %s10, 2
      // Predicated region
      $region45: #{dinov2_mid_encoder_forward.3} parent=43 // pred_check
        %p2306 = pneg %p128
      $region46: #{dinov2_mid_encoder_forward.3} parent=43 // pred_check_branch
        %2308 = sbr.rel (%p2306) target = $region48
      $region47: #{dinov2_mid_encoder_forward.3} parent=43 // pred_region
        %s2309 = smul.u32 32, %s16
        %p2310 = scmp.lt.s32.totalorder %s2309, 127
        %s2311 = scalar_select %p2310, %s2309, 127
        %s2312 = smul.addr %s2311, 4
        %s2313 = smul.addr %s2312, 8
        %s2314 = scalar_lea.vmem %s4, %s2313
      $region48: #{dinov2_mid_encoder_forward.3} parent=43 // pred_fallthru
        _
    $region44: #{dinov2_mid_encoder_forward.3} parent=5 // pred_fallthru
      _
  $region6: #{dinov2_mid_encoder_forward.3} parent=0 // loop_footer
    %s14 = sadd.s32 1, %s10
  $region7: #{dinov2_mid_encoder_forward.3} parent=0 // loop_footer_branch
    %9 = sbr.rel target = $region3
  $region8: #{dinov2_mid_encoder_forward.3} parent=0 // loop_exit
    _

// kernel: dinov2_mid_encoder_forward.2
$region0: #{dinov2_mid_encoder_forward.2}
  #allocation0 [shape = 'u32[]', space=smem, size = 0x4, offset = 0x4, fixed_abs, tag = 'smem constant byte address 0x4 - core index']
  #allocation1 [shape = 'u32[72,128]{1,0:T(1,128)}', space=vmem, size = 0x9000, scoped, tag = 'internal scratch']
  #allocation2 [shape = 'f32[5,128]{1,0:T(8,128)}', space=vmem, size = 0x1000, scoped, tag = 'scratch operand']
  %s0 = inlined_call_operand.vmem [shape: bf16[4,588], index: 0, kind: input, shape index: {}]
  %s1 = inlined_call_operand.vmem [shape: bf16[588,128], index: 1, kind: input, shape index: {}]
  %s2 = inlined_call_operand.vmem [shape: f32[5,128], index: 2, kind: input, shape index: {}]
  %s3 = inlined_call_operand.hbm [shape: f32[32,8,512], index: 3, kind: input, shape index: {}]
  %s4 = inlined_call_operand.hbm [shape: bf16[32,128,384], index: 4, kind: input, shape index: {}]
  %s5 = inlined_call_operand.hbm [shape: bf16[32,128,128], index: 5, kind: input, shape index: {}]
  %s6 = inlined_call_operand.vmem [shape: bf16[32,128,512], index: 6, kind: input, shape index: {}]
  %s7 = inlined_call_operand.hbm [shape: bf16[32,512,128], index: 7, kind: input, shape index: {}]
  %s8 = inlined_call_operand.vmem [shape: f32[4,128], index: 8, kind: output, shape index: {}]
  %s9 = sld [smem:[#allocation0]]
  $region117: #{dinov2_mid_encoder_forward.2} parent=0
    _
  %s11 = ssub.s32 1, %s9
  %s12 = scalar_select 0, %s11, %s9
  $region1: #{dinov2_mid_encoder_forward.2} parent=0
    #allocation3 [shape = 'u8[131072]{0}', space=vmem, size = 0x20000, scoped, tag = 'input window, operand 3']
    #allocation4 [shape = 's32[2]{0}', space=sflag, size = 0x8, scoped, tag = 'scoped memory for dinov2_mid_encoder_forward.2']
    #allocation5 [shape = 'u8[786432]{0}', space=vmem, size = 0xc0000, scoped, tag = 'input window, operand 4']
    #allocation6 [shape = 's32[2]{0}', space=sflag, size = 0x8, scoped, tag = 'scoped memory for dinov2_mid_encoder_forward.2']
    #allocation7 [shape = 'u8[262144]{0}', space=vmem, size = 0x40000, scoped, tag = 'input window, operand 5']
    #allocation8 [shape = 'u8[1048576]{0}', space=vmem, size = 0x100000, scoped, tag = 'input window, operand 7']
    #allocation9 [shape = 's32[2]{0}', space=sflag, size = 0x8, scoped, tag = 'scoped memory for dinov2_mid_encoder_forward.2']
    %13 = vsyncpa [#allocation4], 0
    %s14 = scalar_lea.sflag [#allocation4], 1
    %15 = vsyncpa %s14, 0
    %16 = vsyncpa [#allocation6], 0
    %s17 = scalar_lea.sflag [#allocation6], 1
    %18 = vsyncpa %s17, 0
    %19 = vsyncpa [#allocation9], 0
    %s20 = scalar_lea.sflag [#allocation9], 1
    %21 = vsyncpa %s20, 0
    loop: start=0, step=1, limit=10
    $region2: #{dinov2_mid_encoder_forward.2} parent=1 // loop_pre_header
      _
    $region3: #{dinov2_mid_encoder_forward.2} parent=1 // loop_header
      %s23 = sphi 0, %s27
      %p24 = scmp.ge.s32.totalorder %s23, 10
      %s31 = sphi 0, %s31
      %s33 = sphi 0, %s31
      %s34 = sphi 0, %s33
      %s48 = sphi 0, %s34
      %s52 = sphi 0, %s52
      %s54 = sphi 0, %s52
      %s55 = sphi 0, %s54
      %s69 = sphi 0, %s55
      %s73 = sphi 0, %s73
      %s75 = sphi 0, %s73
      %s76 = sphi 0, %s75
      %s90 = sphi 0, %s76
      %s96 = sphi 0, %s98
      %s99 = sphi 0, %s96
      %s100 = sphi 0, %s99
      %s116 = sphi 0, %s100
      %s122 = sphi 0, %s124
      %s125 = sphi 0, %s122
      %s126 = sphi 0, %s125
      %s142 = sphi 0, %s126
      %s148 = sphi 0, %s150
      %s151 = sphi 0, %s148
      %s152 = sphi 0, %s151
      %s168 = sphi 0, %s152
      %s174 = sphi 0, %s176
      %s177 = sphi 0, %s174
      %s178 = sphi 0, %s177
      %s194 = sphi 0, %s178
      %s200 = sphi 0, %s202
      %s203 = sphi 0, %s200
      %s204 = sphi 0, %s203
      %s220 = sphi 0, %s204
      %s224 = sphi 0, %s224
      %s226 = sphi 0, %s224
      %s227 = sphi 0, %s226
      %s241 = sphi 0, %s227
    $region4: #{dinov2_mid_encoder_forward.2} parent=1 // loop_header_branch
      %26 = sbr.rel (%p24) target = $region8
    $region5: #{dinov2_mid_encoder_forward.2} parent=1 // loop_body
      %s28 = ssub.s32 %s23, 1
      %s29 = ssub.s32 %s23, 2
      %s30 = sadd.s32 %s23, 1
      %s32 = sadd.s32 %s31, 1
      %p35 = scmp.eq.s32.totalorder %s23, 7
      %p36 = scmp.ne.s32.totalorder %s31, %s33
      %p37 = scmp.eq.s32.totalorder %s23, 0
      %p38 = por %p36, %p37
      %p39 = scmp.ne.s32.totalorder %s31, %s33
      %p40 = scmp.eq.s32.totalorder %s28, 7
      %p41 = por %p39, %p40
      %p42 = scmp.ne.s32.totalorder %s33, %s34
      %p43 = scmp.eq.s32.totalorder %s28, 0
      %p44 = por %p42, %p43
      %p45 = scmp.ne.s32.totalorder %s33, %s34
      %p46 = scmp.eq.s32.totalorder %s29, 7
      %p47 = por %p45, %p46
      %p49 = scmp.ne.s32.totalorder %s34, %s48
      %p50 = scmp.eq.s32.totalorder %s29, 0
      %p51 = por %p49, %p50
      %s53 = sadd.s32 %s52, 1
      %p56 = scmp.eq.s32.totalorder %s23, 7
      %p57 = scmp.ne.s32.totalorder %s52, %s54
      %p58 = scmp.eq.s32.totalorder %s23, 0
      %p59 = por %p57, %p58
      %p60 = scmp.ne.s32.totalorder %s52, %s54
      %p61 = scmp.eq.s32.totalorder %s28, 7
      %p62 = por %p60, %p61
      %p63 = scmp.ne.s32.totalorder %s54, %s55
      %p64 = scmp.eq.s32.totalorder %s28, 0
      %p65 = por %p63, %p64
      %p66 = scmp.ne.s32.totalorder %s54, %s55
      %p67 = scmp.eq.s32.totalorder %s29, 7
      %p68 = por %p66, %p67
      %p70 = scmp.ne.s32.totalorder %s55, %s69
      %p71 = scmp.eq.s32.totalorder %s29, 0
      %p72 = por %p70, %p71
      %s74 = sadd.s32 %s73, 1
      %p77 = scmp.eq.s32.totalorder %s23, 7
      %p78 = scmp.ne.s32.totalorder %s73, %s75
      %p79 = scmp.eq.s32.totalorder %s23, 0
      %p80 = por %p78, %p79
      %p81 = scmp.ne.s32.totalorder %s73, %s75
      %p82 = scmp.eq.s32.totalorder %s28, 7
      %p83 = por %p81, %p82
      %p84 = scmp.ne.s32.totalorder %s75, %s76
      %p85 = scmp.eq.s32.totalorder %s28, 0
      %p86 = por %p84, %p85
      %p87 = scmp.ne.s32.totalorder %s75, %s76
      %p88 = scmp.eq.s32.totalorder %s29, 7
      %p89 = por %p87, %p88
      %p91 = scmp.ne.s32.totalorder %s76, %s90
      %p92 = scmp.eq.s32.totalorder %s29, 0
      %p93 = por %p91, %p92
      %s94 = ssub.s32 %s23, %s30
      %p95 = scmp.eq.s32.totalorder %s94, 0
      %s97 = sadd.s32 %s96, 1
      %s98 = scalar_select %p95, %s96, %s97
      %p101 = pneg %p95
      %p102 = scmp.eq.s32.totalorder %s23, 7
      %p103 = por %p101, %p102
      %p104 = scmp.ne.s32.totalorder %s96, %s99
      %p105 = scmp.eq.s32.totalorder %s23, 0
      %p106 = por %p104, %p105
      %p107 = scmp.ne.s32.totalorder %s96, %s99
      %p108 = scmp.eq.s32.totalorder %s28, 7
      %p109 = por %p107, %p108
      %p110 = scmp.ne.s32.totalorder %s99, %s100
      %p111 = scmp.eq.s32.totalorder %s28, 0
      %p112 = por %p110, %p111
      %p113 = scmp.ne.s32.totalorder %s99, %s100
      %p114 = scmp.eq.s32.totalorder %s29, 7
      %p115 = por %p113, %p114
      %p117 = scmp.ne.s32.totalorder %s100, %s116
      %p118 = scmp.eq.s32.totalorder %s29, 0
      %p119 = por %p117, %p118
      %s120 = ssub.s32 %s23, %s30
      %p121 = scmp.eq.s32.totalorder %s120, 0
      %s123 = sadd.s32 %s122, 1
      %s124 = scalar_select %p121, %s122, %s123
      %p127 = pneg %p121
      %p128 = scmp.eq.s32.totalorder %s23, 7
      %p129 = por %p127, %p128
      %p130 = scmp.ne.s32.totalorder %s122, %s125
      %p131 = scmp.eq.s32.totalorder %s23, 0
      %p132 = por %p130, %p131
      %p133 = scmp.ne.s32.totalorder %s122, %s125
      %p134 = scmp.eq.s32.totalorder %s28, 7
      %p135 = por %p133, %p134
      %p136 = scmp.ne.s32.totalorder %s125, %s126
      %p137 = scmp.eq.s32.totalorder %s28, 0
      %p138 = por %p136, %p137
      %p139 = scmp.ne.s32.totalorder %s125, %s126
      %p140 = scmp.eq.s32.totalorder %s29, 7
      %p141 = por %p139, %p140
      %p143 = scmp.ne.s32.totalorder %s126, %s142
      %p144 = scmp.eq.s32.totalorder %s29, 0
      %p145 = por %p143, %p144
      %s146 = ssub.s32 %s23, %s30
      %p147 = scmp.eq.s32.totalorder %s146, 0
      %s149 = sadd.s32 %s148, 1
      %s150 = scalar_select %p147, %s148, %s149
      %p153 = pneg %p147
      %p154 = scmp.eq.s32.totalorder %s23, 7
      %p155 = por %p153, %p154
      %p156 = scmp.ne.s32.totalorder %s148, %s151
      %p157 = scmp.eq.s32.totalorder %s23, 0
      %p158 = por %p156, %p157
      %p159 = scmp.ne.s32.totalorder %s148, %s151
      %p160 = scmp.eq.s32.totalorder %s28, 7
      %p161 = por %p159, %p160
      %p162 = scmp.ne.s32.totalorder %s151, %s152
      %p163 = scmp.eq.s32.totalorder %s28, 0
      %p164 = por %p162, %p163
      %p165 = scmp.ne.s32.totalorder %s151, %s152
      %p166 = scmp.eq.s32.totalorder %s29, 7
      %p167 = por %p165, %p166
      %p169 = scmp.ne.s32.totalorder %s152, %s168
      %p170 = scmp.eq.s32.totalorder %s29, 0
      %p171 = por %p169, %p170
      %s172 = ssub.s32 %s23, %s30
      %p173 = scmp.eq.s32.totalorder %s172, 0
      %s175 = sadd.s32 %s174, 1
      %s176 = scalar_select %p173, %s174, %s175
      %p179 = pneg %p173
      %p180 = scmp.eq.s32.totalorder %s23, 7
      %p181 = por %p179, %p180
      %p182 = scmp.ne.s32.totalorder %s174, %s177
      %p183 = scmp.eq.s32.totalorder %s23, 0
      %p184 = por %p182, %p183
      %p185 = scmp.ne.s32.totalorder %s174, %s177
      %p186 = scmp.eq.s32.totalorder %s28, 7
      %p187 = por %p185, %p186
      %p188 = scmp.ne.s32.totalorder %s177, %s178
      %p189 = scmp.eq.s32.totalorder %s28, 0
      %p190 = por %p188, %p189
      %p191 = scmp.ne.s32.totalorder %s177, %s178
      %p192 = scmp.eq.s32.totalorder %s29, 7
      %p193 = por %p191, %p192
      %p195 = scmp.ne.s32.totalorder %s178, %s194
      %p196 = scmp.eq.s32.totalorder %s29, 0
      %p197 = por %p195, %p196
      %s198 = ssub.s32 %s23, %s30
      %p199 = scmp.eq.s32.totalorder %s198, 0
      %s201 = sadd.s32 %s200, 1
      %s202 = scalar_select %p199, %s200, %s201
      %p205 = pneg %p199
      %p206 = scmp.eq.s32.totalorder %s23, 7
      %p207 = por %p205, %p206
      %p208 = scmp.ne.s32.totalorder %s200, %s203
      %p209 = scmp.eq.s32.totalorder %s23, 0
      %p210 = por %p208, %p209
      %p211 = scmp.ne.s32.totalorder %s200, %s203
      %p212 = scmp.eq.s32.totalorder %s28, 7
      %p213 = por %p211, %p212
      %p214 = scmp.ne.s32.totalorder %s203, %s204
      %p215 = scmp.eq.s32.totalorder %s28, 0
      %p216 = por %p214, %p215
      %p217 = scmp.ne.s32.totalorder %s203, %s204
      %p218 = scmp.eq.s32.totalorder %s29, 7
      %p219 = por %p217, %p218
      %p221 = scmp.ne.s32.totalorder %s204, %s220
      %p222 = scmp.eq.s32.totalorder %s29, 0
      %p223 = por %p221, %p222
      %s225 = sadd.s32 %s224, 1
      %p228 = scmp.eq.s32.totalorder %s23, 7
      %p229 = scmp.ne.s32.totalorder %s224, %s226
      %p230 = scmp.eq.s32.totalorder %s23, 0
      %p231 = por %p229, %p230
      %p232 = scmp.ne.s32.totalorder %s224, %s226
      %p233 = scmp.eq.s32.totalorder %s28, 7
      %p234 = por %p232, %p233
      %p235 = scmp.ne.s32.totalorder %s226, %s227
      %p236 = scmp.eq.s32.totalorder %s28, 0
      %p237 = por %p235, %p236
      %p238 = scmp.ne.s32.totalorder %s226, %s227
      %p239 = scmp.eq.s32.totalorder %s29, 7
      %p240 = por %p238, %p239
      %p242 = scmp.ne.s32.totalorder %s227, %s241
      %p243 = scmp.eq.s32.totalorder %s29, 0
      %p244 = por %p242, %p243
      %p245 = scmp.le.s32.totalorder 1, %s23
      %p246 = scmp.lt.s32.totalorder %s23, 9
      %p247 = pnand %p245, %p246
      %p248 = pneg %p247
      // Predicated region
      $region9: #{dinov2_mid_encoder_forward.2} parent=5 // pred_check
        _
      $region10: #{dinov2_mid_encoder_forward.2} parent=5 // pred_check_branch
        %250 = sbr.rel (%p247) target = $region12
      $region11: #{dinov2_mid_encoder_forward.2} parent=5 // pred_region
        %s251 = ssub.s32 %s23, 1
        // Predicated region
        $region13: #{dinov2_mid_encoder_forward.2} parent=11 // pred_check
          %p252 = pneg %p44
        $region14: #{dinov2_mid_encoder_forward.2} parent=11 // pred_check_branch
          %254 = sbr.rel (%p252) target = $region16
        $region15: #{dinov2_mid_encoder_forward.2} parent=11 // pred_region
          _
        $region16: #{dinov2_mid_encoder_forward.2} parent=11 // pred_fallthru
          _
        // Predicated region
        $region17: #{dinov2_mid_encoder_forward.2} parent=11 // pred_check
          %p255 = pneg %p65
        $region18: #{dinov2_mid_encoder_forward.2} parent=11 // pred_check_branch
          %257 = sbr.rel (%p255) target = $region20
        $region19: #{dinov2_mid_encoder_forward.2} parent=11 // pred_region
          _
        $region20: #{dinov2_mid_encoder_forward.2} parent=11 // pred_fallthru
          _
        // Predicated region
        $region21: #{dinov2_mid_encoder_forward.2} parent=11 // pred_check
          %p258 = pneg %p86
        $region22: #{dinov2_mid_encoder_forward.2} parent=11 // pred_check_branch
          %260 = sbr.rel (%p258) target = $region24
        $region23: #{dinov2_mid_encoder_forward.2} parent=11 // pred_region
          _
        $region24: #{dinov2_mid_encoder_forward.2} parent=11 // pred_fallthru
          _
      $region12: #{dinov2_mid_encoder_forward.2} parent=5 // pred_fallthru
        _
      %p261 = scmp.lt.s32.totalorder %s23, 8
      // Predicated region
      $region25: #{dinov2_mid_encoder_forward.2} parent=5 // pred_check
        %p262 = pneg %p261
      $region26: #{dinov2_mid_encoder_forward.2} parent=5 // pred_check_branch
        %264 = sbr.rel (%p262) target = $region28
      $region27: #{dinov2_mid_encoder_forward.2} parent=5 // pred_region
        // Predicated region
        $region29: #{dinov2_mid_encoder_forward.2} parent=27 // pred_check
          %p265 = pneg %p106
        $region30: #{dinov2_mid_encoder_forward.2} parent=27 // pred_check_branch
          %267 = sbr.rel (%p265) target = $region32
        $region31: #{dinov2_mid_encoder_forward.2} parent=27 // pred_region
          %s268 = sand.u32 %s96, 1
          %s269 = scalar_lea.sflag [#allocation4], %s268
          %s270 = sand.u32 %s96, 1
          %s271 = smul.addr %s270, 128
          %s272 = scalar_lea.vmem [#allocation3], %s271
          %s273 = smul.u32 4, %s23
          %275 = vsyncadd %s269, 0
          %s276 = smul.addr %s273, 4
          %s277 = smul.addr %s276, 8
          %s278 = scalar_lea.hbm %s3, %s277
          %s279 = sshll.u32 %s278, 4
          %s280 = int_to_ptr.hbm [resolvable:$true] %s279
          %s281 = sshll.u32 %s272, 4
          %s282 = int_to_ptr.vmem [resolvable:$true] %s281
          %287 = dma.hbm_to_vmem [thread:$0]  %s280, 2048, %s282, %s269, 512, 512, 32
        $region32: #{dinov2_mid_encoder_forward.2} parent=27 // pred_fallthru
          _
        // Predicated region
        $region33: #{dinov2_mid_encoder_forward.2} parent=27 // pred_check
          %p288 = pneg %p132
        $region34: #{dinov2_mid_encoder_forward.2} parent=27 // pred_check_branch
          %290 = sbr.rel (%p288) target = $region36
        $region35: #{dinov2_mid_encoder_forward.2} parent=27 // pred_region
          %s291 = sand.u32 %s23, 1
          %s292 = scalar_lea.sflag [#allocation6], %s291
          %s293 = sand.u32 %s122, 1
          %s294 = smul.addr %s293, 768
          %s295 = scalar_lea.vmem [#allocation5], %s294
          %s296 = smul.u32 4, %s23
          %298 = vsyncadd %s292, 0
          %s299 = smul.addr %s296, 48
          %s300 = smul.addr %s299, 4
          %s301 = scalar_lea.hbm %s4, %s300
          %s302 = sshll.u32 %s301, 4
          %s303 = int_to_ptr.hbm [resolvable:$true] %s302
          %s304 = sshll.u32 %s295, 4
          %s305 = int_to_ptr.vmem [resolvable:$true] %s304
          %310 = dma.hbm_to_vmem [thread:$0]  %s303, 12288, %s305, %s292, 192, 192, 12
        $region36: #{dinov2_mid_encoder_forward.2} parent=27 // pred_fallthru
          _
        // Predicated region
        $region37: #{dinov2_mid_encoder_forward.2} parent=27 // pred_check
          %p311 = pneg %p158
        $region38: #{dinov2_mid_encoder_forward.2} parent=27 // pred_check_branch
          %313 = sbr.rel (%p311) target = $region40
        $region39: #{dinov2_mid_encoder_forward.2} parent=27 // pred_region
          %s314 = sand.u32 %s23, 1
          %s315 = scalar_lea.sflag [#allocation6], %s314
          %s316 = sand.u32 %s148, 1
          %s317 = smul.addr %s316, 256
          %s318 = scalar_lea.vmem [#allocation7], %s317
          %s319 = smul.u32 4, %s23
          %321 = vsyncadd %s315, 0
          %s322 = smul.addr %s319, 16
          %s323 = smul.addr %s322, 4
          %s324 = scalar_lea.hbm %s5, %s323
          %s325 = sshll.u32 %s324, 4
          %s326 = int_to_ptr.hbm [resolvable:$true] %s325
          %s327 = sshll.u32 %s318, 4
          %s328 = int_to_ptr.vmem [resolvable:$true] %s327
          %333 = dma.hbm_to_vmem [thread:$0]  %s326, 4096, %s328, %s315, 64, 64, 4
        $region40: #{dinov2_mid_encoder_forward.2} parent=27 // pred_fallthru
          _
        // Predicated region
        $region41: #{dinov2_mid_encoder_forward.2} parent=27 // pred_check
          %p334 = pneg %p184
        $region42: #{dinov2_mid_encoder_forward.2} parent=27 // pred_check_branch
          %336 = sbr.rel (%p334) target = $region44
        $region43: #{dinov2_mid_encoder_forward.2} parent=27 // pred_region
          %s337 = smul.u32 4, %s23
          %p338 = scmp.lt.s32.totalorder %s337, 31
          %s339 = scalar_select %p338, %s337, 31
          %s340 = smul.addr %s339, 64
          %s341 = smul.addr %s340, 4
          %s342 = scalar_lea.vmem %s6, %s341
          %s343 = smul.u32 4, %s23
        $region44: #{dinov2_mid_encoder_forward.2} parent=27 // pred_fallthru
          _
        // Predicated region
        $region45: #{dinov2_mid_encoder_forward.2} parent=27 // pred_check
          %p344 = pneg %p210
        $region46: #{dinov2_mid_encoder_forward.2} parent=27 // pred_check_branch
          %346 = sbr.rel (%p344) target = $region48
        $region47: #{dinov2_mid_encoder_forward.2} parent=27 // pred_region
          %s347 = sand.u32 %s200, 1
          %s348 = scalar_lea.sflag [#allocation9], %s347
          %s349 = sand.u32 %s200, 1
          %s350 = smul.addr %s349, 1024
          %s351 = scalar_lea.vmem [#allocation8], %s350
          %s352 = smul.u32 4, %s23
          %354 = vsyncadd %s348, 0
          %s355 = smul.addr %s352, 64
          %s356 = smul.addr %s355, 4
          %s357 = scalar_lea.hbm %s7, %s356
          %s358 = sshll.u32 %s357, 4
          %s359 = int_to_ptr.hbm [resolvable:$true] %s358
          %s360 = sshll.u32 %s351, 4
          %s361 = int_to_ptr.vmem [resolvable:$true] %s360
          %366 = dma.hbm_to_vmem [thread:$0]  %s359, 16384, %s361, %s348, 64, 64, 4
        $region48: #{dinov2_mid_encoder_forward.2} parent=27 // pred_fallthru
          _
      $region28: #{dinov2_mid_encoder_forward.2} parent=5 // pred_fallthru
        _
      %p367 = scmp.le.s32.totalorder 1, %s23
      %p368 = scmp.lt.s32.totalorder %s23, 9
      %p369 = pnand %p367, %p368
      %p370 = pneg %p369
      // Predicated region
      $region49: #{dinov2_mid_encoder_forward.2} parent=5 // pred_check
        _
      $region50: #{dinov2_mid_encoder_forward.2} parent=5 // pred_check_branch
        %372 = sbr.rel (%p369) target = $region52
      $region51: #{dinov2_mid_encoder_forward.2} parent=5 // pred_region
        %s373 = ssub.s32 %s23, 1
        %s374 = sand.u32 %s99, 1
        %s375 = scalar_lea.sflag [#allocation4], %s374
        %s376 = sand.u32 %s99, 1
        %s377 = smul.addr %s376, 128
        %s378 = scalar_lea.vmem [#allocation3], %s377
        // Predicated region
        $region53: #{dinov2_mid_encoder_forward.2} parent=51 // pred_check
          %p379 = pneg %p112
        $region54: #{dinov2_mid_encoder_forward.2} parent=51 // pred_check_branch
          %381 = sbr.rel (%p379) target = $region56
        $region55: #{dinov2_mid_encoder_forward.2} parent=51 // pred_region
          %383 = dma.done %s375, 2048
        $region56: #{dinov2_mid_encoder_forward.2} parent=51 // pred_fallthru
          _
        %s384 = sand.u32 %s28, 1
        %s385 = scalar_lea.sflag [#allocation6], %s384
        %s386 = sand.u32 %s125, 1
        %s387 = smul.addr %s386, 768
        %s388 = scalar_lea.vmem [#allocation5], %s387
        // Predicated region
        $region57: #{dinov2_mid_encoder_forward.2} parent=51 // pred_check
          %p389 = pneg %p138
        $region58: #{dinov2_mid_encoder_forward.2} parent=51 // pred_check_branch
          %391 = sbr.rel (%p389) target = $region60
        $region59: #{dinov2_mid_encoder_forward.2} parent=51 // pred_region
          %393 = dma.done %s385, 12288
        $region60: #{dinov2_mid_encoder_forward.2} parent=51 // pred_fallthru
          _
        %s394 = sand.u32 %s28, 1
        %s395 = scalar_lea.sflag [#allocation6], %s394
        %s396 = sand.u32 %s151, 1
        %s397 = smul.addr %s396, 256
        %s398 = scalar_lea.vmem [#allocation7], %s397
        // Predicated region
        $region61: #{dinov2_mid_encoder_forward.2} parent=51 // pred_check
          %p399 = pneg %p164
        $region62: #{dinov2_mid_encoder_forward.2} parent=51 // pred_check_branch
          %401 = sbr.rel (%p399) target = $region64
        $region63: #{dinov2_mid_encoder_forward.2} parent=51 // pred_region
          %403 = dma.done %s395, 4096
        $region64: #{dinov2_mid_encoder_forward.2} parent=51 // pred_fallthru
          _
        %s404 = sand.u32 %s203, 1
        %s405 = scalar_lea.sflag [#allocation9], %s404
        %s406 = sand.u32 %s203, 1
        %s407 = smul.addr %s406, 1024
        %s408 = scalar_lea.vmem [#allocation8], %s407
        // Predicated region
        $region65: #{dinov2_mid_encoder_forward.2} parent=51 // pred_check
          %p409 = pneg %p216
        $region66: #{dinov2_mid_encoder_forward.2} parent=51 // pred_check_branch
          %411 = sbr.rel (%p409) target = $region68
        $region67: #{dinov2_mid_encoder_forward.2} parent=51 // pred_region
          %413 = dma.done %s405, 16384
        $region68: #{dinov2_mid_encoder_forward.2} parent=51 // pred_fallthru
          _
        %p414 = pneg %p44
        %p415 = pneg %p41
        %p416 = pneg %p65
        %p417 = pneg %p62
        %p418 = pneg %p86
        %p419 = pneg %p83
        %s420 = sand.u32 %s99, 1
        %s421 = scalar_lea.sflag [#allocation4], %s420
        %s422 = sand.u32 %s99, 1
        %s423 = smul.addr %s422, 128
        %s424 = scalar_lea.vmem [#allocation3], %s423
        %p425 = pneg %p112
        %p426 = pneg %p109
        %s427 = sand.u32 %s28, 1
        %s428 = scalar_lea.sflag [#allocation6], %s427
        %s429 = sand.u32 %s125, 1
        %s430 = smul.addr %s429, 768
        %s431 = scalar_lea.vmem [#allocation5], %s430
        %p432 = pneg %p138
        %p433 = pneg %p135
        %s434 = sand.u32 %s28, 1
        %s435 = scalar_lea.sflag [#allocation6], %s434
        %s436 = sand.u32 %s151, 1
        %s437 = smul.addr %s436, 256
        %s438 = scalar_lea.vmem [#allocation7], %s437
        %p439 = pneg %p164
        %p440 = pneg %p161
        %s441 = smul.u32 4, %s28
        %p442 = scmp.lt.s32.totalorder %s441, 31
        %s443 = scalar_select %p442, %s441, 31
        %s444 = smul.addr %s443, 64
        %s445 = smul.addr %s444, 4
        %s446 = scalar_lea.vmem %s6, %s445
        %p447 = pneg %p190
        %p448 = pneg %p187
        %s449 = sand.u32 %s203, 1
        %s450 = scalar_lea.sflag [#allocation9], %s449
        %s451 = sand.u32 %s203, 1
        %s452 = smul.addr %s451, 1024
        %s453 = scalar_lea.vmem [#allocation8], %s452
        %p454 = pneg %p216
        %p455 = pneg %p213
        %p456 = pneg %p237
        %p457 = pneg %p234
        %s458 = smul.u32 4, %s28
        %s459 = smul.u32 4, %s28
        %s460 = smul.u32 4, %s28
        %s461 = smul.u32 4, %s28
        %p462 = scmp.lt.s32.totalorder %s461, 31
        %s463 = scalar_select %p462, %s461, 31
        %s464 = smul.addr %s463, 64
        %s465 = smul.addr %s464, 4
        %s466 = scalar_lea.vmem %s6, %s465
        %s467 = smul.u32 4, %s28
        %s468 = smul.u32 4, %s28
        %p470 = scmp.eq.s32.totalorder %s28, 0
        // Predicated region
        $region69: #{dinov2_mid_encoder_forward.2} parent=51 // pred_check
          %p471 = pneg %p470
        $region70: #{dinov2_mid_encoder_forward.2} parent=51 // pred_check_branch
          %473 = sbr.rel (%p471) target = $region72
        $region71: #{dinov2_mid_encoder_forward.2} parent=51 // pred_region
          %v474 = vld [vmem:[%s0] sm:$0xff]
          %v475 = vld [vmem:[%s0 + $0x8] sm:$0x3]
          %v476 = vld [vmem:[%s1] sm:$0xf]
          %v477 = vld [vmem:[%s1 + $0x4] sm:$0xf]
          %v478 = vld [vmem:[%s1 + $0x8] sm:$0xf]
          %v479 = vld [vmem:[%s1 + $0xc] sm:$0xf]
          %v480 = vld [vmem:[%s1 + $0x10] sm:$0xf]
          %v481 = vld [vmem:[%s1 + $0x14] sm:$0xf]
          %v482 = vld [vmem:[%s1 + $0x18] sm:$0xf]
          %v483 = vld [vmem:[%s1 + $0x1c] sm:$0xf]
          %v484 = vld [vmem:[%s1 + $0x20] sm:$0xf]
          %v485 = vld [vmem:[%s1 + $0x24] sm:$0xf]
          %v486 = vld [vmem:[%s1 + $0x28] sm:$0xf]
          %v487 = vld [vmem:[%s1 + $0x2c] sm:$0xf]
          %v488 = vld [vmem:[%s1 + $0x30] sm:$0xf]
          %v489 = vld [vmem:[%s1 + $0x34] sm:$0xf]
          %v490 = vld [vmem:[%s1 + $0x38] sm:$0xf]
          %v491 = vld [vmem:[%s1 + $0x3c] sm:$0xf]
          %v492 = vld [vmem:[%s1 + $0x40] sm:$0xf]
          %v493 = vld [vmem:[%s1 + $0x44] sm:$0xf]
          %v494 = vld [vmem:[%s1 + $0x48] sm:$0xf]
          %v495 = vld [vmem:[%s1 + $0x4c] sm:$0xf]
          %v496 = vld [vmem:[%s1 + $0x50] sm:$0xf]
          %v497 = vld [vmem:[%s1 + $0x54] sm:$0xf]
          %v498 = vld [vmem:[%s1 + $0x58] sm:$0xf]
          %v499 = vld [vmem:[%s1 + $0x5c] sm:$0xf]
          %v500 = vld [vmem:[%s1 + $0x60] sm:$0xf]
          %v501 = vld [vmem:[%s1 + $0x64] sm:$0xf]
          %v502 = vld [vmem:[%s1 + $0x68] sm:$0xf]
          %v503 = vld [vmem:[%s1 + $0x6c] sm:$0xf]
          %v504 = vld [vmem:[%s1 + $0x70] sm:$0xf]
          %v505 = vld [vmem:[%s1 + $0x74] sm:$0xf]
          %v506 = vld [vmem:[%s1 + $0x78] sm:$0xf]
          %v507 = vld [vmem:[%s1 + $0x7c] sm:$0xf]
          %v508 = vld [vmem:[%s1 + $0x80] sm:$0xf]
          %v509 = vld [vmem:[%s1 + $0x84] sm:$0xf]
          %v510 = vld [vmem:[%s1 + $0x88] sm:$0xf]
          %v511 = vld [vmem:[%s1 + $0x8c] sm:$0xf]
          %v512 = vld [vmem:[%s1 + $0x90] sm:$0xf]
          %v513 = vld [vmem:[%s1 + $0x94] sm:$0xf]
          %v514 = vld [vmem:[%s1 + $0x98] sm:$0xf]
          %v515 = vld [vmem:[%s1 + $0x9c] sm:$0xf]
          %v516 = vld [vmem:[%s1 + $0xa0] sm:$0xf]
          %v517 = vld [vmem:[%s1 + $0xa4] sm:$0xf]
          %v518 = vld [vmem:[%s1 + $0xa8] sm:$0xf]
          %v519 = vld [vmem:[%s1 + $0xac] sm:$0xf]
          %v520 = vld [vmem:[%s1 + $0xb0] sm:$0xf]
          %v521 = vld [vmem:[%s1 + $0xb4] sm:$0xf]
          %v522 = vld [vmem:[%s1 + $0xb8] sm:$0xf]
          %v523 = vld [vmem:[%s1 + $0xbc] sm:$0xf]
          %v524 = vld [vmem:[%s1 + $0xc0] sm:$0xf]
          %v525 = vld [vmem:[%s1 + $0xc4] sm:$0xf]
          %v526 = vld [vmem:[%s1 + $0xc8] sm:$0xf]
          %v527 = vld [vmem:[%s1 + $0xcc] sm:$0xf]
          %v528 = vld [vmem:[%s1 + $0xd0] sm:$0xf]
          %v529 = vld [vmem:[%s1 + $0xd4] sm:$0xf]
          %v530 = vld [vmem:[%s1 + $0xd8] sm:$0xf]
          %v531 = vld [vmem:[%s1 + $0xdc] sm:$0xf]
          %v532 = vld [vmem:[%s1 + $0xe0] sm:$0xf]
          %v533 = vld [vmem:[%s1 + $0xe4] sm:$0xf]
          %v534 = vld [vmem:[%s1 + $0xe8] sm:$0xf]
          %v535 = vld [vmem:[%s1 + $0xec] sm:$0xf]
          %v536 = vld [vmem:[%s1 + $0xf0] sm:$0xf]
          %v537 = vld [vmem:[%s1 + $0xf4] sm:$0xf]
          %v538 = vld [vmem:[%s1 + $0xf8] sm:$0xf]
          %v539 = vld [vmem:[%s1 + $0xfc] sm:$0xf]
          %v540 = vld [vmem:[%s1 + $0x100] sm:$0xf]
          %v541 = vld [vmem:[%s1 + $0x104] sm:$0xf]
          %v542 = vld [vmem:[%s1 + $0x108] sm:$0xf]
          %v543 = vld [vmem:[%s1 + $0x10c] sm:$0xf]
          %v544 = vld [vmem:[%s1 + $0x110] sm:$0xf]
          %v545 = vld [vmem:[%s1 + $0x114] sm:$0xf]
          %v546 = vld [vmem:[%s1 + $0x118] sm:$0xf]
          %v547 = vld [vmem:[%s1 + $0x11c] sm:$0xf]
          %v548 = vld [vmem:[%s1 + $0x120] sm:$0xf]
          %v549 = vld [vmem:[%s1 + $0x124] sm:$0x3]
          %v550 = vld [vmem:[%s2] sm:$0x1]
          %551 = vst [vmem:[#allocation2] sm:$0x1] %v550
          %v552 = vld [vmem:[%s2 + $0x1] sm:$0xf]
          %554 = vst [vmem:[#allocation1] ss:$4 sm:$0xff] %v474
          %s556 = scalar_lea.vmem [#allocation1], 32
          %557 = vst [vmem:[%s556] ss:$4 sm:$0xff] %v475
          %v558 = vld.sshfl [vmem:[#allocation1] sm:$0xff pattern:$0x73625140]
          %v559 = vld.sshfl [vmem:[#allocation1 + $0x8] sm:$0xff pattern:$0x73625140]
          %v560 = vld.sshfl [vmem:[#allocation1 + $0x10] sm:$0xff pattern:$0x73625140]
          %v561 = vld.sshfl [vmem:[#allocation1 + $0x18] sm:$0xff pattern:$0x73625140]
          %v562 = vld.sshfl [vmem:[#allocation1 + $0x20] sm:$0xff pattern:$0x73625140]
          %v641 = vunpack.c.l.b16 %v476
          %v642 = vunpack.c.l.b16 %v477
          %v643 = vunpack.c.l.b16 %v478
          %v644 = vunpack.c.l.b16 %v479
          %v645 = vunpack.c.l.b16 %v480
          %v646 = vunpack.c.l.b16 %v481
          %v647 = vunpack.c.l.b16 %v482
          %v648 = vunpack.c.l.b16 %v483
          %v649 = vunpack.c.l.b16 %v484
          %v650 = vunpack.c.l.b16 %v485
          %v651 = vunpack.c.l.b16 %v486
          %v652 = vunpack.c.l.b16 %v487
          %v653 = vunpack.c.l.b16 %v488
          %v654 = vunpack.c.l.b16 %v489
          %v655 = vunpack.c.l.b16 %v490
          %v656 = vunpack.c.l.b16 %v491
          %v657 = vunpack.c.l.b16 %v492
          %v658 = vunpack.c.l.b16 %v493
          %v659 = vunpack.c.l.b16 %v494
          %v660 = vunpack.c.l.b16 %v495
          %v661 = vunpack.c.l.b16 %v496
          %v662 = vunpack.c.l.b16 %v497
          %v663 = vunpack.c.l.b16 %v498
          %v664 = vunpack.c.l.b16 %v499
          %v665 = vunpack.c.l.b16 %v500
          %v666 = vunpack.c.l.b16 %v501
          %v667 = vunpack.c.l.b16 %v502
          %v668 = vunpack.c.l.b16 %v503
          %v669 = vunpack.c.l.b16 %v504
          %v670 = vunpack.c.l.b16 %v505
          %v671 = vunpack.c.l.b16 %v506
          %v672 = vunpack.c.l.b16 %v507
          %v673 = vunpack.c.l.b16 %v508
          %v674 = vunpack.c.l.b16 %v509
          %v675 = vunpack.c.l.b16 %v510
          %v676 = vunpack.c.l.b16 %v511
          %v677 = vunpack.c.l.b16 %v512
          %v678 = vunpack.c.l.b16 %v513
          %v679 = vunpack.c.l.b16 %v514
          %v680 = vunpack.c.l.b16 %v515
          %v681 = vunpack.c.l.b16 %v516
          %v682 = vunpack.c.l.b16 %v517
          %v683 = vunpack.c.l.b16 %v518
          %v684 = vunpack.c.l.b16 %v519
          %v685 = vunpack.c.l.b16 %v520
          %v686 = vunpack.c.l.b16 %v521
          %v687 = vunpack.c.l.b16 %v522
          %v688 = vunpack.c.l.b16 %v523
          %v689 = vunpack.c.l.b16 %v524
          %v690 = vunpack.c.l.b16 %v525
          %v691 = vunpack.c.l.b16 %v526
          %v692 = vunpack.c.l.b16 %v527
          %v693 = vunpack.c.l.b16 %v528
          %v694 = vunpack.c.l.b16 %v529
          %v695 = vunpack.c.l.b16 %v530
          %v696 = vunpack.c.l.b16 %v531
          %v697 = vunpack.c.l.b16 %v532
          %v698 = vunpack.c.l.b16 %v533
          %v699 = vunpack.c.l.b16 %v534
          %v700 = vunpack.c.l.b16 %v535
          %v701 = vunpack.c.l.b16 %v536
          %v702 = vunpack.c.l.b16 %v537
          %v703 = vunpack.c.l.b16 %v538
          %v704 = vunpack.c.l.b16 %v539
          %v705 = vunpack.c.l.b16 %v540
          %v706 = vunpack.c.l.b16 %v541
          %v707 = vunpack.c.l.b16 %v542
          %v708 = vunpack.c.l.b16 %v543
          %v709 = vunpack.c.l.b16 %v544
          %v710 = vunpack.c.l.b16 %v545
          %v711 = vunpack.c.l.b16 %v546
          %v712 = vunpack.c.l.b16 %v547
          %v713 = vunpack.c.l.b16 %v548
          %v714 = vunpack.c.l.b16 %v549
          %v715 = vpack.c.b16 %v642, %v641
          %v716 = vpack.c.b16 %v644, %v643
          %v717 = vpack.c.b16 %v646, %v645
          %v718 = vpack.c.b16 %v648, %v647
          %v719 = vpack.c.b16 %v650, %v649
          %v720 = vpack.c.b16 %v652, %v651
          %v721 = vpack.c.b16 %v654, %v653
          %v722 = vpack.c.b16 %v656, %v655
          %v723 = vpack.c.b16 %v658, %v657
          %v724 = vpack.c.b16 %v660, %v659
          %v725 = vpack.c.b16 %v662, %v661
          %v726 = vpack.c.b16 %v664, %v663
          %v727 = vpack.c.b16 %v666, %v665
          %v728 = vpack.c.b16 %v668, %v667
          %v729 = vpack.c.b16 %v670, %v669
          %v730 = vpack.c.b16 %v672, %v671
          %v731 = vpack.c.b16 %v674, %v673
          %v732 = vpack.c.b16 %v676, %v675
          %v733 = vpack.c.b16 %v678, %v677
          %v734 = vpack.c.b16 %v680, %v679
          %v735 = vpack.c.b16 %v682, %v681
          %v736 = vpack.c.b16 %v684, %v683
          %v737 = vpack.c.b16 %v686, %v685
          %v738 = vpack.c.b16 %v688, %v687
          %v739 = vpack.c.b16 %v690, %v689
          %v740 = vpack.c.b16 %v692, %v691
          %v741 = vpack.c.b16 %v694, %v693
          %v742 = vpack.c.b16 %v696, %v695
          %v743 = vpack.c.b16 %v698, %v697
          %v744 = vpack.c.b16 %v700, %v699
          %v745 = vpack.c.b16 %v702, %v701
          %v746 = vpack.c.b16 %v704, %v703
          %v747 = vpack.c.b16 %v706, %v705
          %v748 = vpack.c.b16 %v708, %v707
          %v749 = vpack.c.b16 %v710, %v709
          %v750 = vpack.c.b16 %v712, %v711
          %v751 = vpack.c.b16 %v714, %v713
          %vm788 = vcmask 621568
          %v789 = vsel %vm788, %v562, 0
          %vm791 = vcmask 1045504
          %v793 = vsel %vm791, %v751, 0
          %795 = vmatpush.bf16.msra.mxu0 %v722
          %796 = vmatpush.bf16.msra.mxu0 %v721
          %797 = vmatpush.bf16.msra.mxu0 %v720
          %798 = vmatpush.bf16.msra.mxu0 %v719
          %799 = vmatpush.bf16.msra.mxu0 %v718
          %800 = vmatpush.bf16.msra.mxu0 %v717
          %801 = vmatpush.bf16.msra.mxu0 %v716
          %802 = vmatpush.bf16.msra.mxu0 %v715
          %803 = vmatmul.bf16.gmra.mxu0 %v558
          %v804 = vpop.f32.mrf.mxu0
          %v805 = vadd.f32 %v552, %v804
          %v806 = vpop.f32.mrf.mxu0
          %807 = vdwg.mxu0
          %808 = vmatpush.bf16.msra.mxu0 %v730
          %809 = vmatpush.bf16.msra.mxu0 %v729
          %810 = vmatpush.bf16.msra.mxu0 %v728
          %811 = vmatpush.bf16.msra.mxu0 %v727
          %812 = vmatpush.bf16.msra.mxu0 %v726
          %813 = vmatpush.bf16.msra.mxu0 %v725
          %814 = vmatpush.bf16.msra.mxu0 %v724
          %815 = vmatpush.bf16.msra.mxu0 %v723
          %816 = vmatmul.bf16.gmra.mxu0 %v559
          %v817 = vpop.f32.mrf.mxu0
          %v818 = vadd.f32 %v805, %v817
          %v819 = vpop.f32.mrf.mxu0
          %820 = vdwg.mxu0
          %821 = vmatpush.bf16.msra.mxu0 %v738
          %822 = vmatpush.bf16.msra.mxu0 %v737
          %823 = vmatpush.bf16.msra.mxu0 %v736
          %824 = vmatpush.bf16.msra.mxu0 %v735
          %825 = vmatpush.bf16.msra.mxu0 %v734
          %826 = vmatpush.bf16.msra.mxu0 %v733
          %827 = vmatpush.bf16.msra.mxu0 %v732
          %828 = vmatpush.bf16.msra.mxu0 %v731
          %829 = vmatmul.bf16.gmra.mxu0 %v560
          %v830 = vpop.f32.mrf.mxu0
          %v831 = vadd.f32 %v818, %v830
          %v832 = vpop.f32.mrf.mxu0
          %833 = vdwg.mxu0
          %834 = vmatpush.bf16.msra.mxu0 %v746
          %835 = vmatpush.bf16.msra.mxu0 %v745
          %836 = vmatpush.bf16.msra.mxu0 %v744
          %837 = vmatpush.bf16.msra.mxu0 %v743
          %838 = vmatpush.bf16.msra.mxu0 %v742
          %839 = vmatpush.bf16.msra.mxu0 %v741
          %840 = vmatpush.bf16.msra.mxu0 %v740
          %841 = vmatpush.bf16.msra.mxu0 %v739
          %842 = vmatmul.bf16.gmra.mxu0 %v561
          %v843 = vpop.f32.mrf.mxu0
          %v844 = vadd.f32 %v831, %v843
          %v845 = vpop.f32.mrf.mxu0
          %846 = vdwg.mxu0
          %847 = vmatpush.bf16.msra.mxu0 0
          %848 = vmatpush.bf16.msra.mxu0 0
          %849 = vmatpush.bf16.msra.mxu0 0
          %850 = vmatpush.bf16.msra.mxu0 %v793
          %851 = vmatpush.bf16.msra.mxu0 %v750
          %852 = vmatpush.bf16.msra.mxu0 %v749
          %853 = vmatpush.bf16.msra.mxu0 %v748
          %854 = vmatpush.bf16.msra.mxu0 %v747
          %855 = vmatmul.bf16.gmra.mxu0 %v789
          %v856 = vpop.f32.mrf.mxu0
          %v857 = vadd.f32 %v844, %v856
          %v858 = vpop.f32.mrf.mxu0
          %859 = vdwg.mxu0
          %860 = vst [vmem:[#allocation2 + $0x1] sm:$0xf] %v857
        $region72: #{dinov2_mid_encoder_forward.2} parent=51 // pred_fallthru
          _
        %s861 = smul.u32 %s28, 4
        %p862 = scmp.lt.s32.totalorder %s861, 31
        // Predicated region
        $region73: #{dinov2_mid_encoder_forward.2} parent=51 // pred_check
          %p863 = pneg %p862
        $region74: #{dinov2_mid_encoder_forward.2} parent=51 // pred_check_branch
          %865 = sbr.rel (%p863) target = $region76
        $region75: #{dinov2_mid_encoder_forward.2} parent=51 // pred_region
          %v866 = vld [vmem:[%s378] sm:$0xff]
          %v867 = vld [vmem:[%s378 + $0x8] sm:$0xff]
          %v868 = vld [vmem:[%s378 + $0x10] sm:$0xff]
          %v869 = vld [vmem:[%s378 + $0x18] sm:$0xff]
          %v870 = vld [vmem:[#allocation2] sm:$0x1f]
          %vm871 = vcmask 1044480
          %v872 = vsel %vm871, %v870, 0.0
          %873 = vadd.xlane.f32.xlu0 %v872
          %v874 = vpop.xlane.xlu0 %873
          %v875 = vrcp.pop 128.0
          %v876 = vmul.f32 128.0, %v875
          %v877 = vsub.f32 1.0, %v876
          %v878 = vmul.f32 %v875, %v877
          %v879 = vadd.f32 %v875, %v878
          %vm880 = vweird.f32 %v875
          %v881 = vsel %vm880, %v875, %v879
          %v882 = vmul.f32 %v874, %v881
          %v883 = vsub.f32 %v870, %v882
          %v884 = vmul.f32 %v883, %v883
          %v885 = vsel %vm871, %v884, 0.0
          %886 = vadd.xlane.f32.xlu0 %v885
          %v887 = vpop.xlane.xlu0 %886
          %v888 = vmul.f32 %v887, %v881
          %v889 = vadd.f32 %v888, 1e-06
          %v890 = vrsqrt.pop %v889
          %v891 = vmul.f32 %v890, %v889
          %v892 = vmul.f32 %v891, %v890
          %v893 = vmul.f32 0.5, %v892
          %v894 = vsub.f32 1.5, %v893
          %v895 = vmul.f32 %v890, %v894
          %vm896 = vweird.f32 %v889
          %vm897 = vweird.f32 %v890
          %vm898 = vmor %vm896, %vm897
          %v899 = vsel %vm898, %v890, %v895
          %v900 = vmul.f32 %v883, %v899
          %v901 = vperm.slane %v866, 0
          %v902 = vmul.f32 %v900, %v901
          %v903 = vperm.slane %v866, 1
          %v904 = vadd.f32 %v902, %v903
          %v905 = vpack.c.bf16 %v904, %v904
          %v906 = vld [vmem:[%s388] sm:$0xff]
          %v907 = vld [vmem:[%s388 + $0x8] sm:$0xf]
          %v908 = vld [vmem:[%s388 + $0xc] sm:$0xff]
          %v909 = vld [vmem:[%s388 + $0x14] sm:$0xf]
          %v910 = vld [vmem:[%s388 + $0x18] sm:$0xff]
          %v911 = vld [vmem:[%s388 + $0x20] sm:$0xf]
          %v912 = vld [vmem:[%s388 + $0x24] sm:$0xff]
          %v913 = vld [vmem:[%s388 + $0x2c] sm:$0xf]
          %v914 = vld [vmem:[%s388 + $0x30] sm:$0xff]
          %v915 = vld [vmem:[%s388 + $0x38] sm:$0xf]
          %v916 = vld [vmem:[%s388 + $0x3c] sm:$0xff]
          %v917 = vld [vmem:[%s388 + $0x44] sm:$0xf]
          %v918 = vld [vmem:[%s388 + $0x48] sm:$0xff]
          %v919 = vld [vmem:[%s388 + $0x50] sm:$0xf]
          %v920 = vld [vmem:[%s388 + $0x54] sm:$0xff]
          %v921 = vld [vmem:[%s388 + $0x5c] sm:$0xf]
          %v922 = vld [vmem:[%s388 + $0x60] sm:$0xff]
          %v923 = vld [vmem:[%s388 + $0x68] sm:$0xf]
          %v924 = vld [vmem:[%s388 + $0x6c] sm:$0xff]
          %v925 = vld [vmem:[%s388 + $0x74] sm:$0xf]
          %v926 = vld [vmem:[%s388 + $0x78] sm:$0xff]
          %v927 = vld [vmem:[%s388 + $0x80] sm:$0xf]
          %v928 = vld [vmem:[%s388 + $0x84] sm:$0xff]
          %v929 = vld [vmem:[%s388 + $0x8c] sm:$0xf]
          %v930 = vld [vmem:[%s388 + $0x90] sm:$0xff]
          %v931 = vld [vmem:[%s388 + $0x98] sm:$0xf]
          %v932 = vld [vmem:[%s388 + $0x9c] sm:$0xff]
          %v933 = vld [vmem:[%s388 + $0xa4] sm:$0xf]
          %v934 = vld [vmem:[%s388 + $0xa8] sm:$0xff]
          %v935 = vld [vmem:[%s388 + $0xb0] sm:$0xf]
          %v936 = vld [vmem:[%s388 + $0xb4] sm:$0xff]
          %v937 = vld [vmem:[%s388 + $0xbc] sm:$0xf]
          %v938 = vperm.slane %v866, 2
          %v939 = vperm.slane %v867, 2
          %v940 = vperm.slane %v868, 2
          %v973 = vunpack.c.l.b16 %v906
          %v974 = vunpack.c.h.b16 %v906
          %v975 = vunpack.c.l.b16 %v907
          %v976 = vunpack.c.l.b16 %v908
          %v977 = vunpack.c.h.b16 %v908
          %v978 = vunpack.c.l.b16 %v909
          %v979 = vunpack.c.l.b16 %v910
          %v980 = vunpack.c.h.b16 %v910
          %v981 = vunpack.c.l.b16 %v911
          %v982 = vunpack.c.l.b16 %v912
          %v983 = vunpack.c.h.b16 %v912
          %v984 = vunpack.c.l.b16 %v913
          %v985 = vunpack.c.l.b16 %v914
          %v986 = vunpack.c.h.b16 %v914
          %v987 = vunpack.c.l.b16 %v915
          %v988 = vunpack.c.l.b16 %v916
          %v989 = vunpack.c.h.b16 %v916
          %v990 = vunpack.c.l.b16 %v917
          %v991 = vunpack.c.l.b16 %v918
          %v992 = vunpack.c.h.b16 %v918
          %v993 = vunpack.c.l.b16 %v919
          %v994 = vunpack.c.l.b16 %v920
          %v995 = vunpack.c.h.b16 %v920
          %v996 = vunpack.c.l.b16 %v921
          %v997 = vunpack.c.l.b16 %v922
          %v998 = vunpack.c.h.b16 %v922
          %v999 = vunpack.c.l.b16 %v923
          %v1000 = vunpack.c.l.b16 %v924
          %v1001 = vunpack.c.h.b16 %v924
          %v1002 = vunpack.c.l.b16 %v925
          %v1003 = vunpack.c.l.b16 %v926
          %v1004 = vunpack.c.h.b16 %v926
          %v1005 = vunpack.c.l.b16 %v927
          %v1006 = vunpack.c.l.b16 %v928
          %v1007 = vunpack.c.h.b16 %v928
          %v1008 = vunpack.c.l.b16 %v929
          %v1009 = vunpack.c.l.b16 %v930
          %v1010 = vunpack.c.h.b16 %v930
          %v1011 = vunpack.c.l.b16 %v931
          %v1012 = vunpack.c.l.b16 %v932
          %v1013 = vunpack.c.h.b16 %v932
          %v1014 = vunpack.c.l.b16 %v933
          %v1015 = vunpack.c.l.b16 %v934
          %v1016 = vunpack.c.h.b16 %v934
          %v1017 = vunpack.c.l.b16 %v935
          %v1018 = vunpack.c.l.b16 %v936
          %v1019 = vunpack.c.h.b16 %v936
          %v1020 = vunpack.c.l.b16 %v937
          %v1021 = vpack.c.b16 %v976, %v973
          %v1022 = vpack.c.b16 %v977, %v974
          %v1023 = vpack.c.b16 %v978, %v975
          %v1024 = vpack.c.b16 %v982, %v979
          %v1025 = vpack.c.b16 %v983, %v980
          %v1026 = vpack.c.b16 %v984, %v981
          %v1027 = vpack.c.b16 %v988, %v985
          %v1028 = vpack.c.b16 %v989, %v986
          %v1029 = vpack.c.b16 %v990, %v987
          %v1030 = vpack.c.b16 %v994, %v991
          %v1031 = vpack.c.b16 %v995, %v992
          %v1032 = vpack.c.b16 %v996, %v993
          %v1033 = vpack.c.b16 %v1000, %v997
          %v1034 = vpack.c.b16 %v1001, %v998
          %v1035 = vpack.c.b16 %v1002, %v999
          %v1036 = vpack.c.b16 %v1006, %v1003
          %v1037 = vpack.c.b16 %v1007, %v1004
          %v1038 = vpack.c.b16 %v1008, %v1005
          %v1039 = vpack.c.b16 %v1012, %v1009
          %v1040 = vpack.c.b16 %v1013, %v1010
          %v1041 = vpack.c.b16 %v1014, %v1011
          %v1042 = vpack.c.b16 %v1018, %v1015
          %v1043 = vpack.c.b16 %v1019, %v1016
          %v1044 = vpack.c.b16 %v1020, %v1017
          %1069 = vmatpush.bf16.msra.mxu0 %v1042
          %1070 = vmatpush.bf16.msra.mxu0 %v1039
          %1071 = vmatpush.bf16.msra.mxu0 %v1036
          %1072 = vmatpush.bf16.msra.mxu0 %v1033
          %1073 = vmatpush.bf16.msra.mxu0 %v1030
          %1074 = vmatpush.bf16.msra.mxu0 %v1027
          %1075 = vmatpush.bf16.msra.mxu0 %v1024
          %1076 = vmatpush.bf16.msra.mxu0 %v1021
          %1077 = vmatmul.bf16.gmra.mxu0 %v905
          %v1078 = vpop.f32.mrf.mxu0
          %v1079 = vadd.f32 %v938, %v1078
          %v1080 = vpop.f32.mrf.mxu0
          %1081 = vdwg.mxu0
          %1082 = vmatpush.bf16.msra.mxu0 %v1043
          %1083 = vmatpush.bf16.msra.mxu0 %v1040
          %1084 = vmatpush.bf16.msra.mxu0 %v1037
          %1085 = vmatpush.bf16.msra.mxu0 %v1034
          %1086 = vmatpush.bf16.msra.mxu0 %v1031
          %1087 = vmatpush.bf16.msra.mxu0 %v1028
          %1088 = vmatpush.bf16.msra.mxu0 %v1025
          %1089 = vmatpush.bf16.msra.mxu0 %v1022
          %1090 = vmatmul.bf16.gmra.mxu0 %v905
          %v1091 = vpop.f32.mrf.mxu0
          %v1092 = vadd.f32 %v939, %v1091
          %v1093 = vpop.f32.mrf.mxu0
          %1094 = vdwg.mxu0
          %1095 = vmatpush.bf16.msra.mxu0 %v1044
          %1096 = vmatpush.bf16.msra.mxu0 %v1041
          %1097 = vmatpush.bf16.msra.mxu0 %v1038
          %1098 = vmatpush.bf16.msra.mxu0 %v1035
          %1099 = vmatpush.bf16.msra.mxu0 %v1032
          %1100 = vmatpush.bf16.msra.mxu0 %v1029
          %1101 = vmatpush.bf16.msra.mxu0 %v1026
          %1102 = vmatpush.bf16.msra.mxu0 %v1023
          %1103 = vmatmul.bf16.gmra.mxu0 %v905
          %v1104 = vpop.f32.mrf.mxu0
          %v1105 = vadd.f32 %v940, %v1104
          %v1106 = vpop.f32.mrf.mxu0
          %1107 = vdwg.mxu0
          %1109 = vrot.lane.b32.xlu0 %v1079, 96
          %v1110 = vpop.permute.xlu0 %1109
          %1112 = vrot.lane.b32.xlu0 %v1079, 64
          %v1113 = vpop.permute.xlu0 %1112
          %1115 = vrot.lane.b32.xlu0 %v1079, 32
          %v1116 = vpop.permute.xlu0 %1115
          %v1118 = vpack.c.bf16 %v1079, %v1079
          %v1119 = vpack.c.bf16 %v1110, %v1110
          %v1120 = vpack.c.bf16 %v1113, %v1113
          %v1121 = vpack.c.bf16 %v1116, %v1116
          %1123 = vrot.lane.b32.xlu0 %v1092, 96
          %v1124 = vpop.permute.xlu0 %1123
          %1126 = vrot.lane.b32.xlu0 %v1092, 64
          %v1127 = vpop.permute.xlu0 %1126
          %1129 = vrot.lane.b32.xlu0 %v1092, 32
          %v1130 = vpop.permute.xlu0 %1129
          %v1132 = vpack.c.bf16 %v1092, %v1092
          %v1133 = vpack.c.bf16 %v1124, %v1124
          %v1134 = vpack.c.bf16 %v1127, %v1127
          %v1135 = vpack.c.bf16 %v1130, %v1130
          %1137 = vrot.lane.b32.xlu0 %v1105, 96
          %v1138 = vpop.permute.xlu0 %1137
          %1140 = vrot.lane.b32.xlu0 %v1105, 64
          %v1141 = vpop.permute.xlu0 %1140
          %1143 = vrot.lane.b32.xlu0 %v1105, 32
          %v1144 = vpop.permute.xlu0 %1143
          %v1146 = vpack.c.bf16 %v1105, %v1105
          %v1147 = vpack.c.bf16 %v1138, %v1138
          %v1148 = vpack.c.bf16 %v1141, %v1141
          %v1149 = vpack.c.bf16 %v1144, %v1144
          %vm1150 = vcmask 261120
          %v1152 = vsel %vm1150, %v1118, 0
          %v1155 = vsel %vm1150, %v1132, 0
          %1157 = vmatpush.bf16.xpose.msra.mxu0 0
          %1158 = vmatpush.bf16.xpose.msra.mxu0 0
          %1159 = vmatpush.bf16.xpose.msra.mxu0 0
          %1160 = vmatpush.bf16.xpose.msra.mxu0 0
          %1161 = vmatpush.bf16.xpose.msra.mxu0 0
          %1162 = vmatpush.bf16.xpose.msra.mxu0 0
          %1163 = vmatpush.bf16.xpose.msra.mxu0 0
          %1164 = vmatpush.bf16.xpose.msra.mxu0 %v1155
          %1165 = vmatmul.bf16.gmra.mxu0 %v1152
          %v1166 = vpop.f32.mrf.mxu0
          %v1167 = vadd.f32 0.0, %v1166
          %v1168 = vpop.f32.mrf.mxu0
          %1169 = vdwg.mxu0
          %v1171 = vsel %vm1150, %v1119, 0
          %v1174 = vsel %vm1150, %v1133, 0
          %1176 = vmatpush.bf16.xpose.msra.mxu0 0
          %1177 = vmatpush.bf16.xpose.msra.mxu0 0
          %1178 = vmatpush.bf16.xpose.msra.mxu0 0
          %1179 = vmatpush.bf16.xpose.msra.mxu0 0
          %1180 = vmatpush.bf16.xpose.msra.mxu0 0
          %1181 = vmatpush.bf16.xpose.msra.mxu0 0
          %1182 = vmatpush.bf16.xpose.msra.mxu0 0
          %1183 = vmatpush.bf16.xpose.msra.mxu0 %v1174
          %1184 = vmatmul.bf16.gmra.mxu0 %v1171
          %v1185 = vpop.f32.mrf.mxu0
          %v1186 = vadd.f32 0.0, %v1185
          %v1187 = vpop.f32.mrf.mxu0
          %1188 = vdwg.mxu0
          %v1190 = vsel %vm1150, %v1120, 0
          %v1193 = vsel %vm1150, %v1134, 0
          %1195 = vmatpush.bf16.xpose.msra.mxu0 0
          %1196 = vmatpush.bf16.xpose.msra.mxu0 0
          %1197 = vmatpush.bf16.xpose.msra.mxu0 0
          %1198 = vmatpush.bf16.xpose.msra.mxu0 0
          %1199 = vmatpush.bf16.xpose.msra.mxu0 0
          %1200 = vmatpush.bf16.xpose.msra.mxu0 0
          %1201 = vmatpush.bf16.xpose.msra.mxu0 0
          %1202 = vmatpush.bf16.xpose.msra.mxu0 %v1193
          %1203 = vmatmul.bf16.gmra.mxu0 %v1190
          %v1204 = vpop.f32.mrf.mxu0
          %v1205 = vadd.f32 0.0, %v1204
          %v1206 = vpop.f32.mrf.mxu0
          %1207 = vdwg.mxu0
          %v1209 = vsel %vm1150, %v1121, 0
          %v1212 = vsel %vm1150, %v1135, 0
          %1214 = vmatpush.bf16.xpose.msra.mxu0 0
          %1215 = vmatpush.bf16.xpose.msra.mxu0 0
          %1216 = vmatpush.bf16.xpose.msra.mxu0 0
          %1217 = vmatpush.bf16.xpose.msra.mxu0 0
          %1218 = vmatpush.bf16.xpose.msra.mxu0 0
          %1219 = vmatpush.bf16.xpose.msra.mxu0 0
          %1220 = vmatpush.bf16.xpose.msra.mxu0 0
          %1221 = vmatpush.bf16.xpose.msra.mxu0 %v1212
          %1222 = vmatmul.bf16.gmra.mxu0 %v1209
          %v1223 = vpop.f32.mrf.mxu0
          %v1224 = vadd.f32 0.0, %v1223
          %v1225 = vpop.f32.mrf.mxu0
          %1226 = vdwg.mxu0
          %vm1227 = vcmask 36864
          %v1228 = vsel %vm1227, %v1167, -inf
          %1229 = vmax.xlane.f32.xlu0 %v1228
          %v1230 = vpop.xlane.xlu0 %1229
          %v1231 = vsel %vm1227, %v1186, -inf
          %1232 = vmax.xlane.f32.xlu0 %v1231
          %v1233 = vpop.xlane.xlu0 %1232
          %v1234 = vsel %vm1227, %v1205, -inf
          %1235 = vmax.xlane.f32.xlu0 %v1234
          %v1236 = vpop.xlane.xlu0 %1235
          %v1237 = vsel %vm1227, %v1224, -inf
          %1238 = vmax.xlane.f32.xlu0 %v1237
          %v1239 = vpop.xlane.xlu0 %1238
          %v1240 = vsub.f32 %v1167, %v1230
          %v1241 = vsub.f32 %v1186, %v1233
          %v1242 = vsub.f32 %v1205, %v1236
          %v1243 = vsub.f32 %v1224, %v1239
          %v1244 = vmul.f32 %v1240, 1.442695
          %v1245 = vpow.pop %v1244
          %v1246 = vmul.f32 %v1241, 1.442695
          %v1247 = vpow.pop %v1246
          %v1248 = vmul.f32 %v1242, 1.442695
          %v1249 = vpow.pop %v1248
          %v1250 = vmul.f32 %v1243, 1.442695
          %v1251 = vpow.pop %v1250
          %v1252 = vsel %vm1227, %v1245, 0.0
          %1253 = vadd.xlane.f32.xlu0 %v1252
          %v1254 = vpop.xlane.xlu0 %1253
          %v1255 = vsel %vm1227, %v1247, 0.0
          %1256 = vadd.xlane.f32.xlu0 %v1255
          %v1257 = vpop.xlane.xlu0 %1256
          %v1258 = vsel %vm1227, %v1249, 0.0
          %1259 = vadd.xlane.f32.xlu0 %v1258
          %v1260 = vpop.xlane.xlu0 %1259
          %v1261 = vsel %vm1227, %v1251, 0.0
          %1262 = vadd.xlane.f32.xlu0 %v1261
          %v1263 = vpop.xlane.xlu0 %1262
          %v1264 = vrcp.pop %v1254
          %v1265 = vrcp.pop %v1257
          %v1266 = vrcp.pop %v1260
          %v1267 = vrcp.pop %v1263
          %v1268 = vmul.f32 %v1245, %v1264
          %v1269 = vmul.f32 %v1247, %v1265
          %v1270 = vmul.f32 %v1249, %v1266
          %v1271 = vmul.f32 %v1251, %v1267
          %v1272 = vpack.c.bf16 %v1268, %v1268
          %v1273 = vpack.c.bf16 %v1269, %v1269
          %v1274 = vpack.c.bf16 %v1270, %v1270
          %v1275 = vpack.c.bf16 %v1271, %v1271
          %vm1276 = vcmask 39936
          %v1278 = vsel %vm1276, %v1272, 0
          %vm1280 = vcmask 1041408
          %vm1281 = vcmask 1042432
          %v1282 = vsel %vm1280, 4294967295, 65535
          %v1283 = vsel %vm1281, %v1282, 0
          %v1285 = vand.u32 %v1146, %v1283
          %1287 = vmatpush.bf16.msra.mxu0 0
          %1288 = vmatpush.bf16.msra.mxu0 0
          %1289 = vmatpush.bf16.msra.mxu0 0
          %1290 = vmatpush.bf16.msra.mxu0 0
          %1291 = vmatpush.bf16.msra.mxu0 0
          %1292 = vmatpush.bf16.msra.mxu0 0
          %1293 = vmatpush.bf16.msra.mxu0 0
          %1294 = vmatpush.bf16.msra.mxu0 %v1285
          %1295 = vmatmul.bf16.gmra.mxu0 %v1278
          %v1296 = vpop.f32.mrf.mxu0
          %v1297 = vadd.f32 0.0, %v1296
          %v1298 = vpop.f32.mrf.mxu0
          %1299 = vdwg.mxu0
          %v1301 = vsel %vm1276, %v1273, 0
          %v1304 = vand.u32 %v1147, %v1283
          %1306 = vmatpush.bf16.msra.mxu0 0
          %1307 = vmatpush.bf16.msra.mxu0 0
          %1308 = vmatpush.bf16.msra.mxu0 0
          %1309 = vmatpush.bf16.msra.mxu0 0
          %1310 = vmatpush.bf16.msra.mxu0 0
          %1311 = vmatpush.bf16.msra.mxu0 0
          %1312 = vmatpush.bf16.msra.mxu0 0
          %1313 = vmatpush.bf16.msra.mxu0 %v1304
          %1314 = vmatmul.bf16.gmra.mxu0 %v1301
          %v1315 = vpop.f32.mrf.mxu0
          %v1316 = vadd.f32 0.0, %v1315
          %v1317 = vpop.f32.mrf.mxu0
          %1318 = vdwg.mxu0
          %v1320 = vsel %vm1276, %v1274, 0
          %v1323 = vand.u32 %v1148, %v1283
          %1325 = vmatpush.bf16.msra.mxu0 0
          %1326 = vmatpush.bf16.msra.mxu0 0
          %1327 = vmatpush.bf16.msra.mxu0 0
          %1328 = vmatpush.bf16.msra.mxu0 0
          %1329 = vmatpush.bf16.msra.mxu0 0
          %1330 = vmatpush.bf16.msra.mxu0 0
          %1331 = vmatpush.bf16.msra.mxu0 0
          %1332 = vmatpush.bf16.msra.mxu0 %v1323
          %1333 = vmatmul.bf16.gmra.mxu0 %v1320
          %v1334 = vpop.f32.mrf.mxu0
          %v1335 = vadd.f32 0.0, %v1334
          %v1336 = vpop.f32.mrf.mxu0
          %1337 = vdwg.mxu0
          %v1339 = vsel %vm1276, %v1275, 0
          %v1342 = vand.u32 %v1149, %v1283
          %1344 = vmatpush.bf16.msra.mxu0 0
          %1345 = vmatpush.bf16.msra.mxu0 0
          %1346 = vmatpush.bf16.msra.mxu0 0
          %1347 = vmatpush.bf16.msra.mxu0 0
          %1348 = vmatpush.bf16.msra.mxu0 0
          %1349 = vmatpush.bf16.msra.mxu0 0
          %1350 = vmatpush.bf16.msra.mxu0 0
          %1351 = vmatpush.bf16.msra.mxu0 %v1342
          %1352 = vmatmul.bf16.gmra.mxu0 %v1339
          %v1353 = vpop.f32.mrf.mxu0
          %v1354 = vadd.f32 0.0, %v1353
          %v1355 = vpop.f32.mrf.mxu0
          %1356 = vdwg.mxu0
          %1358 = vrot.lane.b32.xlu0 %v1316, 32
          %v1359 = vpop.permute.xlu0 %1358
          %1362 = vrot.lane.b32.xlu0 %v1335, 64
          %v1363 = vpop.permute.xlu0 %1362
          %1366 = vrot.lane.b32.xlu0 %v1354, 96
          %v1367 = vpop.permute.xlu0 %1366
          %v1369 = vsel %vm1150, %v1297, %v1359
          %vm1370 = vcmask 523264
          %v1371 = vsel %vm1370, %v1369, %v1363
          %vm1372 = vcmask 785408
          %v1373 = vsel %vm1372, %v1371, %v1367
          %v1374 = vpack.c.bf16 %v1373, %v1373
          %v1375 = vld [vmem:[%s398] sm:$0xf]
          %v1376 = vld [vmem:[%s398 + $0x4] sm:$0xf]
          %v1377 = vld [vmem:[%s398 + $0x8] sm:$0xf]
          %v1378 = vld [vmem:[%s398 + $0xc] sm:$0xf]
          %v1379 = vld [vmem:[%s398 + $0x10] sm:$0xf]
          %v1380 = vld [vmem:[%s398 + $0x14] sm:$0xf]
          %v1381 = vld [vmem:[%s398 + $0x18] sm:$0xf]
          %v1382 = vld [vmem:[%s398 + $0x1c] sm:$0xf]
          %v1383 = vld [vmem:[%s398 + $0x20] sm:$0xf]
          %v1384 = vld [vmem:[%s398 + $0x24] sm:$0xf]
          %v1385 = vld [vmem:[%s398 + $0x28] sm:$0xf]
          %v1386 = vld [vmem:[%s398 + $0x2c] sm:$0xf]
          %v1387 = vld [vmem:[%s398 + $0x30] sm:$0xf]
          %v1388 = vld [vmem:[%s398 + $0x34] sm:$0xf]
          %v1389 = vld [vmem:[%s398 + $0x38] sm:$0xf]
          %v1390 = vld [vmem:[%s398 + $0x3c] sm:$0xf]
          %v1391 = vperm.slane %v866, 3
          %v1408 = vunpack.c.l.b16 %v1375
          %v1409 = vunpack.c.l.b16 %v1376
          %v1410 = vunpack.c.l.b16 %v1377
          %v1411 = vunpack.c.l.b16 %v1378
          %v1412 = vunpack.c.l.b16 %v1379
          %v1413 = vunpack.c.l.b16 %v1380
          %v1414 = vunpack.c.l.b16 %v1381
          %v1415 = vunpack.c.l.b16 %v1382
          %v1416 = vunpack.c.l.b16 %v1383
          %v1417 = vunpack.c.l.b16 %v1384
          %v1418 = vunpack.c.l.b16 %v1385
          %v1419 = vunpack.c.l.b16 %v1386
          %v1420 = vunpack.c.l.b16 %v1387
          %v1421 = vunpack.c.l.b16 %v1388
          %v1422 = vunpack.c.l.b16 %v1389
          %v1423 = vunpack.c.l.b16 %v1390
          %v1424 = vpack.c.b16 %v1409, %v1408
          %v1425 = vpack.c.b16 %v1411, %v1410
          %v1426 = vpack.c.b16 %v1413, %v1412
          %v1427 = vpack.c.b16 %v1415, %v1414
          %v1428 = vpack.c.b16 %v1417, %v1416
          %v1429 = vpack.c.b16 %v1419, %v1418
          %v1430 = vpack.c.b16 %v1421, %v1420
          %v1431 = vpack.c.b16 %v1423, %v1422
          %1440 = vmatpush.bf16.msra.mxu0 %v1431
          %1441 = vmatpush.bf16.msra.mxu0 %v1430
          %1442 = vmatpush.bf16.msra.mxu0 %v1429
          %1443 = vmatpush.bf16.msra.mxu0 %v1428
          %1444 = vmatpush.bf16.msra.mxu0 %v1427
          %1445 = vmatpush.bf16.msra.mxu0 %v1426
          %1446 = vmatpush.bf16.msra.mxu0 %v1425
          %1447 = vmatpush.bf16.msra.mxu0 %v1424
          %1448 = vmatmul.bf16.gmra.mxu0 %v1374
          %v1449 = vpop.f32.mrf.mxu0
          %v1450 = vadd.f32 %v1391, %v1449
          %v1451 = vpop.f32.mrf.mxu0
          %1452 = vdwg.mxu0
          %v1453 = vadd.f32 %v870, %v1450
          %v1454 = vsel %vm871, %v1453, 0.0
          %1455 = vadd.xlane.f32.xlu0 %v1454
          %v1456 = vpop.xlane.xlu0 %1455
          %v1457 = vmul.f32 %v1456, %v881
          %v1458 = vsub.f32 %v1453, %v1457
          %v1459 = vmul.f32 %v1458, %v1458
          %v1460 = vsel %vm871, %v1459, 0.0
          %1461 = vadd.xlane.f32.xlu0 %v1460
          %v1462 = vpop.xlane.xlu0 %1461
          %v1463 = vmul.f32 %v1462, %v881
          %v1464 = vadd.f32 %v1463, 1e-06
          %v1465 = vrsqrt.pop %v1464
          %v1466 = vmul.f32 %v1465, %v1464
          %v1467 = vmul.f32 %v1466, %v1465
          %v1468 = vmul.f32 0.5, %v1467
          %v1469 = vsub.f32 1.5, %v1468
          %v1470 = vmul.f32 %v1465, %v1469
          %vm1471 = vweird.f32 %v1464
          %vm1472 = vweird.f32 %v1465
          %vm1473 = vmor %vm1471, %vm1472
          %v1474 = vsel %vm1473, %v1465, %v1470
          %v1475 = vmul.f32 %v1458, %v1474
          %v1476 = vperm.slane %v866, 4
          %v1477 = vmul.f32 %v1475, %v1476
          %v1478 = vperm.slane %v866, 5
          %v1479 = vadd.f32 %v1477, %v1478
          %v1480 = vpack.c.bf16 %v1479, %v1479
          %v1481 = vld [vmem:[%s466] sm:$0xff]
          %v1482 = vld [vmem:[%s466 + $0x8] sm:$0xff]
          %v1483 = vld [vmem:[%s466 + $0x10] sm:$0xff]
          %v1484 = vld [vmem:[%s466 + $0x18] sm:$0xff]
          %v1485 = vld [vmem:[%s466 + $0x20] sm:$0xff]
          %v1486 = vld [vmem:[%s466 + $0x28] sm:$0xff]
          %v1487 = vld [vmem:[%s466 + $0x30] sm:$0xff]
          %v1488 = vld [vmem:[%s466 + $0x38] sm:$0xff]
          %v1489 = vld [vmem:[%s466 + $0x40] sm:$0xff]
          %v1490 = vld [vmem:[%s466 + $0x48] sm:$0xff]
          %v1491 = vld [vmem:[%s466 + $0x50] sm:$0xff]
          %v1492 = vld [vmem:[%s466 + $0x58] sm:$0xff]
          %v1493 = vld [vmem:[%s466 + $0x60] sm:$0xff]
          %v1494 = vld [vmem:[%s466 + $0x68] sm:$0xff]
          %v1495 = vld [vmem:[%s466 + $0x70] sm:$0xff]
          %v1496 = vld [vmem:[%s466 + $0x78] sm:$0xff]
          %v1497 = vld [vmem:[%s466 + $0x80] sm:$0xff]
          %v1498 = vld [vmem:[%s466 + $0x88] sm:$0xff]
          %v1499 = vld [vmem:[%s466 + $0x90] sm:$0xff]
          %v1500 = vld [vmem:[%s466 + $0x98] sm:$0xff]
          %v1501 = vld [vmem:[%s466 + $0xa0] sm:$0xff]
          %v1502 = vld [vmem:[%s466 + $0xa8] sm:$0xff]
          %v1503 = vld [vmem:[%s466 + $0xb0] sm:$0xff]
          %v1504 = vld [vmem:[%s466 + $0xb8] sm:$0xff]
          %v1505 = vld [vmem:[%s466 + $0xc0] sm:$0xff]
          %v1506 = vld [vmem:[%s466 + $0xc8] sm:$0xff]
          %v1507 = vld [vmem:[%s466 + $0xd0] sm:$0xff]
          %v1508 = vld [vmem:[%s466 + $0xd8] sm:$0xff]
          %v1509 = vld [vmem:[%s466 + $0xe0] sm:$0xff]
          %v1510 = vld [vmem:[%s466 + $0xe8] sm:$0xff]
          %v1511 = vld [vmem:[%s466 + $0xf0] sm:$0xff]
          %v1512 = vld [vmem:[%s466 + $0xf8] sm:$0xff]
          %v1513 = vperm.slane %v866, 6
          %v1514 = vperm.slane %v867, 6
          %v1515 = vperm.slane %v868, 6
          %v1516 = vperm.slane %v869, 6
          %v1549 = vunpack.c.l.b16 %v1481
          %v1550 = vunpack.c.h.b16 %v1481
          %v1551 = vunpack.c.l.b16 %v1482
          %v1552 = vunpack.c.h.b16 %v1482
          %v1553 = vunpack.c.l.b16 %v1483
          %v1554 = vunpack.c.h.b16 %v1483
          %v1555 = vunpack.c.l.b16 %v1484
          %v1556 = vunpack.c.h.b16 %v1484
          %v1557 = vunpack.c.l.b16 %v1485
          %v1558 = vunpack.c.h.b16 %v1485
          %v1559 = vunpack.c.l.b16 %v1486
          %v1560 = vunpack.c.h.b16 %v1486
          %v1561 = vunpack.c.l.b16 %v1487
          %v1562 = vunpack.c.h.b16 %v1487
          %v1563 = vunpack.c.l.b16 %v1488
          %v1564 = vunpack.c.h.b16 %v1488
          %v1565 = vunpack.c.l.b16 %v1489
          %v1566 = vunpack.c.h.b16 %v1489
          %v1567 = vunpack.c.l.b16 %v1490
          %v1568 = vunpack.c.h.b16 %v1490
          %v1569 = vunpack.c.l.b16 %v1491
          %v1570 = vunpack.c.h.b16 %v1491
          %v1571 = vunpack.c.l.b16 %v1492
          %v1572 = vunpack.c.h.b16 %v1492
          %v1573 = vunpack.c.l.b16 %v1493
          %v1574 = vunpack.c.h.b16 %v1493
          %v1575 = vunpack.c.l.b16 %v1494
          %v1576 = vunpack.c.h.b16 %v1494
          %v1577 = vunpack.c.l.b16 %v1495
          %v1578 = vunpack.c.h.b16 %v1495
          %v1579 = vunpack.c.l.b16 %v1496
          %v1580 = vunpack.c.h.b16 %v1496
          %v1581 = vunpack.c.l.b16 %v1497
          %v1582 = vunpack.c.h.b16 %v1497
          %v1583 = vunpack.c.l.b16 %v1498
          %v1584 = vunpack.c.h.b16 %v1498
          %v1585 = vunpack.c.l.b16 %v1499
          %v1586 = vunpack.c.h.b16 %v1499
          %v1587 = vunpack.c.l.b16 %v1500
          %v1588 = vunpack.c.h.b16 %v1500
          %v1589 = vunpack.c.l.b16 %v1501
          %v1590 = vunpack.c.h.b16 %v1501
          %v1591 = vunpack.c.l.b16 %v1502
          %v1592 = vunpack.c.h.b16 %v1502
          %v1593 = vunpack.c.l.b16 %v1503
          %v1594 = vunpack.c.h.b16 %v1503
          %v1595 = vunpack.c.l.b16 %v1504
          %v1596 = vunpack.c.h.b16 %v1504
          %v1597 = vunpack.c.l.b16 %v1505
          %v1598 = vunpack.c.h.b16 %v1505
          %v1599 = vunpack.c.l.b16 %v1506
          %v1600 = vunpack.c.h.b16 %v1506
          %v1601 = vunpack.c.l.b16 %v1507
          %v1602 = vunpack.c.h.b16 %v1507
          %v1603 = vunpack.c.l.b16 %v1508
          %v1604 = vunpack.c.h.b16 %v1508
          %v1605 = vunpack.c.l.b16 %v1509
          %v1606 = vunpack.c.h.b16 %v1509
          %v1607 = vunpack.c.l.b16 %v1510
          %v1608 = vunpack.c.h.b16 %v1510
          %v1609 = vunpack.c.l.b16 %v1511
          %v1610 = vunpack.c.h.b16 %v1511
          %v1611 = vunpack.c.l.b16 %v1512
          %v1612 = vunpack.c.h.b16 %v1512
          %v1613 = vpack.c.b16 %v1553, %v1549
          %v1614 = vpack.c.b16 %v1554, %v1550
          %v1615 = vpack.c.b16 %v1555, %v1551
          %v1616 = vpack.c.b16 %v1556, %v1552
          %v1617 = vpack.c.b16 %v1561, %v1557
          %v1618 = vpack.c.b16 %v1562, %v1558
          %v1619 = vpack.c.b16 %v1563, %v1559
          %v1620 = vpack.c.b16 %v1564, %v1560
          %v1621 = vpack.c.b16 %v1569, %v1565
          %v1622 = vpack.c.b16 %v1570, %v1566
          %v1623 = vpack.c.b16 %v1571, %v1567
          %v1624 = vpack.c.b16 %v1572, %v1568
          %v1625 = vpack.c.b16 %v1577, %v1573
          %v1626 = vpack.c.b16 %v1578, %v1574
          %v1627 = vpack.c.b16 %v1579, %v1575
          %v1628 = vpack.c.b16 %v1580, %v1576
          %v1629 = vpack.c.b16 %v1585, %v1581
          %v1630 = vpack.c.b16 %v1586, %v1582
          %v1631 = vpack.c.b16 %v1587, %v1583
          %v1632 = vpack.c.b16 %v1588, %v1584
          %v1633 = vpack.c.b16 %v1593, %v1589
          %v1634 = vpack.c.b16 %v1594, %v1590
          %v1635 = vpack.c.b16 %v1595, %v1591
          %v1636 = vpack.c.b16 %v1596, %v1592
          %v1637 = vpack.c.b16 %v1601, %v1597
          %v1638 = vpack.c.b16 %v1602, %v1598
          %v1639 = vpack.c.b16 %v1603, %v1599
          %v1640 = vpack.c.b16 %v1604, %v1600
          %v1641 = vpack.c.b16 %v1609, %v1605
          %v1642 = vpack.c.b16 %v1610, %v1606
          %v1643 = vpack.c.b16 %v1611, %v1607
          %v1644 = vpack.c.b16 %v1612, %v1608
          %1677 = vmatpush.bf16.msra.mxu0 %v1641
          %1678 = vmatpush.bf16.msra.mxu0 %v1637
          %1679 = vmatpush.bf16.msra.mxu0 %v1633
          %1680 = vmatpush.bf16.msra.mxu0 %v1629
          %1681 = vmatpush.bf16.msra.mxu0 %v1625
          %1682 = vmatpush.bf16.msra.mxu0 %v1621
          %1683 = vmatpush.bf16.msra.mxu0 %v1617
          %1684 = vmatpush.bf16.msra.mxu0 %v1613
          %1685 = vmatmul.bf16.gmra.mxu0 %v1480
          %v1686 = vpop.f32.mrf.mxu0
          %v1687 = vadd.f32 %v1513, %v1686
          %v1688 = vpop.f32.mrf.mxu0
          %1689 = vdwg.mxu0
          %1690 = vmatpush.bf16.msra.mxu0 %v1642
          %1691 = vmatpush.bf16.msra.mxu0 %v1638
          %1692 = vmatpush.bf16.msra.mxu0 %v1634
          %1693 = vmatpush.bf16.msra.mxu0 %v1630
          %1694 = vmatpush.bf16.msra.mxu0 %v1626
          %1695 = vmatpush.bf16.msra.mxu0 %v1622
          %1696 = vmatpush.bf16.msra.mxu0 %v1618
          %1697 = vmatpush.bf16.msra.mxu0 %v1614
          %1698 = vmatmul.bf16.gmra.mxu0 %v1480
          %v1699 = vpop.f32.mrf.mxu0
          %v1700 = vadd.f32 %v1514, %v1699
          %v1701 = vpop.f32.mrf.mxu0
          %1702 = vdwg.mxu0
          %1703 = vmatpush.bf16.msra.mxu0 %v1643
          %1704 = vmatpush.bf16.msra.mxu0 %v1639
          %1705 = vmatpush.bf16.msra.mxu0 %v1635
          %1706 = vmatpush.bf16.msra.mxu0 %v1631
          %1707 = vmatpush.bf16.msra.mxu0 %v1627
          %1708 = vmatpush.bf16.msra.mxu0 %v1623
          %1709 = vmatpush.bf16.msra.mxu0 %v1619
          %1710 = vmatpush.bf16.msra.mxu0 %v1615
          %1711 = vmatmul.bf16.gmra.mxu0 %v1480
          %v1712 = vpop.f32.mrf.mxu0
          %v1713 = vadd.f32 %v1515, %v1712
          %v1714 = vpop.f32.mrf.mxu0
          %1715 = vdwg.mxu0
          %1716 = vmatpush.bf16.msra.mxu0 %v1644
          %1717 = vmatpush.bf16.msra.mxu0 %v1640
          %1718 = vmatpush.bf16.msra.mxu0 %v1636
          %1719 = vmatpush.bf16.msra.mxu0 %v1632
          %1720 = vmatpush.bf16.msra.mxu0 %v1628
          %1721 = vmatpush.bf16.msra.mxu0 %v1624
          %1722 = vmatpush.bf16.msra.mxu0 %v1620
          %1723 = vmatpush.bf16.msra.mxu0 %v1616
          %1724 = vmatmul.bf16.gmra.mxu0 %v1480
          %v1725 = vpop.f32.mrf.mxu0
          %v1726 = vadd.f32 %v1516, %v1725
          %v1727 = vpop.f32.mrf.mxu0
          %1728 = vdwg.mxu0
          %v1729 = vmul.f32 %v1687, %v1687
          %v1730 = vmul.f32 %v1700, %v1700
          %v1731 = vmul.f32 %v1713, %v1713
          %v1732 = vmul.f32 %v1726, %v1726
          %v1733 = vmul.f32 %v1687, %v1729
          %v1734 = vmul.f32 %v1700, %v1730
          %v1735 = vmul.f32 %v1713, %v1731
          %v1736 = vmul.f32 %v1726, %v1732
          %v1737 = vmul.f32 %v1733, 0.044715
          %v1738 = vmul.f32 %v1734, 0.044715
          %v1739 = vmul.f32 %v1735, 0.044715
          %v1740 = vmul.f32 %v1736, 0.044715
          %v1741 = vadd.f32 %v1687, %v1737
          %v1742 = vadd.f32 %v1700, %v1738
          %v1743 = vadd.f32 %v1713, %v1739
          %v1744 = vadd.f32 %v1726, %v1740
          %v1745 = vmul.f32 %v1741, 0.7978846
          %v1746 = vmul.f32 %v1742, 0.7978846
          %v1747 = vmul.f32 %v1743, 0.7978846
          %v1748 = vmul.f32 %v1744, 0.7978846
          %v1749 = vtanh.pop %v1745
          %v1750 = vtanh.pop %v1746
          %v1751 = vtanh.pop %v1747
          %v1752 = vtanh.pop %v1748
          %v1753 = vadd.f32 %v1749, 1.0
          %v1754 = vadd.f32 %v1750, 1.0
          %v1755 = vadd.f32 %v1751, 1.0
          %v1756 = vadd.f32 %v1752, 1.0
          %v1757 = vmul.f32 %v1753, 0.5
          %v1758 = vmul.f32 %v1754, 0.5
          %v1759 = vmul.f32 %v1755, 0.5
          %v1760 = vmul.f32 %v1756, 0.5
          %v1761 = vmul.f32 %v1687, %v1757
          %v1762 = vmul.f32 %v1700, %v1758
          %v1763 = vmul.f32 %v1713, %v1759
          %v1764 = vmul.f32 %v1726, %v1760
          %v1765 = vpack.c.bf16 %v1761, %v1761
          %v1766 = vpack.c.bf16 %v1762, %v1762
          %v1767 = vpack.c.bf16 %v1763, %v1763
          %v1768 = vpack.c.bf16 %v1764, %v1764
          %v1769 = vld [vmem:[%s408] sm:$0xf]
          %v1770 = vld [vmem:[%s408 + $0x4] sm:$0xf]
          %v1771 = vld [vmem:[%s408 + $0x8] sm:$0xf]
          %v1772 = vld [vmem:[%s408 + $0xc] sm:$0xf]
          %v1773 = vld [vmem:[%s408 + $0x10] sm:$0xf]
          %v1774 = vld [vmem:[%s408 + $0x14] sm:$0xf]
          %v1775 = vld [vmem:[%s408 + $0x18] sm:$0xf]
          %v1776 = vld [vmem:[%s408 + $0x1c] sm:$0xf]
          %v1777 = vld [vmem:[%s408 + $0x20] sm:$0xf]
          %v1778 = vld [vmem:[%s408 + $0x24] sm:$0xf]
          %v1779 = vld [vmem:[%s408 + $0x28] sm:$0xf]
          %v1780 = vld [vmem:[%s408 + $0x2c] sm:$0xf]
          %v1781 = vld [vmem:[%s408 + $0x30] sm:$0xf]
          %v1782 = vld [vmem:[%s408 + $0x34] sm:$0xf]
          %v1783 = vld [vmem:[%s408 + $0x38] sm:$0xf]
          %v1784 = vld [vmem:[%s408 + $0x3c] sm:$0xf]
          %v1785 = vld [vmem:[%s408 + $0x40] sm:$0xf]
          %v1786 = vld [vmem:[%s408 + $0x44] sm:$0xf]
          %v1787 = vld [vmem:[%s408 + $0x48] sm:$0xf]
          %v1788 = vld [vmem:[%s408 + $0x4c] sm:$0xf]
          %v1789 = vld [vmem:[%s408 + $0x50] sm:$0xf]
          %v1790 = vld [vmem:[%s408 + $0x54] sm:$0xf]
          %v1791 = vld [vmem:[%s408 + $0x58] sm:$0xf]
          %v1792 = vld [vmem:[%s408 + $0x5c] sm:$0xf]
          %v1793 = vld [vmem:[%s408 + $0x60] sm:$0xf]
          %v1794 = vld [vmem:[%s408 + $0x64] sm:$0xf]
          %v1795 = vld [vmem:[%s408 + $0x68] sm:$0xf]
          %v1796 = vld [vmem:[%s408 + $0x6c] sm:$0xf]
          %v1797 = vld [vmem:[%s408 + $0x70] sm:$0xf]
          %v1798 = vld [vmem:[%s408 + $0x74] sm:$0xf]
          %v1799 = vld [vmem:[%s408 + $0x78] sm:$0xf]
          %v1800 = vld [vmem:[%s408 + $0x7c] sm:$0xf]
          %v1801 = vld [vmem:[%s408 + $0x80] sm:$0xf]
          %v1802 = vld [vmem:[%s408 + $0x84] sm:$0xf]
          %v1803 = vld [vmem:[%s408 + $0x88] sm:$0xf]
          %v1804 = vld [vmem:[%s408 + $0x8c] sm:$0xf]
          %v1805 = vld [vmem:[%s408 + $0x90] sm:$0xf]
          %v1806 = vld [vmem:[%s408 + $0x94] sm:$0xf]
          %v1807 = vld [vmem:[%s408 + $0x98] sm:$0xf]
          %v1808 = vld [vmem:[%s408 + $0x9c] sm:$0xf]
          %v1809 = vld [vmem:[%s408 + $0xa0] sm:$0xf]
          %v1810 = vld [vmem:[%s408 + $0xa4] sm:$0xf]
          %v1811 = vld [vmem:[%s408 + $0xa8] sm:$0xf]
          %v1812 = vld [vmem:[%s408 + $0xac] sm:$0xf]
          %v1813 = vld [vmem:[%s408 + $0xb0] sm:$0xf]
          %v1814 = vld [vmem:[%s408 + $0xb4] sm:$0xf]
          %v1815 = vld [vmem:[%s408 + $0xb8] sm:$0xf]
          %v1816 = vld [vmem:[%s408 + $0xbc] sm:$0xf]
          %v1817 = vld [vmem:[%s408 + $0xc0] sm:$0xf]
          %v1818 = vld [vmem:[%s408 + $0xc4] sm:$0xf]
          %v1819 = vld [vmem:[%s408 + $0xc8] sm:$0xf]
          %v1820 = vld [vmem:[%s408 + $0xcc] sm:$0xf]
          %v1821 = vld [vmem:[%s408 + $0xd0] sm:$0xf]
          %v1822 = vld [vmem:[%s408 + $0xd4] sm:$0xf]
          %v1823 = vld [vmem:[%s408 + $0xd8] sm:$0xf]
          %v1824 = vld [vmem:[%s408 + $0xdc] sm:$0xf]
          %v1825 = vld [vmem:[%s408 + $0xe0] sm:$0xf]
          %v1826 = vld [vmem:[%s408 + $0xe4] sm:$0xf]
          %v1827 = vld [vmem:[%s408 + $0xe8] sm:$0xf]
          %v1828 = vld [vmem:[%s408 + $0xec] sm:$0xf]
          %v1829 = vld [vmem:[%s408 + $0xf0] sm:$0xf]
          %v1830 = vld [vmem:[%s408 + $0xf4] sm:$0xf]
          %v1831 = vld [vmem:[%s408 + $0xf8] sm:$0xf]
          %v1832 = vld [vmem:[%s408 + $0xfc] sm:$0xf]
          %v1833 = vperm.slane %v866, 7
          %v1898 = vunpack.c.l.b16 %v1769
          %v1899 = vunpack.c.l.b16 %v1770
          %v1900 = vunpack.c.l.b16 %v1771
          %v1901 = vunpack.c.l.b16 %v1772
          %v1902 = vunpack.c.l.b16 %v1773
          %v1903 = vunpack.c.l.b16 %v1774
          %v1904 = vunpack.c.l.b16 %v1775
          %v1905 = vunpack.c.l.b16 %v1776
          %v1906 = vunpack.c.l.b16 %v1777
          %v1907 = vunpack.c.l.b16 %v1778
          %v1908 = vunpack.c.l.b16 %v1779
          %v1909 = vunpack.c.l.b16 %v1780
          %v1910 = vunpack.c.l.b16 %v1781
          %v1911 = vunpack.c.l.b16 %v1782
          %v1912 = vunpack.c.l.b16 %v1783
          %v1913 = vunpack.c.l.b16 %v1784
          %v1914 = vunpack.c.l.b16 %v1785
          %v1915 = vunpack.c.l.b16 %v1786
          %v1916 = vunpack.c.l.b16 %v1787
          %v1917 = vunpack.c.l.b16 %v1788
          %v1918 = vunpack.c.l.b16 %v1789
          %v1919 = vunpack.c.l.b16 %v1790
          %v1920 = vunpack.c.l.b16 %v1791
          %v1921 = vunpack.c.l.b16 %v1792
          %v1922 = vunpack.c.l.b16 %v1793
          %v1923 = vunpack.c.l.b16 %v1794
          %v1924 = vunpack.c.l.b16 %v1795
          %v1925 = vunpack.c.l.b16 %v1796
          %v1926 = vunpack.c.l.b16 %v1797
          %v1927 = vunpack.c.l.b16 %v1798
          %v1928 = vunpack.c.l.b16 %v1799
          %v1929 = vunpack.c.l.b16 %v1800
          %v1930 = vunpack.c.l.b16 %v1801
          %v1931 = vunpack.c.l.b16 %v1802
          %v1932 = vunpack.c.l.b16 %v1803
          %v1933 = vunpack.c.l.b16 %v1804
          %v1934 = vunpack.c.l.b16 %v1805
          %v1935 = vunpack.c.l.b16 %v1806
          %v1936 = vunpack.c.l.b16 %v1807
          %v1937 = vunpack.c.l.b16 %v1808
          %v1938 = vunpack.c.l.b16 %v1809
          %v1939 = vunpack.c.l.b16 %v1810
          %v1940 = vunpack.c.l.b16 %v1811
          %v1941 = vunpack.c.l.b16 %v1812
          %v1942 = vunpack.c.l.b16 %v1813
          %v1943 = vunpack.c.l.b16 %v1814
          %v1944 = vunpack.c.l.b16 %v1815
          %v1945 = vunpack.c.l.b16 %v1816
          %v1946 = vunpack.c.l.b16 %v1817
          %v1947 = vunpack.c.l.b16 %v1818
          %v1948 = vunpack.c.l.b16 %v1819
          %v1949 = vunpack.c.l.b16 %v1820
          %v1950 = vunpack.c.l.b16 %v1821
          %v1951 = vunpack.c.l.b16 %v1822
          %v1952 = vunpack.c.l.b16 %v1823
          %v1953 = vunpack.c.l.b16 %v1824
          %v1954 = vunpack.c.l.b16 %v1825
          %v1955 = vunpack.c.l.b16 %v1826
          %v1956 = vunpack.c.l.b16 %v1827
          %v1957 = vunpack.c.l.b16 %v1828
          %v1958 = vunpack.c.l.b16 %v1829
          %v1959 = vunpack.c.l.b16 %v1830
          %v1960 = vunpack.c.l.b16 %v1831
          %v1961 = vunpack.c.l.b16 %v1832
          %v1962 = vpack.c.b16 %v1899, %v1898
          %v1963 = vpack.c.b16 %v1901, %v1900
          %v1964 = vpack.c.b16 %v1903, %v1902
          %v1965 = vpack.c.b16 %v1905, %v1904
          %v1966 = vpack.c.b16 %v1907, %v1906
          %v1967 = vpack.c.b16 %v1909, %v1908
          %v1968 = vpack.c.b16 %v1911, %v1910
          %v1969 = vpack.c.b16 %v1913, %v1912
          %v1970 = vpack.c.b16 %v1915, %v1914
          %v1971 = vpack.c.b16 %v1917, %v1916
          %v1972 = vpack.c.b16 %v1919, %v1918
          %v1973 = vpack.c.b16 %v1921, %v1920
          %v1974 = vpack.c.b16 %v1923, %v1922
          %v1975 = vpack.c.b16 %v1925, %v1924
          %v1976 = vpack.c.b16 %v1927, %v1926
          %v1977 = vpack.c.b16 %v1929, %v1928
          %v1978 = vpack.c.b16 %v1931, %v1930
          %v1979 = vpack.c.b16 %v1933, %v1932
          %v1980 = vpack.c.b16 %v1935, %v1934
          %v1981 = vpack.c.b16 %v1937, %v1936
          %v1982 = vpack.c.b16 %v1939, %v1938
          %v1983 = vpack.c.b16 %v1941, %v1940
          %v1984 = vpack.c.b16 %v1943, %v1942
          %v1985 = vpack.c.b16 %v1945, %v1944
          %v1986 = vpack.c.b16 %v1947, %v1946
          %v1987 = vpack.c.b16 %v1949, %v1948
          %v1988 = vpack.c.b16 %v1951, %v1950
          %v1989 = vpack.c.b16 %v1953, %v1952
          %v1990 = vpack.c.b16 %v1955, %v1954
          %v1991 = vpack.c.b16 %v1957, %v1956
          %v1992 = vpack.c.b16 %v1959, %v1958
          %v1993 = vpack.c.b16 %v1961, %v1960
          %2026 = vmatpush.bf16.msra.mxu0 %v1969
          %2027 = vmatpush.bf16.msra.mxu0 %v1968
          %2028 = vmatpush.bf16.msra.mxu0 %v1967
          %2029 = vmatpush.bf16.msra.mxu0 %v1966
          %2030 = vmatpush.bf16.msra.mxu0 %v1965
          %2031 = vmatpush.bf16.msra.mxu0 %v1964
          %2032 = vmatpush.bf16.msra.mxu0 %v1963
          %2033 = vmatpush.bf16.msra.mxu0 %v1962
          %2034 = vmatmul.bf16.gmra.mxu0 %v1765
          %v2035 = vpop.f32.mrf.mxu0
          %v2036 = vadd.f32 %v1833, %v2035
          %v2037 = vpop.f32.mrf.mxu0
          %2038 = vdwg.mxu0
          %2039 = vmatpush.bf16.msra.mxu0 %v1977
          %2040 = vmatpush.bf16.msra.mxu0 %v1976
          %2041 = vmatpush.bf16.msra.mxu0 %v1975
          %2042 = vmatpush.bf16.msra.mxu0 %v1974
          %2043 = vmatpush.bf16.msra.mxu0 %v1973
          %2044 = vmatpush.bf16.msra.mxu0 %v1972
          %2045 = vmatpush.bf16.msra.mxu0 %v1971
          %2046 = vmatpush.bf16.msra.mxu0 %v1970
          %2047 = vmatmul.bf16.gmra.mxu0 %v1766
          %v2048 = vpop.f32.mrf.mxu0
          %v2049 = vadd.f32 %v2036, %v2048
          %v2050 = vpop.f32.mrf.mxu0
          %2051 = vdwg.mxu0
          %2052 = vmatpush.bf16.msra.mxu0 %v1985
          %2053 = vmatpush.bf16.msra.mxu0 %v1984
          %2054 = vmatpush.bf16.msra.mxu0 %v1983
          %2055 = vmatpush.bf16.msra.mxu0 %v1982
          %2056 = vmatpush.bf16.msra.mxu0 %v1981
          %2057 = vmatpush.bf16.msra.mxu0 %v1980
          %2058 = vmatpush.bf16.msra.mxu0 %v1979
          %2059 = vmatpush.bf16.msra.mxu0 %v1978
          %2060 = vmatmul.bf16.gmra.mxu0 %v1767
          %v2061 = vpop.f32.mrf.mxu0
          %v2062 = vadd.f32 %v2049, %v2061
          %v2063 = vpop.f32.mrf.mxu0
          %2064 = vdwg.mxu0
          %2065 = vmatpush.bf16.msra.mxu0 %v1993
          %2066 = vmatpush.bf16.msra.mxu0 %v1992
          %2067 = vmatpush.bf16.msra.mxu0 %v1991
          %2068 = vmatpush.bf16.msra.mxu0 %v1990
          %2069 = vmatpush.bf16.msra.mxu0 %v1989
          %2070 = vmatpush.bf16.msra.mxu0 %v1988
          %2071 = vmatpush.bf16.msra.mxu0 %v1987
          %2072 = vmatpush.bf16.msra.mxu0 %v1986
          %2073 = vmatmul.bf16.gmra.mxu0 %v1768
          %v2074 = vpop.f32.mrf.mxu0
          %v2075 = vadd.f32 %v2062, %v2074
          %v2076 = vpop.f32.mrf.mxu0
          %2077 = vdwg.mxu0
          %v2078 = vadd.f32 %v1453, %v2075
          %2079 = vst [vmem:[#allocation2] sm:$0x1f] %v2078
        $region76: #{dinov2_mid_encoder_forward.2} parent=51 // pred_fallthru
          _
        %p2080 = scmp.eq.s32.totalorder %s861, 31
        // Predicated region
        $region77: #{dinov2_mid_encoder_forward.2} parent=51 // pred_check
          %p2081 = pneg %p2080
        $region78: #{dinov2_mid_encoder_forward.2} parent=51 // pred_check_branch
          %2083 = sbr.rel (%p2081) target = $region80
        $region79: #{dinov2_mid_encoder_forward.2} parent=51 // pred_region
          %v2084 = vld [vmem:[%s378] sm:$0xff]
          %v2085 = vld [vmem:[%s378 + $0x10] sm:$0xff]
          %v2086 = vld [vmem:[#allocation2] sm:$0x1f]
          %vm2087 = vcmask 1044480
          %v2088 = vsel %vm2087, %v2086, 0.0
          %2089 = vadd.xlane.f32.xlu0 %v2088
          %v2090 = vpop.xlane.xlu0 %2089
          %v2091 = vrcp.pop 128.0
          %v2092 = vmul.f32 128.0, %v2091
          %v2093 = vsub.f32 1.0, %v2092
          %v2094 = vmul.f32 %v2091, %v2093
          %v2095 = vadd.f32 %v2091, %v2094
          %vm2096 = vweird.f32 %v2091
          %v2097 = vsel %vm2096, %v2091, %v2095
          %v2098 = vmul.f32 %v2090, %v2097
          %v2099 = vsub.f32 %v2086, %v2098
          %v2100 = vmul.f32 %v2099, %v2099
          %v2101 = vsel %vm2087, %v2100, 0.0
          %2102 = vadd.xlane.f32.xlu0 %v2101
          %v2103 = vpop.xlane.xlu0 %2102
          %v2104 = vmul.f32 %v2103, %v2097
          %v2105 = vadd.f32 %v2104, 1e-06
          %v2106 = vrsqrt.pop %v2105
          %v2107 = vmul.f32 %v2106, %v2105
          %v2108 = vmul.f32 %v2107, %v2106
          %v2109 = vmul.f32 0.5, %v2108
          %v2110 = vsub.f32 1.5, %v2109
          %v2111 = vmul.f32 %v2106, %v2110
          %vm2112 = vweird.f32 %v2105
          %vm2113 = vweird.f32 %v2106
          %vm2114 = vmor %vm2112, %vm2113
          %v2115 = vsel %vm2114, %v2106, %v2111
          %v2116 = vmul.f32 %v2099, %v2115
          %v2117 = vperm.slane %v2084, 0
          %v2118 = vmul.f32 %v2116, %v2117
          %v2119 = vperm.slane %v2084, 1
          %v2120 = vadd.f32 %v2118, %v2119
          %v2121 = vld [vmem:[%s388 + $0x8] sm:$0xf]
          %v2122 = vld [vmem:[%s388 + $0x14] sm:$0xf]
          %v2123 = vld [vmem:[%s388 + $0x20] sm:$0xf]
          %v2124 = vld [vmem:[%s388 + $0x2c] sm:$0xf]
          %v2125 = vld [vmem:[%s388 + $0x38] sm:$0xf]
          %v2126 = vld [vmem:[%s388 + $0x44] sm:$0xf]
          %v2127 = vld [vmem:[%s388 + $0x50] sm:$0xf]
          %v2128 = vld [vmem:[%s388 + $0x5c] sm:$0xf]
          %v2129 = vld [vmem:[%s388 + $0x68] sm:$0xf]
          %v2130 = vld [vmem:[%s388 + $0x74] sm:$0xf]
          %v2131 = vld [vmem:[%s388 + $0x80] sm:$0xf]
          %v2132 = vld [vmem:[%s388 + $0x8c] sm:$0xf]
          %v2133 = vld [vmem:[%s388 + $0x98] sm:$0xf]
          %v2134 = vld [vmem:[%s388 + $0xa4] sm:$0xf]
          %v2135 = vld [vmem:[%s388 + $0xb0] sm:$0xf]
          %v2136 = vld [vmem:[%s388 + $0xbc] sm:$0xf]
          %v2137 = vpack.c.bf16 %v2120, %v2120
          %v2138 = vperm.slane %v2085, 2
          %v2155 = vunpack.c.l.b16 %v2121
          %v2156 = vunpack.c.l.b16 %v2122
          %v2157 = vunpack.c.l.b16 %v2123
          %v2158 = vunpack.c.l.b16 %v2124
          %v2159 = vunpack.c.l.b16 %v2125
          %v2160 = vunpack.c.l.b16 %v2126
          %v2161 = vunpack.c.l.b16 %v2127
          %v2162 = vunpack.c.l.b16 %v2128
          %v2163 = vunpack.c.l.b16 %v2129
          %v2164 = vunpack.c.l.b16 %v2130
          %v2165 = vunpack.c.l.b16 %v2131
          %v2166 = vunpack.c.l.b16 %v2132
          %v2167 = vunpack.c.l.b16 %v2133
          %v2168 = vunpack.c.l.b16 %v2134
          %v2169 = vunpack.c.l.b16 %v2135
          %v2170 = vunpack.c.l.b16 %v2136
          %v2171 = vpack.c.b16 %v2156, %v2155
          %v2172 = vpack.c.b16 %v2158, %v2157
          %v2173 = vpack.c.b16 %v2160, %v2159
          %v2174 = vpack.c.b16 %v2162, %v2161
          %v2175 = vpack.c.b16 %v2164, %v2163
          %v2176 = vpack.c.b16 %v2166, %v2165
          %v2177 = vpack.c.b16 %v2168, %v2167
          %v2178 = vpack.c.b16 %v2170, %v2169
          %2187 = vmatpush.bf16.msra.mxu0 %v2178
          %2188 = vmatpush.bf16.msra.mxu0 %v2177
          %2189 = vmatpush.bf16.msra.mxu0 %v2176
          %2190 = vmatpush.bf16.msra.mxu0 %v2175
          %2191 = vmatpush.bf16.msra.mxu0 %v2174
          %2192 = vmatpush.bf16.msra.mxu0 %v2173
          %2193 = vmatpush.bf16.msra.mxu0 %v2172
          %2194 = vmatpush.bf16.msra.mxu0 %v2171
          %2195 = vmatmul.bf16.gmra.mxu0 %v2137
          %v2196 = vpop.f32.mrf.mxu0
          %v2197 = vadd.f32 %v2138, %v2196
          %v2198 = vpop.f32.mrf.mxu0
          %2199 = vdwg.mxu0
          %v2200 = vmul.f32 %v2197, %v2197
          %v2201 = vsel %vm2087, %v2200, 0.0
          %2202 = vadd.xlane.f32.xlu0 %v2201
          %v2203 = vpop.xlane.xlu0 %2202
          %v2204 = vmax.f32 %v2203, 1e-24
          %v2205 = vrsqrt.pop %v2204
          %v2206 = vmul.f32 %v2205, %v2204
          %v2207 = vmul.f32 %v2206, %v2205
          %v2208 = vmul.f32 0.5, %v2207
          %v2209 = vsub.f32 1.5, %v2208
          %v2210 = vmul.f32 %v2205, %v2209
          %vm2211 = vweird.f32 %v2204
          %vm2212 = vweird.f32 %v2205
          %vm2213 = vmor %vm2211, %vm2212
          %v2214 = vsel %vm2213, %v2205, %v2210
          %v2215 = vmul.f32 %v2197, %v2214
          %2216 = vst [vmem:[%s8 - $0x1] sm:$0x1e] %v2215
        $region80: #{dinov2_mid_encoder_forward.2} parent=51 // pred_fallthru
          _
        %s2217 = sadd.s32 %s861, 1
        %p2218 = scmp.lt.s32.totalorder %s2217, 31
        // Predicated region
        $region81: #{dinov2_mid_encoder_forward.2} parent=51 // pred_check
          %p2219 = pneg %p2218
        $region82: #{dinov2_mid_encoder_forward.2} parent=51 // pred_check_branch
          %2221 = sbr.rel (%p2219) target = $region84
        $region83: #{dinov2_mid_encoder_forward.2} parent=51 // pred_region
          %s2222 = scalar_lea.vmem %s378, 32 [#allocation3]
          %v2223 = vld [vmem:[%s2222] sm:$0xff]
          %v2224 = vld [vmem:[%s2222 + $0x8] sm:$0xff]
          %v2225 = vld [vmem:[%s2222 + $0x10] sm:$0xff]
          %v2226 = vld [vmem:[%s2222 + $0x18] sm:$0xff]
          %v2227 = vld [vmem:[#allocation2] sm:$0x1f]
          %vm2228 = vcmask 1044480
          %v2229 = vsel %vm2228, %v2227, 0.0
          %2230 = vadd.xlane.f32.xlu0 %v2229
          %v2231 = vpop.xlane.xlu0 %2230
          %v2232 = vrcp.pop 128.0
          %v2233 = vmul.f32 128.0, %v2232
          %v2234 = vsub.f32 1.0, %v2233
          %v2235 = vmul.f32 %v2232, %v2234
          %v2236 = vadd.f32 %v2232, %v2235
          %vm2237 = vweird.f32 %v2232
          %v2238 = vsel %vm2237, %v2232, %v2236
          %v2239 = vmul.f32 %v2231, %v2238
          %v2240 = vsub.f32 %v2227, %v2239
          %v2241 = vmul.f32 %v2240, %v2240
          %v2242 = vsel %vm2228, %v2241, 0.0
          %2243 = vadd.xlane.f32.xlu0 %v2242
          %v2244 = vpop.xlane.xlu0 %2243
          %v2245 = vmul.f32 %v2244, %v2238
          %v2246 = vadd.f32 %v2245, 1e-06
          %v2247 = vrsqrt.pop %v2246
          %v2248 = vmul.f32 %v2247, %v2246
          %v2249 = vmul.f32 %v2248, %v2247
          %v2250 = vmul.f32 0.5, %v2249
          %v2251 = vsub.f32 1.5, %v2250
          %v2252 = vmul.f32 %v2247, %v2251
          %vm2253 = vweird.f32 %v2246
          %vm2254 = vweird.f32 %v2247
          %vm2255 = vmor %vm2253, %vm2254
          %v2256 = vsel %vm2255, %v2247, %v2252
          %v2257 = vmul.f32 %v2240, %v2256
          %v2258 = vperm.slane %v2223, 0
          %v2259 = vmul.f32 %v2257, %v2258
          %v2260 = vperm.slane %v2223, 1
          %v2261 = vadd.f32 %v2259, %v2260
          %v2262 = vpack.c.bf16 %v2261, %v2261
          %s2263 = scalar_lea.vmem %s388, 192 [#allocation5]
          %v2264 = vld [vmem:[%s2263] sm:$0xff]
          %v2265 = vld [vmem:[%s2263 + $0x8] sm:$0xf]
          %v2266 = vld [vmem:[%s2263 + $0xc] sm:$0xff]
          %v2267 = vld [vmem:[%s2263 + $0x14] sm:$0xf]
          %v2268 = vld [vmem:[%s2263 + $0x18] sm:$0xff]
          %v2269 = vld [vmem:[%s2263 + $0x20] sm:$0xf]
          %v2270 = vld [vmem:[%s2263 + $0x24] sm:$0xff]
          %v2271 = vld [vmem:[%s2263 + $0x2c] sm:$0xf]
          %v2272 = vld [vmem:[%s2263 + $0x30] sm:$0xff]
          %v2273 = vld [vmem:[%s2263 + $0x38] sm:$0xf]
          %v2274 = vld [vmem:[%s2263 + $0x3c] sm:$0xff]
          %v2275 = vld [vmem:[%s2263 + $0x44] sm:$0xf]
          %v2276 = vld [vmem:[%s2263 + $0x48] sm:$0xff]
          %v2277 = vld [vmem:[%s2263 + $0x50] sm:$0xf]
          %v2278 = vld [vmem:[%s2263 + $0x54] sm:$0xff]
          %v2279 = vld [vmem:[%s2263 + $0x5c] sm:$0xf]
          %v2280 = vld [vmem:[%s2263 + $0x60] sm:$0xff]
          %v2281 = vld [vmem:[%s2263 + $0x68] sm:$0xf]
          %v2282 = vld [vmem:[%s2263 + $0x6c] sm:$0xff]
          %v2283 = vld [vmem:[%s2263 + $0x74] sm:$0xf]
          %v2284 = vld [vmem:[%s2263 + $0x78] sm:$0xff]
          %v2285 = vld [vmem:[%s2263 + $0x80] sm:$0xf]
          %v2286 = vld [vmem:[%s2263 + $0x84] sm:$0xff]
          %v2287 = vld [vmem:[%s2263 + $0x8c] sm:$0xf]
          %v2288 = vld [vmem:[%s2263 + $0x90] sm:$0xff]
          %v2289 = vld [vmem:[%s2263 + $0x98] sm:$0xf]
          %v2290 = vld [vmem:[%s2263 + $0x9c] sm:$0xff]
          %v2291 = vld [vmem:[%s2263 + $0xa4] sm:$0xf]
          %v2292 = vld [vmem:[%s2263 + $0xa8] sm:$0xff]
          %v2293 = vld [vmem:[%s2263 + $0xb0] sm:$0xf]
          %v2294 = vld [vmem:[%s2263 + $0xb4] sm:$0xff]
          %v2295 = vld [vmem:[%s2263 + $0xbc] sm:$0xf]
          %v2296 = vperm.slane %v2223, 2
          %v2297 = vperm.slane %v2224, 2
          %v2298 = vperm.slane %v2225, 2
          %v2331 = vunpack.c.l.b16 %v2264
          %v2332 = vunpack.c.h.b16 %v2264
          %v2333 = vunpack.c.l.b16 %v2265
          %v2334 = vunpack.c.l.b16 %v2266
          %v2335 = vunpack.c.h.b16 %v2266
          %v2336 = vunpack.c.l.b16 %v2267
          %v2337 = vunpack.c.l.b16 %v2268
          %v2338 = vunpack.c.h.b16 %v2268
          %v2339 = vunpack.c.l.b16 %v2269
          %v2340 = vunpack.c.l.b16 %v2270
          %v2341 = vunpack.c.h.b16 %v2270
          %v2342 = vunpack.c.l.b16 %v2271
          %v2343 = vunpack.c.l.b16 %v2272
          %v2344 = vunpack.c.h.b16 %v2272
          %v2345 = vunpack.c.l.b16 %v2273
          %v2346 = vunpack.c.l.b16 %v2274
          %v2347 = vunpack.c.h.b16 %v2274
          %v2348 = vunpack.c.l.b16 %v2275
          %v2349 = vunpack.c.l.b16 %v2276
          %v2350 = vunpack.c.h.b16 %v2276
          %v2351 = vunpack.c.l.b16 %v2277
          %v2352 = vunpack.c.l.b16 %v2278
          %v2353 = vunpack.c.h.b16 %v2278
          %v2354 = vunpack.c.l.b16 %v2279
          %v2355 = vunpack.c.l.b16 %v2280
          %v2356 = vunpack.c.h.b16 %v2280
          %v2357 = vunpack.c.l.b16 %v2281
          %v2358 = vunpack.c.l.b16 %v2282
          %v2359 = vunpack.c.h.b16 %v2282
          %v2360 = vunpack.c.l.b16 %v2283
          %v2361 = vunpack.c.l.b16 %v2284
          %v2362 = vunpack.c.h.b16 %v2284
          %v2363 = vunpack.c.l.b16 %v2285
          %v2364 = vunpack.c.l.b16 %v2286
          %v2365 = vunpack.c.h.b16 %v2286
          %v2366 = vunpack.c.l.b16 %v2287
          %v2367 = vunpack.c.l.b16 %v2288
          %v2368 = vunpack.c.h.b16 %v2288
          %v2369 = vunpack.c.l.b16 %v2289
          %v2370 = vunpack.c.l.b16 %v2290
          %v2371 = vunpack.c.h.b16 %v2290
          %v2372 = vunpack.c.l.b16 %v2291
          %v2373 = vunpack.c.l.b16 %v2292
          %v2374 = vunpack.c.h.b16 %v2292
          %v2375 = vunpack.c.l.b16 %v2293
          %v2376 = vunpack.c.l.b16 %v2294
          %v2377 = vunpack.c.h.b16 %v2294
          %v2378 = vunpack.c.l.b16 %v2295
          %v2379 = vpack.c.b16 %v2334, %v2331
          %v2380 = vpack.c.b16 %v2335, %v2332
          %v2381 = vpack.c.b16 %v2336, %v2333
          %v2382 = vpack.c.b16 %v2340, %v2337
          %v2383 = vpack.c.b16 %v2341, %v2338
          %v2384 = vpack.c.b16 %v2342, %v2339
          %v2385 = vpack.c.b16 %v2346, %v2343
          %v2386 = vpack.c.b16 %v2347, %v2344
          %v2387 = vpack.c.b16 %v2348, %v2345
          %v2388 = vpack.c.b16 %v2352, %v2349
          %v2389 = vpack.c.b16 %v2353, %v2350
          %v2390 = vpack.c.b16 %v2354, %v2351
          %v2391 = vpack.c.b16 %v2358, %v2355
          %v2392 = vpack.c.b16 %v2359, %v2356
          %v2393 = vpack.c.b16 %v2360, %v2357
          %v2394 = vpack.c.b16 %v2364, %v2361
          %v2395 = vpack.c.b16 %v2365, %v2362
          %v2396 = vpack.c.b16 %v2366, %v2363
          %v2397 = vpack.c.b16 %v2370, %v2367
          %v2398 = vpack.c.b16 %v2371, %v2368
          %v2399 = vpack.c.b16 %v2372, %v2369
          %v2400 = vpack.c.b16 %v2376, %v2373
          %v2401 = vpack.c.b16 %v2377, %v2374
          %v2402 = vpack.c.b16 %v2378, %v2375
          %2427 = vmatpush.bf16.msra.mxu0 %v2400
          %2428 = vmatpush.bf16.msra.mxu0 %v2397
          %2429 = vmatpush.bf16.msra.mxu0 %v2394
          %2430 = vmatpush.bf16.msra.mxu0 %v2391
          %2431 = vmatpush.bf16.msra.mxu0 %v2388
          %2432 = vmatpush.bf16.msra.mxu0 %v2385
          %2433 = vmatpush.bf16.msra.mxu0 %v2382
          %2434 = vmatpush.bf16.msra.mxu0 %v2379
          %2435 = vmatmul.bf16.gmra.mxu0 %v2262
          %v2436 = vpop.f32.mrf.mxu0
          %v2437 = vadd.f32 %v2296, %v2436
          %v2438 = vpop.f32.mrf.mxu0
          %2439 = vdwg.mxu0
          %2440 = vmatpush.bf16.msra.mxu0 %v2401
          %2441 = vmatpush.bf16.msra.mxu0 %v2398
          %2442 = vmatpush.bf16.msra.mxu0 %v2395
          %2443 = vmatpush.bf16.msra.mxu0 %v2392
          %2444 = vmatpush.bf16.msra.mxu0 %v2389
          %2445 = vmatpush.bf16.msra.mxu0 %v2386
          %2446 = vmatpush.bf16.msra.mxu0 %v2383
          %2447 = vmatpush.bf16.msra.mxu0 %v2380
          %2448 = vmatmul.bf16.gmra.mxu0 %v2262
          %v2449 = vpop.f32.mrf.mxu0
          %v2450 = vadd.f32 %v2297, %v2449
          %v2451 = vpop.f32.mrf.mxu0
          %2452 = vdwg.mxu0
          %2453 = vmatpush.bf16.msra.mxu0 %v2402
          %2454 = vmatpush.bf16.msra.mxu0 %v2399
          %2455 = vmatpush.bf16.msra.mxu0 %v2396
          %2456 = vmatpush.bf16.msra.mxu0 %v2393
          %2457 = vmatpush.bf16.msra.mxu0 %v2390
          %2458 = vmatpush.bf16.msra.mxu0 %v2387
          %2459 = vmatpush.bf16.msra.mxu0 %v2384
          %2460 = vmatpush.bf16.msra.mxu0 %v2381
          %2461 = vmatmul.bf16.gmra.mxu0 %v2262
          %v2462 = vpop.f32.mrf.mxu0
          %v2463 = vadd.f32 %v2298, %v2462
          %v2464 = vpop.f32.mrf.mxu0
          %2465 = vdwg.mxu0
          %2467 = vrot.lane.b32.xlu0 %v2437, 96
          %v2468 = vpop.permute.xlu0 %2467
          %2470 = vrot.lane.b32.xlu0 %v2437, 64
          %v2471 = vpop.permute.xlu0 %2470
          %2473 = vrot.lane.b32.xlu0 %v2437, 32
          %v2474 = vpop.permute.xlu0 %2473
          %v2476 = vpack.c.bf16 %v2437, %v2437
          %v2477 = vpack.c.bf16 %v2468, %v2468
          %v2478 = vpack.c.bf16 %v2471, %v2471
          %v2479 = vpack.c.bf16 %v2474, %v2474
          %2481 = vrot.lane.b32.xlu0 %v2450, 96
          %v2482 = vpop.permute.xlu0 %2481
          %2484 = vrot.lane.b32.xlu0 %v2450, 64
          %v2485 = vpop.permute.xlu0 %2484
          %2487 = vrot.lane.b32.xlu0 %v2450, 32
          %v2488 = vpop.permute.xlu0 %2487
          %v2490 = vpack.c.bf16 %v2450, %v2450
          %v2491 = vpack.c.bf16 %v2482, %v2482
          %v2492 = vpack.c.bf16 %v2485, %v2485
          %v2493 = vpack.c.bf16 %v2488, %v2488
          %2495 = vrot.lane.b32.xlu0 %v2463, 96
          %v2496 = vpop.permute.xlu0 %2495
          %2498 = vrot.lane.b32.xlu0 %v2463, 64
          %v2499 = vpop.permute.xlu0 %2498
          %2501 = vrot.lane.b32.xlu0 %v2463, 32
          %v2502 = vpop.permute.xlu0 %2501
          %v2504 = vpack.c.bf16 %v2463, %v2463
          %v2505 = vpack.c.bf16 %v2496, %v2496
          %v2506 = vpack.c.bf16 %v2499, %v2499
          %v2507 = vpack.c.bf16 %v2502, %v2502
          %vm2508 = vcmask 261120
          %v2510 = vsel %vm2508, %v2476, 0
          %v2513 = vsel %vm2508, %v2490, 0
          %2515 = vmatpush.bf16.xpose.msra.mxu0 0
          %2516 = vmatpush.bf16.xpose.msra.mxu0 0
          %2517 = vmatpush.bf16.xpose.msra.mxu0 0
          %2518 = vmatpush.bf16.xpose.msra.mxu0 0
          %2519 = vmatpush.bf16.xpose.msra.mxu0 0
          %2520 = vmatpush.bf16.xpose.msra.mxu0 0
          %2521 = vmatpush.bf16.xpose.msra.mxu0 0
          %2522 = vmatpush.bf16.xpose.msra.mxu0 %v2513
          %2523 = vmatmul.bf16.gmra.mxu0 %v2510
          %v2524 = vpop.f32.mrf.mxu0
          %v2525 = vadd.f32 0.0, %v2524
          %v2526 = vpop.f32.mrf.mxu0
          %2527 = vdwg.mxu0
          %v2529 = vsel %vm2508, %v2477, 0
          %v2532 = vsel %vm2508, %v2491, 0
          %2534 = vmatpush.bf16.xpose.msra.mxu0 0
          %2535 = vmatpush.bf16.xpose.msra.mxu0 0
          %2536 = vmatpush.bf16.xpose.msra.mxu0 0
          %2537 = vmatpush.bf16.xpose.msra.mxu0 0
          %2538 = vmatpush.bf16.xpose.msra.mxu0 0
          %2539 = vmatpush.bf16.xpose.msra.mxu0 0
          %2540 = vmatpush.bf16.xpose.msra.mxu0 0
          %2541 = vmatpush.bf16.xpose.msra.mxu0 %v2532
          %2542 = vmatmul.bf16.gmra.mxu0 %v2529
          %v2543 = vpop.f32.mrf.mxu0
          %v2544 = vadd.f32 0.0, %v2543
          %v2545 = vpop.f32.mrf.mxu0
          %2546 = vdwg.mxu0
          %v2548 = vsel %vm2508, %v2478, 0
          %v2551 = vsel %vm2508, %v2492, 0
          %2553 = vmatpush.bf16.xpose.msra.mxu0 0
          %2554 = vmatpush.bf16.xpose.msra.mxu0 0
          %2555 = vmatpush.bf16.xpose.msra.mxu0 0
          %2556 = vmatpush.bf16.xpose.msra.mxu0 0
          %2557 = vmatpush.bf16.xpose.msra.mxu0 0
          %2558 = vmatpush.bf16.xpose.msra.mxu0 0
          %2559 = vmatpush.bf16.xpose.msra.mxu0 0
          %2560 = vmatpush.bf16.xpose.msra.mxu0 %v2551
          %2561 = vmatmul.bf16.gmra.mxu0 %v2548
          %v2562 = vpop.f32.mrf.mxu0
          %v2563 = vadd.f32 0.0, %v2562
          %v2564 = vpop.f32.mrf.mxu0
          %2565 = vdwg.mxu0
          %v2567 = vsel %vm2508, %v2479, 0
          %v2570 = vsel %vm2508, %v2493, 0
          %2572 = vmatpush.bf16.xpose.msra.mxu0 0
          %2573 = vmatpush.bf16.xpose.msra.mxu0 0
          %2574 = vmatpush.bf16.xpose.msra.mxu0 0
          %2575 = vmatpush.bf16.xpose.msra.mxu0 0
          %2576 = vmatpush.bf16.xpose.msra.mxu0 0
          %2577 = vmatpush.bf16.xpose.msra.mxu0 0
          %2578 = vmatpush.bf16.xpose.msra.mxu0 0
          %2579 = vmatpush.bf16.xpose.msra.mxu0 %v2570
          %2580 = vmatmul.bf16.gmra.mxu0 %v2567
          %v2581 = vpop.f32.mrf.mxu0
          %v2582 = vadd.f32 0.0, %v2581
          %v2583 = vpop.f32.mrf.mxu0
          %2584 = vdwg.mxu0
          %vm2585 = vcmask 36864
          %v2586 = vsel %vm2585, %v2525, -inf
          %2587 = vmax.xlane.f32.xlu0 %v2586
          %v2588 = vpop.xlane.xlu0 %2587
          %v2589 = vsel %vm2585, %v2544, -inf
          %2590 = vmax.xlane.f32.xlu0 %v2589
          %v2591 = vpop.xlane.xlu0 %2590
          %v2592 = vsel %vm2585, %v2563, -inf
          %2593 = vmax.xlane.f32.xlu0 %v2592
          %v2594 = vpop.xlane.xlu0 %2593
          %v2595 = vsel %vm2585, %v2582, -inf
          %2596 = vmax.xlane.f32.xlu0 %v2595
          %v2597 = vpop.xlane.xlu0 %2596
          %v2598 = vsub.f32 %v2525, %v2588
          %v2599 = vsub.f32 %v2544, %v2591
          %v2600 = vsub.f32 %v2563, %v2594
          %v2601 = vsub.f32 %v2582, %v2597
          %v2602 = vmul.f32 %v2598, 1.442695
          %v2603 = vpow.pop %v2602
          %v2604 = vmul.f32 %v2599, 1.442695
          %v2605 = vpow.pop %v2604
          %v2606 = vmul.f32 %v2600, 1.442695
          %v2607 = vpow.pop %v2606
          %v2608 = vmul.f32 %v2601, 1.442695
          %v2609 = vpow.pop %v2608
          %v2610 = vsel %vm2585, %v2603, 0.0
          %2611 = vadd.xlane.f32.xlu0 %v2610
          %v2612 = vpop.xlane.xlu0 %2611
          %v2613 = vsel %vm2585, %v2605, 0.0
          %2614 = vadd.xlane.f32.xlu0 %v2613
          %v2615 = vpop.xlane.xlu0 %2614
          %v2616 = vsel %vm2585, %v2607, 0.0
          %2617 = vadd.xlane.f32.xlu0 %v2616
          %v2618 = vpop.xlane.xlu0 %2617
          %v2619 = vsel %vm2585, %v2609, 0.0
          %2620 = vadd.xlane.f32.xlu0 %v2619
          %v2621 = vpop.xlane.xlu0 %2620
          %v2622 = vrcp.pop %v2612
          %v2623 = vrcp.pop %v2615
          %v2624 = vrcp.pop %v2618
          %v2625 = vrcp.pop %v2621
          %v2626 = vmul.f32 %v2603, %v2622
          %v2627 = vmul.f32 %v2605, %v2623
          %v2628 = vmul.f32 %v2607, %v2624
          %v2629 = vmul.f32 %v2609, %v2625
          %v2630 = vpack.c.bf16 %v2626, %v2626
          %v2631 = vpack.c.bf16 %v2627, %v2627
          %v2632 = vpack.c.bf16 %v2628, %v2628
          %v2633 = vpack.c.bf16 %v2629, %v2629
          %vm2634 = vcmask 39936
          %v2636 = vsel %vm2634, %v2630, 0
          %vm2638 = vcmask 1041408
          %vm2639 = vcmask 1042432
          %v2640 = vsel %vm2638, 4294967295, 65535
          %v2641 = vsel %vm2639, %v2640, 0
          %v2643 = vand.u32 %v2504, %v2641
          %2645 = vmatpush.bf16.msra.mxu0 0
          %2646 = vmatpush.bf16.msra.mxu0 0
          %2647 = vmatpush.bf16.msra.mxu0 0
          %2648 = vmatpush.bf16.msra.mxu0 0
          %2649 = vmatpush.bf16.msra.mxu0 0
          %2650 = vmatpush.bf16.msra.mxu0 0
          %2651 = vmatpush.bf16.msra.mxu0 0
          %2652 = vmatpush.bf16.msra.mxu0 %v2643
          %2653 = vmatmul.bf16.gmra.mxu0 %v2636
          %v2654 = vpop.f32.mrf.mxu0
          %v2655 = vadd.f32 0.0, %v2654
          %v2656 = vpop.f32.mrf.mxu0
          %2657 = vdwg.mxu0
          %v2659 = vsel %vm2634, %v2631, 0
          %v2662 = vand.u32 %v2505, %v2641
          %2664 = vmatpush.bf16.msra.mxu0 0
          %2665 = vmatpush.bf16.msra.mxu0 0
          %2666 = vmatpush.bf16.msra.mxu0 0
          %2667 = vmatpush.bf16.msra.mxu0 0
          %2668 = vmatpush.bf16.msra.mxu0 0
          %2669 = vmatpush.bf16.msra.mxu0 0
          %2670 = vmatpush.bf16.msra.mxu0 0
          %2671 = vmatpush.bf16.msra.mxu0 %v2662
          %2672 = vmatmul.bf16.gmra.mxu0 %v2659
          %v2673 = vpop.f32.mrf.mxu0
          %v2674 = vadd.f32 0.0, %v2673
          %v2675 = vpop.f32.mrf.mxu0
          %2676 = vdwg.mxu0
          %v2678 = vsel %vm2634, %v2632, 0
          %v2681 = vand.u32 %v2506, %v2641
          %2683 = vmatpush.bf16.msra.mxu0 0
          %2684 = vmatpush.bf16.msra.mxu0 0
          %2685 = vmatpush.bf16.msra.mxu0 0
          %2686 = vmatpush.bf16.msra.mxu0 0
          %2687 = vmatpush.bf16.msra.mxu0 0
          %2688 = vmatpush.bf16.msra.mxu0 0
          %2689 = vmatpush.bf16.msra.mxu0 0
          %2690 = vmatpush.bf16.msra.mxu0 %v2681
          %2691 = vmatmul.bf16.gmra.mxu0 %v2678
          %v2692 = vpop.f32.mrf.mxu0
          %v2693 = vadd.f32 0.0, %v2692
          %v2694 = vpop.f32.mrf.mxu0
          %2695 = vdwg.mxu0
          %v2697 = vsel %vm2634, %v2633, 0
          %v2700 = vand.u32 %v2507, %v2641
          %2702 = vmatpush.bf16.msra.mxu0 0
          %2703 = vmatpush.bf16.msra.mxu0 0
          %2704 = vmatpush.bf16.msra.mxu0 0
          %2705 = vmatpush.bf16.msra.mxu0 0
          %2706 = vmatpush.bf16.msra.mxu0 0
          %2707 = vmatpush.bf16.msra.mxu0 0
          %2708 = vmatpush.bf16.msra.mxu0 0
          %2709 = vmatpush.bf16.msra.mxu0 %v2700
          %2710 = vmatmul.bf16.gmra.mxu0 %v2697
          %v2711 = vpop.f32.mrf.mxu0
          %v2712 = vadd.f32 0.0, %v2711
          %v2713 = vpop.f32.mrf.mxu0
          %2714 = vdwg.mxu0
          %2716 = vrot.lane.b32.xlu0 %v2674, 32
          %v2717 = vpop.permute.xlu0 %2716
          %2720 = vrot.lane.b32.xlu0 %v2693, 64
          %v2721 = vpop.permute.xlu0 %2720
          %2724 = vrot.lane.b32.xlu0 %v2712, 96
          %v2725 = vpop.permute.xlu0 %2724
          %v2727 = vsel %vm2508, %v2655, %v2717
          %vm2728 = vcmask 523264
          %v2729 = vsel %vm2728, %v2727, %v2721
          %vm2730 = vcmask 785408
          %v2731 = vsel %vm2730, %v2729, %v2725
          %v2732 = vpack.c.bf16 %v2731, %v2731
          %s2733 = scalar_lea.vmem %s398, 64 [#allocation7]
          %v2734 = vld [vmem:[%s2733] sm:$0xf]
          %v2735 = vld [vmem:[%s2733 + $0x4] sm:$0xf]
          %v2736 = vld [vmem:[%s2733 + $0x8] sm:$0xf]
          %v2737 = vld [vmem:[%s2733 + $0xc] sm:$0xf]
          %v2738 = vld [vmem:[%s2733 + $0x10] sm:$0xf]
          %v2739 = vld [vmem:[%s2733 + $0x14] sm:$0xf]
          %v2740 = vld [vmem:[%s2733 + $0x18] sm:$0xf]
          %v2741 = vld [vmem:[%s2733 + $0x1c] sm:$0xf]
          %v2742 = vld [vmem:[%s2733 + $0x20] sm:$0xf]
          %v2743 = vld [vmem:[%s2733 + $0x24] sm:$0xf]
          %v2744 = vld [vmem:[%s2733 + $0x28] sm:$0xf]
          %v2745 = vld [vmem:[%s2733 + $0x2c] sm:$0xf]
          %v2746 = vld [vmem:[%s2733 + $0x30] sm:$0xf]
          %v2747 = vld [vmem:[%s2733 + $0x34] sm:$0xf]
          %v2748 = vld [vmem:[%s2733 + $0x38] sm:$0xf]
          %v2749 = vld [vmem:[%s2733 + $0x3c] sm:$0xf]
          %v2750 = vperm.slane %v2223, 3
          %v2767 = vunpack.c.l.b16 %v2734
          %v2768 = vunpack.c.l.b16 %v2735
          %v2769 = vunpack.c.l.b16 %v2736
          %v2770 = vunpack.c.l.b16 %v2737
          %v2771 = vunpack.c.l.b16 %v2738
          %v2772 = vunpack.c.l.b16 %v2739
          %v2773 = vunpack.c.l.b16 %v2740
          %v2774 = vunpack.c.l.b16 %v2741
          %v2775 = vunpack.c.l.b16 %v2742
          %v2776 = vunpack.c.l.b16 %v2743
          %v2777 = vunpack.c.l.b16 %v2744
          %v2778 = vunpack.c.l.b16 %v2745
          %v2779 = vunpack.c.l.b16 %v2746
          %v2780 = vunpack.c.l.b16 %v2747
          %v2781 = vunpack.c.l.b16 %v2748
          %v2782 = vunpack.c.l.b16 %v2749
          %v2783 = vpack.c.b16 %v2768, %v2767
          %v2784 = vpack.c.b16 %v2770, %v2769
          %v2785 = vpack.c.b16 %v2772, %v2771
          %v2786 = vpack.c.b16 %v2774, %v2773
          %v2787 = vpack.c.b16 %v2776, %v2775
          %v2788 = vpack.c.b16 %v2778, %v2777
          %v2789 = vpack.c.b16 %v2780, %v2779
          %v2790 = vpack.c.b16 %v2782, %v2781
          %2799 = vmatpush.bf16.msra.mxu0 %v2790
          %2800 = vmatpush.bf16.msra.mxu0 %v2789
          %2801 = vmatpush.bf16.msra.mxu0 %v2788
          %2802 = vmatpush.bf16.msra.mxu0 %v2787
          %2803 = vmatpush.bf16.msra.mxu0 %v2786
          %2804 = vmatpush.bf16.msra.mxu0 %v2785
          %2805 = vmatpush.bf16.msra.mxu0 %v2784
          %2806 = vmatpush.bf16.msra.mxu0 %v2783
          %2807 = vmatmul.bf16.gmra.mxu0 %v2732
          %v2808 = vpop.f32.mrf.mxu0
          %v2809 = vadd.f32 %v2750, %v2808
          %v2810 = vpop.f32.mrf.mxu0
          %2811 = vdwg.mxu0
          %v2812 = vadd.f32 %v2227, %v2809
          %v2813 = vsel %vm2228, %v2812, 0.0
          %2814 = vadd.xlane.f32.xlu0 %v2813
          %v2815 = vpop.xlane.xlu0 %2814
          %v2816 = vmul.f32 %v2815, %v2238
          %v2817 = vsub.f32 %v2812, %v2816
          %v2818 = vmul.f32 %v2817, %v2817
          %v2819 = vsel %vm2228, %v2818, 0.0
          %2820 = vadd.xlane.f32.xlu0 %v2819
          %v2821 = vpop.xlane.xlu0 %2820
          %v2822 = vmul.f32 %v2821, %v2238
          %v2823 = vadd.f32 %v2822, 1e-06
          %v2824 = vrsqrt.pop %v2823
          %v2825 = vmul.f32 %v2824, %v2823
          %v2826 = vmul.f32 %v2825, %v2824
          %v2827 = vmul.f32 0.5, %v2826
          %v2828 = vsub.f32 1.5, %v2827
          %v2829 = vmul.f32 %v2824, %v2828
          %vm2830 = vweird.f32 %v2823
          %vm2831 = vweird.f32 %v2824
          %vm2832 = vmor %vm2830, %vm2831
          %v2833 = vsel %vm2832, %v2824, %v2829
          %v2834 = vmul.f32 %v2817, %v2833
          %v2835 = vperm.slane %v2223, 4
          %v2836 = vmul.f32 %v2834, %v2835
          %v2837 = vperm.slane %v2223, 5
          %v2838 = vadd.f32 %v2836, %v2837
          %v2839 = vpack.c.bf16 %v2838, %v2838
          %s2840 = scalar_lea.vmem %s466, 256
          %v2841 = vld [vmem:[%s2840] sm:$0xff]
          %v2842 = vld [vmem:[%s2840 + $0x8] sm:$0xff]
          %v2843 = vld [vmem:[%s2840 + $0x10] sm:$0xff]
          %v2844 = vld [vmem:[%s2840 + $0x18] sm:$0xff]
          %v2845 = vld [vmem:[%s2840 + $0x20] sm:$0xff]
          %v2846 = vld [vmem:[%s2840 + $0x28] sm:$0xff]
          %v2847 = vld [vmem:[%s2840 + $0x30] sm:$0xff]
          %v2848 = vld [vmem:[%s2840 + $0x38] sm:$0xff]
          %v2849 = vld [vmem:[%s2840 + $0x40] sm:$0xff]
          %v2850 = vld [vmem:[%s2840 + $0x48] sm:$0xff]
          %v2851 = vld [vmem:[%s2840 + $0x50] sm:$0xff]
          %v2852 = vld [vmem:[%s2840 + $0x58] sm:$0xff]
          %v2853 = vld [vmem:[%s2840 + $0x60] sm:$0xff]
          %v2854 = vld [vmem:[%s2840 + $0x68] sm:$0xff]
          %v2855 = vld [vmem:[%s2840 + $0x70] sm:$0xff]
          %v2856 = vld [vmem:[%s2840 + $0x78] sm:$0xff]
          %v2857 = vld [vmem:[%s2840 + $0x80] sm:$0xff]
          %v2858 = vld [vmem:[%s2840 + $0x88] sm:$0xff]
          %v2859 = vld [vmem:[%s2840 + $0x90] sm:$0xff]
          %v2860 = vld [vmem:[%s2840 + $0x98] sm:$0xff]
          %v2861 = vld [vmem:[%s2840 + $0xa0] sm:$0xff]
          %v2862 = vld [vmem:[%s2840 + $0xa8] sm:$0xff]
          %v2863 = vld [vmem:[%s2840 + $0xb0] sm:$0xff]
          %v2864 = vld [vmem:[%s2840 + $0xb8] sm:$0xff]
          %v2865 = vld [vmem:[%s2840 + $0xc0] sm:$0xff]
          %v2866 = vld [vmem:[%s2840 + $0xc8] sm:$0xff]
          %v2867 = vld [vmem:[%s2840 + $0xd0] sm:$0xff]
          %v2868 = vld [vmem:[%s2840 + $0xd8] sm:$0xff]
          %v2869 = vld [vmem:[%s2840 + $0xe0] sm:$0xff]
          %v2870 = vld [vmem:[%s2840 + $0xe8] sm:$0xff]
          %v2871 = vld [vmem:[%s2840 + $0xf0] sm:$0xff]
          %v2872 = vld [vmem:[%s2840 + $0xf8] sm:$0xff]
          %v2873 = vperm.slane %v2223, 6
          %v2874 = vperm.slane %v2224, 6
          %v2875 = vperm.slane %v2225, 6
          %v2876 = vperm.slane %v2226, 6
          %v2909 = vunpack.c.l.b16 %v2841
          %v2910 = vunpack.c.h.b16 %v2841
          %v2911 = vunpack.c.l.b16 %v2842
          %v2912 = vunpack.c.h.b16 %v2842
          %v2913 = vunpack.c.l.b16 %v2843
          %v2914 = vunpack.c.h.b16 %v2843
          %v2915 = vunpack.c.l.b16 %v2844
          %v2916 = vunpack.c.h.b16 %v2844
          %v2917 = vunpack.c.l.b16 %v2845
          %v2918 = vunpack.c.h.b16 %v2845
          %v2919 = vunpack.c.l.b16 %v2846
          %v2920 = vunpack.c.h.b16 %v2846
          %v2921 = vunpack.c.l.b16 %v2847
          %v2922 = vunpack.c.h.b16 %v2847
          %v2923 = vunpack.c.l.b16 %v2848
          %v2924 = vunpack.c.h.b16 %v2848
          %v2925 = vunpack.c.l.b16 %v2849
          %v2926 = vunpack.c.h.b16 %v2849
          %v2927 = vunpack.c.l.b16 %v2850
          %v2928 = vunpack.c.h.b16 %v2850
          %v2929 = vunpack.c.l.b16 %v2851
          %v2930 = vunpack.c.h.b16 %v2851
          %v2931 = vunpack.c.l.b16 %v2852
          %v2932 = vunpack.c.h.b16 %v2852
          %v2933 = vunpack.c.l.b16 %v2853
          %v2934 = vunpack.c.h.b16 %v2853
          %v2935 = vunpack.c.l.b16 %v2854
          %v2936 = vunpack.c.h.b16 %v2854
          %v2937 = vunpack.c.l.b16 %v2855
          %v2938 = vunpack.c.h.b16 %v2855
          %v2939 = vunpack.c.l.b16 %v2856
          %v2940 = vunpack.c.h.b16 %v2856
          %v2941 = vunpack.c.l.b16 %v2857
          %v2942 = vunpack.c.h.b16 %v2857
          %v2943 = vunpack.c.l.b16 %v2858
          %v2944 = vunpack.c.h.b16 %v2858
          %v2945 = vunpack.c.l.b16 %v2859
          %v2946 = vunpack.c.h.b16 %v2859
          %v2947 = vunpack.c.l.b16 %v2860
          %v2948 = vunpack.c.h.b16 %v2860
          %v2949 = vunpack.c.l.b16 %v2861
          %v2950 = vunpack.c.h.b16 %v2861
          %v2951 = vunpack.c.l.b16 %v2862
          %v2952 = vunpack.c.h.b16 %v2862
          %v2953 = vunpack.c.l.b16 %v2863
          %v2954 = vunpack.c.h.b16 %v2863
          %v2955 = vunpack.c.l.b16 %v2864
          %v2956 = vunpack.c.h.b16 %v2864
          %v2957 = vunpack.c.l.b16 %v2865
          %v2958 = vunpack.c.h.b16 %v2865
          %v2959 = vunpack.c.l.b16 %v2866
          %v2960 = vunpack.c.h.b16 %v2866
          %v2961 = vunpack.c.l.b16 %v2867
          %v2962 = vunpack.c.h.b16 %v2867
          %v2963 = vunpack.c.l.b16 %v2868
          %v2964 = vunpack.c.h.b16 %v2868
          %v2965 = vunpack.c.l.b16 %v2869
          %v2966 = vunpack.c.h.b16 %v2869
          %v2967 = vunpack.c.l.b16 %v2870
          %v2968 = vunpack.c.h.b16 %v2870
          %v2969 = vunpack.c.l.b16 %v2871
          %v2970 = vunpack.c.h.b16 %v2871
          %v2971 = vunpack.c.l.b16 %v2872
          %v2972 = vunpack.c.h.b16 %v2872
          %v2973 = vpack.c.b16 %v2913, %v2909
          %v2974 = vpack.c.b16 %v2914, %v2910
          %v2975 = vpack.c.b16 %v2915, %v2911
          %v2976 = vpack.c.b16 %v2916, %v2912
          %v2977 = vpack.c.b16 %v2921, %v2917
          %v2978 = vpack.c.b16 %v2922, %v2918
          %v2979 = vpack.c.b16 %v2923, %v2919
          %v2980 = vpack.c.b16 %v2924, %v2920
          %v2981 = vpack.c.b16 %v2929, %v2925
          %v2982 = vpack.c.b16 %v2930, %v2926
          %v2983 = vpack.c.b16 %v2931, %v2927
          %v2984 = vpack.c.b16 %v2932, %v2928
          %v2985 = vpack.c.b16 %v2937, %v2933
          %v2986 = vpack.c.b16 %v2938, %v2934
          %v2987 = vpack.c.b16 %v2939, %v2935
          %v2988 = vpack.c.b16 %v2940, %v2936
          %v2989 = vpack.c.b16 %v2945, %v2941
          %v2990 = vpack.c.b16 %v2946, %v2942
          %v2991 = vpack.c.b16 %v2947, %v2943
          %v2992 = vpack.c.b16 %v2948, %v2944
          %v2993 = vpack.c.b16 %v2953, %v2949
          %v2994 = vpack.c.b16 %v2954, %v2950
          %v2995 = vpack.c.b16 %v2955, %v2951
          %v2996 = vpack.c.b16 %v2956, %v2952
          %v2997 = vpack.c.b16 %v2961, %v2957
          %v2998 = vpack.c.b16 %v2962, %v2958
          %v2999 = vpack.c.b16 %v2963, %v2959
          %v3000 = vpack.c.b16 %v2964, %v2960
          %v3001 = vpack.c.b16 %v2969, %v2965
          %v3002 = vpack.c.b16 %v2970, %v2966
          %v3003 = vpack.c.b16 %v2971, %v2967
          %v3004 = vpack.c.b16 %v2972, %v2968
          %3037 = vmatpush.bf16.msra.mxu0 %v3001
          %3038 = vmatpush.bf16.msra.mxu0 %v2997
          %3039 = vmatpush.bf16.msra.mxu0 %v2993
          %3040 = vmatpush.bf16.msra.mxu0 %v2989
          %3041 = vmatpush.bf16.msra.mxu0 %v2985
          %3042 = vmatpush.bf16.msra.mxu0 %v2981
          %3043 = vmatpush.bf16.msra.mxu0 %v2977
          %3044 = vmatpush.bf16.msra.mxu0 %v2973
          %3045 = vmatmul.bf16.gmra.mxu0 %v2839
          %v3046 = vpop.f32.mrf.mxu0
          %v3047 = vadd.f32 %v2873, %v3046
          %v3048 = vpop.f32.mrf.mxu0
          %3049 = vdwg.mxu0
          %3050 = vmatpush.bf16.msra.mxu0 %v3002
          %3051 = vmatpush.bf16.msra.mxu0 %v2998
          %3052 = vmatpush.bf16.msra.mxu0 %v2994
          %3053 = vmatpush.bf16.msra.mxu0 %v2990
          %3054 = vmatpush.bf16.msra.mxu0 %v2986
          %3055 = vmatpush.bf16.msra.mxu0 %v2982
          %3056 = vmatpush.bf16.msra.mxu0 %v2978
          %3057 = vmatpush.bf16.msra.mxu0 %v2974
          %3058 = vmatmul.bf16.gmra.mxu0 %v2839
          %v3059 = vpop.f32.mrf.mxu0
          %v3060 = vadd.f32 %v2874, %v3059
          %v3061 = vpop.f32.mrf.mxu0
          %3062 = vdwg.mxu0
          %3063 = vmatpush.bf16.msra.mxu0 %v3003
          %3064 = vmatpush.bf16.msra.mxu0 %v2999
          %3065 = vmatpush.bf16.msra.mxu0 %v2995
          %3066 = vmatpush.bf16.msra.mxu0 %v2991
          %3067 = vmatpush.bf16.msra.mxu0 %v2987
          %3068 = vmatpush.bf16.msra.mxu0 %v2983
          %3069 = vmatpush.bf16.msra.mxu0 %v2979
          %3070 = vmatpush.bf16.msra.mxu0 %v2975
          %3071 = vmatmul.bf16.gmra.mxu0 %v2839
          %v3072 = vpop.f32.mrf.mxu0
          %v3073 = vadd.f32 %v2875, %v3072
          %v3074 = vpop.f32.mrf.mxu0
          %3075 = vdwg.mxu0
          %3076 = vmatpush.bf16.msra.mxu0 %v3004
          %3077 = vmatpush.bf16.msra.mxu0 %v3000
          %3078 = vmatpush.bf16.msra.mxu0 %v2996
          %3079 = vmatpush.bf16.msra.mxu0 %v2992
          %3080 = vmatpush.bf16.msra.mxu0 %v2988
          %3081 = vmatpush.bf16.msra.mxu0 %v2984
          %3082 = vmatpush.bf16.msra.mxu0 %v2980
          %3083 = vmatpush.bf16.msra.mxu0 %v2976
          %3084 = vmatmul.bf16.gmra.mxu0 %v2839
          %v3085 = vpop.f32.mrf.mxu0
          %v3086 = vadd.f32 %v2876, %v3085
          %v3087 = vpop.f32.mrf.mxu0
          %3088 = vdwg.mxu0
          %v3089 = vmul.f32 %v3047, %v3047
          %v3090 = vmul.f32 %v3060, %v3060
          %v3091 = vmul.f32 %v3073, %v3073
          %v3092 = vmul.f32 %v3086, %v3086
          %v3093 = vmul.f32 %v3047, %v3089
          %v3094 = vmul.f32 %v3060, %v3090
          %v3095 = vmul.f32 %v3073, %v3091
          %v3096 = vmul.f32 %v3086, %v3092
          %v3097 = vmul.f32 %v3093, 0.044715
          %v3098 = vmul.f32 %v3094, 0.044715
          %v3099 = vmul.f32 %v3095, 0.044715
          %v3100 = vmul.f32 %v3096, 0.044715
          %v3101 = vadd.f32 %v3047, %v3097
          %v3102 = vadd.f32 %v3060, %v3098
          %v3103 = vadd.f32 %v3073, %v3099
          %v3104 = vadd.f32 %v3086, %v3100
          %v3105 = vmul.f32 %v3101, 0.7978846
          %v3106 = vmul.f32 %v3102, 0.7978846
          %v3107 = vmul.f32 %v3103, 0.7978846
          %v3108 = vmul.f32 %v3104, 0.7978846
          %v3109 = vtanh.pop %v3105
          %v3110 = vtanh.pop %v3106
          %v3111 = vtanh.pop %v3107
          %v3112 = vtanh.pop %v3108
          %v3113 = vadd.f32 %v3109, 1.0
          %v3114 = vadd.f32 %v3110, 1.0
          %v3115 = vadd.f32 %v3111, 1.0
          %v3116 = vadd.f32 %v3112, 1.0
          %v3117 = vmul.f32 %v3113, 0.5
          %v3118 = vmul.f32 %v3114, 0.5
          %v3119 = vmul.f32 %v3115, 0.5
          %v3120 = vmul.f32 %v3116, 0.5
          %v3121 = vmul.f32 %v3047, %v3117
          %v3122 = vmul.f32 %v3060, %v3118
          %v3123 = vmul.f32 %v3073, %v3119
          %v3124 = vmul.f32 %v3086, %v3120
          %v3125 = vpack.c.bf16 %v3121, %v3121
          %v3126 = vpack.c.bf16 %v3122, %v3122
          %v3127 = vpack.c.bf16 %v3123, %v3123
          %v3128 = vpack.c.bf16 %v3124, %v3124
          %s3129 = scalar_lea.vmem %s408, 256 [#allocation8]
          %v3130 = vld [vmem:[%s3129] sm:$0xf]
          %v3131 = vld [vmem:[%s3129 + $0x4] sm:$0xf]
          %v3132 = vld [vmem:[%s3129 + $0x8] sm:$0xf]
          %v3133 = vld [vmem:[%s3129 + $0xc] sm:$0xf]
          %v3134 = vld [vmem:[%s3129 + $0x10] sm:$0xf]
          %v3135 = vld [vmem:[%s3129 + $0x14] sm:$0xf]
          %v3136 = vld [vmem:[%s3129 + $0x18] sm:$0xf]
          %v3137 = vld [vmem:[%s3129 + $0x1c] sm:$0xf]
          %v3138 = vld [vmem:[%s3129 + $0x20] sm:$0xf]
          %v3139 = vld [vmem:[%s3129 + $0x24] sm:$0xf]
          %v3140 = vld [vmem:[%s3129 + $0x28] sm:$0xf]
          %v3141 = vld [vmem:[%s3129 + $0x2c] sm:$0xf]
          %v3142 = vld [vmem:[%s3129 + $0x30] sm:$0xf]
          %v3143 = vld [vmem:[%s3129 + $0x34] sm:$0xf]
          %v3144 = vld [vmem:[%s3129 + $0x38] sm:$0xf]
          %v3145 = vld [vmem:[%s3129 + $0x3c] sm:$0xf]
          %v3146 = vld [vmem:[%s3129 + $0x40] sm:$0xf]
          %v3147 = vld [vmem:[%s3129 + $0x44] sm:$0xf]
          %v3148 = vld [vmem:[%s3129 + $0x48] sm:$0xf]
          %v3149 = vld [vmem:[%s3129 + $0x4c] sm:$0xf]
          %v3150 = vld [vmem:[%s3129 + $0x50] sm:$0xf]
          %v3151 = vld [vmem:[%s3129 + $0x54] sm:$0xf]
          %v3152 = vld [vmem:[%s3129 + $0x58] sm:$0xf]
          %v3153 = vld [vmem:[%s3129 + $0x5c] sm:$0xf]
          %v3154 = vld [vmem:[%s3129 + $0x60] sm:$0xf]
          %v3155 = vld [vmem:[%s3129 + $0x64] sm:$0xf]
          %v3156 = vld [vmem:[%s3129 + $0x68] sm:$0xf]
          %v3157 = vld [vmem:[%s3129 + $0x6c] sm:$0xf]
          %v3158 = vld [vmem:[%s3129 + $0x70] sm:$0xf]
          %v3159 = vld [vmem:[%s3129 + $0x74] sm:$0xf]
          %v3160 = vld [vmem:[%s3129 + $0x78] sm:$0xf]
          %v3161 = vld [vmem:[%s3129 + $0x7c] sm:$0xf]
          %v3162 = vld [vmem:[%s3129 + $0x80] sm:$0xf]
          %v3163 = vld [vmem:[%s3129 + $0x84] sm:$0xf]
          %v3164 = vld [vmem:[%s3129 + $0x88] sm:$0xf]
          %v3165 = vld [vmem:[%s3129 + $0x8c] sm:$0xf]
          %v3166 = vld [vmem:[%s3129 + $0x90] sm:$0xf]
          %v3167 = vld [vmem:[%s3129 + $0x94] sm:$0xf]
          %v3168 = vld [vmem:[%s3129 + $0x98] sm:$0xf]
          %v3169 = vld [vmem:[%s3129 + $0x9c] sm:$0xf]
          %v3170 = vld [vmem:[%s3129 + $0xa0] sm:$0xf]
          %v3171 = vld [vmem:[%s3129 + $0xa4] sm:$0xf]
          %v3172 = vld [vmem:[%s3129 + $0xa8] sm:$0xf]
          %v3173 = vld [vmem:[%s3129 + $0xac] sm:$0xf]
          %v3174 = vld [vmem:[%s3129 + $0xb0] sm:$0xf]
          %v3175 = vld [vmem:[%s3129 + $0xb4] sm:$0xf]
          %v3176 = vld [vmem:[%s3129 + $0xb8] sm:$0xf]
          %v3177 = vld [vmem:[%s3129 + $0xbc] sm:$0xf]
          %v3178 = vld [vmem:[%s3129 + $0xc0] sm:$0xf]
          %v3179 = vld [vmem:[%s3129 + $0xc4] sm:$0xf]
          %v3180 = vld [vmem:[%s3129 + $0xc8] sm:$0xf]
          %v3181 = vld [vmem:[%s3129 + $0xcc] sm:$0xf]
          %v3182 = vld [vmem:[%s3129 + $0xd0] sm:$0xf]
          %v3183 = vld [vmem:[%s3129 + $0xd4] sm:$0xf]
          %v3184 = vld [vmem:[%s3129 + $0xd8] sm:$0xf]
          %v3185 = vld [vmem:[%s3129 + $0xdc] sm:$0xf]
          %v3186 = vld [vmem:[%s3129 + $0xe0] sm:$0xf]
          %v3187 = vld [vmem:[%s3129 + $0xe4] sm:$0xf]
          %v3188 = vld [vmem:[%s3129 + $0xe8] sm:$0xf]
          %v3189 = vld [vmem:[%s3129 + $0xec] sm:$0xf]
          %v3190 = vld [vmem:[%s3129 + $0xf0] sm:$0xf]
          %v3191 = vld [vmem:[%s3129 + $0xf4] sm:$0xf]
          %v3192 = vld [vmem:[%s3129 + $0xf8] sm:$0xf]
          %v3193 = vld [vmem:[%s3129 + $0xfc] sm:$0xf]
          %v3194 = vperm.slane %v2223, 7
          %v3259 = vunpack.c.l.b16 %v3130
          %v3260 = vunpack.c.l.b16 %v3131
          %v3261 = vunpack.c.l.b16 %v3132
          %v3262 = vunpack.c.l.b16 %v3133
          %v3263 = vunpack.c.l.b16 %v3134
          %v3264 = vunpack.c.l.b16 %v3135
          %v3265 = vunpack.c.l.b16 %v3136
          %v3266 = vunpack.c.l.b16 %v3137
          %v3267 = vunpack.c.l.b16 %v3138
          %v3268 = vunpack.c.l.b16 %v3139
          %v3269 = vunpack.c.l.b16 %v3140
          %v3270 = vunpack.c.l.b16 %v3141
          %v3271 = vunpack.c.l.b16 %v3142
          %v3272 = vunpack.c.l.b16 %v3143
          %v3273 = vunpack.c.l.b16 %v3144
          %v3274 = vunpack.c.l.b16 %v3145
          %v3275 = vunpack.c.l.b16 %v3146
          %v3276 = vunpack.c.l.b16 %v3147
          %v3277 = vunpack.c.l.b16 %v3148
          %v3278 = vunpack.c.l.b16 %v3149
          %v3279 = vunpack.c.l.b16 %v3150
          %v3280 = vunpack.c.l.b16 %v3151
          %v3281 = vunpack.c.l.b16 %v3152
          %v3282 = vunpack.c.l.b16 %v3153
          %v3283 = vunpack.c.l.b16 %v3154
          %v3284 = vunpack.c.l.b16 %v3155
          %v3285 = vunpack.c.l.b16 %v3156
          %v3286 = vunpack.c.l.b16 %v3157
          %v3287 = vunpack.c.l.b16 %v3158
          %v3288 = vunpack.c.l.b16 %v3159
          %v3289 = vunpack.c.l.b16 %v3160
          %v3290 = vunpack.c.l.b16 %v3161
          %v3291 = vunpack.c.l.b16 %v3162
          %v3292 = vunpack.c.l.b16 %v3163
          %v3293 = vunpack.c.l.b16 %v3164
          %v3294 = vunpack.c.l.b16 %v3165
          %v3295 = vunpack.c.l.b16 %v3166
          %v3296 = vunpack.c.l.b16 %v3167
          %v3297 = vunpack.c.l.b16 %v3168
          %v3298 = vunpack.c.l.b16 %v3169
          %v3299 = vunpack.c.l.b16 %v3170
          %v3300 = vunpack.c.l.b16 %v3171
          %v3301 = vunpack.c.l.b16 %v3172
          %v3302 = vunpack.c.l.b16 %v3173
          %v3303 = vunpack.c.l.b16 %v3174
          %v3304 = vunpack.c.l.b16 %v3175
          %v3305 = vunpack.c.l.b16 %v3176
          %v3306 = vunpack.c.l.b16 %v3177
          %v3307 = vunpack.c.l.b16 %v3178
          %v3308 = vunpack.c.l.b16 %v3179
          %v3309 = vunpack.c.l.b16 %v3180
          %v3310 = vunpack.c.l.b16 %v3181
          %v3311 = vunpack.c.l.b16 %v3182
          %v3312 = vunpack.c.l.b16 %v3183
          %v3313 = vunpack.c.l.b16 %v3184
          %v3314 = vunpack.c.l.b16 %v3185
          %v3315 = vunpack.c.l.b16 %v3186
          %v3316 = vunpack.c.l.b16 %v3187
          %v3317 = vunpack.c.l.b16 %v3188
          %v3318 = vunpack.c.l.b16 %v3189
          %v3319 = vunpack.c.l.b16 %v3190
          %v3320 = vunpack.c.l.b16 %v3191
          %v3321 = vunpack.c.l.b16 %v3192
          %v3322 = vunpack.c.l.b16 %v3193
          %v3323 = vpack.c.b16 %v3260, %v3259
          %v3324 = vpack.c.b16 %v3262, %v3261
          %v3325 = vpack.c.b16 %v3264, %v3263
          %v3326 = vpack.c.b16 %v3266, %v3265
          %v3327 = vpack.c.b16 %v3268, %v3267
          %v3328 = vpack.c.b16 %v3270, %v3269
          %v3329 = vpack.c.b16 %v3272, %v3271
          %v3330 = vpack.c.b16 %v3274, %v3273
          %v3331 = vpack.c.b16 %v3276, %v3275
          %v3332 = vpack.c.b16 %v3278, %v3277
          %v3333 = vpack.c.b16 %v3280, %v3279
          %v3334 = vpack.c.b16 %v3282, %v3281
          %v3335 = vpack.c.b16 %v3284, %v3283
          %v3336 = vpack.c.b16 %v3286, %v3285
          %v3337 = vpack.c.b16 %v3288, %v3287
          %v3338 = vpack.c.b16 %v3290, %v3289
          %v3339 = vpack.c.b16 %v3292, %v3291
          %v3340 = vpack.c.b16 %v3294, %v3293
          %v3341 = vpack.c.b16 %v3296, %v3295
          %v3342 = vpack.c.b16 %v3298, %v3297
          %v3343 = vpack.c.b16 %v3300, %v3299
          %v3344 = vpack.c.b16 %v3302, %v3301
          %v3345 = vpack.c.b16 %v3304, %v3303
          %v3346 = vpack.c.b16 %v3306, %v3305
          %v3347 = vpack.c.b16 %v3308, %v3307
          %v3348 = vpack.c.b16 %v3310, %v3309
          %v3349 = vpack.c.b16 %v3312, %v3311
          %v3350 = vpack.c.b16 %v3314, %v3313
          %v3351 = vpack.c.b16 %v3316, %v3315
          %v3352 = vpack.c.b16 %v3318, %v3317
          %v3353 = vpack.c.b16 %v3320, %v3319
          %v3354 = vpack.c.b16 %v3322, %v3321
          %3387 = vmatpush.bf16.msra.mxu0 %v3330
          %3388 = vmatpush.bf16.msra.mxu0 %v3329
          %3389 = vmatpush.bf16.msra.mxu0 %v3328
          %3390 = vmatpush.bf16.msra.mxu0 %v3327
          %3391 = vmatpush.bf16.msra.mxu0 %v3326
          %3392 = vmatpush.bf16.msra.mxu0 %v3325
          %3393 = vmatpush.bf16.msra.mxu0 %v3324
          %3394 = vmatpush.bf16.msra.mxu0 %v3323
          %3395 = vmatmul.bf16.gmra.mxu0 %v3125
          %v3396 = vpop.f32.mrf.mxu0
          %v3397 = vadd.f32 %v3194, %v3396
          %v3398 = vpop.f32.mrf.mxu0
          %3399 = vdwg.mxu0
          %3400 = vmatpush.bf16.msra.mxu0 %v3338
          %3401 = vmatpush.bf16.msra.mxu0 %v3337
          %3402 = vmatpush.bf16.msra.mxu0 %v3336
          %3403 = vmatpush.bf16.msra.mxu0 %v3335
          %3404 = vmatpush.bf16.msra.mxu0 %v3334
          %3405 = vmatpush.bf16.msra.mxu0 %v3333
          %3406 = vmatpush.bf16.msra.mxu0 %v3332
          %3407 = vmatpush.bf16.msra.mxu0 %v3331
          %3408 = vmatmul.bf16.gmra.mxu0 %v3126
          %v3409 = vpop.f32.mrf.mxu0
          %v3410 = vadd.f32 %v3397, %v3409
          %v3411 = vpop.f32.mrf.mxu0
          %3412 = vdwg.mxu0
          %3413 = vmatpush.bf16.msra.mxu0 %v3346
          %3414 = vmatpush.bf16.msra.mxu0 %v3345
          %3415 = vmatpush.bf16.msra.mxu0 %v3344
          %3416 = vmatpush.bf16.msra.mxu0 %v3343
          %3417 = vmatpush.bf16.msra.mxu0 %v3342
          %3418 = vmatpush.bf16.msra.mxu0 %v3341
          %3419 = vmatpush.bf16.msra.mxu0 %v3340
          %3420 = vmatpush.bf16.msra.mxu0 %v3339
          %3421 = vmatmul.bf16.gmra.mxu0 %v3127
          %v3422 = vpop.f32.mrf.mxu0
          %v3423 = vadd.f32 %v3410, %v3422
          %v3424 = vpop.f32.mrf.mxu0
          %3425 = vdwg.mxu0
          %3426 = vmatpush.bf16.msra.mxu0 %v3354
          %3427 = vmatpush.bf16.msra.mxu0 %v3353
          %3428 = vmatpush.bf16.msra.mxu0 %v3352
          %3429 = vmatpush.bf16.msra.mxu0 %v3351
          %3430 = vmatpush.bf16.msra.mxu0 %v3350
          %3431 = vmatpush.bf16.msra.mxu0 %v3349
          %3432 = vmatpush.bf16.msra.mxu0 %v3348
          %3433 = vmatpush.bf16.msra.mxu0 %v3347
          %3434 = vmatmul.bf16.gmra.mxu0 %v3128
          %v3435 = vpop.f32.mrf.mxu0
          %v3436 = vadd.f32 %v3423, %v3435
          %v3437 = vpop.f32.mrf.mxu0
          %3438 = vdwg.mxu0
          %v3439 = vadd.f32 %v2812, %v3436
          %3440 = vst [vmem:[#allocation2] sm:$0x1f] %v3439
        $region84: #{dinov2_mid_encoder_forward.2} parent=51 // pred_fallthru
          _
        %p3441 = scmp.eq.s32.totalorder %s2217, 31
        // Predicated region
        $region85: #{dinov2_mid_encoder_forward.2} parent=51 // pred_check
          %p3442 = pneg %p3441
        $region86: #{dinov2_mid_encoder_forward.2} parent=51 // pred_check_branch
          %3444 = sbr.rel (%p3442) target = $region88
        $region87: #{dinov2_mid_encoder_forward.2} parent=51 // pred_region
          %s3445 = scalar_lea.vmem %s378, 32 [#allocation3]
          %v3446 = vld [vmem:[%s3445] sm:$0xff]
          %v3447 = vld [vmem:[%s3445 + $0x10] sm:$0xff]
          %v3448 = vld [vmem:[#allocation2] sm:$0x1f]
          %vm3449 = vcmask 1044480
          %v3450 = vsel %vm3449, %v3448, 0.0
          %3451 = vadd.xlane.f32.xlu0 %v3450
          %v3452 = vpop.xlane.xlu0 %3451
          %v3453 = vrcp.pop 128.0
          %v3454 = vmul.f32 128.0, %v3453
          %v3455 = vsub.f32 1.0, %v3454
          %v3456 = vmul.f32 %v3453, %v3455
          %v3457 = vadd.f32 %v3453, %v3456
          %vm3458 = vweird.f32 %v3453
          %v3459 = vsel %vm3458, %v3453, %v3457
          %v3460 = vmul.f32 %v3452, %v3459
          %v3461 = vsub.f32 %v3448, %v3460
          %v3462 = vmul.f32 %v3461, %v3461
          %v3463 = vsel %vm3449, %v3462, 0.0
          %3464 = vadd.xlane.f32.xlu0 %v3463
          %v3465 = vpop.xlane.xlu0 %3464
          %v3466 = vmul.f32 %v3465, %v3459
          %v3467 = vadd.f32 %v3466, 1e-06
          %v3468 = vrsqrt.pop %v3467
          %v3469 = vmul.f32 %v3468, %v3467
          %v3470 = vmul.f32 %v3469, %v3468
          %v3471 = vmul.f32 0.5, %v3470
          %v3472 = vsub.f32 1.5, %v3471
          %v3473 = vmul.f32 %v3468, %v3472
          %vm3474 = vweird.f32 %v3467
          %vm3475 = vweird.f32 %v3468
          %vm3476 = vmor %vm3474, %vm3475
          %v3477 = vsel %vm3476, %v3468, %v3473
          %v3478 = vmul.f32 %v3461, %v3477
          %v3479 = vperm.slane %v3446, 0
          %v3480 = vmul.f32 %v3478, %v3479
          %v3481 = vperm.slane %v3446, 1
          %v3482 = vadd.f32 %v3480, %v3481
          %s3483 = scalar_lea.vmem %s388, 192 [#allocation5]
          %v3484 = vld [vmem:[%s3483 + $0x8] sm:$0xf]
          %v3485 = vld [vmem:[%s3483 + $0x14] sm:$0xf]
          %v3486 = vld [vmem:[%s3483 + $0x20] sm:$0xf]
          %v3487 = vld [vmem:[%s3483 + $0x2c] sm:$0xf]
          %v3488 = vld [vmem:[%s3483 + $0x38] sm:$0xf]
          %v3489 = vld [vmem:[%s3483 + $0x44] sm:$0xf]
          %v3490 = vld [vmem:[%s3483 + $0x50] sm:$0xf]
          %v3491 = vld [vmem:[%s3483 + $0x5c] sm:$0xf]
          %v3492 = vld [vmem:[%s3483 + $0x68] sm:$0xf]
          %v3493 = vld [vmem:[%s3483 + $0x74] sm:$0xf]
          %v3494 = vld [vmem:[%s3483 + $0x80] sm:$0xf]
          %v3495 = vld [vmem:[%s3483 + $0x8c] sm:$0xf]
          %v3496 = vld [vmem:[%s3483 + $0x98] sm:$0xf]
          %v3497 = vld [vmem:[%s3483 + $0xa4] sm:$0xf]
          %v3498 = vld [vmem:[%s3483 + $0xb0] sm:$0xf]
          %v3499 = vld [vmem:[%s3483 + $0xbc] sm:$0xf]
          %v3500 = vpack.c.bf16 %v3482, %v3482
          %v3501 = vperm.slane %v3447, 2
          %v3518 = vunpack.c.l.b16 %v3484
          %v3519 = vunpack.c.l.b16 %v3485
          %v3520 = vunpack.c.l.b16 %v3486
          %v3521 = vunpack.c.l.b16 %v3487
          %v3522 = vunpack.c.l.b16 %v3488
          %v3523 = vunpack.c.l.b16 %v3489
          %v3524 = vunpack.c.l.b16 %v3490
          %v3525 = vunpack.c.l.b16 %v3491
          %v3526 = vunpack.c.l.b16 %v3492
          %v3527 = vunpack.c.l.b16 %v3493
          %v3528 = vunpack.c.l.b16 %v3494
          %v3529 = vunpack.c.l.b16 %v3495
          %v3530 = vunpack.c.l.b16 %v3496
          %v3531 = vunpack.c.l.b16 %v3497
          %v3532 = vunpack.c.l.b16 %v3498
          %v3533 = vunpack.c.l.b16 %v3499
          %v3534 = vpack.c.b16 %v3519, %v3518
          %v3535 = vpack.c.b16 %v3521, %v3520
          %v3536 = vpack.c.b16 %v3523, %v3522
          %v3537 = vpack.c.b16 %v3525, %v3524
          %v3538 = vpack.c.b16 %v3527, %v3526
          %v3539 = vpack.c.b16 %v3529, %v3528
          %v3540 = vpack.c.b16 %v3531, %v3530
          %v3541 = vpack.c.b16 %v3533, %v3532
          %3550 = vmatpush.bf16.msra.mxu0 %v3541
          %3551 = vmatpush.bf16.msra.mxu0 %v3540
          %3552 = vmatpush.bf16.msra.mxu0 %v3539
          %3553 = vmatpush.bf16.msra.mxu0 %v3538
          %3554 = vmatpush.bf16.msra.mxu0 %v3537
          %3555 = vmatpush.bf16.msra.mxu0 %v3536
          %3556 = vmatpush.bf16.msra.mxu0 %v3535
          %3557 = vmatpush.bf16.msra.mxu0 %v3534
          %3558 = vmatmul.bf16.gmra.mxu0 %v3500
          %v3559 = vpop.f32.mrf.mxu0
          %v3560 = vadd.f32 %v3501, %v3559
          %v3561 = vpop.f32.mrf.mxu0
          %3562 = vdwg.mxu0
          %v3563 = vmul.f32 %v3560, %v3560
          %v3564 = vsel %vm3449, %v3563, 0.0
          %3565 = vadd.xlane.f32.xlu0 %v3564
          %v3566 = vpop.xlane.xlu0 %3565
          %v3567 = vmax.f32 %v3566, 1e-24
          %v3568 = vrsqrt.pop %v3567
          %v3569 = vmul.f32 %v3568, %v3567
          %v3570 = vmul.f32 %v3569, %v3568
          %v3571 = vmul.f32 0.5, %v3570
          %v3572 = vsub.f32 1.5, %v3571
          %v3573 = vmul.f32 %v3568, %v3572
          %vm3574 = vweird.f32 %v3567
          %vm3575 = vweird.f32 %v3568
          %vm3576 = vmor %vm3574, %vm3575
          %v3577 = vsel %vm3576, %v3568, %v3573
          %v3578 = vmul.f32 %v3560, %v3577
          %3579 = vst [vmem:[%s8 - $0x1] sm:$0x1e] %v3578
        $region88: #{dinov2_mid_encoder_forward.2} parent=51 // pred_fallthru
          _
        %s3580 = sadd.s32 %s861, 2
        %p3581 = scmp.lt.s32.totalorder %s3580, 31
        // Predicated region
        $region89: #{dinov2_mid_encoder_forward.2} parent=51 // pred_check
          %p3582 = pneg %p3581
        $region90: #{dinov2_mid_encoder_forward.2} parent=51 // pred_check_branch
          %3584 = sbr.rel (%p3582) target = $region92
        $region91: #{dinov2_mid_encoder_forward.2} parent=51 // pred_region
          %s3585 = scalar_lea.vmem %s378, 64 [#allocation3]
          %v3586 = vld [vmem:[%s3585] sm:$0xff]
          %v3587 = vld [vmem:[%s3585 + $0x8] sm:$0xff]
          %v3588 = vld [vmem:[%s3585 + $0x10] sm:$0xff]
          %v3589 = vld [vmem:[%s3585 + $0x18] sm:$0xff]
          %v3590 = vld [vmem:[#allocation2] sm:$0x1f]
          %vm3591 = vcmask 1044480
          %v3592 = vsel %vm3591, %v3590, 0.0
          %3593 = vadd.xlane.f32.xlu0 %v3592
          %v3594 = vpop.xlane.xlu0 %3593
          %v3595 = vrcp.pop 128.0
          %v3596 = vmul.f32 128.0, %v3595
          %v3597 = vsub.f32 1.0, %v3596
          %v3598 = vmul.f32 %v3595, %v3597
          %v3599 = vadd.f32 %v3595, %v3598
          %vm3600 = vweird.f32 %v3595
          %v3601 = vsel %vm3600, %v3595, %v3599
          %v3602 = vmul.f32 %v3594, %v3601
          %v3603 = vsub.f32 %v3590, %v3602
          %v3604 = vmul.f32 %v3603, %v3603
          %v3605 = vsel %vm3591, %v3604, 0.0
          %3606 = vadd.xlane.f32.xlu0 %v3605
          %v3607 = vpop.xlane.xlu0 %3606
          %v3608 = vmul.f32 %v3607, %v3601
          %v3609 = vadd.f32 %v3608, 1e-06
          %v3610 = vrsqrt.pop %v3609
          %v3611 = vmul.f32 %v3610, %v3609
          %v3612 = vmul.f32 %v3611, %v3610
          %v3613 = vmul.f32 0.5, %v3612
          %v3614 = vsub.f32 1.5, %v3613
          %v3615 = vmul.f32 %v3610, %v3614
          %vm3616 = vweird.f32 %v3609
          %vm3617 = vweird.f32 %v3610
          %vm3618 = vmor %vm3616, %vm3617
          %v3619 = vsel %vm3618, %v3610, %v3615
          %v3620 = vmul.f32 %v3603, %v3619
          %v3621 = vperm.slane %v3586, 0
          %v3622 = vmul.f32 %v3620, %v3621
          %v3623 = vperm.slane %v3586, 1
          %v3624 = vadd.f32 %v3622, %v3623
          %v3625 = vpack.c.bf16 %v3624, %v3624
          %s3626 = scalar_lea.vmem %s388, 384 [#allocation5]
          %v3627 = vld [vmem:[%s3626] sm:$0xff]
          %v3628 = vld [vmem:[%s3626 + $0x8] sm:$0xf]
          %v3629 = vld [vmem:[%s3626 + $0xc] sm:$0xff]
          %v3630 = vld [vmem:[%s3626 + $0x14] sm:$0xf]
          %v3631 = vld [vmem:[%s3626 + $0x18] sm:$0xff]
          %v3632 = vld [vmem:[%s3626 + $0x20] sm:$0xf]
          %v3633 = vld [vmem:[%s3626 + $0x24] sm:$0xff]
          %v3634 = vld [vmem:[%s3626 + $0x2c] sm:$0xf]
          %v3635 = vld [vmem:[%s3626 + $0x30] sm:$0xff]
          %v3636 = vld [vmem:[%s3626 + $0x38] sm:$0xf]
          %v3637 = vld [vmem:[%s3626 + $0x3c] sm:$0xff]
          %v3638 = vld [vmem:[%s3626 + $0x44] sm:$0xf]
          %v3639 = vld [vmem:[%s3626 + $0x48] sm:$0xff]
          %v3640 = vld [vmem:[%s3626 + $0x50] sm:$0xf]
          %v3641 = vld [vmem:[%s3626 + $0x54] sm:$0xff]
          %v3642 = vld [vmem:[%s3626 + $0x5c] sm:$0xf]
          %v3643 = vld [vmem:[%s3626 + $0x60] sm:$0xff]
          %v3644 = vld [vmem:[%s3626 + $0x68] sm:$0xf]
          %v3645 = vld [vmem:[%s3626 + $0x6c] sm:$0xff]
          %v3646 = vld [vmem:[%s3626 + $0x74] sm:$0xf]
          %v3647 = vld [vmem:[%s3626 + $0x78] sm:$0xff]
          %v3648 = vld [vmem:[%s3626 + $0x80] sm:$0xf]
          %v3649 = vld [vmem:[%s3626 + $0x84] sm:$0xff]
          %v3650 = vld [vmem:[%s3626 + $0x8c] sm:$0xf]
          %v3651 = vld [vmem:[%s3626 + $0x90] sm:$0xff]
          %v3652 = vld [vmem:[%s3626 + $0x98] sm:$0xf]
          %v3653 = vld [vmem:[%s3626 + $0x9c] sm:$0xff]
          %v3654 = vld [vmem:[%s3626 + $0xa4] sm:$0xf]
          %v3655 = vld [vmem:[%s3626 + $0xa8] sm:$0xff]
          %v3656 = vld [vmem:[%s3626 + $0xb0] sm:$0xf]
          %v3657 = vld [vmem:[%s3626 + $0xb4] sm:$0xff]
          %v3658 = vld [vmem:[%s3626 + $0xbc] sm:$0xf]
          %v3659 = vperm.slane %v3586, 2
          %v3660 = vperm.slane %v3587, 2
          %v3661 = vperm.slane %v3588, 2
          %v3694 = vunpack.c.l.b16 %v3627
          %v3695 = vunpack.c.h.b16 %v3627
          %v3696 = vunpack.c.l.b16 %v3628
          %v3697 = vunpack.c.l.b16 %v3629
          %v3698 = vunpack.c.h.b16 %v3629
          %v3699 = vunpack.c.l.b16 %v3630
          %v3700 = vunpack.c.l.b16 %v3631
          %v3701 = vunpack.c.h.b16 %v3631
          %v3702 = vunpack.c.l.b16 %v3632
          %v3703 = vunpack.c.l.b16 %v3633
          %v3704 = vunpack.c.h.b16 %v3633
          %v3705 = vunpack.c.l.b16 %v3634
          %v3706 = vunpack.c.l.b16 %v3635
          %v3707 = vunpack.c.h.b16 %v3635
          %v3708 = vunpack.c.l.b16 %v3636
          %v3709 = vunpack.c.l.b16 %v3637
          %v3710 = vunpack.c.h.b16 %v3637
          %v3711 = vunpack.c.l.b16 %v3638
          %v3712 = vunpack.c.l.b16 %v3639
          %v3713 = vunpack.c.h.b16 %v3639
          %v3714 = vunpack.c.l.b16 %v3640
          %v3715 = vunpack.c.l.b16 %v3641
          %v3716 = vunpack.c.h.b16 %v3641
          %v3717 = vunpack.c.l.b16 %v3642
          %v3718 = vunpack.c.l.b16 %v3643
          %v3719 = vunpack.c.h.b16 %v3643
          %v3720 = vunpack.c.l.b16 %v3644
          %v3721 = vunpack.c.l.b16 %v3645
          %v3722 = vunpack.c.h.b16 %v3645
          %v3723 = vunpack.c.l.b16 %v3646
          %v3724 = vunpack.c.l.b16 %v3647
          %v3725 = vunpack.c.h.b16 %v3647
          %v3726 = vunpack.c.l.b16 %v3648
          %v3727 = vunpack.c.l.b16 %v3649
          %v3728 = vunpack.c.h.b16 %v3649
          %v3729 = vunpack.c.l.b16 %v3650
          %v3730 = vunpack.c.l.b16 %v3651
          %v3731 = vunpack.c.h.b16 %v3651
          %v3732 = vunpack.c.l.b16 %v3652
          %v3733 = vunpack.c.l.b16 %v3653
          %v3734 = vunpack.c.h.b16 %v3653
          %v3735 = vunpack.c.l.b16 %v3654
          %v3736 = vunpack.c.l.b16 %v3655
          %v3737 = vunpack.c.h.b16 %v3655
          %v3738 = vunpack.c.l.b16 %v3656
          %v3739 = vunpack.c.l.b16 %v3657
          %v3740 = vunpack.c.h.b16 %v3657
          %v3741 = vunpack.c.l.b16 %v3658
          %v3742 = vpack.c.b16 %v3697, %v3694
          %v3743 = vpack.c.b16 %v3698, %v3695
          %v3744 = vpack.c.b16 %v3699, %v3696
          %v3745 = vpack.c.b16 %v3703, %v3700
          %v3746 = vpack.c.b16 %v3704, %v3701
          %v3747 = vpack.c.b16 %v3705, %v3702
          %v3748 = vpack.c.b16 %v3709, %v3706
          %v3749 = vpack.c.b16 %v3710, %v3707
          %v3750 = vpack.c.b16 %v3711, %v3708
          %v3751 = vpack.c.b16 %v3715, %v3712
          %v3752 = vpack.c.b16 %v3716, %v3713
          %v3753 = vpack.c.b16 %v3717, %v3714
          %v3754 = vpack.c.b16 %v3721, %v3718
          %v3755 = vpack.c.b16 %v3722, %v3719
          %v3756 = vpack.c.b16 %v3723, %v3720
          %v3757 = vpack.c.b16 %v3727, %v3724
          %v3758 = vpack.c.b16 %v3728, %v3725
          %v3759 = vpack.c.b16 %v3729, %v3726
          %v3760 = vpack.c.b16 %v3733, %v3730
          %v3761 = vpack.c.b16 %v3734, %v3731
          %v3762 = vpack.c.b16 %v3735, %v3732
          %v3763 = vpack.c.b16 %v3739, %v3736
          %v3764 = vpack.c.b16 %v3740, %v3737
          %v3765 = vpack.c.b16 %v3741, %v3738
          %3790 = vmatpush.bf16.msra.mxu0 %v3763
          %3791 = vmatpush.bf16.msra.mxu0 %v3760
          %3792 = vmatpush.bf16.msra.mxu0 %v3757
          %3793 = vmatpush.bf16.msra.mxu0 %v3754
          %3794 = vmatpush.bf16.msra.mxu0 %v3751
          %3795 = vmatpush.bf16.msra.mxu0 %v3748
          %3796 = vmatpush.bf16.msra.mxu0 %v3745
          %3797 = vmatpush.bf16.msra.mxu0 %v3742
          %3798 = vmatmul.bf16.gmra.mxu0 %v3625
          %v3799 = vpop.f32.mrf.mxu0
          %v3800 = vadd.f32 %v3659, %v3799
          %v3801 = vpop.f32.mrf.mxu0
          %3802 = vdwg.mxu0
          %3803 = vmatpush.bf16.msra.mxu0 %v3764
          %3804 = vmatpush.bf16.msra.mxu0 %v3761
          %3805 = vmatpush.bf16.msra.mxu0 %v3758
          %3806 = vmatpush.bf16.msra.mxu0 %v3755
          %3807 = vmatpush.bf16.msra.mxu0 %v3752
          %3808 = vmatpush.bf16.msra.mxu0 %v3749
          %3809 = vmatpush.bf16.msra.mxu0 %v3746
          %3810 = vmatpush.bf16.msra.mxu0 %v3743
          %3811 = vmatmul.bf16.gmra.mxu0 %v3625
          %v3812 = vpop.f32.mrf.mxu0
          %v3813 = vadd.f32 %v3660, %v3812
          %v3814 = vpop.f32.mrf.mxu0
          %3815 = vdwg.mxu0
          %3816 = vmatpush.bf16.msra.mxu0 %v3765
          %3817 = vmatpush.bf16.msra.mxu0 %v3762
          %3818 = vmatpush.bf16.msra.mxu0 %v3759
          %3819 = vmatpush.bf16.msra.mxu0 %v3756
          %3820 = vmatpush.bf16.msra.mxu0 %v3753
          %3821 = vmatpush.bf16.msra.mxu0 %v3750
          %3822 = vmatpush.bf16.msra.mxu0 %v3747
          %3823 = vmatpush.bf16.msra.mxu0 %v3744
          %3824 = vmatmul.bf16.gmra.mxu0 %v3625
          %v3825 = vpop.f32.mrf.mxu0
          %v3826 = vadd.f32 %v3661, %v3825
          %v3827 = vpop.f32.mrf.mxu0
          %3828 = vdwg.mxu0
          %3830 = vrot.lane.b32.xlu0 %v3800, 96
          %v3831 = vpop.permute.xlu0 %3830
          %3833 = vrot.lane.b32.xlu0 %v3800, 64
          %v3834 = vpop.permute.xlu0 %3833
          %3836 = vrot.lane.b32.xlu0 %v3800, 32
          %v3837 = vpop.permute.xlu0 %3836
          %v3839 = vpack.c.bf16 %v3800, %v3800
          %v3840 = vpack.c.bf16 %v3831, %v3831
          %v3841 = vpack.c.bf16 %v3834, %v3834
          %v3842 = vpack.c.bf16 %v3837, %v3837
          %3844 = vrot.lane.b32.xlu0 %v3813, 96
          %v3845 = vpop.permute.xlu0 %3844
          %3847 = vrot.lane.b32.xlu0 %v3813, 64
          %v3848 = vpop.permute.xlu0 %3847
          %3850 = vrot.lane.b32.xlu0 %v3813, 32
          %v3851 = vpop.permute.xlu0 %3850
          %v3853 = vpack.c.bf16 %v3813, %v3813
          %v3854 = vpack.c.bf16 %v3845, %v3845
          %v3855 = vpack.c.bf16 %v3848, %v3848
          %v3856 = vpack.c.bf16 %v3851, %v3851
          %3858 = vrot.lane.b32.xlu0 %v3826, 96
          %v3859 = vpop.permute.xlu0 %3858
          %3861 = vrot.lane.b32.xlu0 %v3826, 64
          %v3862 = vpop.permute.xlu0 %3861
          %3864 = vrot.lane.b32.xlu0 %v3826, 32
          %v3865 = vpop.permute.xlu0 %3864
          %v3867 = vpack.c.bf16 %v3826, %v3826
          %v3868 = vpack.c.bf16 %v3859, %v3859
          %v3869 = vpack.c.bf16 %v3862, %v3862
          %v3870 = vpack.c.bf16 %v3865, %v3865
          %vm3871 = vcmask 261120
          %v3873 = vsel %vm3871, %v3839, 0
          %v3876 = vsel %vm3871, %v3853, 0
          %3878 = vmatpush.bf16.xpose.msra.mxu0 0
          %3879 = vmatpush.bf16.xpose.msra.mxu0 0
          %3880 = vmatpush.bf16.xpose.msra.mxu0 0
          %3881 = vmatpush.bf16.xpose.msra.mxu0 0
          %3882 = vmatpush.bf16.xpose.msra.mxu0 0
          %3883 = vmatpush.bf16.xpose.msra.mxu0 0
          %3884 = vmatpush.bf16.xpose.msra.mxu0 0
          %3885 = vmatpush.bf16.xpose.msra.mxu0 %v3876
          %3886 = vmatmul.bf16.gmra.mxu0 %v3873
          %v3887 = vpop.f32.mrf.mxu0
          %v3888 = vadd.f32 0.0, %v3887
          %v3889 = vpop.f32.mrf.mxu0
          %3890 = vdwg.mxu0
          %v3892 = vsel %vm3871, %v3840, 0
          %v3895 = vsel %vm3871, %v3854, 0
          %3897 = vmatpush.bf16.xpose.msra.mxu0 0
          %3898 = vmatpush.bf16.xpose.msra.mxu0 0
          %3899 = vmatpush.bf16.xpose.msra.mxu0 0
          %3900 = vmatpush.bf16.xpose.msra.mxu0 0
          %3901 = vmatpush.bf16.xpose.msra.mxu0 0
          %3902 = vmatpush.bf16.xpose.msra.mxu0 0
          %3903 = vmatpush.bf16.xpose.msra.mxu0 0
          %3904 = vmatpush.bf16.xpose.msra.mxu0 %v3895
          %3905 = vmatmul.bf16.gmra.mxu0 %v3892
          %v3906 = vpop.f32.mrf.mxu0
          %v3907 = vadd.f32 0.0, %v3906
          %v3908 = vpop.f32.mrf.mxu0
          %3909 = vdwg.mxu0
          %v3911 = vsel %vm3871, %v3841, 0
          %v3914 = vsel %vm3871, %v3855, 0
          %3916 = vmatpush.bf16.xpose.msra.mxu0 0
          %3917 = vmatpush.bf16.xpose.msra.mxu0 0
          %3918 = vmatpush.bf16.xpose.msra.mxu0 0
          %3919 = vmatpush.bf16.xpose.msra.mxu0 0
          %3920 = vmatpush.bf16.xpose.msra.mxu0 0
          %3921 = vmatpush.bf16.xpose.msra.mxu0 0
          %3922 = vmatpush.bf16.xpose.msra.mxu0 0
          %3923 = vmatpush.bf16.xpose.msra.mxu0 %v3914
          %3924 = vmatmul.bf16.gmra.mxu0 %v3911
          %v3925 = vpop.f32.mrf.mxu0
          %v3926 = vadd.f32 0.0, %v3925
          %v3927 = vpop.f32.mrf.mxu0
          %3928 = vdwg.mxu0
          %v3930 = vsel %vm3871, %v3842, 0
          %v3933 = vsel %vm3871, %v3856, 0
          %3935 = vmatpush.bf16.xpose.msra.mxu0 0
          %3936 = vmatpush.bf16.xpose.msra.mxu0 0
          %3937 = vmatpush.bf16.xpose.msra.mxu0 0
          %3938 = vmatpush.bf16.xpose.msra.mxu0 0
          %3939 = vmatpush.bf16.xpose.msra.mxu0 0
          %3940 = vmatpush.bf16.xpose.msra.mxu0 0
          %3941 = vmatpush.bf16.xpose.msra.mxu0 0
          %3942 = vmatpush.bf16.xpose.msra.mxu0 %v3933
          %3943 = vmatmul.bf16.gmra.mxu0 %v3930
          %v3944 = vpop.f32.mrf.mxu0
          %v3945 = vadd.f32 0.0, %v3944
          %v3946 = vpop.f32.mrf.mxu0
          %3947 = vdwg.mxu0
          %vm3948 = vcmask 36864
          %v3949 = vsel %vm3948, %v3888, -inf
          %3950 = vmax.xlane.f32.xlu0 %v3949
          %v3951 = vpop.xlane.xlu0 %3950
          %v3952 = vsel %vm3948, %v3907, -inf
          %3953 = vmax.xlane.f32.xlu0 %v3952
          %v3954 = vpop.xlane.xlu0 %3953
          %v3955 = vsel %vm3948, %v3926, -inf
          %3956 = vmax.xlane.f32.xlu0 %v3955
          %v3957 = vpop.xlane.xlu0 %3956
          %v3958 = vsel %vm3948, %v3945, -inf
          %3959 = vmax.xlane.f32.xlu0 %v3958
          %v3960 = vpop.xlane.xlu0 %3959
          %v3961 = vsub.f32 %v3888, %v3951
          %v3962 = vsub.f32 %v3907, %v3954
          %v3963 = vsub.f32 %v3926, %v3957
          %v3964 = vsub.f32 %v3945, %v3960
          %v3965 = vmul.f32 %v3961, 1.442695
          %v3966 = vpow.pop %v3965
          %v3967 = vmul.f32 %v3962, 1.442695
          %v3968 = vpow.pop %v3967
          %v3969 = vmul.f32 %v3963, 1.442695
          %v3970 = vpow.pop %v3969
          %v3971 = vmul.f32 %v3964, 1.442695
          %v3972 = vpow.pop %v3971
          %v3973 = vsel %vm3948, %v3966, 0.0
          %3974 = vadd.xlane.f32.xlu0 %v3973
          %v3975 = vpop.xlane.xlu0 %3974
          %v3976 = vsel %vm3948, %v3968, 0.0
          %3977 = vadd.xlane.f32.xlu0 %v3976
          %v3978 = vpop.xlane.xlu0 %3977
          %v3979 = vsel %vm3948, %v3970, 0.0
          %3980 = vadd.xlane.f32.xlu0 %v3979
          %v3981 = vpop.xlane.xlu0 %3980
          %v3982 = vsel %vm3948, %v3972, 0.0
          %3983 = vadd.xlane.f32.xlu0 %v3982
          %v3984 = vpop.xlane.xlu0 %3983
          %v3985 = vrcp.pop %v3975
          %v3986 = vrcp.pop %v3978
          %v3987 = vrcp.pop %v3981
          %v3988 = vrcp.pop %v3984
          %v3989 = vmul.f32 %v3966, %v3985
          %v3990 = vmul.f32 %v3968, %v3986
          %v3991 = vmul.f32 %v3970, %v3987
          %v3992 = vmul.f32 %v3972, %v3988
          %v3993 = vpack.c.bf16 %v3989, %v3989
          %v3994 = vpack.c.bf16 %v3990, %v3990
          %v3995 = vpack.c.bf16 %v3991, %v3991
          %v3996 = vpack.c.bf16 %v3992, %v3992
          %vm3997 = vcmask 39936
          %v3999 = vsel %vm3997, %v3993, 0
          %vm4001 = vcmask 1041408
          %vm4002 = vcmask 1042432
          %v4003 = vsel %vm4001, 4294967295, 65535
          %v4004 = vsel %vm4002, %v4003, 0
          %v4006 = vand.u32 %v3867, %v4004
          %4008 = vmatpush.bf16.msra.mxu0 0
          %4009 = vmatpush.bf16.msra.mxu0 0
          %4010 = vmatpush.bf16.msra.mxu0 0
          %4011 = vmatpush.bf16.msra.mxu0 0
          %4012 = vmatpush.bf16.msra.mxu0 0
          %4013 = vmatpush.bf16.msra.mxu0 0
          %4014 = vmatpush.bf16.msra.mxu0 0
          %4015 = vmatpush.bf16.msra.mxu0 %v4006
          %4016 = vmatmul.bf16.gmra.mxu0 %v3999
          %v4017 = vpop.f32.mrf.mxu0
          %v4018 = vadd.f32 0.0, %v4017
          %v4019 = vpop.f32.mrf.mxu0
          %4020 = vdwg.mxu0
          %v4022 = vsel %vm3997, %v3994, 0
          %v4025 = vand.u32 %v3868, %v4004
          %4027 = vmatpush.bf16.msra.mxu0 0
          %4028 = vmatpush.bf16.msra.mxu0 0
          %4029 = vmatpush.bf16.msra.mxu0 0
          %4030 = vmatpush.bf16.msra.mxu0 0
          %4031 = vmatpush.bf16.msra.mxu0 0
          %4032 = vmatpush.bf16.msra.mxu0 0
          %4033 = vmatpush.bf16.msra.mxu0 0
          %4034 = vmatpush.bf16.msra.mxu0 %v4025
          %4035 = vmatmul.bf16.gmra.mxu0 %v4022
          %v4036 = vpop.f32.mrf.mxu0
          %v4037 = vadd.f32 0.0, %v4036
          %v4038 = vpop.f32.mrf.mxu0
          %4039 = vdwg.mxu0
          %v4041 = vsel %vm3997, %v3995, 0
          %v4044 = vand.u32 %v3869, %v4004
          %4046 = vmatpush.bf16.msra.mxu0 0
          %4047 = vmatpush.bf16.msra.mxu0 0
          %4048 = vmatpush.bf16.msra.mxu0 0
          %4049 = vmatpush.bf16.msra.mxu0 0
          %4050 = vmatpush.bf16.msra.mxu0 0
          %4051 = vmatpush.bf16.msra.mxu0 0
          %4052 = vmatpush.bf16.msra.mxu0 0
          %4053 = vmatpush.bf16.msra.mxu0 %v4044
          %4054 = vmatmul.bf16.gmra.mxu0 %v4041
          %v4055 = vpop.f32.mrf.mxu0
          %v4056 = vadd.f32 0.0, %v4055
          %v4057 = vpop.f32.mrf.mxu0
          %4058 = vdwg.mxu0
          %v4060 = vsel %vm3997, %v3996, 0
          %v4063 = vand.u32 %v3870, %v4004
          %4065 = vmatpush.bf16.msra.mxu0 0
          %4066 = vmatpush.bf16.msra.mxu0 0
          %4067 = vmatpush.bf16.msra.mxu0 0
          %4068 = vmatpush.bf16.msra.mxu0 0
          %4069 = vmatpush.bf16.msra.mxu0 0
          %4070 = vmatpush.bf16.msra.mxu0 0
          %4071 = vmatpush.bf16.msra.mxu0 0
          %4072 = vmatpush.bf16.msra.mxu0 %v4063
          %4073 = vmatmul.bf16.gmra.mxu0 %v4060
          %v4074 = vpop.f32.mrf.mxu0
          %v4075 = vadd.f32 0.0, %v4074
          %v4076 = vpop.f32.mrf.mxu0
          %4077 = vdwg.mxu0
          %4079 = vrot.lane.b32.xlu0 %v4037, 32
          %v4080 = vpop.permute.xlu0 %4079
          %4083 = vrot.lane.b32.xlu0 %v4056, 64
          %v4084 = vpop.permute.xlu0 %4083
          %4087 = vrot.lane.b32.xlu0 %v4075, 96
          %v4088 = vpop.permute.xlu0 %4087
          %v4090 = vsel %vm3871, %v4018, %v4080
          %vm4091 = vcmask 523264
          %v4092 = vsel %vm4091, %v4090, %v4084
          %vm4093 = vcmask 785408
          %v4094 = vsel %vm4093, %v4092, %v4088
          %v4095 = vpack.c.bf16 %v4094, %v4094
          %s4096 = scalar_lea.vmem %s398, 128 [#allocation7]
          %v4097 = vld [vmem:[%s4096] sm:$0xf]
          %v4098 = vld [vmem:[%s4096 + $0x4] sm:$0xf]
          %v4099 = vld [vmem:[%s4096 + $0x8] sm:$0xf]
          %v4100 = vld [vmem:[%s4096 + $0xc] sm:$0xf]
          %v4101 = vld [vmem:[%s4096 + $0x10] sm:$0xf]
          %v4102 = vld [vmem:[%s4096 + $0x14] sm:$0xf]
          %v4103 = vld [vmem:[%s4096 + $0x18] sm:$0xf]
          %v4104 = vld [vmem:[%s4096 + $0x1c] sm:$0xf]
          %v4105 = vld [vmem:[%s4096 + $0x20] sm:$0xf]
          %v4106 = vld [vmem:[%s4096 + $0x24] sm:$0xf]
          %v4107 = vld [vmem:[%s4096 + $0x28] sm:$0xf]
          %v4108 = vld [vmem:[%s4096 + $0x2c] sm:$0xf]
          %v4109 = vld [vmem:[%s4096 + $0x30] sm:$0xf]
          %v4110 = vld [vmem:[%s4096 + $0x34] sm:$0xf]
          %v4111 = vld [vmem:[%s4096 + $0x38] sm:$0xf]
          %v4112 = vld [vmem:[%s4096 + $0x3c] sm:$0xf]
          %v4113 = vperm.slane %v3586, 3
          %v4130 = vunpack.c.l.b16 %v4097
          %v4131 = vunpack.c.l.b16 %v4098
          %v4132 = vunpack.c.l.b16 %v4099
          %v4133 = vunpack.c.l.b16 %v4100
          %v4134 = vunpack.c.l.b16 %v4101
          %v4135 = vunpack.c.l.b16 %v4102
          %v4136 = vunpack.c.l.b16 %v4103
          %v4137 = vunpack.c.l.b16 %v4104
          %v4138 = vunpack.c.l.b16 %v4105
          %v4139 = vunpack.c.l.b16 %v4106
          %v4140 = vunpack.c.l.b16 %v4107
          %v4141 = vunpack.c.l.b16 %v4108
          %v4142 = vunpack.c.l.b16 %v4109
          %v4143 = vunpack.c.l.b16 %v4110
          %v4144 = vunpack.c.l.b16 %v4111
          %v4145 = vunpack.c.l.b16 %v4112
          %v4146 = vpack.c.b16 %v4131, %v4130
          %v4147 = vpack.c.b16 %v4133, %v4132
          %v4148 = vpack.c.b16 %v4135, %v4134
          %v4149 = vpack.c.b16 %v4137, %v4136
          %v4150 = vpack.c.b16 %v4139, %v4138
          %v4151 = vpack.c.b16 %v4141, %v4140
          %v4152 = vpack.c.b16 %v4143, %v4142
          %v4153 = vpack.c.b16 %v4145, %v4144
          %4162 = vmatpush.bf16.msra.mxu0 %v4153
          %4163 = vmatpush.bf16.msra.mxu0 %v4152
          %4164 = vmatpush.bf16.msra.mxu0 %v4151
          %4165 = vmatpush.bf16.msra.mxu0 %v4150
          %4166 = vmatpush.bf16.msra.mxu0 %v4149
          %4167 = vmatpush.bf16.msra.mxu0 %v4148
          %4168 = vmatpush.bf16.msra.mxu0 %v4147
          %4169 = vmatpush.bf16.msra.mxu0 %v4146
          %4170 = vmatmul.bf16.gmra.mxu0 %v4095
          %v4171 = vpop.f32.mrf.mxu0
          %v4172 = vadd.f32 %v4113, %v4171
          %v4173 = vpop.f32.mrf.mxu0
          %4174 = vdwg.mxu0
          %v4175 = vadd.f32 %v3590, %v4172
          %v4176 = vsel %vm3591, %v4175, 0.0
          %4177 = vadd.xlane.f32.xlu0 %v4176
          %v4178 = vpop.xlane.xlu0 %4177
          %v4179 = vmul.f32 %v4178, %v3601
          %v4180 = vsub.f32 %v4175, %v4179
          %v4181 = vmul.f32 %v4180, %v4180
          %v4182 = vsel %vm3591, %v4181, 0.0
          %4183 = vadd.xlane.f32.xlu0 %v4182
          %v4184 = vpop.xlane.xlu0 %4183
          %v4185 = vmul.f32 %v4184, %v3601
          %v4186 = vadd.f32 %v4185, 1e-06
          %v4187 = vrsqrt.pop %v4186
          %v4188 = vmul.f32 %v4187, %v4186
          %v4189 = vmul.f32 %v4188, %v4187
          %v4190 = vmul.f32 0.5, %v4189
          %v4191 = vsub.f32 1.5, %v4190
          %v4192 = vmul.f32 %v4187, %v4191
          %vm4193 = vweird.f32 %v4186
          %vm4194 = vweird.f32 %v4187
          %vm4195 = vmor %vm4193, %vm4194
          %v4196 = vsel %vm4195, %v4187, %v4192
          %v4197 = vmul.f32 %v4180, %v4196
          %v4198 = vperm.slane %v3586, 4
          %v4199 = vmul.f32 %v4197, %v4198
          %v4200 = vperm.slane %v3586, 5
          %v4201 = vadd.f32 %v4199, %v4200
          %v4202 = vpack.c.bf16 %v4201, %v4201
          %s4203 = scalar_lea.vmem %s466, 512
          %v4204 = vld [vmem:[%s4203] sm:$0xff]
          %v4205 = vld [vmem:[%s4203 + $0x8] sm:$0xff]
          %v4206 = vld [vmem:[%s4203 + $0x10] sm:$0xff]
          %v4207 = vld [vmem:[%s4203 + $0x18] sm:$0xff]
          %v4208 = vld [vmem:[%s4203 + $0x20] sm:$0xff]
          %v4209 = vld [vmem:[%s4203 + $0x28] sm:$0xff]
          %v4210 = vld [vmem:[%s4203 + $0x30] sm:$0xff]
          %v4211 = vld [vmem:[%s4203 + $0x38] sm:$0xff]
          %v4212 = vld [vmem:[%s4203 + $0x40] sm:$0xff]
          %v4213 = vld [vmem:[%s4203 + $0x48] sm:$0xff]
          %v4214 = vld [vmem:[%s4203 + $0x50] sm:$0xff]
          %v4215 = vld [vmem:[%s4203 + $0x58] sm:$0xff]
          %v4216 = vld [vmem:[%s4203 + $0x60] sm:$0xff]
          %v4217 = vld [vmem:[%s4203 + $0x68] sm:$0xff]
          %v4218 = vld [vmem:[%s4203 + $0x70] sm:$0xff]
          %v4219 = vld [vmem:[%s4203 + $0x78] sm:$0xff]
          %v4220 = vld [vmem:[%s4203 + $0x80] sm:$0xff]
          %v4221 = vld [vmem:[%s4203 + $0x88] sm:$0xff]
          %v4222 = vld [vmem:[%s4203 + $0x90] sm:$0xff]
          %v4223 = vld [vmem:[%s4203 + $0x98] sm:$0xff]
          %v4224 = vld [vmem:[%s4203 + $0xa0] sm:$0xff]
          %v4225 = vld [vmem:[%s4203 + $0xa8] sm:$0xff]
          %v4226 = vld [vmem:[%s4203 + $0xb0] sm:$0xff]
          %v4227 = vld [vmem:[%s4203 + $0xb8] sm:$0xff]
          %v4228 = vld [vmem:[%s4203 + $0xc0] sm:$0xff]
          %v4229 = vld [vmem:[%s4203 + $0xc8] sm:$0xff]
          %v4230 = vld [vmem:[%s4203 + $0xd0] sm:$0xff]
          %v4231 = vld [vmem:[%s4203 + $0xd8] sm:$0xff]
          %v4232 = vld [vmem:[%s4203 + $0xe0] sm:$0xff]
          %v4233 = vld [vmem:[%s4203 + $0xe8] sm:$0xff]
          %v4234 = vld [vmem:[%s4203 + $0xf0] sm:$0xff]
          %v4235 = vld [vmem:[%s4203 + $0xf8] sm:$0xff]
          %v4236 = vperm.slane %v3586, 6
          %v4237 = vperm.slane %v3587, 6
          %v4238 = vperm.slane %v3588, 6
          %v4239 = vperm.slane %v3589, 6
          %v4272 = vunpack.c.l.b16 %v4204
          %v4273 = vunpack.c.h.b16 %v4204
          %v4274 = vunpack.c.l.b16 %v4205
          %v4275 = vunpack.c.h.b16 %v4205
          %v4276 = vunpack.c.l.b16 %v4206
          %v4277 = vunpack.c.h.b16 %v4206
          %v4278 = vunpack.c.l.b16 %v4207
          %v4279 = vunpack.c.h.b16 %v4207
          %v4280 = vunpack.c.l.b16 %v4208
          %v4281 = vunpack.c.h.b16 %v4208
          %v4282 = vunpack.c.l.b16 %v4209
          %v4283 = vunpack.c.h.b16 %v4209
          %v4284 = vunpack.c.l.b16 %v4210
          %v4285 = vunpack.c.h.b16 %v4210
          %v4286 = vunpack.c.l.b16 %v4211
          %v4287 = vunpack.c.h.b16 %v4211
          %v4288 = vunpack.c.l.b16 %v4212
          %v4289 = vunpack.c.h.b16 %v4212
          %v4290 = vunpack.c.l.b16 %v4213
          %v4291 = vunpack.c.h.b16 %v4213
          %v4292 = vunpack.c.l.b16 %v4214
          %v4293 = vunpack.c.h.b16 %v4214
          %v4294 = vunpack.c.l.b16 %v4215
          %v4295 = vunpack.c.h.b16 %v4215
          %v4296 = vunpack.c.l.b16 %v4216
          %v4297 = vunpack.c.h.b16 %v4216
          %v4298 = vunpack.c.l.b16 %v4217
          %v4299 = vunpack.c.h.b16 %v4217
          %v4300 = vunpack.c.l.b16 %v4218
          %v4301 = vunpack.c.h.b16 %v4218
          %v4302 = vunpack.c.l.b16 %v4219
          %v4303 = vunpack.c.h.b16 %v4219
          %v4304 = vunpack.c.l.b16 %v4220
          %v4305 = vunpack.c.h.b16 %v4220
          %v4306 = vunpack.c.l.b16 %v4221
          %v4307 = vunpack.c.h.b16 %v4221
          %v4308 = vunpack.c.l.b16 %v4222
          %v4309 = vunpack.c.h.b16 %v4222
          %v4310 = vunpack.c.l.b16 %v4223
          %v4311 = vunpack.c.h.b16 %v4223
          %v4312 = vunpack.c.l.b16 %v4224
          %v4313 = vunpack.c.h.b16 %v4224
          %v4314 = vunpack.c.l.b16 %v4225
          %v4315 = vunpack.c.h.b16 %v4225
          %v4316 = vunpack.c.l.b16 %v4226
          %v4317 = vunpack.c.h.b16 %v4226
          %v4318 = vunpack.c.l.b16 %v4227
          %v4319 = vunpack.c.h.b16 %v4227
          %v4320 = vunpack.c.l.b16 %v4228
          %v4321 = vunpack.c.h.b16 %v4228
          %v4322 = vunpack.c.l.b16 %v4229
          %v4323 = vunpack.c.h.b16 %v4229
          %v4324 = vunpack.c.l.b16 %v4230
          %v4325 = vunpack.c.h.b16 %v4230
          %v4326 = vunpack.c.l.b16 %v4231
          %v4327 = vunpack.c.h.b16 %v4231
          %v4328 = vunpack.c.l.b16 %v4232
          %v4329 = vunpack.c.h.b16 %v4232
          %v4330 = vunpack.c.l.b16 %v4233
          %v4331 = vunpack.c.h.b16 %v4233
          %v4332 = vunpack.c.l.b16 %v4234
          %v4333 = vunpack.c.h.b16 %v4234
          %v4334 = vunpack.c.l.b16 %v4235
          %v4335 = vunpack.c.h.b16 %v4235
          %v4336 = vpack.c.b16 %v4276, %v4272
          %v4337 = vpack.c.b16 %v4277, %v4273
          %v4338 = vpack.c.b16 %v4278, %v4274
          %v4339 = vpack.c.b16 %v4279, %v4275
          %v4340 = vpack.c.b16 %v4284, %v4280
          %v4341 = vpack.c.b16 %v4285, %v4281
          %v4342 = vpack.c.b16 %v4286, %v4282
          %v4343 = vpack.c.b16 %v4287, %v4283
          %v4344 = vpack.c.b16 %v4292, %v4288
          %v4345 = vpack.c.b16 %v4293, %v4289
          %v4346 = vpack.c.b16 %v4294, %v4290
          %v4347 = vpack.c.b16 %v4295, %v4291
          %v4348 = vpack.c.b16 %v4300, %v4296
          %v4349 = vpack.c.b16 %v4301, %v4297
          %v4350 = vpack.c.b16 %v4302, %v4298
          %v4351 = vpack.c.b16 %v4303, %v4299
          %v4352 = vpack.c.b16 %v4308, %v4304
          %v4353 = vpack.c.b16 %v4309, %v4305
          %v4354 = vpack.c.b16 %v4310, %v4306
          %v4355 = vpack.c.b16 %v4311, %v4307
          %v4356 = vpack.c.b16 %v4316, %v4312
          %v4357 = vpack.c.b16 %v4317, %v4313
          %v4358 = vpack.c.b16 %v4318, %v4314
          %v4359 = vpack.c.b16 %v4319, %v4315
          %v4360 = vpack.c.b16 %v4324, %v4320
          %v4361 = vpack.c.b16 %v4325, %v4321
          %v4362 = vpack.c.b16 %v4326, %v4322
          %v4363 = vpack.c.b16 %v4327, %v4323
          %v4364 = vpack.c.b16 %v4332, %v4328
          %v4365 = vpack.c.b16 %v4333, %v4329
          %v4366 = vpack.c.b16 %v4334, %v4330
          %v4367 = vpack.c.b16 %v4335, %v4331
          %4400 = vmatpush.bf16.msra.mxu0 %v4364
          %4401 = vmatpush.bf16.msra.mxu0 %v4360
          %4402 = vmatpush.bf16.msra.mxu0 %v4356
          %4403 = vmatpush.bf16.msra.mxu0 %v4352
          %4404 = vmatpush.bf16.msra.mxu0 %v4348
          %4405 = vmatpush.bf16.msra.mxu0 %v4344
          %4406 = vmatpush.bf16.msra.mxu0 %v4340
          %4407 = vmatpush.bf16.msra.mxu0 %v4336
          %4408 = vmatmul.bf16.gmra.mxu0 %v4202
          %v4409 = vpop.f32.mrf.mxu0
          %v4410 = vadd.f32 %v4236, %v4409
          %v4411 = vpop.f32.mrf.mxu0
          %4412 = vdwg.mxu0
          %4413 = vmatpush.bf16.msra.mxu0 %v4365
          %4414 = vmatpush.bf16.msra.mxu0 %v4361
          %4415 = vmatpush.bf16.msra.mxu0 %v4357
          %4416 = vmatpush.bf16.msra.mxu0 %v4353
          %4417 = vmatpush.bf16.msra.mxu0 %v4349
          %4418 = vmatpush.bf16.msra.mxu0 %v4345
          %4419 = vmatpush.bf16.msra.mxu0 %v4341
          %4420 = vmatpush.bf16.msra.mxu0 %v4337
          %4421 = vmatmul.bf16.gmra.mxu0 %v4202
          %v4422 = vpop.f32.mrf.mxu0
          %v4423 = vadd.f32 %v4237, %v4422
          %v4424 = vpop.f32.mrf.mxu0
          %4425 = vdwg.mxu0
          %4426 = vmatpush.bf16.msra.mxu0 %v4366
          %4427 = vmatpush.bf16.msra.mxu0 %v4362
          %4428 = vmatpush.bf16.msra.mxu0 %v4358
          %4429 = vmatpush.bf16.msra.mxu0 %v4354
          %4430 = vmatpush.bf16.msra.mxu0 %v4350
          %4431 = vmatpush.bf16.msra.mxu0 %v4346
          %4432 = vmatpush.bf16.msra.mxu0 %v4342
          %4433 = vmatpush.bf16.msra.mxu0 %v4338
          %4434 = vmatmul.bf16.gmra.mxu0 %v4202
          %v4435 = vpop.f32.mrf.mxu0
          %v4436 = vadd.f32 %v4238, %v4435
          %v4437 = vpop.f32.mrf.mxu0
          %4438 = vdwg.mxu0
          %4439 = vmatpush.bf16.msra.mxu0 %v4367
          %4440 = vmatpush.bf16.msra.mxu0 %v4363
          %4441 = vmatpush.bf16.msra.mxu0 %v4359
          %4442 = vmatpush.bf16.msra.mxu0 %v4355
          %4443 = vmatpush.bf16.msra.mxu0 %v4351
          %4444 = vmatpush.bf16.msra.mxu0 %v4347
          %4445 = vmatpush.bf16.msra.mxu0 %v4343
          %4446 = vmatpush.bf16.msra.mxu0 %v4339
          %4447 = vmatmul.bf16.gmra.mxu0 %v4202
          %v4448 = vpop.f32.mrf.mxu0
          %v4449 = vadd.f32 %v4239, %v4448
          %v4450 = vpop.f32.mrf.mxu0
          %4451 = vdwg.mxu0
          %v4452 = vmul.f32 %v4410, %v4410
          %v4453 = vmul.f32 %v4423, %v4423
          %v4454 = vmul.f32 %v4436, %v4436
          %v4455 = vmul.f32 %v4449, %v4449
          %v4456 = vmul.f32 %v4410, %v4452
          %v4457 = vmul.f32 %v4423, %v4453
          %v4458 = vmul.f32 %v4436, %v4454
          %v4459 = vmul.f32 %v4449, %v4455
          %v4460 = vmul.f32 %v4456, 0.044715
          %v4461 = vmul.f32 %v4457, 0.044715
          %v4462 = vmul.f32 %v4458, 0.044715
          %v4463 = vmul.f32 %v4459, 0.044715
          %v4464 = vadd.f32 %v4410, %v4460
          %v4465 = vadd.f32 %v4423, %v4461
          %v4466 = vadd.f32 %v4436, %v4462
          %v4467 = vadd.f32 %v4449, %v4463
          %v4468 = vmul.f32 %v4464, 0.7978846
          %v4469 = vmul.f32 %v4465, 0.7978846
          %v4470 = vmul.f32 %v4466, 0.7978846
          %v4471 = vmul.f32 %v4467, 0.7978846
          %v4472 = vtanh.pop %v4468
          %v4473 = vtanh.pop %v4469
          %v4474 = vtanh.pop %v4470
          %v4475 = vtanh.pop %v4471
          %v4476 = vadd.f32 %v4472, 1.0
          %v4477 = vadd.f32 %v4473, 1.0
          %v4478 = vadd.f32 %v4474, 1.0
          %v4479 = vadd.f32 %v4475, 1.0
          %v4480 = vmul.f32 %v4476, 0.5
          %v4481 = vmul.f32 %v4477, 0.5
          %v4482 = vmul.f32 %v4478, 0.5
          %v4483 = vmul.f32 %v4479, 0.5
          %v4484 = vmul.f32 %v4410, %v4480
          %v4485 = vmul.f32 %v4423, %v4481
          %v4486 = vmul.f32 %v4436, %v4482
          %v4487 = vmul.f32 %v4449, %v4483
          %v4488 = vpack.c.bf16 %v4484, %v4484
          %v4489 = vpack.c.bf16 %v4485, %v4485
          %v4490 = vpack.c.bf16 %v4486, %v4486
          %v4491 = vpack.c.bf16 %v4487, %v4487
          %s4492 = scalar_lea.vmem %s408, 512 [#allocation8]
          %v4493 = vld [vmem:[%s4492] sm:$0xf]
          %v4494 = vld [vmem:[%s4492 + $0x4] sm:$0xf]
          %v4495 = vld [vmem:[%s4492 + $0x8] sm:$0xf]
          %v4496 = vld [vmem:[%s4492 + $0xc] sm:$0xf]
          %v4497 = vld [vmem:[%s4492 + $0x10] sm:$0xf]
          %v4498 = vld [vmem:[%s4492 + $0x14] sm:$0xf]
          %v4499 = vld [vmem:[%s4492 + $0x18] sm:$0xf]
          %v4500 = vld [vmem:[%s4492 + $0x1c] sm:$0xf]
          %v4501 = vld [vmem:[%s4492 + $0x20] sm:$0xf]
          %v4502 = vld [vmem:[%s4492 + $0x24] sm:$0xf]
          %v4503 = vld [vmem:[%s4492 + $0x28] sm:$0xf]
          %v4504 = vld [vmem:[%s4492 + $0x2c] sm:$0xf]
          %v4505 = vld [vmem:[%s4492 + $0x30] sm:$0xf]
          %v4506 = vld [vmem:[%s4492 + $0x34] sm:$0xf]
          %v4507 = vld [vmem:[%s4492 + $0x38] sm:$0xf]
          %v4508 = vld [vmem:[%s4492 + $0x3c] sm:$0xf]
          %v4509 = vld [vmem:[%s4492 + $0x40] sm:$0xf]
          %v4510 = vld [vmem:[%s4492 + $0x44] sm:$0xf]
          %v4511 = vld [vmem:[%s4492 + $0x48] sm:$0xf]
          %v4512 = vld [vmem:[%s4492 + $0x4c] sm:$0xf]
          %v4513 = vld [vmem:[%s4492 + $0x50] sm:$0xf]
          %v4514 = vld [vmem:[%s4492 + $0x54] sm:$0xf]
          %v4515 = vld [vmem:[%s4492 + $0x58] sm:$0xf]
          %v4516 = vld [vmem:[%s4492 + $0x5c] sm:$0xf]
          %v4517 = vld [vmem:[%s4492 + $0x60] sm:$0xf]
          %v4518 = vld [vmem:[%s4492 + $0x64] sm:$0xf]
          %v4519 = vld [vmem:[%s4492 + $0x68] sm:$0xf]
          %v4520 = vld [vmem:[%s4492 + $0x6c] sm:$0xf]
          %v4521 = vld [vmem:[%s4492 + $0x70] sm:$0xf]
          %v4522 = vld [vmem:[%s4492 + $0x74] sm:$0xf]
          %v4523 = vld [vmem:[%s4492 + $0x78] sm:$0xf]
          %v4524 = vld [vmem:[%s4492 + $0x7c] sm:$0xf]
          %v4525 = vld [vmem:[%s4492 + $0x80] sm:$0xf]
          %v4526 = vld [vmem:[%s4492 + $0x84] sm:$0xf]
          %v4527 = vld [vmem:[%s4492 + $0x88] sm:$0xf]
          %v4528 = vld [vmem:[%s4492 + $0x8c] sm:$0xf]
          %v4529 = vld [vmem:[%s4492 + $0x90] sm:$0xf]
          %v4530 = vld [vmem:[%s4492 + $0x94] sm:$0xf]
          %v4531 = vld [vmem:[%s4492 + $0x98] sm:$0xf]
          %v4532 = vld [vmem:[%s4492 + $0x9c] sm:$0xf]
          %v4533 = vld [vmem:[%s4492 + $0xa0] sm:$0xf]
          %v4534 = vld [vmem:[%s4492 + $0xa4] sm:$0xf]
          %v4535 = vld [vmem:[%s4492 + $0xa8] sm:$0xf]
          %v4536 = vld [vmem:[%s4492 + $0xac] sm:$0xf]
          %v4537 = vld [vmem:[%s4492 + $0xb0] sm:$0xf]
          %v4538 = vld [vmem:[%s4492 + $0xb4] sm:$0xf]
          %v4539 = vld [vmem:[%s4492 + $0xb8] sm:$0xf]
          %v4540 = vld [vmem:[%s4492 + $0xbc] sm:$0xf]
          %v4541 = vld [vmem:[%s4492 + $0xc0] sm:$0xf]
          %v4542 = vld [vmem:[%s4492 + $0xc4] sm:$0xf]
          %v4543 = vld [vmem:[%s4492 + $0xc8] sm:$0xf]
          %v4544 = vld [vmem:[%s4492 + $0xcc] sm:$0xf]
          %v4545 = vld [vmem:[%s4492 + $0xd0] sm:$0xf]
          %v4546 = vld [vmem:[%s4492 + $0xd4] sm:$0xf]
          %v4547 = vld [vmem:[%s4492 + $0xd8] sm:$0xf]
          %v4548 = vld [vmem:[%s4492 + $0xdc] sm:$0xf]
          %v4549 = vld [vmem:[%s4492 + $0xe0] sm:$0xf]
          %v4550 = vld [vmem:[%s4492 + $0xe4] sm:$0xf]
          %v4551 = vld [vmem:[%s4492 + $0xe8] sm:$0xf]
          %v4552 = vld [vmem:[%s4492 + $0xec] sm:$0xf]
          %v4553 = vld [vmem:[%s4492 + $0xf0] sm:$0xf]
          %v4554 = vld [vmem:[%s4492 + $0xf4] sm:$0xf]
          %v4555 = vld [vmem:[%s4492 + $0xf8] sm:$0xf]
          %v4556 = vld [vmem:[%s4492 + $0xfc] sm:$0xf]
          %v4557 = vperm.slane %v3586, 7
          %v4622 = vunpack.c.l.b16 %v4493
          %v4623 = vunpack.c.l.b16 %v4494
          %v4624 = vunpack.c.l.b16 %v4495
          %v4625 = vunpack.c.l.b16 %v4496
          %v4626 = vunpack.c.l.b16 %v4497
          %v4627 = vunpack.c.l.b16 %v4498
          %v4628 = vunpack.c.l.b16 %v4499
          %v4629 = vunpack.c.l.b16 %v4500
          %v4630 = vunpack.c.l.b16 %v4501
          %v4631 = vunpack.c.l.b16 %v4502
          %v4632 = vunpack.c.l.b16 %v4503
          %v4633 = vunpack.c.l.b16 %v4504
          %v4634 = vunpack.c.l.b16 %v4505
          %v4635 = vunpack.c.l.b16 %v4506
          %v4636 = vunpack.c.l.b16 %v4507
          %v4637 = vunpack.c.l.b16 %v4508
          %v4638 = vunpack.c.l.b16 %v4509
          %v4639 = vunpack.c.l.b16 %v4510
          %v4640 = vunpack.c.l.b16 %v4511
          %v4641 = vunpack.c.l.b16 %v4512
          %v4642 = vunpack.c.l.b16 %v4513
          %v4643 = vunpack.c.l.b16 %v4514
          %v4644 = vunpack.c.l.b16 %v4515
          %v4645 = vunpack.c.l.b16 %v4516
          %v4646 = vunpack.c.l.b16 %v4517
          %v4647 = vunpack.c.l.b16 %v4518
          %v4648 = vunpack.c.l.b16 %v4519
          %v4649 = vunpack.c.l.b16 %v4520
          %v4650 = vunpack.c.l.b16 %v4521
          %v4651 = vunpack.c.l.b16 %v4522
          %v4652 = vunpack.c.l.b16 %v4523
          %v4653 = vunpack.c.l.b16 %v4524
          %v4654 = vunpack.c.l.b16 %v4525
          %v4655 = vunpack.c.l.b16 %v4526
          %v4656 = vunpack.c.l.b16 %v4527
          %v4657 = vunpack.c.l.b16 %v4528
          %v4658 = vunpack.c.l.b16 %v4529
          %v4659 = vunpack.c.l.b16 %v4530
          %v4660 = vunpack.c.l.b16 %v4531
          %v4661 = vunpack.c.l.b16 %v4532
          %v4662 = vunpack.c.l.b16 %v4533
          %v4663 = vunpack.c.l.b16 %v4534
          %v4664 = vunpack.c.l.b16 %v4535
          %v4665 = vunpack.c.l.b16 %v4536
          %v4666 = vunpack.c.l.b16 %v4537
          %v4667 = vunpack.c.l.b16 %v4538
          %v4668 = vunpack.c.l.b16 %v4539
          %v4669 = vunpack.c.l.b16 %v4540
          %v4670 = vunpack.c.l.b16 %v4541
          %v4671 = vunpack.c.l.b16 %v4542
          %v4672 = vunpack.c.l.b16 %v4543
          %v4673 = vunpack.c.l.b16 %v4544
          %v4674 = vunpack.c.l.b16 %v4545
          %v4675 = vunpack.c.l.b16 %v4546
          %v4676 = vunpack.c.l.b16 %v4547
          %v4677 = vunpack.c.l.b16 %v4548
          %v4678 = vunpack.c.l.b16 %v4549
          %v4679 = vunpack.c.l.b16 %v4550
          %v4680 = vunpack.c.l.b16 %v4551
          %v4681 = vunpack.c.l.b16 %v4552
          %v4682 = vunpack.c.l.b16 %v4553
          %v4683 = vunpack.c.l.b16 %v4554
          %v4684 = vunpack.c.l.b16 %v4555
          %v4685 = vunpack.c.l.b16 %v4556
          %v4686 = vpack.c.b16 %v4623, %v4622
          %v4687 = vpack.c.b16 %v4625, %v4624
          %v4688 = vpack.c.b16 %v4627, %v4626
          %v4689 = vpack.c.b16 %v4629, %v4628
          %v4690 = vpack.c.b16 %v4631, %v4630
          %v4691 = vpack.c.b16 %v4633, %v4632
          %v4692 = vpack.c.b16 %v4635, %v4634
          %v4693 = vpack.c.b16 %v4637, %v4636
          %v4694 = vpack.c.b16 %v4639, %v4638
          %v4695 = vpack.c.b16 %v4641, %v4640
          %v4696 = vpack.c.b16 %v4643, %v4642
          %v4697 = vpack.c.b16 %v4645, %v4644
          %v4698 = vpack.c.b16 %v4647, %v4646
          %v4699 = vpack.c.b16 %v4649, %v4648
          %v4700 = vpack.c.b16 %v4651, %v4650
          %v4701 = vpack.c.b16 %v4653, %v4652
          %v4702 = vpack.c.b16 %v4655, %v4654
          %v4703 = vpack.c.b16 %v4657, %v4656
          %v4704 = vpack.c.b16 %v4659, %v4658
          %v4705 = vpack.c.b16 %v4661, %v4660
          %v4706 = vpack.c.b16 %v4663, %v4662
          %v4707 = vpack.c.b16 %v4665, %v4664
          %v4708 = vpack.c.b16 %v4667, %v4666
          %v4709 = vpack.c.b16 %v4669, %v4668
          %v4710 = vpack.c.b16 %v4671, %v4670
          %v4711 = vpack.c.b16 %v4673, %v4672
          %v4712 = vpack.c.b16 %v4675, %v4674
          %v4713 = vpack.c.b16 %v4677, %v4676
          %v4714 = vpack.c.b16 %v4679, %v4678
          %v4715 = vpack.c.b16 %v4681, %v4680
          %v4716 = vpack.c.b16 %v4683, %v4682
          %v4717 = vpack.c.b16 %v4685, %v4684
          %4750 = vmatpush.bf16.msra.mxu0 %v4693
          %4751 = vmatpush.bf16.msra.mxu0 %v4692
          %4752 = vmatpush.bf16.msra.mxu0 %v4691
          %4753 = vmatpush.bf16.msra.mxu0 %v4690
          %4754 = vmatpush.bf16.msra.mxu0 %v4689
          %4755 = vmatpush.bf16.msra.mxu0 %v4688
          %4756 = vmatpush.bf16.msra.mxu0 %v4687
          %4757 = vmatpush.bf16.msra.mxu0 %v4686
          %4758 = vmatmul.bf16.gmra.mxu0 %v4488
          %v4759 = vpop.f32.mrf.mxu0
          %v4760 = vadd.f32 %v4557, %v4759
          %v4761 = vpop.f32.mrf.mxu0
          %4762 = vdwg.mxu0
          %4763 = vmatpush.bf16.msra.mxu0 %v4701
          %4764 = vmatpush.bf16.msra.mxu0 %v4700
          %4765 = vmatpush.bf16.msra.mxu0 %v4699
          %4766 = vmatpush.bf16.msra.mxu0 %v4698
          %4767 = vmatpush.bf16.msra.mxu0 %v4697
          %4768 = vmatpush.bf16.msra.mxu0 %v4696
          %4769 = vmatpush.bf16.msra.mxu0 %v4695
          %4770 = vmatpush.bf16.msra.mxu0 %v4694
          %4771 = vmatmul.bf16.gmra.mxu0 %v4489
          %v4772 = vpop.f32.mrf.mxu0
          %v4773 = vadd.f32 %v4760, %v4772
          %v4774 = vpop.f32.mrf.mxu0
          %4775 = vdwg.mxu0
          %4776 = vmatpush.bf16.msra.mxu0 %v4709
          %4777 = vmatpush.bf16.msra.mxu0 %v4708
          %4778 = vmatpush.bf16.msra.mxu0 %v4707
          %4779 = vmatpush.bf16.msra.mxu0 %v4706
          %4780 = vmatpush.bf16.msra.mxu0 %v4705
          %4781 = vmatpush.bf16.msra.mxu0 %v4704
          %4782 = vmatpush.bf16.msra.mxu0 %v4703
          %4783 = vmatpush.bf16.msra.mxu0 %v4702
          %4784 = vmatmul.bf16.gmra.mxu0 %v4490
          %v4785 = vpop.f32.mrf.mxu0
          %v4786 = vadd.f32 %v4773, %v4785
          %v4787 = vpop.f32.mrf.mxu0
          %4788 = vdwg.mxu0
          %4789 = vmatpush.bf16.msra.mxu0 %v4717
          %4790 = vmatpush.bf16.msra.mxu0 %v4716
          %4791 = vmatpush.bf16.msra.mxu0 %v4715
          %4792 = vmatpush.bf16.msra.mxu0 %v4714
          %4793 = vmatpush.bf16.msra.mxu0 %v4713
          %4794 = vmatpush.bf16.msra.mxu0 %v4712
          %4795 = vmatpush.bf16.msra.mxu0 %v4711
          %4796 = vmatpush.bf16.msra.mxu0 %v4710
          %4797 = vmatmul.bf16.gmra.mxu0 %v4491
          %v4798 = vpop.f32.mrf.mxu0
          %v4799 = vadd.f32 %v4786, %v4798
          %v4800 = vpop.f32.mrf.mxu0
          %4801 = vdwg.mxu0
          %v4802 = vadd.f32 %v4175, %v4799
          %4803 = vst [vmem:[#allocation2] sm:$0x1f] %v4802
        $region92: #{dinov2_mid_encoder_forward.2} parent=51 // pred_fallthru
          _
        %p4804 = scmp.eq.s32.totalorder %s3580, 31
        // Predicated region
        $region93: #{dinov2_mid_encoder_forward.2} parent=51 // pred_check
          %p4805 = pneg %p4804
        $region94: #{dinov2_mid_encoder_forward.2} parent=51 // pred_check_branch
          %4807 = sbr.rel (%p4805) target = $region96
        $region95: #{dinov2_mid_encoder_forward.2} parent=51 // pred_region
          %s4808 = scalar_lea.vmem %s378, 64 [#allocation3]
          %v4809 = vld [vmem:[%s4808] sm:$0xff]
          %v4810 = vld [vmem:[%s4808 + $0x10] sm:$0xff]
          %v4811 = vld [vmem:[#allocation2] sm:$0x1f]
          %vm4812 = vcmask 1044480
          %v4813 = vsel %vm4812, %v4811, 0.0
          %4814 = vadd.xlane.f32.xlu0 %v4813
          %v4815 = vpop.xlane.xlu0 %4814
          %v4816 = vrcp.pop 128.0
          %v4817 = vmul.f32 128.0, %v4816
          %v4818 = vsub.f32 1.0, %v4817
          %v4819 = vmul.f32 %v4816, %v4818
          %v4820 = vadd.f32 %v4816, %v4819
          %vm4821 = vweird.f32 %v4816
          %v4822 = vsel %vm4821, %v4816, %v4820
          %v4823 = vmul.f32 %v4815, %v4822
          %v4824 = vsub.f32 %v4811, %v4823
          %v4825 = vmul.f32 %v4824, %v4824
          %v4826 = vsel %vm4812, %v4825, 0.0
          %4827 = vadd.xlane.f32.xlu0 %v4826
          %v4828 = vpop.xlane.xlu0 %4827
          %v4829 = vmul.f32 %v4828, %v4822
          %v4830 = vadd.f32 %v4829, 1e-06
          %v4831 = vrsqrt.pop %v4830
          %v4832 = vmul.f32 %v4831, %v4830
          %v4833 = vmul.f32 %v4832, %v4831
          %v4834 = vmul.f32 0.5, %v4833
          %v4835 = vsub.f32 1.5, %v4834
          %v4836 = vmul.f32 %v4831, %v4835
          %vm4837 = vweird.f32 %v4830
          %vm4838 = vweird.f32 %v4831
          %vm4839 = vmor %vm4837, %vm4838
          %v4840 = vsel %vm4839, %v4831, %v4836
          %v4841 = vmul.f32 %v4824, %v4840
          %v4842 = vperm.slane %v4809, 0
          %v4843 = vmul.f32 %v4841, %v4842
          %v4844 = vperm.slane %v4809, 1
          %v4845 = vadd.f32 %v4843, %v4844
          %s4846 = scalar_lea.vmem %s388, 384 [#allocation5]
          %v4847 = vld [vmem:[%s4846 + $0x8] sm:$0xf]
          %v4848 = vld [vmem:[%s4846 + $0x14] sm:$0xf]
          %v4849 = vld [vmem:[%s4846 + $0x20] sm:$0xf]
          %v4850 = vld [vmem:[%s4846 + $0x2c] sm:$0xf]
          %v4851 = vld [vmem:[%s4846 + $0x38] sm:$0xf]
          %v4852 = vld [vmem:[%s4846 + $0x44] sm:$0xf]
          %v4853 = vld [vmem:[%s4846 + $0x50] sm:$0xf]
          %v4854 = vld [vmem:[%s4846 + $0x5c] sm:$0xf]
          %v4855 = vld [vmem:[%s4846 + $0x68] sm:$0xf]
          %v4856 = vld [vmem:[%s4846 + $0x74] sm:$0xf]
          %v4857 = vld [vmem:[%s4846 + $0x80] sm:$0xf]
          %v4858 = vld [vmem:[%s4846 + $0x8c] sm:$0xf]
          %v4859 = vld [vmem:[%s4846 + $0x98] sm:$0xf]
          %v4860 = vld [vmem:[%s4846 + $0xa4] sm:$0xf]
          %v4861 = vld [vmem:[%s4846 + $0xb0] sm:$0xf]
          %v4862 = vld [vmem:[%s4846 + $0xbc] sm:$0xf]
          %v4863 = vpack.c.bf16 %v4845, %v4845
          %v4864 = vperm.slane %v4810, 2
          %v4881 = vunpack.c.l.b16 %v4847
          %v4882 = vunpack.c.l.b16 %v4848
          %v4883 = vunpack.c.l.b16 %v4849
          %v4884 = vunpack.c.l.b16 %v4850
          %v4885 = vunpack.c.l.b16 %v4851
          %v4886 = vunpack.c.l.b16 %v4852
          %v4887 = vunpack.c.l.b16 %v4853
          %v4888 = vunpack.c.l.b16 %v4854
          %v4889 = vunpack.c.l.b16 %v4855
          %v4890 = vunpack.c.l.b16 %v4856
          %v4891 = vunpack.c.l.b16 %v4857
          %v4892 = vunpack.c.l.b16 %v4858
          %v4893 = vunpack.c.l.b16 %v4859
          %v4894 = vunpack.c.l.b16 %v4860
          %v4895 = vunpack.c.l.b16 %v4861
          %v4896 = vunpack.c.l.b16 %v4862
          %v4897 = vpack.c.b16 %v4882, %v4881
          %v4898 = vpack.c.b16 %v4884, %v4883
          %v4899 = vpack.c.b16 %v4886, %v4885
          %v4900 = vpack.c.b16 %v4888, %v4887
          %v4901 = vpack.c.b16 %v4890, %v4889
          %v4902 = vpack.c.b16 %v4892, %v4891
          %v4903 = vpack.c.b16 %v4894, %v4893
          %v4904 = vpack.c.b16 %v4896, %v4895
          %4913 = vmatpush.bf16.msra.mxu0 %v4904
          %4914 = vmatpush.bf16.msra.mxu0 %v4903
          %4915 = vmatpush.bf16.msra.mxu0 %v4902
          %4916 = vmatpush.bf16.msra.mxu0 %v4901
          %4917 = vmatpush.bf16.msra.mxu0 %v4900
          %4918 = vmatpush.bf16.msra.mxu0 %v4899
          %4919 = vmatpush.bf16.msra.mxu0 %v4898
          %4920 = vmatpush.bf16.msra.mxu0 %v4897
          %4921 = vmatmul.bf16.gmra.mxu0 %v4863
          %v4922 = vpop.f32.mrf.mxu0
          %v4923 = vadd.f32 %v4864, %v4922
          %v4924 = vpop.f32.mrf.mxu0
          %4925 = vdwg.mxu0
          %v4926 = vmul.f32 %v4923, %v4923
          %v4927 = vsel %vm4812, %v4926, 0.0
          %4928 = vadd.xlane.f32.xlu0 %v4927
          %v4929 = vpop.xlane.xlu0 %4928
          %v4930 = vmax.f32 %v4929, 1e-24
          %v4931 = vrsqrt.pop %v4930
          %v4932 = vmul.f32 %v4931, %v4930
          %v4933 = vmul.f32 %v4932, %v4931
          %v4934 = vmul.f32 0.5, %v4933
          %v4935 = vsub.f32 1.5, %v4934
          %v4936 = vmul.f32 %v4931, %v4935
          %vm4937 = vweird.f32 %v4930
          %vm4938 = vweird.f32 %v4931
          %vm4939 = vmor %vm4937, %vm4938
          %v4940 = vsel %vm4939, %v4931, %v4936
          %v4941 = vmul.f32 %v4923, %v4940
          %4942 = vst [vmem:[%s8 - $0x1] sm:$0x1e] %v4941
        $region96: #{dinov2_mid_encoder_forward.2} parent=51 // pred_fallthru
          _
        %s4943 = sadd.s32 %s861, 3
        %p4944 = scmp.lt.s32.totalorder %s4943, 31
        // Predicated region
        $region97: #{dinov2_mid_encoder_forward.2} parent=51 // pred_check
          %p4945 = pneg %p4944
        $region98: #{dinov2_mid_encoder_forward.2} parent=51 // pred_check_branch
          %4947 = sbr.rel (%p4945) target = $region100
        $region99: #{dinov2_mid_encoder_forward.2} parent=51 // pred_region
          %s4948 = scalar_lea.vmem %s378, 96 [#allocation3]
          %v4949 = vld [vmem:[%s4948] sm:$0xff]
          %v4950 = vld [vmem:[%s4948 + $0x8] sm:$0xff]
          %v4951 = vld [vmem:[%s4948 + $0x10] sm:$0xff]
          %v4952 = vld [vmem:[%s4948 + $0x18] sm:$0xff]
          %v4953 = vld [vmem:[#allocation2] sm:$0x1f]
          %vm4954 = vcmask 1044480
          %v4955 = vsel %vm4954, %v4953, 0.0
          %4956 = vadd.xlane.f32.xlu0 %v4955
          %v4957 = vpop.xlane.xlu0 %4956
          %v4958 = vrcp.pop 128.0
          %v4959 = vmul.f32 128.0, %v4958
          %v4960 = vsub.f32 1.0, %v4959
          %v4961 = vmul.f32 %v4958, %v4960
          %v4962 = vadd.f32 %v4958, %v4961
          %vm4963 = vweird.f32 %v4958
          %v4964 = vsel %vm4963, %v4958, %v4962
          %v4965 = vmul.f32 %v4957, %v4964
          %v4966 = vsub.f32 %v4953, %v4965
          %v4967 = vmul.f32 %v4966, %v4966
          %v4968 = vsel %vm4954, %v4967, 0.0
          %4969 = vadd.xlane.f32.xlu0 %v4968
          %v4970 = vpop.xlane.xlu0 %4969
          %v4971 = vmul.f32 %v4970, %v4964
          %v4972 = vadd.f32 %v4971, 1e-06
          %v4973 = vrsqrt.pop %v4972
          %v4974 = vmul.f32 %v4973, %v4972
          %v4975 = vmul.f32 %v4974, %v4973
          %v4976 = vmul.f32 0.5, %v4975
          %v4977 = vsub.f32 1.5, %v4976
          %v4978 = vmul.f32 %v4973, %v4977
          %vm4979 = vweird.f32 %v4972
          %vm4980 = vweird.f32 %v4973
          %vm4981 = vmor %vm4979, %vm4980
          %v4982 = vsel %vm4981, %v4973, %v4978
          %v4983 = vmul.f32 %v4966, %v4982
          %v4984 = vperm.slane %v4949, 0
          %v4985 = vmul.f32 %v4983, %v4984
          %v4986 = vperm.slane %v4949, 1
          %v4987 = vadd.f32 %v4985, %v4986
          %v4988 = vpack.c.bf16 %v4987, %v4987
          %s4989 = scalar_lea.vmem %s388, 576 [#allocation5]
          %v4990 = vld [vmem:[%s4989] sm:$0xff]
          %v4991 = vld [vmem:[%s4989 + $0x8] sm:$0xf]
          %v4992 = vld [vmem:[%s4989 + $0xc] sm:$0xff]
          %v4993 = vld [vmem:[%s4989 + $0x14] sm:$0xf]
          %v4994 = vld [vmem:[%s4989 + $0x18] sm:$0xff]
          %v4995 = vld [vmem:[%s4989 + $0x20] sm:$0xf]
          %v4996 = vld [vmem:[%s4989 + $0x24] sm:$0xff]
          %v4997 = vld [vmem:[%s4989 + $0x2c] sm:$0xf]
          %v4998 = vld [vmem:[%s4989 + $0x30] sm:$0xff]
          %v4999 = vld [vmem:[%s4989 + $0x38] sm:$0xf]
          %v5000 = vld [vmem:[%s4989 + $0x3c] sm:$0xff]
          %v5001 = vld [vmem:[%s4989 + $0x44] sm:$0xf]
          %v5002 = vld [vmem:[%s4989 + $0x48] sm:$0xff]
          %v5003 = vld [vmem:[%s4989 + $0x50] sm:$0xf]
          %v5004 = vld [vmem:[%s4989 + $0x54] sm:$0xff]
          %v5005 = vld [vmem:[%s4989 + $0x5c] sm:$0xf]
          %v5006 = vld [vmem:[%s4989 + $0x60] sm:$0xff]
          %v5007 = vld [vmem:[%s4989 + $0x68] sm:$0xf]
          %v5008 = vld [vmem:[%s4989 + $0x6c] sm:$0xff]
          %v5009 = vld [vmem:[%s4989 + $0x74] sm:$0xf]
          %v5010 = vld [vmem:[%s4989 + $0x78] sm:$0xff]
          %v5011 = vld [vmem:[%s4989 + $0x80] sm:$0xf]
          %v5012 = vld [vmem:[%s4989 + $0x84] sm:$0xff]
          %v5013 = vld [vmem:[%s4989 + $0x8c] sm:$0xf]
          %v5014 = vld [vmem:[%s4989 + $0x90] sm:$0xff]
          %v5015 = vld [vmem:[%s4989 + $0x98] sm:$0xf]
          %v5016 = vld [vmem:[%s4989 + $0x9c] sm:$0xff]
          %v5017 = vld [vmem:[%s4989 + $0xa4] sm:$0xf]
          %v5018 = vld [vmem:[%s4989 + $0xa8] sm:$0xff]
          %v5019 = vld [vmem:[%s4989 + $0xb0] sm:$0xf]
          %v5020 = vld [vmem:[%s4989 + $0xb4] sm:$0xff]
          %v5021 = vld [vmem:[%s4989 + $0xbc] sm:$0xf]
          %v5022 = vperm.slane %v4949, 2
          %v5023 = vperm.slane %v4950, 2
          %v5024 = vperm.slane %v4951, 2
          %v5057 = vunpack.c.l.b16 %v4990
          %v5058 = vunpack.c.h.b16 %v4990
          %v5059 = vunpack.c.l.b16 %v4991
          %v5060 = vunpack.c.l.b16 %v4992
          %v5061 = vunpack.c.h.b16 %v4992
          %v5062 = vunpack.c.l.b16 %v4993
          %v5063 = vunpack.c.l.b16 %v4994
          %v5064 = vunpack.c.h.b16 %v4994
          %v5065 = vunpack.c.l.b16 %v4995
          %v5066 = vunpack.c.l.b16 %v4996
          %v5067 = vunpack.c.h.b16 %v4996
          %v5068 = vunpack.c.l.b16 %v4997
          %v5069 = vunpack.c.l.b16 %v4998
          %v5070 = vunpack.c.h.b16 %v4998
          %v5071 = vunpack.c.l.b16 %v4999
          %v5072 = vunpack.c.l.b16 %v5000
          %v5073 = vunpack.c.h.b16 %v5000
          %v5074 = vunpack.c.l.b16 %v5001
          %v5075 = vunpack.c.l.b16 %v5002
          %v5076 = vunpack.c.h.b16 %v5002
          %v5077 = vunpack.c.l.b16 %v5003
          %v5078 = vunpack.c.l.b16 %v5004
          %v5079 = vunpack.c.h.b16 %v5004
          %v5080 = vunpack.c.l.b16 %v5005
          %v5081 = vunpack.c.l.b16 %v5006
          %v5082 = vunpack.c.h.b16 %v5006
          %v5083 = vunpack.c.l.b16 %v5007
          %v5084 = vunpack.c.l.b16 %v5008
          %v5085 = vunpack.c.h.b16 %v5008
          %v5086 = vunpack.c.l.b16 %v5009
          %v5087 = vunpack.c.l.b16 %v5010
          %v5088 = vunpack.c.h.b16 %v5010
          %v5089 = vunpack.c.l.b16 %v5011
          %v5090 = vunpack.c.l.b16 %v5012
          %v5091 = vunpack.c.h.b16 %v5012
          %v5092 = vunpack.c.l.b16 %v5013
          %v5093 = vunpack.c.l.b16 %v5014
          %v5094 = vunpack.c.h.b16 %v5014
          %v5095 = vunpack.c.l.b16 %v5015
          %v5096 = vunpack.c.l.b16 %v5016
          %v5097 = vunpack.c.h.b16 %v5016
          %v5098 = vunpack.c.l.b16 %v5017
          %v5099 = vunpack.c.l.b16 %v5018
          %v5100 = vunpack.c.h.b16 %v5018
          %v5101 = vunpack.c.l.b16 %v5019
          %v5102 = vunpack.c.l.b16 %v5020
          %v5103 = vunpack.c.h.b16 %v5020
          %v5104 = vunpack.c.l.b16 %v5021
          %v5105 = vpack.c.b16 %v5060, %v5057
          %v5106 = vpack.c.b16 %v5061, %v5058
          %v5107 = vpack.c.b16 %v5062, %v5059
          %v5108 = vpack.c.b16 %v5066, %v5063
          %v5109 = vpack.c.b16 %v5067, %v5064
          %v5110 = vpack.c.b16 %v5068, %v5065
          %v5111 = vpack.c.b16 %v5072, %v5069
          %v5112 = vpack.c.b16 %v5073, %v5070
          %v5113 = vpack.c.b16 %v5074, %v5071
          %v5114 = vpack.c.b16 %v5078, %v5075
          %v5115 = vpack.c.b16 %v5079, %v5076
          %v5116 = vpack.c.b16 %v5080, %v5077
          %v5117 = vpack.c.b16 %v5084, %v5081
          %v5118 = vpack.c.b16 %v5085, %v5082
          %v5119 = vpack.c.b16 %v5086, %v5083
          %v5120 = vpack.c.b16 %v5090, %v5087
          %v5121 = vpack.c.b16 %v5091, %v5088
          %v5122 = vpack.c.b16 %v5092, %v5089
          %v5123 = vpack.c.b16 %v5096, %v5093
          %v5124 = vpack.c.b16 %v5097, %v5094
          %v5125 = vpack.c.b16 %v5098, %v5095
          %v5126 = vpack.c.b16 %v5102, %v5099
          %v5127 = vpack.c.b16 %v5103, %v5100
          %v5128 = vpack.c.b16 %v5104, %v5101
          %5153 = vmatpush.bf16.msra.mxu0 %v5126
          %5154 = vmatpush.bf16.msra.mxu0 %v5123
          %5155 = vmatpush.bf16.msra.mxu0 %v5120
          %5156 = vmatpush.bf16.msra.mxu0 %v5117
          %5157 = vmatpush.bf16.msra.mxu0 %v5114
          %5158 = vmatpush.bf16.msra.mxu0 %v5111
          %5159 = vmatpush.bf16.msra.mxu0 %v5108
          %5160 = vmatpush.bf16.msra.mxu0 %v5105
          %5161 = vmatmul.bf16.gmra.mxu0 %v4988
          %v5162 = vpop.f32.mrf.mxu0
          %v5163 = vadd.f32 %v5022, %v5162
          %v5164 = vpop.f32.mrf.mxu0
          %5165 = vdwg.mxu0
          %5166 = vmatpush.bf16.msra.mxu0 %v5127
          %5167 = vmatpush.bf16.msra.mxu0 %v5124
          %5168 = vmatpush.bf16.msra.mxu0 %v5121
          %5169 = vmatpush.bf16.msra.mxu0 %v5118
          %5170 = vmatpush.bf16.msra.mxu0 %v5115
          %5171 = vmatpush.bf16.msra.mxu0 %v5112
          %5172 = vmatpush.bf16.msra.mxu0 %v5109
          %5173 = vmatpush.bf16.msra.mxu0 %v5106
          %5174 = vmatmul.bf16.gmra.mxu0 %v4988
          %v5175 = vpop.f32.mrf.mxu0
          %v5176 = vadd.f32 %v5023, %v5175
          %v5177 = vpop.f32.mrf.mxu0
          %5178 = vdwg.mxu0
          %5179 = vmatpush.bf16.msra.mxu0 %v5128
          %5180 = vmatpush.bf16.msra.mxu0 %v5125
          %5181 = vmatpush.bf16.msra.mxu0 %v5122
          %5182 = vmatpush.bf16.msra.mxu0 %v5119
          %5183 = vmatpush.bf16.msra.mxu0 %v5116
          %5184 = vmatpush.bf16.msra.mxu0 %v5113
          %5185 = vmatpush.bf16.msra.mxu0 %v5110
          %5186 = vmatpush.bf16.msra.mxu0 %v5107
          %5187 = vmatmul.bf16.gmra.mxu0 %v4988
          %v5188 = vpop.f32.mrf.mxu0
          %v5189 = vadd.f32 %v5024, %v5188
          %v5190 = vpop.f32.mrf.mxu0
          %5191 = vdwg.mxu0
          %5193 = vrot.lane.b32.xlu0 %v5163, 96
          %v5194 = vpop.permute.xlu0 %5193
          %5196 = vrot.lane.b32.xlu0 %v5163, 64
          %v5197 = vpop.permute.xlu0 %5196
          %5199 = vrot.lane.b32.xlu0 %v5163, 32
          %v5200 = vpop.permute.xlu0 %5199
          %v5202 = vpack.c.bf16 %v5163, %v5163
          %v5203 = vpack.c.bf16 %v5194, %v5194
          %v5204 = vpack.c.bf16 %v5197, %v5197
          %v5205 = vpack.c.bf16 %v5200, %v5200
          %5207 = vrot.lane.b32.xlu0 %v5176, 96
          %v5208 = vpop.permute.xlu0 %5207
          %5210 = vrot.lane.b32.xlu0 %v5176, 64
          %v5211 = vpop.permute.xlu0 %5210
          %5213 = vrot.lane.b32.xlu0 %v5176, 32
          %v5214 = vpop.permute.xlu0 %5213
          %v5216 = vpack.c.bf16 %v5176, %v5176
          %v5217 = vpack.c.bf16 %v5208, %v5208
          %v5218 = vpack.c.bf16 %v5211, %v5211
          %v5219 = vpack.c.bf16 %v5214, %v5214
          %5221 = vrot.lane.b32.xlu0 %v5189, 96
          %v5222 = vpop.permute.xlu0 %5221
          %5224 = vrot.lane.b32.xlu0 %v5189, 64
          %v5225 = vpop.permute.xlu0 %5224
          %5227 = vrot.lane.b32.xlu0 %v5189, 32
          %v5228 = vpop.permute.xlu0 %5227
          %v5230 = vpack.c.bf16 %v5189, %v5189
          %v5231 = vpack.c.bf16 %v5222, %v5222
          %v5232 = vpack.c.bf16 %v5225, %v5225
          %v5233 = vpack.c.bf16 %v5228, %v5228
          %vm5234 = vcmask 261120
          %v5236 = vsel %vm5234, %v5202, 0
          %v5239 = vsel %vm5234, %v5216, 0
          %5241 = vmatpush.bf16.xpose.msra.mxu0 0
          %5242 = vmatpush.bf16.xpose.msra.mxu0 0
          %5243 = vmatpush.bf16.xpose.msra.mxu0 0
          %5244 = vmatpush.bf16.xpose.msra.mxu0 0
          %5245 = vmatpush.bf16.xpose.msra.mxu0 0
          %5246 = vmatpush.bf16.xpose.msra.mxu0 0
          %5247 = vmatpush.bf16.xpose.msra.mxu0 0
          %5248 = vmatpush.bf16.xpose.msra.mxu0 %v5239
          %5249 = vmatmul.bf16.gmra.mxu0 %v5236
          %v5250 = vpop.f32.mrf.mxu0
          %v5251 = vadd.f32 0.0, %v5250
          %v5252 = vpop.f32.mrf.mxu0
          %5253 = vdwg.mxu0
          %v5255 = vsel %vm5234, %v5203, 0
          %v5258 = vsel %vm5234, %v5217, 0
          %5260 = vmatpush.bf16.xpose.msra.mxu0 0
          %5261 = vmatpush.bf16.xpose.msra.mxu0 0
          %5262 = vmatpush.bf16.xpose.msra.mxu0 0
          %5263 = vmatpush.bf16.xpose.msra.mxu0 0
          %5264 = vmatpush.bf16.xpose.msra.mxu0 0
          %5265 = vmatpush.bf16.xpose.msra.mxu0 0
          %5266 = vmatpush.bf16.xpose.msra.mxu0 0
          %5267 = vmatpush.bf16.xpose.msra.mxu0 %v5258
          %5268 = vmatmul.bf16.gmra.mxu0 %v5255
          %v5269 = vpop.f32.mrf.mxu0
          %v5270 = vadd.f32 0.0, %v5269
          %v5271 = vpop.f32.mrf.mxu0
          %5272 = vdwg.mxu0
          %v5274 = vsel %vm5234, %v5204, 0
          %v5277 = vsel %vm5234, %v5218, 0
          %5279 = vmatpush.bf16.xpose.msra.mxu0 0
          %5280 = vmatpush.bf16.xpose.msra.mxu0 0
          %5281 = vmatpush.bf16.xpose.msra.mxu0 0
          %5282 = vmatpush.bf16.xpose.msra.mxu0 0
          %5283 = vmatpush.bf16.xpose.msra.mxu0 0
          %5284 = vmatpush.bf16.xpose.msra.mxu0 0
          %5285 = vmatpush.bf16.xpose.msra.mxu0 0
          %5286 = vmatpush.bf16.xpose.msra.mxu0 %v5277
          %5287 = vmatmul.bf16.gmra.mxu0 %v5274
          %v5288 = vpop.f32.mrf.mxu0
          %v5289 = vadd.f32 0.0, %v5288
          %v5290 = vpop.f32.mrf.mxu0
          %5291 = vdwg.mxu0
          %v5293 = vsel %vm5234, %v5205, 0
          %v5296 = vsel %vm5234, %v5219, 0
          %5298 = vmatpush.bf16.xpose.msra.mxu0 0
          %5299 = vmatpush.bf16.xpose.msra.mxu0 0
          %5300 = vmatpush.bf16.xpose.msra.mxu0 0
          %5301 = vmatpush.bf16.xpose.msra.mxu0 0
          %5302 = vmatpush.bf16.xpose.msra.mxu0 0
          %5303 = vmatpush.bf16.xpose.msra.mxu0 0
          %5304 = vmatpush.bf16.xpose.msra.mxu0 0
          %5305 = vmatpush.bf16.xpose.msra.mxu0 %v5296
          %5306 = vmatmul.bf16.gmra.mxu0 %v5293
          %v5307 = vpop.f32.mrf.mxu0
          %v5308 = vadd.f32 0.0, %v5307
          %v5309 = vpop.f32.mrf.mxu0
          %5310 = vdwg.mxu0
          %vm5311 = vcmask 36864
          %v5312 = vsel %vm5311, %v5251, -inf
          %5313 = vmax.xlane.f32.xlu0 %v5312
          %v5314 = vpop.xlane.xlu0 %5313
          %v5315 = vsel %vm5311, %v5270, -inf
          %5316 = vmax.xlane.f32.xlu0 %v5315
          %v5317 = vpop.xlane.xlu0 %5316
          %v5318 = vsel %vm5311, %v5289, -inf
          %5319 = vmax.xlane.f32.xlu0 %v5318
          %v5320 = vpop.xlane.xlu0 %5319
          %v5321 = vsel %vm5311, %v5308, -inf
          %5322 = vmax.xlane.f32.xlu0 %v5321
          %v5323 = vpop.xlane.xlu0 %5322
          %v5324 = vsub.f32 %v5251, %v5314
          %v5325 = vsub.f32 %v5270, %v5317
          %v5326 = vsub.f32 %v5289, %v5320
          %v5327 = vsub.f32 %v5308, %v5323
          %v5328 = vmul.f32 %v5324, 1.442695
          %v5329 = vpow.pop %v5328
          %v5330 = vmul.f32 %v5325, 1.442695
          %v5331 = vpow.pop %v5330
          %v5332 = vmul.f32 %v5326, 1.442695
          %v5333 = vpow.pop %v5332
          %v5334 = vmul.f32 %v5327, 1.442695
          %v5335 = vpow.pop %v5334
          %v5336 = vsel %vm5311, %v5329, 0.0
          %5337 = vadd.xlane.f32.xlu0 %v5336
          %v5338 = vpop.xlane.xlu0 %5337
          %v5339 = vsel %vm5311, %v5331, 0.0
          %5340 = vadd.xlane.f32.xlu0 %v5339
          %v5341 = vpop.xlane.xlu0 %5340
          %v5342 = vsel %vm5311, %v5333, 0.0
          %5343 = vadd.xlane.f32.xlu0 %v5342
          %v5344 = vpop.xlane.xlu0 %5343
          %v5345 = vsel %vm5311, %v5335, 0.0
          %5346 = vadd.xlane.f32.xlu0 %v5345
          %v5347 = vpop.xlane.xlu0 %5346
          %v5348 = vrcp.pop %v5338
          %v5349 = vrcp.pop %v5341
          %v5350 = vrcp.pop %v5344
          %v5351 = vrcp.pop %v5347
          %v5352 = vmul.f32 %v5329, %v5348
          %v5353 = vmul.f32 %v5331, %v5349
          %v5354 = vmul.f32 %v5333, %v5350
          %v5355 = vmul.f32 %v5335, %v5351
          %v5356 = vpack.c.bf16 %v5352, %v5352
          %v5357 = vpack.c.bf16 %v5353, %v5353
          %v5358 = vpack.c.bf16 %v5354, %v5354
          %v5359 = vpack.c.bf16 %v5355, %v5355
          %vm5360 = vcmask 39936
          %v5362 = vsel %vm5360, %v5356, 0
          %vm5364 = vcmask 1041408
          %vm5365 = vcmask 1042432
          %v5366 = vsel %vm5364, 4294967295, 65535
          %v5367 = vsel %vm5365, %v5366, 0
          %v5369 = vand.u32 %v5230, %v5367
          %5371 = vmatpush.bf16.msra.mxu0 0
          %5372 = vmatpush.bf16.msra.mxu0 0
          %5373 = vmatpush.bf16.msra.mxu0 0
          %5374 = vmatpush.bf16.msra.mxu0 0
          %5375 = vmatpush.bf16.msra.mxu0 0
          %5376 = vmatpush.bf16.msra.mxu0 0
          %5377 = vmatpush.bf16.msra.mxu0 0
          %5378 = vmatpush.bf16.msra.mxu0 %v5369
          %5379 = vmatmul.bf16.gmra.mxu0 %v5362
          %v5380 = vpop.f32.mrf.mxu0
          %v5381 = vadd.f32 0.0, %v5380
          %v5382 = vpop.f32.mrf.mxu0
          %5383 = vdwg.mxu0
          %v5385 = vsel %vm5360, %v5357, 0
          %v5388 = vand.u32 %v5231, %v5367
          %5390 = vmatpush.bf16.msra.mxu0 0
          %5391 = vmatpush.bf16.msra.mxu0 0
          %5392 = vmatpush.bf16.msra.mxu0 0
          %5393 = vmatpush.bf16.msra.mxu0 0
          %5394 = vmatpush.bf16.msra.mxu0 0
          %5395 = vmatpush.bf16.msra.mxu0 0
          %5396 = vmatpush.bf16.msra.mxu0 0
          %5397 = vmatpush.bf16.msra.mxu0 %v5388
          %5398 = vmatmul.bf16.gmra.mxu0 %v5385
          %v5399 = vpop.f32.mrf.mxu0
          %v5400 = vadd.f32 0.0, %v5399
          %v5401 = vpop.f32.mrf.mxu0
          %5402 = vdwg.mxu0
          %v5404 = vsel %vm5360, %v5358, 0
          %v5407 = vand.u32 %v5232, %v5367
          %5409 = vmatpush.bf16.msra.mxu0 0
          %5410 = vmatpush.bf16.msra.mxu0 0
          %5411 = vmatpush.bf16.msra.mxu0 0
          %5412 = vmatpush.bf16.msra.mxu0 0
          %5413 = vmatpush.bf16.msra.mxu0 0
          %5414 = vmatpush.bf16.msra.mxu0 0
          %5415 = vmatpush.bf16.msra.mxu0 0
          %5416 = vmatpush.bf16.msra.mxu0 %v5407
          %5417 = vmatmul.bf16.gmra.mxu0 %v5404
          %v5418 = vpop.f32.mrf.mxu0
          %v5419 = vadd.f32 0.0, %v5418
          %v5420 = vpop.f32.mrf.mxu0
          %5421 = vdwg.mxu0
          %v5423 = vsel %vm5360, %v5359, 0
          %v5426 = vand.u32 %v5233, %v5367
          %5428 = vmatpush.bf16.msra.mxu0 0
          %5429 = vmatpush.bf16.msra.mxu0 0
          %5430 = vmatpush.bf16.msra.mxu0 0
          %5431 = vmatpush.bf16.msra.mxu0 0
          %5432 = vmatpush.bf16.msra.mxu0 0
          %5433 = vmatpush.bf16.msra.mxu0 0
          %5434 = vmatpush.bf16.msra.mxu0 0
          %5435 = vmatpush.bf16.msra.mxu0 %v5426
          %5436 = vmatmul.bf16.gmra.mxu0 %v5423
          %v5437 = vpop.f32.mrf.mxu0
          %v5438 = vadd.f32 0.0, %v5437
          %v5439 = vpop.f32.mrf.mxu0
          %5440 = vdwg.mxu0
          %5442 = vrot.lane.b32.xlu0 %v5400, 32
          %v5443 = vpop.permute.xlu0 %5442
          %5446 = vrot.lane.b32.xlu0 %v5419, 64
          %v5447 = vpop.permute.xlu0 %5446
          %5450 = vrot.lane.b32.xlu0 %v5438, 96
          %v5451 = vpop.permute.xlu0 %5450
          %v5453 = vsel %vm5234, %v5381, %v5443
          %vm5454 = vcmask 523264
          %v5455 = vsel %vm5454, %v5453, %v5447
          %vm5456 = vcmask 785408
          %v5457 = vsel %vm5456, %v5455, %v5451
          %v5458 = vpack.c.bf16 %v5457, %v5457
          %s5459 = scalar_lea.vmem %s398, 192 [#allocation7]
          %v5460 = vld [vmem:[%s5459] sm:$0xf]
          %v5461 = vld [vmem:[%s5459 + $0x4] sm:$0xf]
          %v5462 = vld [vmem:[%s5459 + $0x8] sm:$0xf]
          %v5463 = vld [vmem:[%s5459 + $0xc] sm:$0xf]
          %v5464 = vld [vmem:[%s5459 + $0x10] sm:$0xf]
          %v5465 = vld [vmem:[%s5459 + $0x14] sm:$0xf]
          %v5466 = vld [vmem:[%s5459 + $0x18] sm:$0xf]
          %v5467 = vld [vmem:[%s5459 + $0x1c] sm:$0xf]
          %v5468 = vld [vmem:[%s5459 + $0x20] sm:$0xf]
          %v5469 = vld [vmem:[%s5459 + $0x24] sm:$0xf]
          %v5470 = vld [vmem:[%s5459 + $0x28] sm:$0xf]
          %v5471 = vld [vmem:[%s5459 + $0x2c] sm:$0xf]
          %v5472 = vld [vmem:[%s5459 + $0x30] sm:$0xf]
          %v5473 = vld [vmem:[%s5459 + $0x34] sm:$0xf]
          %v5474 = vld [vmem:[%s5459 + $0x38] sm:$0xf]
          %v5475 = vld [vmem:[%s5459 + $0x3c] sm:$0xf]
          %v5476 = vperm.slane %v4949, 3
          %v5493 = vunpack.c.l.b16 %v5460
          %v5494 = vunpack.c.l.b16 %v5461
          %v5495 = vunpack.c.l.b16 %v5462
          %v5496 = vunpack.c.l.b16 %v5463
          %v5497 = vunpack.c.l.b16 %v5464
          %v5498 = vunpack.c.l.b16 %v5465
          %v5499 = vunpack.c.l.b16 %v5466
          %v5500 = vunpack.c.l.b16 %v5467
          %v5501 = vunpack.c.l.b16 %v5468
          %v5502 = vunpack.c.l.b16 %v5469
          %v5503 = vunpack.c.l.b16 %v5470
          %v5504 = vunpack.c.l.b16 %v5471
          %v5505 = vunpack.c.l.b16 %v5472
          %v5506 = vunpack.c.l.b16 %v5473
          %v5507 = vunpack.c.l.b16 %v5474
          %v5508 = vunpack.c.l.b16 %v5475
          %v5509 = vpack.c.b16 %v5494, %v5493
          %v5510 = vpack.c.b16 %v5496, %v5495
          %v5511 = vpack.c.b16 %v5498, %v5497
          %v5512 = vpack.c.b16 %v5500, %v5499
          %v5513 = vpack.c.b16 %v5502, %v5501
          %v5514 = vpack.c.b16 %v5504, %v5503
          %v5515 = vpack.c.b16 %v5506, %v5505
          %v5516 = vpack.c.b16 %v5508, %v5507
          %5525 = vmatpush.bf16.msra.mxu0 %v5516
          %5526 = vmatpush.bf16.msra.mxu0 %v5515
          %5527 = vmatpush.bf16.msra.mxu0 %v5514
          %5528 = vmatpush.bf16.msra.mxu0 %v5513
          %5529 = vmatpush.bf16.msra.mxu0 %v5512
          %5530 = vmatpush.bf16.msra.mxu0 %v5511
          %5531 = vmatpush.bf16.msra.mxu0 %v5510
          %5532 = vmatpush.bf16.msra.mxu0 %v5509
          %5533 = vmatmul.bf16.gmra.mxu0 %v5458
          %v5534 = vpop.f32.mrf.mxu0
          %v5535 = vadd.f32 %v5476, %v5534
          %v5536 = vpop.f32.mrf.mxu0
          %5537 = vdwg.mxu0
          %v5538 = vadd.f32 %v4953, %v5535
          %v5539 = vsel %vm4954, %v5538, 0.0
          %5540 = vadd.xlane.f32.xlu0 %v5539
          %v5541 = vpop.xlane.xlu0 %5540
          %v5542 = vmul.f32 %v5541, %v4964
          %v5543 = vsub.f32 %v5538, %v5542
          %v5544 = vmul.f32 %v5543, %v5543
          %v5545 = vsel %vm4954, %v5544, 0.0
          %5546 = vadd.xlane.f32.xlu0 %v5545
          %v5547 = vpop.xlane.xlu0 %5546
          %v5548 = vmul.f32 %v5547, %v4964
          %v5549 = vadd.f32 %v5548, 1e-06
          %v5550 = vrsqrt.pop %v5549
          %v5551 = vmul.f32 %v5550, %v5549
          %v5552 = vmul.f32 %v5551, %v5550
          %v5553 = vmul.f32 0.5, %v5552
          %v5554 = vsub.f32 1.5, %v5553
          %v5555 = vmul.f32 %v5550, %v5554
          %vm5556 = vweird.f32 %v5549
          %vm5557 = vweird.f32 %v5550
          %vm5558 = vmor %vm5556, %vm5557
          %v5559 = vsel %vm5558, %v5550, %v5555
          %v5560 = vmul.f32 %v5543, %v5559
          %v5561 = vperm.slane %v4949, 4
          %v5562 = vmul.f32 %v5560, %v5561
          %v5563 = vperm.slane %v4949, 5
          %v5564 = vadd.f32 %v5562, %v5563
          %v5565 = vpack.c.bf16 %v5564, %v5564
          %s5566 = scalar_lea.vmem %s466, 768
          %v5567 = vld [vmem:[%s5566] sm:$0xff]
          %v5568 = vld [vmem:[%s5566 + $0x8] sm:$0xff]
          %v5569 = vld [vmem:[%s5566 + $0x10] sm:$0xff]
          %v5570 = vld [vmem:[%s5566 + $0x18] sm:$0xff]
          %v5571 = vld [vmem:[%s5566 + $0x20] sm:$0xff]
          %v5572 = vld [vmem:[%s5566 + $0x28] sm:$0xff]
          %v5573 = vld [vmem:[%s5566 + $0x30] sm:$0xff]
          %v5574 = vld [vmem:[%s5566 + $0x38] sm:$0xff]
          %v5575 = vld [vmem:[%s5566 + $0x40] sm:$0xff]
          %v5576 = vld [vmem:[%s5566 + $0x48] sm:$0xff]
          %v5577 = vld [vmem:[%s5566 + $0x50] sm:$0xff]
          %v5578 = vld [vmem:[%s5566 + $0x58] sm:$0xff]
          %v5579 = vld [vmem:[%s5566 + $0x60] sm:$0xff]
          %v5580 = vld [vmem:[%s5566 + $0x68] sm:$0xff]
          %v5581 = vld [vmem:[%s5566 + $0x70] sm:$0xff]
          %v5582 = vld [vmem:[%s5566 + $0x78] sm:$0xff]
          %v5583 = vld [vmem:[%s5566 + $0x80] sm:$0xff]
          %v5584 = vld [vmem:[%s5566 + $0x88] sm:$0xff]
          %v5585 = vld [vmem:[%s5566 + $0x90] sm:$0xff]
          %v5586 = vld [vmem:[%s5566 + $0x98] sm:$0xff]
          %v5587 = vld [vmem:[%s5566 + $0xa0] sm:$0xff]
          %v5588 = vld [vmem:[%s5566 + $0xa8] sm:$0xff]
          %v5589 = vld [vmem:[%s5566 + $0xb0] sm:$0xff]
          %v5590 = vld [vmem:[%s5566 + $0xb8] sm:$0xff]
          %v5591 = vld [vmem:[%s5566 + $0xc0] sm:$0xff]
          %v5592 = vld [vmem:[%s5566 + $0xc8] sm:$0xff]
          %v5593 = vld [vmem:[%s5566 + $0xd0] sm:$0xff]
          %v5594 = vld [vmem:[%s5566 + $0xd8] sm:$0xff]
          %v5595 = vld [vmem:[%s5566 + $0xe0] sm:$0xff]
          %v5596 = vld [vmem:[%s5566 + $0xe8] sm:$0xff]
          %v5597 = vld [vmem:[%s5566 + $0xf0] sm:$0xff]
          %v5598 = vld [vmem:[%s5566 + $0xf8] sm:$0xff]
          %v5599 = vperm.slane %v4949, 6
          %v5600 = vperm.slane %v4950, 6
          %v5601 = vperm.slane %v4951, 6
          %v5602 = vperm.slane %v4952, 6
          %v5635 = vunpack.c.l.b16 %v5567
          %v5636 = vunpack.c.h.b16 %v5567
          %v5637 = vunpack.c.l.b16 %v5568
          %v5638 = vunpack.c.h.b16 %v5568
          %v5639 = vunpack.c.l.b16 %v5569
          %v5640 = vunpack.c.h.b16 %v5569
          %v5641 = vunpack.c.l.b16 %v5570
          %v5642 = vunpack.c.h.b16 %v5570
          %v5643 = vunpack.c.l.b16 %v5571
          %v5644 = vunpack.c.h.b16 %v5571
          %v5645 = vunpack.c.l.b16 %v5572
          %v5646 = vunpack.c.h.b16 %v5572
          %v5647 = vunpack.c.l.b16 %v5573
          %v5648 = vunpack.c.h.b16 %v5573
          %v5649 = vunpack.c.l.b16 %v5574
          %v5650 = vunpack.c.h.b16 %v5574
          %v5651 = vunpack.c.l.b16 %v5575
          %v5652 = vunpack.c.h.b16 %v5575
          %v5653 = vunpack.c.l.b16 %v5576
          %v5654 = vunpack.c.h.b16 %v5576
          %v5655 = vunpack.c.l.b16 %v5577
          %v5656 = vunpack.c.h.b16 %v5577
          %v5657 = vunpack.c.l.b16 %v5578
          %v5658 = vunpack.c.h.b16 %v5578
          %v5659 = vunpack.c.l.b16 %v5579
          %v5660 = vunpack.c.h.b16 %v5579
          %v5661 = vunpack.c.l.b16 %v5580
          %v5662 = vunpack.c.h.b16 %v5580
          %v5663 = vunpack.c.l.b16 %v5581
          %v5664 = vunpack.c.h.b16 %v5581
          %v5665 = vunpack.c.l.b16 %v5582
          %v5666 = vunpack.c.h.b16 %v5582
          %v5667 = vunpack.c.l.b16 %v5583
          %v5668 = vunpack.c.h.b16 %v5583
          %v5669 = vunpack.c.l.b16 %v5584
          %v5670 = vunpack.c.h.b16 %v5584
          %v5671 = vunpack.c.l.b16 %v5585
          %v5672 = vunpack.c.h.b16 %v5585
          %v5673 = vunpack.c.l.b16 %v5586
          %v5674 = vunpack.c.h.b16 %v5586
          %v5675 = vunpack.c.l.b16 %v5587
          %v5676 = vunpack.c.h.b16 %v5587
          %v5677 = vunpack.c.l.b16 %v5588
          %v5678 = vunpack.c.h.b16 %v5588
          %v5679 = vunpack.c.l.b16 %v5589
          %v5680 = vunpack.c.h.b16 %v5589
          %v5681 = vunpack.c.l.b16 %v5590
          %v5682 = vunpack.c.h.b16 %v5590
          %v5683 = vunpack.c.l.b16 %v5591
          %v5684 = vunpack.c.h.b16 %v5591
          %v5685 = vunpack.c.l.b16 %v5592
          %v5686 = vunpack.c.h.b16 %v5592
          %v5687 = vunpack.c.l.b16 %v5593
          %v5688 = vunpack.c.h.b16 %v5593
          %v5689 = vunpack.c.l.b16 %v5594
          %v5690 = vunpack.c.h.b16 %v5594
          %v5691 = vunpack.c.l.b16 %v5595
          %v5692 = vunpack.c.h.b16 %v5595
          %v5693 = vunpack.c.l.b16 %v5596
          %v5694 = vunpack.c.h.b16 %v5596
          %v5695 = vunpack.c.l.b16 %v5597
          %v5696 = vunpack.c.h.b16 %v5597
          %v5697 = vunpack.c.l.b16 %v5598
          %v5698 = vunpack.c.h.b16 %v5598
          %v5699 = vpack.c.b16 %v5639, %v5635
          %v5700 = vpack.c.b16 %v5640, %v5636
          %v5701 = vpack.c.b16 %v5641, %v5637
          %v5702 = vpack.c.b16 %v5642, %v5638
          %v5703 = vpack.c.b16 %v5647, %v5643
          %v5704 = vpack.c.b16 %v5648, %v5644
          %v5705 = vpack.c.b16 %v5649, %v5645
          %v5706 = vpack.c.b16 %v5650, %v5646
          %v5707 = vpack.c.b16 %v5655, %v5651
          %v5708 = vpack.c.b16 %v5656, %v5652
          %v5709 = vpack.c.b16 %v5657, %v5653
          %v5710 = vpack.c.b16 %v5658, %v5654
          %v5711 = vpack.c.b16 %v5663, %v5659
          %v5712 = vpack.c.b16 %v5664, %v5660
          %v5713 = vpack.c.b16 %v5665, %v5661
          %v5714 = vpack.c.b16 %v5666, %v5662
          %v5715 = vpack.c.b16 %v5671, %v5667
          %v5716 = vpack.c.b16 %v5672, %v5668
          %v5717 = vpack.c.b16 %v5673, %v5669
          %v5718 = vpack.c.b16 %v5674, %v5670
          %v5719 = vpack.c.b16 %v5679, %v5675
          %v5720 = vpack.c.b16 %v5680, %v5676
          %v5721 = vpack.c.b16 %v5681, %v5677
          %v5722 = vpack.c.b16 %v5682, %v5678
          %v5723 = vpack.c.b16 %v5687, %v5683
          %v5724 = vpack.c.b16 %v5688, %v5684
          %v5725 = vpack.c.b16 %v5689, %v5685
          %v5726 = vpack.c.b16 %v5690, %v5686
          %v5727 = vpack.c.b16 %v5695, %v5691
          %v5728 = vpack.c.b16 %v5696, %v5692
          %v5729 = vpack.c.b16 %v5697, %v5693
          %v5730 = vpack.c.b16 %v5698, %v5694
          %5763 = vmatpush.bf16.msra.mxu0 %v5727
          %5764 = vmatpush.bf16.msra.mxu0 %v5723
          %5765 = vmatpush.bf16.msra.mxu0 %v5719
          %5766 = vmatpush.bf16.msra.mxu0 %v5715
          %5767 = vmatpush.bf16.msra.mxu0 %v5711
          %5768 = vmatpush.bf16.msra.mxu0 %v5707
          %5769 = vmatpush.bf16.msra.mxu0 %v5703
          %5770 = vmatpush.bf16.msra.mxu0 %v5699
          %5771 = vmatmul.bf16.gmra.mxu0 %v5565
          %v5772 = vpop.f32.mrf.mxu0
          %v5773 = vadd.f32 %v5599, %v5772
          %v5774 = vpop.f32.mrf.mxu0
          %5775 = vdwg.mxu0
          %5776 = vmatpush.bf16.msra.mxu0 %v5728
          %5777 = vmatpush.bf16.msra.mxu0 %v5724
          %5778 = vmatpush.bf16.msra.mxu0 %v5720
          %5779 = vmatpush.bf16.msra.mxu0 %v5716
          %5780 = vmatpush.bf16.msra.mxu0 %v5712
          %5781 = vmatpush.bf16.msra.mxu0 %v5708
          %5782 = vmatpush.bf16.msra.mxu0 %v5704
          %5783 = vmatpush.bf16.msra.mxu0 %v5700
          %5784 = vmatmul.bf16.gmra.mxu0 %v5565
          %v5785 = vpop.f32.mrf.mxu0
          %v5786 = vadd.f32 %v5600, %v5785
          %v5787 = vpop.f32.mrf.mxu0
          %5788 = vdwg.mxu0
          %5789 = vmatpush.bf16.msra.mxu0 %v5729
          %5790 = vmatpush.bf16.msra.mxu0 %v5725
          %5791 = vmatpush.bf16.msra.mxu0 %v5721
          %5792 = vmatpush.bf16.msra.mxu0 %v5717
          %5793 = vmatpush.bf16.msra.mxu0 %v5713
          %5794 = vmatpush.bf16.msra.mxu0 %v5709
          %5795 = vmatpush.bf16.msra.mxu0 %v5705
          %5796 = vmatpush.bf16.msra.mxu0 %v5701
          %5797 = vmatmul.bf16.gmra.mxu0 %v5565
          %v5798 = vpop.f32.mrf.mxu0
          %v5799 = vadd.f32 %v5601, %v5798
          %v5800 = vpop.f32.mrf.mxu0
          %5801 = vdwg.mxu0
          %5802 = vmatpush.bf16.msra.mxu0 %v5730
          %5803 = vmatpush.bf16.msra.mxu0 %v5726
          %5804 = vmatpush.bf16.msra.mxu0 %v5722
          %5805 = vmatpush.bf16.msra.mxu0 %v5718
          %5806 = vmatpush.bf16.msra.mxu0 %v5714
          %5807 = vmatpush.bf16.msra.mxu0 %v5710
          %5808 = vmatpush.bf16.msra.mxu0 %v5706
          %5809 = vmatpush.bf16.msra.mxu0 %v5702
          %5810 = vmatmul.bf16.gmra.mxu0 %v5565
          %v5811 = vpop.f32.mrf.mxu0
          %v5812 = vadd.f32 %v5602, %v5811
          %v5813 = vpop.f32.mrf.mxu0
          %5814 = vdwg.mxu0
          %v5815 = vmul.f32 %v5773, %v5773
          %v5816 = vmul.f32 %v5786, %v5786
          %v5817 = vmul.f32 %v5799, %v5799
          %v5818 = vmul.f32 %v5812, %v5812
          %v5819 = vmul.f32 %v5773, %v5815
          %v5820 = vmul.f32 %v5786, %v5816
          %v5821 = vmul.f32 %v5799, %v5817
          %v5822 = vmul.f32 %v5812, %v5818
          %v5823 = vmul.f32 %v5819, 0.044715
          %v5824 = vmul.f32 %v5820, 0.044715
          %v5825 = vmul.f32 %v5821, 0.044715
          %v5826 = vmul.f32 %v5822, 0.044715
          %v5827 = vadd.f32 %v5773, %v5823
          %v5828 = vadd.f32 %v5786, %v5824
          %v5829 = vadd.f32 %v5799, %v5825
          %v5830 = vadd.f32 %v5812, %v5826
          %v5831 = vmul.f32 %v5827, 0.7978846
          %v5832 = vmul.f32 %v5828, 0.7978846
          %v5833 = vmul.f32 %v5829, 0.7978846
          %v5834 = vmul.f32 %v5830, 0.7978846
          %v5835 = vtanh.pop %v5831
          %v5836 = vtanh.pop %v5832
          %v5837 = vtanh.pop %v5833
          %v5838 = vtanh.pop %v5834
          %v5839 = vadd.f32 %v5835, 1.0
          %v5840 = vadd.f32 %v5836, 1.0
          %v5841 = vadd.f32 %v5837, 1.0
          %v5842 = vadd.f32 %v5838, 1.0
          %v5843 = vmul.f32 %v5839, 0.5
          %v5844 = vmul.f32 %v5840, 0.5
          %v5845 = vmul.f32 %v5841, 0.5
          %v5846 = vmul.f32 %v5842, 0.5
          %v5847 = vmul.f32 %v5773, %v5843
          %v5848 = vmul.f32 %v5786, %v5844
          %v5849 = vmul.f32 %v5799, %v5845
          %v5850 = vmul.f32 %v5812, %v5846
          %v5851 = vpack.c.bf16 %v5847, %v5847
          %v5852 = vpack.c.bf16 %v5848, %v5848
          %v5853 = vpack.c.bf16 %v5849, %v5849
          %v5854 = vpack.c.bf16 %v5850, %v5850
          %s5855 = scalar_lea.vmem %s408, 768 [#allocation8]
          %v5856 = vld [vmem:[%s5855] sm:$0xf]
          %v5857 = vld [vmem:[%s5855 + $0x4] sm:$0xf]
          %v5858 = vld [vmem:[%s5855 + $0x8] sm:$0xf]
          %v5859 = vld [vmem:[%s5855 + $0xc] sm:$0xf]
          %v5860 = vld [vmem:[%s5855 + $0x10] sm:$0xf]
          %v5861 = vld [vmem:[%s5855 + $0x14] sm:$0xf]
          %v5862 = vld [vmem:[%s5855 + $0x18] sm:$0xf]
          %v5863 = vld [vmem:[%s5855 + $0x1c] sm:$0xf]
          %v5864 = vld [vmem:[%s5855 + $0x20] sm:$0xf]
          %v5865 = vld [vmem:[%s5855 + $0x24] sm:$0xf]
          %v5866 = vld [vmem:[%s5855 + $0x28] sm:$0xf]
          %v5867 = vld [vmem:[%s5855 + $0x2c] sm:$0xf]
          %v5868 = vld [vmem:[%s5855 + $0x30] sm:$0xf]
          %v5869 = vld [vmem:[%s5855 + $0x34] sm:$0xf]
          %v5870 = vld [vmem:[%s5855 + $0x38] sm:$0xf]
          %v5871 = vld [vmem:[%s5855 + $0x3c] sm:$0xf]
          %v5872 = vld [vmem:[%s5855 + $0x40] sm:$0xf]
          %v5873 = vld [vmem:[%s5855 + $0x44] sm:$0xf]
          %v5874 = vld [vmem:[%s5855 + $0x48] sm:$0xf]
          %v5875 = vld [vmem:[%s5855 + $0x4c] sm:$0xf]
          %v5876 = vld [vmem:[%s5855 + $0x50] sm:$0xf]
          %v5877 = vld [vmem:[%s5855 + $0x54] sm:$0xf]
          %v5878 = vld [vmem:[%s5855 + $0x58] sm:$0xf]
          %v5879 = vld [vmem:[%s5855 + $0x5c] sm:$0xf]
          %v5880 = vld [vmem:[%s5855 + $0x60] sm:$0xf]
          %v5881 = vld [vmem:[%s5855 + $0x64] sm:$0xf]
          %v5882 = vld [vmem:[%s5855 + $0x68] sm:$0xf]
          %v5883 = vld [vmem:[%s5855 + $0x6c] sm:$0xf]
          %v5884 = vld [vmem:[%s5855 + $0x70] sm:$0xf]
          %v5885 = vld [vmem:[%s5855 + $0x74] sm:$0xf]
          %v5886 = vld [vmem:[%s5855 + $0x78] sm:$0xf]
          %v5887 = vld [vmem:[%s5855 + $0x7c] sm:$0xf]
          %v5888 = vld [vmem:[%s5855 + $0x80] sm:$0xf]
          %v5889 = vld [vmem:[%s5855 + $0x84] sm:$0xf]
          %v5890 = vld [vmem:[%s5855 + $0x88] sm:$0xf]
          %v5891 = vld [vmem:[%s5855 + $0x8c] sm:$0xf]
          %v5892 = vld [vmem:[%s5855 + $0x90] sm:$0xf]
          %v5893 = vld [vmem:[%s5855 + $0x94] sm:$0xf]
          %v5894 = vld [vmem:[%s5855 + $0x98] sm:$0xf]
          %v5895 = vld [vmem:[%s5855 + $0x9c] sm:$0xf]
          %v5896 = vld [vmem:[%s5855 + $0xa0] sm:$0xf]
          %v5897 = vld [vmem:[%s5855 + $0xa4] sm:$0xf]
          %v5898 = vld [vmem:[%s5855 + $0xa8] sm:$0xf]
          %v5899 = vld [vmem:[%s5855 + $0xac] sm:$0xf]
          %v5900 = vld [vmem:[%s5855 + $0xb0] sm:$0xf]
          %v5901 = vld [vmem:[%s5855 + $0xb4] sm:$0xf]
          %v5902 = vld [vmem:[%s5855 + $0xb8] sm:$0xf]
          %v5903 = vld [vmem:[%s5855 + $0xbc] sm:$0xf]
          %v5904 = vld [vmem:[%s5855 + $0xc0] sm:$0xf]
          %v5905 = vld [vmem:[%s5855 + $0xc4] sm:$0xf]
          %v5906 = vld [vmem:[%s5855 + $0xc8] sm:$0xf]
          %v5907 = vld [vmem:[%s5855 + $0xcc] sm:$0xf]
          %v5908 = vld [vmem:[%s5855 + $0xd0] sm:$0xf]
          %v5909 = vld [vmem:[%s5855 + $0xd4] sm:$0xf]
          %v5910 = vld [vmem:[%s5855 + $0xd8] sm:$0xf]
          %v5911 = vld [vmem:[%s5855 + $0xdc] sm:$0xf]
          %v5912 = vld [vmem:[%s5855 + $0xe0] sm:$0xf]
          %v5913 = vld [vmem:[%s5855 + $0xe4] sm:$0xf]
          %v5914 = vld [vmem:[%s5855 + $0xe8] sm:$0xf]
          %v5915 = vld [vmem:[%s5855 + $0xec] sm:$0xf]
          %v5916 = vld [vmem:[%s5855 + $0xf0] sm:$0xf]
          %v5917 = vld [vmem:[%s5855 + $0xf4] sm:$0xf]
          %v5918 = vld [vmem:[%s5855 + $0xf8] sm:$0xf]
          %v5919 = vld [vmem:[%s5855 + $0xfc] sm:$0xf]
          %v5920 = vperm.slane %v4949, 7
          %v5985 = vunpack.c.l.b16 %v5856
          %v5986 = vunpack.c.l.b16 %v5857
          %v5987 = vunpack.c.l.b16 %v5858
          %v5988 = vunpack.c.l.b16 %v5859
          %v5989 = vunpack.c.l.b16 %v5860
          %v5990 = vunpack.c.l.b16 %v5861
          %v5991 = vunpack.c.l.b16 %v5862
          %v5992 = vunpack.c.l.b16 %v5863
          %v5993 = vunpack.c.l.b16 %v5864
          %v5994 = vunpack.c.l.b16 %v5865
          %v5995 = vunpack.c.l.b16 %v5866
          %v5996 = vunpack.c.l.b16 %v5867
          %v5997 = vunpack.c.l.b16 %v5868
          %v5998 = vunpack.c.l.b16 %v5869
          %v5999 = vunpack.c.l.b16 %v5870
          %v6000 = vunpack.c.l.b16 %v5871
          %v6001 = vunpack.c.l.b16 %v5872
          %v6002 = vunpack.c.l.b16 %v5873
          %v6003 = vunpack.c.l.b16 %v5874
          %v6004 = vunpack.c.l.b16 %v5875
          %v6005 = vunpack.c.l.b16 %v5876
          %v6006 = vunpack.c.l.b16 %v5877
          %v6007 = vunpack.c.l.b16 %v5878
          %v6008 = vunpack.c.l.b16 %v5879
          %v6009 = vunpack.c.l.b16 %v5880
          %v6010 = vunpack.c.l.b16 %v5881
          %v6011 = vunpack.c.l.b16 %v5882
          %v6012 = vunpack.c.l.b16 %v5883
          %v6013 = vunpack.c.l.b16 %v5884
          %v6014 = vunpack.c.l.b16 %v5885
          %v6015 = vunpack.c.l.b16 %v5886
          %v6016 = vunpack.c.l.b16 %v5887
          %v6017 = vunpack.c.l.b16 %v5888
          %v6018 = vunpack.c.l.b16 %v5889
          %v6019 = vunpack.c.l.b16 %v5890
          %v6020 = vunpack.c.l.b16 %v5891
          %v6021 = vunpack.c.l.b16 %v5892
          %v6022 = vunpack.c.l.b16 %v5893
          %v6023 = vunpack.c.l.b16 %v5894
          %v6024 = vunpack.c.l.b16 %v5895
          %v6025 = vunpack.c.l.b16 %v5896
          %v6026 = vunpack.c.l.b16 %v5897
          %v6027 = vunpack.c.l.b16 %v5898
          %v6028 = vunpack.c.l.b16 %v5899
          %v6029 = vunpack.c.l.b16 %v5900
          %v6030 = vunpack.c.l.b16 %v5901
          %v6031 = vunpack.c.l.b16 %v5902
          %v6032 = vunpack.c.l.b16 %v5903
          %v6033 = vunpack.c.l.b16 %v5904
          %v6034 = vunpack.c.l.b16 %v5905
          %v6035 = vunpack.c.l.b16 %v5906
          %v6036 = vunpack.c.l.b16 %v5907
          %v6037 = vunpack.c.l.b16 %v5908
          %v6038 = vunpack.c.l.b16 %v5909
          %v6039 = vunpack.c.l.b16 %v5910
          %v6040 = vunpack.c.l.b16 %v5911
          %v6041 = vunpack.c.l.b16 %v5912
          %v6042 = vunpack.c.l.b16 %v5913
          %v6043 = vunpack.c.l.b16 %v5914
          %v6044 = vunpack.c.l.b16 %v5915
          %v6045 = vunpack.c.l.b16 %v5916
          %v6046 = vunpack.c.l.b16 %v5917
          %v6047 = vunpack.c.l.b16 %v5918
          %v6048 = vunpack.c.l.b16 %v5919
          %v6049 = vpack.c.b16 %v5986, %v5985
          %v6050 = vpack.c.b16 %v5988, %v5987
          %v6051 = vpack.c.b16 %v5990, %v5989
          %v6052 = vpack.c.b16 %v5992, %v5991
          %v6053 = vpack.c.b16 %v5994, %v5993
          %v6054 = vpack.c.b16 %v5996, %v5995
          %v6055 = vpack.c.b16 %v5998, %v5997
          %v6056 = vpack.c.b16 %v6000, %v5999
          %v6057 = vpack.c.b16 %v6002, %v6001
          %v6058 = vpack.c.b16 %v6004, %v6003
          %v6059 = vpack.c.b16 %v6006, %v6005
          %v6060 = vpack.c.b16 %v6008, %v6007
          %v6061 = vpack.c.b16 %v6010, %v6009
          %v6062 = vpack.c.b16 %v6012, %v6011
          %v6063 = vpack.c.b16 %v6014, %v6013
          %v6064 = vpack.c.b16 %v6016, %v6015
          %v6065 = vpack.c.b16 %v6018, %v6017
          %v6066 = vpack.c.b16 %v6020, %v6019
          %v6067 = vpack.c.b16 %v6022, %v6021
          %v6068 = vpack.c.b16 %v6024, %v6023
          %v6069 = vpack.c.b16 %v6026, %v6025
          %v6070 = vpack.c.b16 %v6028, %v6027
          %v6071 = vpack.c.b16 %v6030, %v6029
          %v6072 = vpack.c.b16 %v6032, %v6031
          %v6073 = vpack.c.b16 %v6034, %v6033
          %v6074 = vpack.c.b16 %v6036, %v6035
          %v6075 = vpack.c.b16 %v6038, %v6037
          %v6076 = vpack.c.b16 %v6040, %v6039
          %v6077 = vpack.c.b16 %v6042, %v6041
          %v6078 = vpack.c.b16 %v6044, %v6043
          %v6079 = vpack.c.b16 %v6046, %v6045
          %v6080 = vpack.c.b16 %v6048, %v6047
          %6113 = vmatpush.bf16.msra.mxu0 %v6056
          %6114 = vmatpush.bf16.msra.mxu0 %v6055
          %6115 = vmatpush.bf16.msra.mxu0 %v6054
          %6116 = vmatpush.bf16.msra.mxu0 %v6053
          %6117 = vmatpush.bf16.msra.mxu0 %v6052
          %6118 = vmatpush.bf16.msra.mxu0 %v6051
          %6119 = vmatpush.bf16.msra.mxu0 %v6050
          %6120 = vmatpush.bf16.msra.mxu0 %v6049
          %6121 = vmatmul.bf16.gmra.mxu0 %v5851
          %v6122 = vpop.f32.mrf.mxu0
          %v6123 = vadd.f32 %v5920, %v6122
          %v6124 = vpop.f32.mrf.mxu0
          %6125 = vdwg.mxu0
          %6126 = vmatpush.bf16.msra.mxu0 %v6064
          %6127 = vmatpush.bf16.msra.mxu0 %v6063
          %6128 = vmatpush.bf16.msra.mxu0 %v6062
          %6129 = vmatpush.bf16.msra.mxu0 %v6061
          %6130 = vmatpush.bf16.msra.mxu0 %v6060
          %6131 = vmatpush.bf16.msra.mxu0 %v6059
          %6132 = vmatpush.bf16.msra.mxu0 %v6058
          %6133 = vmatpush.bf16.msra.mxu0 %v6057
          %6134 = vmatmul.bf16.gmra.mxu0 %v5852
          %v6135 = vpop.f32.mrf.mxu0
          %v6136 = vadd.f32 %v6123, %v6135
          %v6137 = vpop.f32.mrf.mxu0
          %6138 = vdwg.mxu0
          %6139 = vmatpush.bf16.msra.mxu0 %v6072
          %6140 = vmatpush.bf16.msra.mxu0 %v6071
          %6141 = vmatpush.bf16.msra.mxu0 %v6070
          %6142 = vmatpush.bf16.msra.mxu0 %v6069
          %6143 = vmatpush.bf16.msra.mxu0 %v6068
          %6144 = vmatpush.bf16.msra.mxu0 %v6067
          %6145 = vmatpush.bf16.msra.mxu0 %v6066
          %6146 = vmatpush.bf16.msra.mxu0 %v6065
          %6147 = vmatmul.bf16.gmra.mxu0 %v5853
          %v6148 = vpop.f32.mrf.mxu0
          %v6149 = vadd.f32 %v6136, %v6148
          %v6150 = vpop.f32.mrf.mxu0
          %6151 = vdwg.mxu0
          %6152 = vmatpush.bf16.msra.mxu0 %v6080
          %6153 = vmatpush.bf16.msra.mxu0 %v6079
          %6154 = vmatpush.bf16.msra.mxu0 %v6078
          %6155 = vmatpush.bf16.msra.mxu0 %v6077
          %6156 = vmatpush.bf16.msra.mxu0 %v6076
          %6157 = vmatpush.bf16.msra.mxu0 %v6075
          %6158 = vmatpush.bf16.msra.mxu0 %v6074
          %6159 = vmatpush.bf16.msra.mxu0 %v6073
          %6160 = vmatmul.bf16.gmra.mxu0 %v5854
          %v6161 = vpop.f32.mrf.mxu0
          %v6162 = vadd.f32 %v6149, %v6161
          %v6163 = vpop.f32.mrf.mxu0
          %6164 = vdwg.mxu0
          %v6165 = vadd.f32 %v5538, %v6162
          %6166 = vst [vmem:[#allocation2] sm:$0x1f] %v6165
        $region100: #{dinov2_mid_encoder_forward.2} parent=51 // pred_fallthru
          _
        %p6167 = scmp.eq.s32.totalorder %s4943, 31
        // Predicated region
        $region101: #{dinov2_mid_encoder_forward.2} parent=51 // pred_check
          %p6168 = pneg %p6167
        $region102: #{dinov2_mid_encoder_forward.2} parent=51 // pred_check_branch
          %6170 = sbr.rel (%p6168) target = $region104
        $region103: #{dinov2_mid_encoder_forward.2} parent=51 // pred_region
          %s6171 = scalar_lea.vmem %s378, 96 [#allocation3]
          %v6172 = vld [vmem:[%s6171] sm:$0xff]
          %v6173 = vld [vmem:[%s6171 + $0x10] sm:$0xff]
          %v6174 = vld [vmem:[#allocation2] sm:$0x1f]
          %vm6175 = vcmask 1044480
          %v6176 = vsel %vm6175, %v6174, 0.0
          %6177 = vadd.xlane.f32.xlu0 %v6176
          %v6178 = vpop.xlane.xlu0 %6177
          %v6179 = vrcp.pop 128.0
          %v6180 = vmul.f32 128.0, %v6179
          %v6181 = vsub.f32 1.0, %v6180
          %v6182 = vmul.f32 %v6179, %v6181
          %v6183 = vadd.f32 %v6179, %v6182
          %vm6184 = vweird.f32 %v6179
          %v6185 = vsel %vm6184, %v6179, %v6183
          %v6186 = vmul.f32 %v6178, %v6185
          %v6187 = vsub.f32 %v6174, %v6186
          %v6188 = vmul.f32 %v6187, %v6187
          %v6189 = vsel %vm6175, %v6188, 0.0
          %6190 = vadd.xlane.f32.xlu0 %v6189
          %v6191 = vpop.xlane.xlu0 %6190
          %v6192 = vmul.f32 %v6191, %v6185
          %v6193 = vadd.f32 %v6192, 1e-06
          %v6194 = vrsqrt.pop %v6193
          %v6195 = vmul.f32 %v6194, %v6193
          %v6196 = vmul.f32 %v6195, %v6194
          %v6197 = vmul.f32 0.5, %v6196
          %v6198 = vsub.f32 1.5, %v6197
          %v6199 = vmul.f32 %v6194, %v6198
          %vm6200 = vweird.f32 %v6193
          %vm6201 = vweird.f32 %v6194
          %vm6202 = vmor %vm6200, %vm6201
          %v6203 = vsel %vm6202, %v6194, %v6199
          %v6204 = vmul.f32 %v6187, %v6203
          %v6205 = vperm.slane %v6172, 0
          %v6206 = vmul.f32 %v6204, %v6205
          %v6207 = vperm.slane %v6172, 1
          %v6208 = vadd.f32 %v6206, %v6207
          %s6209 = scalar_lea.vmem %s388, 576 [#allocation5]
          %v6210 = vld [vmem:[%s6209 + $0x8] sm:$0xf]
          %v6211 = vld [vmem:[%s6209 + $0x14] sm:$0xf]
          %v6212 = vld [vmem:[%s6209 + $0x20] sm:$0xf]
          %v6213 = vld [vmem:[%s6209 + $0x2c] sm:$0xf]
          %v6214 = vld [vmem:[%s6209 + $0x38] sm:$0xf]
          %v6215 = vld [vmem:[%s6209 + $0x44] sm:$0xf]
          %v6216 = vld [vmem:[%s6209 + $0x50] sm:$0xf]
          %v6217 = vld [vmem:[%s6209 + $0x5c] sm:$0xf]
          %v6218 = vld [vmem:[%s6209 + $0x68] sm:$0xf]
          %v6219 = vld [vmem:[%s6209 + $0x74] sm:$0xf]
          %v6220 = vld [vmem:[%s6209 + $0x80] sm:$0xf]
          %v6221 = vld [vmem:[%s6209 + $0x8c] sm:$0xf]
          %v6222 = vld [vmem:[%s6209 + $0x98] sm:$0xf]
          %v6223 = vld [vmem:[%s6209 + $0xa4] sm:$0xf]
          %v6224 = vld [vmem:[%s6209 + $0xb0] sm:$0xf]
          %v6225 = vld [vmem:[%s6209 + $0xbc] sm:$0xf]
          %v6226 = vpack.c.bf16 %v6208, %v6208
          %v6227 = vperm.slane %v6173, 2
          %v6244 = vunpack.c.l.b16 %v6210
          %v6245 = vunpack.c.l.b16 %v6211
          %v6246 = vunpack.c.l.b16 %v6212
          %v6247 = vunpack.c.l.b16 %v6213
          %v6248 = vunpack.c.l.b16 %v6214
          %v6249 = vunpack.c.l.b16 %v6215
          %v6250 = vunpack.c.l.b16 %v6216
          %v6251 = vunpack.c.l.b16 %v6217
          %v6252 = vunpack.c.l.b16 %v6218
          %v6253 = vunpack.c.l.b16 %v6219
          %v6254 = vunpack.c.l.b16 %v6220
          %v6255 = vunpack.c.l.b16 %v6221
          %v6256 = vunpack.c.l.b16 %v6222
          %v6257 = vunpack.c.l.b16 %v6223
          %v6258 = vunpack.c.l.b16 %v6224
          %v6259 = vunpack.c.l.b16 %v6225
          %v6260 = vpack.c.b16 %v6245, %v6244
          %v6261 = vpack.c.b16 %v6247, %v6246
          %v6262 = vpack.c.b16 %v6249, %v6248
          %v6263 = vpack.c.b16 %v6251, %v6250
          %v6264 = vpack.c.b16 %v6253, %v6252
          %v6265 = vpack.c.b16 %v6255, %v6254
          %v6266 = vpack.c.b16 %v6257, %v6256
          %v6267 = vpack.c.b16 %v6259, %v6258
          %6276 = vmatpush.bf16.msra.mxu0 %v6267
          %6277 = vmatpush.bf16.msra.mxu0 %v6266
          %6278 = vmatpush.bf16.msra.mxu0 %v6265
          %6279 = vmatpush.bf16.msra.mxu0 %v6264
          %6280 = vmatpush.bf16.msra.mxu0 %v6263
          %6281 = vmatpush.bf16.msra.mxu0 %v6262
          %6282 = vmatpush.bf16.msra.mxu0 %v6261
          %6283 = vmatpush.bf16.msra.mxu0 %v6260
          %6284 = vmatmul.bf16.gmra.mxu0 %v6226
          %v6285 = vpop.f32.mrf.mxu0
          %v6286 = vadd.f32 %v6227, %v6285
          %v6287 = vpop.f32.mrf.mxu0
          %6288 = vdwg.mxu0
          %v6289 = vmul.f32 %v6286, %v6286
          %v6290 = vsel %vm6175, %v6289, 0.0
          %6291 = vadd.xlane.f32.xlu0 %v6290
          %v6292 = vpop.xlane.xlu0 %6291
          %v6293 = vmax.f32 %v6292, 1e-24
          %v6294 = vrsqrt.pop %v6293
          %v6295 = vmul.f32 %v6294, %v6293
          %v6296 = vmul.f32 %v6295, %v6294
          %v6297 = vmul.f32 0.5, %v6296
          %v6298 = vsub.f32 1.5, %v6297
          %v6299 = vmul.f32 %v6294, %v6298
          %vm6300 = vweird.f32 %v6293
          %vm6301 = vweird.f32 %v6294
          %vm6302 = vmor %vm6300, %vm6301
          %v6303 = vsel %vm6302, %v6294, %v6299
          %v6304 = vmul.f32 %v6286, %v6303
          %6305 = vst [vmem:[%s8 - $0x1] sm:$0x1e] %v6304
        $region104: #{dinov2_mid_encoder_forward.2} parent=51 // pred_fallthru
          _
        // Predicated region
        $region105: #{dinov2_mid_encoder_forward.2} parent=51 // pred_check
          %p6306 = pneg %p234
        $region106: #{dinov2_mid_encoder_forward.2} parent=51 // pred_check_branch
          %6308 = sbr.rel (%p6306) target = $region108
        $region107: #{dinov2_mid_encoder_forward.2} parent=51 // pred_region
          _
        $region108: #{dinov2_mid_encoder_forward.2} parent=51 // pred_fallthru
          _
        // Predicated region
        $region109: #{dinov2_mid_encoder_forward.2} parent=51 // pred_check
          %p6309 = pneg %p234
        $region110: #{dinov2_mid_encoder_forward.2} parent=51 // pred_check_branch
          %6311 = sbr.rel (%p6309) target = $region112
        $region111: #{dinov2_mid_encoder_forward.2} parent=51 // pred_region
          _
        $region112: #{dinov2_mid_encoder_forward.2} parent=51 // pred_fallthru
          _
      $region52: #{dinov2_mid_encoder_forward.2} parent=5 // pred_fallthru
        _
      %p6312 = scmp.le.s32.totalorder 2, %s23
      // Predicated region
      $region113: #{dinov2_mid_encoder_forward.2} parent=5 // pred_check
        %p6313 = pneg %p6312
      $region114: #{dinov2_mid_encoder_forward.2} parent=5 // pred_check_branch
        %6315 = sbr.rel (%p6313) target = $region116
      $region115: #{dinov2_mid_encoder_forward.2} parent=5 // pred_region
        %s6316 = ssub.s32 %s23, 2
      $region116: #{dinov2_mid_encoder_forward.2} parent=5 // pred_fallthru
        _
    $region6: #{dinov2_mid_encoder_forward.2} parent=1 // loop_footer
      %s27 = sadd.s32 1, %s23
    $region7: #{dinov2_mid_encoder_forward.2} parent=1 // loop_footer_branch
      %22 = sbr.rel target = $region3
    $region8: #{dinov2_mid_encoder_forward.2} parent=1 // loop_exit
      _
    %6317 = vsyncpa [#allocation4], 1
    %s6318 = scalar_lea.sflag [#allocation4], 1
    %6319 = vsyncpa %s6318, 1
    %6320 = vsyncpa [#allocation6], 1
    %s6321 = scalar_lea.sflag [#allocation6], 1
    %6322 = vsyncpa %s6321, 1
    %6323 = vsyncpa [#allocation9], 1
    %s6324 = scalar_lea.sflag [#allocation9], 1
    %6325 = vsyncpa %s6324, 1

</llo_original>
